<compile_context>
chip_gen: v7x
topology: tpu7x:2x2x1
jax: 0.10.0
libtpu: 0.0.40
codegen_flags: <defaults>
</compile_context>

<pallas_src>
import numpy as np
import jax
import jax.numpy as jnp
from jax.experimental import pallas as pl
from jax.experimental.pallas import tpu as pltpu

# Shapes implied by the torch forward (AvgPool2d(7) on the backbone output):
# 28x28 input -> conv s2 -> 14x14 -> conv s2 -> 7x7 feature map.
C_IN, C_MID, C_OUT = 3, 16, 32
H_IN = W_IN = 28
H1 = W1 = 14                 # conv1 output spatial
H2 = W2 = 7                  # conv2 output spatial (= AvgPool window)
P1 = H1 * W1                 # 196
P1P = 208                    # P1 padded to a multiple of 16 (bf16 sublane tile)
P2 = H2 * W2                 # 49
K1 = 3 * 3 * C_IN            # 27  (conv1 im2col depth)
K2 = 3 * 3 * C_MID           # 144 (conv2 fused im2col depth)
N_PAD = 128                  # lane-dense padded output-channel width
BT_MAX = 8                   # max images per grid step


# ----------------------------- Pallas kernel ------------------------------- #

def _make_fused_kernel(bt):
    """Batch-blocked fused backbone: conv1 GEMM -> conv2 patch GEMM -> pool."""

    def kernel(p_ref, w1_ref, b1_ref, s2_ref, w2c_ref, b2_ref, vf_ref, avg_ref):
        # ---- conv1: ONE big bf16 GEMM over the whole batch block -----------
        # (bt*P1P, 27) @ (27, 16) -> f32 accumulate, bias + ReLU.
        h1 = jnp.dot(p_ref[...], w1_ref[...],
                     preferred_element_type=jnp.float32)
        h1 = jnp.maximum(h1 + b1_ref[...], 0.0)               # (bt*P1P, C_MID)
        h1 = h1.astype(jnp.bfloat16)                           # MXU operand dtype

        w2c = w2c_ref[...]                                     # (K2, N_PAD) bf16
        b2 = b2_ref[...]                                       # (1, N_PAD) f32

        # ---- conv2 per image: bf16 0/1 gather -> fused K=144 weight GEMM ----
        for b in range(bt):                                    # static unroll
            h1_b = h1[b * P1P:(b + 1) * P1P, :]                # tile-aligned slice
            taps = [jnp.dot(s2_ref[t], h1_b,                   # (P2, C_MID) each
                            preferred_element_type=jnp.float32)
                    for t in range(9)]
            patch = jnp.concatenate(taps, axis=-1).astype(jnp.bfloat16)  # (P2, K2)
            h2 = jnp.dot(patch, w2c,
                         preferred_element_type=jnp.float32)   # (P2, N_PAD)
            h2 = jnp.maximum(h2 + b2, 0.0)

            # lane-dense stores + fused AvgPool2d(kernel=7) epilogue
            vf_ref[b] = h2
            avg_ref[b] = jnp.mean(h2, axis=0, keepdims=True)   # (1, N_PAD)

    return kernel


def _fused_backbone(patches_flat, w1_mat, b1_row, s2, w2cat, b2_row, bt, bpad):
    grid = (bpad // bt,)
    return pl.pallas_call(
        _make_fused_kernel(bt),
        out_shape=(jax.ShapeDtypeStruct((bpad, P2, N_PAD), jnp.float32),
                   jax.ShapeDtypeStruct((bpad, 1, N_PAD), jnp.float32)),
        grid_spec=pltpu.PrefetchScalarGridSpec(
            num_scalar_prefetch=0,
            grid=grid,
            in_specs=[
                pl.BlockSpec((bt * P1P, K1), lambda i: (i, 0)),    # patches (flat)
                pl.BlockSpec((K1, C_MID), lambda i: (0, 0)),       # w1
                pl.BlockSpec((1, C_MID), lambda i: (0, 0)),        # b1
                pl.BlockSpec((9, P2, P1P), lambda i: (0, 0, 0)),   # S2 taps (bf16)
                pl.BlockSpec((K2, N_PAD), lambda i: (0, 0)),       # w2 (K-fused)
                pl.BlockSpec((1, N_PAD), lambda i: (0, 0)),        # b2
            ],
            out_specs=[
                pl.BlockSpec((bt, P2, N_PAD), lambda i: (i, 0, 0)),   # features
                pl.BlockSpec((bt, 1, N_PAD), lambda i: (i, 0, 0)),    # pooled
            ],
        ),
        compiler_params=pltpu.CompilerParams(
            dimension_semantics=("parallel",)),   # >=2 steps -> both v7x TCs
    )(patches_flat, w1_mat, b1_row, s2, w2cat, b2_row)


# ------------------------------ JAX glue ----------------------------------- #

@jax.jit
def _forward(images_nchw, w1_mat, b1_row, s2, w2cat, b2_row):
    B = images_nchw.shape[0]
    bt = max(1, min(BT_MAX, B // 2))       # keep >=2 grid steps whenever B >= 2
    bpad = pl.cdiv(B, bt) * bt

    # NCHW -> channel-last once at the module boundary; NHWC after.
    x = jnp.transpose(images_nchw, (0, 2, 3, 1))
    xp = jnp.pad(x, ((0, 0), (1, 1), (1, 1), (0, 0)))          # (B, 30, 30, 3)
    # conv1 im2col (tiny, tap-major / channel-minor columns).
    # TODO(synk): fold this im2col into the kernel once resolution/batch grow.
    cols = [xp[:, ki:ki + 2 * H1 - 1:2, kj:kj + 2 * W1 - 1:2, :]
            for ki in range(3) for kj in range(3)]
    patches = jnp.concatenate(cols, axis=-1).reshape(B, P1, K1)
    patches = jnp.pad(patches, ((0, bpad - B), (0, P1P - P1), (0, 0)))
    patches_flat = patches.reshape(bpad * P1P, K1).astype(jnp.bfloat16)

    vf_pad, avg_pad = _fused_backbone(patches_flat, w1_mat, b1_row, s2,
                                      w2cat, b2_row, bt, bpad)

    # Slice off batch/lane padding; present visual_features in torch NCHW.
    vf = vf_pad[:B, :, :C_OUT].reshape(B, H2, W2, C_OUT)
    visual_features = jnp.transpose(vf, (0, 3, 1, 2))           # (B, 32, 7, 7)
    avg_features = avg_pad[:B, 0, :C_OUT]                       # (B, 32)
    return visual_features, avg_features


class VisualFeatureExtractorPallas:
    """Mirrors VisualFeatureExtractor(model_name='densenet201').forward()."""

    def __init__(self, key, in_channels=C_IN, mid_channels=C_MID,
                 out_features=C_OUT):
        k1, k2, k3 = jax.random.split(key, 3)
        self.out_features = out_features
        # Backbone stand-in weights (PyTorch OIHW layout), deterministic.
        self.w1 = 0.1 * jax.random.normal(
            k1, (mid_channels, in_channels, 3, 3), jnp.float32)
        self.b1 = jnp.zeros((mid_channels,), jnp.float32)
        self.w2 = 0.1 * jax.random.normal(
            k2, (out_features, mid_channels, 3, 3), jnp.float32)
        self.b2 = jnp.zeros((out_features,), jnp.float32)
        # Declared in the torch __init__ but never used in forward():
        self.linear_w = 0.1 * jax.random.normal(
            k3, (out_features, out_features), jnp.float32)
        self.linear_b = jnp.zeros((out_features,), jnp.float32)
        self.bn_gamma = jnp.ones((out_features,), jnp.float32)
        self.bn_beta = jnp.zeros((out_features,), jnp.float32)

        # --- kernel-ready operands (precomputed once) -----------------------
        # conv1 weights as a (KH*KW*Cin, Cmid) GEMM matrix (tap-major rows).
        self.w1_mat = jnp.transpose(self.w1, (2, 3, 1, 0)).reshape(
            K1, mid_channels).astype(jnp.bfloat16)
        self.b1_row = self.b1.reshape(1, mid_channels)
        # conv2 weights fused along K: (9*Cmid, Cout) -> lane-padded (144, 128).
        w2_t = jnp.transpose(self.w2, (2, 3, 1, 0)).reshape(K2, out_features)
        self.w2cat = jnp.pad(
            w2_t, ((0, 0), (0, N_PAD - out_features))).astype(jnp.bfloat16)
        self.b2_row = jnp.pad(self.b2, (0, N_PAD - out_features)).reshape(1, N_PAD)
        # conv2 im2col as 0/1 selection matrices, one per tap, stored bf16
        # (exact for 0/1; halves the dominant HBM->VMEM operand).
        s2 = np.zeros((9, P2, P1P), np.float32)
        for ki in range(3):
            for kj in range(3):
                tap = ki * 3 + kj
                for p in range(H2):
                    for q in range(W2):
                        r, c = 2 * p - 1 + ki, 2 * q - 1 + kj
                        if 0 <= r < H1 and 0 <= c < W1:
                            s2[tap, p * W2 + q, r * W1 + c] = 1.0
        self.s2 = jnp.asarray(s2, dtype=jnp.bfloat16)

    def __call__(self, images_nchw):
        return _forward(images_nchw, self.w1_mat, self.b1_row, self.s2,
                        self.w2cat, self.b2_row)


def _reference_forward(images_nchw, w1, b1, w2, b2):
    """Pure-JAX f32 reference (lax conv) for correctness checking."""
    dn = ('NCHW', 'OIHW', 'NCHW')
    hp = jax.lax.Precision.HIGHEST
    h = jax.lax.conv_general_dilated(images_nchw, w1, (2, 2), ((1, 1), (1, 1)),
                                     dimension_numbers=dn, precision=hp)
    h = jnp.maximum(h + b1[None, :, None, None], 0.0)
    v = jax.lax.conv_general_dilated(h, w2, (2, 2), ((1, 1), (1, 1)),
                                     dimension_numbers=dn, precision=hp)
    v = jnp.maximum(v + b2[None, :, None, None], 0.0)
    return v, v.mean(axis=(2, 3))


if __name__ == "__main__":
    key = jax.random.PRNGKey(0)
    k_params, k_img = jax.random.split(key)
    # batch=8 (small): BT=4 images per grid step, 2 "parallel" grid steps.
    B = 8
    images = jax.random.normal(k_img, (B, C_IN, H_IN, W_IN), jnp.float32)

    model = VisualFeatureExtractorPallas(k_params)
    visual_features, avg_features = model(images)
    jax.block_until_ready(visual_features)
    jax.block_until_ready(avg_features)

    assert visual_features.shape == (B, C_OUT, H2, W2)
    assert avg_features.shape == (B, C_OUT)

    ref_vf, ref_avg = _reference_forward(images, model.w1, model.b1,
                                         model.w2, model.b2)
    # bf16 GEMM operands with f32 accumulation -> tolerance loosened vs f32.
    assert jnp.allclose(visual_features, ref_vf, atol=2e-2, rtol=2e-2), \
        "visual_features mismatch vs reference conv"
    assert jnp.allclose(avg_features, ref_avg, atol=2e-2, rtol=2e-2), \
        "avg_features mismatch vs reference conv"
    # avg pool consistency: mean over spatial dims of the returned feature map
    assert jnp.allclose(avg_features, visual_features.mean(axis=(2, 3)),
                        atol=1e-5), "avgpool mismatch"

    print("KERNEL_OK")
</pallas_src>

<mosaic_0001>
module attributes {stable_mosaic.version = 11 : i64} {
  func.func @kernel(%arg0: i32, %arg1: memref<832x27xbf16, #tpu.memory_space<vmem>>, %arg2: memref<27x16xbf16, #tpu.memory_space<vmem>>, %arg3: memref<1x16xf32, #tpu.memory_space<vmem>>, %arg4: memref<9x49x208xbf16, #tpu.memory_space<vmem>>, %arg5: memref<144x128xbf16, #tpu.memory_space<vmem>>, %arg6: memref<1x128xf32, #tpu.memory_space<vmem>>, %arg7: memref<4x49x128xf32, #tpu.memory_space<vmem>>, %arg8: memref<4x1x128xf32, #tpu.memory_space<vmem>>) attributes {dimension_semantics = [#tpu.dimension_semantics<parallel>], iteration_bounds = array<i64: 2>, scalar_prefetch = 0 : i64, scratch_operands = 0 : i64, tpu.core_type = #tpu.core_type<tc>, window_params = [{transform_indices = @transform_0, window_bounds = array<i64: 832, 27>}, {pipeline_mode = #tpu.pipeline_mode<synchronous>, transform_indices = @transform_1, window_bounds = array<i64: 27, 16>}, {pipeline_mode = #tpu.pipeline_mode<synchronous>, transform_indices = @transform_2, window_bounds = array<i64: 1, 16>}, {pipeline_mode = #tpu.pipeline_mode<synchronous>, transform_indices = @transform_3, window_bounds = array<i64: 9, 49, 208>}, {pipeline_mode = #tpu.pipeline_mode<synchronous>, transform_indices = @transform_4, window_bounds = array<i64: 144, 128>}, {pipeline_mode = #tpu.pipeline_mode<synchronous>, transform_indices = @transform_5, window_bounds = array<i64: 1, 128>}, {transform_indices = @transform_6, window_bounds = array<i64: 4, 49, 128>}, {transform_indices = @transform_7, window_bounds = array<i64: 4, 1, 128>}]} {
    %c0 = arith.constant 0 : index
    %c0_0 = arith.constant 0 : index
    %0 = vector.load %arg1[%c0, %c0_0] : memref<832x27xbf16, #tpu.memory_space<vmem>>, vector<832x27xbf16>
    %c0_1 = arith.constant 0 : index
    %c0_2 = arith.constant 0 : index
    %1 = vector.load %arg2[%c0_1, %c0_2] : memref<27x16xbf16, #tpu.memory_space<vmem>>, vector<27x16xbf16>
    %cst = arith.constant dense<0.000000e+00> : vector<832x16xf32>
    %2 = tpu.matmul %0, %1, %cst {dimension_numbers = #tpu.dot_dimension_numbers<[1], [0], [0], [1], [0, 0, 1, 1], [], []>} : vector<832x27xbf16>, vector<27x16xbf16>, vector<832x16xf32> -> vector<832x16xf32>
    %c0_3 = arith.constant 0 : index
    %c0_4 = arith.constant 0 : index
    %3 = vector.load %arg3[%c0_3, %c0_4] : memref<1x16xf32, #tpu.memory_space<vmem>>, vector<1x16xf32>
    %4 = vector.broadcast %3 : vector<1x16xf32> to vector<832x16xf32>
    %5 = arith.addf %2, %4 : vector<832x16xf32>
    %cst_5 = arith.constant 0.000000e+00 : f32
    %6 = vector.broadcast %cst_5 : f32 to vector<832x16xf32>
    %7 = arith.maximumf %5, %6 : vector<832x16xf32>
    %8 = arith.truncf %7 : vector<832x16xf32> to vector<832x16xbf16>
    %c0_6 = arith.constant 0 : index
    %c0_7 = arith.constant 0 : index
    %9 = vector.load %arg5[%c0_6, %c0_7] : memref<144x128xbf16, #tpu.memory_space<vmem>>, vector<144x128xbf16>
    %c0_8 = arith.constant 0 : index
    %c0_9 = arith.constant 0 : index
    %10 = vector.load %arg6[%c0_8, %c0_9] : memref<1x128xf32, #tpu.memory_space<vmem>>, vector<1x128xf32>
    %11 = vector.extract_strided_slice %8 {offsets = [0, 0], sizes = [208, 16], strides = [1, 1]} : vector<832x16xbf16> to vector<208x16xbf16>
    %c0_10 = arith.constant 0 : index
    %c0_11 = arith.constant 0 : index
    %c0_12 = arith.constant 0 : index
    %12 = vector.load %arg4[%c0_10, %c0_11, %c0_12] : memref<9x49x208xbf16, #tpu.memory_space<vmem>>, vector<1x49x208xbf16>
    %13 = vector.shape_cast %12 : vector<1x49x208xbf16> to vector<49x208xbf16>
    %cst_13 = arith.constant dense<0.000000e+00> : vector<49x16xf32>
    %14 = tpu.matmul %13, %11, %cst_13 {dimension_numbers = #tpu.dot_dimension_numbers<[1], [0], [0], [1], [0, 0, 1, 1], [], []>} : vector<49x208xbf16>, vector<208x16xbf16>, vector<49x16xf32> -> vector<49x16xf32>
    %c1 = arith.constant 1 : index
    %c0_14 = arith.constant 0 : index
    %c0_15 = arith.constant 0 : index
    %15 = vector.load %arg4[%c1, %c0_14, %c0_15] : memref<9x49x208xbf16, #tpu.memory_space<vmem>>, vector<1x49x208xbf16>
    %16 = vector.shape_cast %15 : vector<1x49x208xbf16> to vector<49x208xbf16>
    %cst_16 = arith.constant dense<0.000000e+00> : vector<49x16xf32>
    %17 = tpu.matmul %16, %11, %cst_16 {dimension_numbers = #tpu.dot_dimension_numbers<[1], [0], [0], [1], [0, 0, 1, 1], [], []>} : vector<49x208xbf16>, vector<208x16xbf16>, vector<49x16xf32> -> vector<49x16xf32>
    %c2 = arith.constant 2 : index
    %c0_17 = arith.constant 0 : index
    %c0_18 = arith.constant 0 : index
    %18 = vector.load %arg4[%c2, %c0_17, %c0_18] : memref<9x49x208xbf16, #tpu.memory_space<vmem>>, vector<1x49x208xbf16>
    %19 = vector.shape_cast %18 : vector<1x49x208xbf16> to vector<49x208xbf16>
    %cst_19 = arith.constant dense<0.000000e+00> : vector<49x16xf32>
    %20 = tpu.matmul %19, %11, %cst_19 {dimension_numbers = #tpu.dot_dimension_numbers<[1], [0], [0], [1], [0, 0, 1, 1], [], []>} : vector<49x208xbf16>, vector<208x16xbf16>, vector<49x16xf32> -> vector<49x16xf32>
    %c3 = arith.constant 3 : index
    %c0_20 = arith.constant 0 : index
    %c0_21 = arith.constant 0 : index
    %21 = vector.load %arg4[%c3, %c0_20, %c0_21] : memref<9x49x208xbf16, #tpu.memory_space<vmem>>, vector<1x49x208xbf16>
    %22 = vector.shape_cast %21 : vector<1x49x208xbf16> to vector<49x208xbf16>
    %cst_22 = arith.constant dense<0.000000e+00> : vector<49x16xf32>
    %23 = tpu.matmul %22, %11, %cst_22 {dimension_numbers = #tpu.dot_dimension_numbers<[1], [0], [0], [1], [0, 0, 1, 1], [], []>} : vector<49x208xbf16>, vector<208x16xbf16>, vector<49x16xf32> -> vector<49x16xf32>
    %c4 = arith.constant 4 : index
    %c0_23 = arith.constant 0 : index
    %c0_24 = arith.constant 0 : index
    %24 = vector.load %arg4[%c4, %c0_23, %c0_24] : memref<9x49x208xbf16, #tpu.memory_space<vmem>>, vector<1x49x208xbf16>
    %25 = vector.shape_cast %24 : vector<1x49x208xbf16> to vector<49x208xbf16>
    %cst_25 = arith.constant dense<0.000000e+00> : vector<49x16xf32>
    %26 = tpu.matmul %25, %11, %cst_25 {dimension_numbers = #tpu.dot_dimension_numbers<[1], [0], [0], [1], [0, 0, 1, 1], [], []>} : vector<49x208xbf16>, vector<208x16xbf16>, vector<49x16xf32> -> vector<49x16xf32>
    %c5 = arith.constant 5 : index
    %c0_26 = arith.constant 0 : index
    %c0_27 = arith.constant 0 : index
    %27 = vector.load %arg4[%c5, %c0_26, %c0_27] : memref<9x49x208xbf16, #tpu.memory_space<vmem>>, vector<1x49x208xbf16>
    %28 = vector.shape_cast %27 : vector<1x49x208xbf16> to vector<49x208xbf16>
    %cst_28 = arith.constant dense<0.000000e+00> : vector<49x16xf32>
    %29 = tpu.matmul %28, %11, %cst_28 {dimension_numbers = #tpu.dot_dimension_numbers<[1], [0], [0], [1], [0, 0, 1, 1], [], []>} : vector<49x208xbf16>, vector<208x16xbf16>, vector<49x16xf32> -> vector<49x16xf32>
    %c6 = arith.constant 6 : index
    %c0_29 = arith.constant 0 : index
    %c0_30 = arith.constant 0 : index
    %30 = vector.load %arg4[%c6, %c0_29, %c0_30] : memref<9x49x208xbf16, #tpu.memory_space<vmem>>, vector<1x49x208xbf16>
    %31 = vector.shape_cast %30 : vector<1x49x208xbf16> to vector<49x208xbf16>
    %cst_31 = arith.constant dense<0.000000e+00> : vector<49x16xf32>
    %32 = tpu.matmul %31, %11, %cst_31 {dimension_numbers = #tpu.dot_dimension_numbers<[1], [0], [0], [1], [0, 0, 1, 1], [], []>} : vector<49x208xbf16>, vector<208x16xbf16>, vector<49x16xf32> -> vector<49x16xf32>
    %c7 = arith.constant 7 : index
    %c0_32 = arith.constant 0 : index
    %c0_33 = arith.constant 0 : index
    %33 = vector.load %arg4[%c7, %c0_32, %c0_33] : memref<9x49x208xbf16, #tpu.memory_space<vmem>>, vector<1x49x208xbf16>
    %34 = vector.shape_cast %33 : vector<1x49x208xbf16> to vector<49x208xbf16>
    %cst_34 = arith.constant dense<0.000000e+00> : vector<49x16xf32>
    %35 = tpu.matmul %34, %11, %cst_34 {dimension_numbers = #tpu.dot_dimension_numbers<[1], [0], [0], [1], [0, 0, 1, 1], [], []>} : vector<49x208xbf16>, vector<208x16xbf16>, vector<49x16xf32> -> vector<49x16xf32>
    %c8 = arith.constant 8 : index
    %c0_35 = arith.constant 0 : index
    %c0_36 = arith.constant 0 : index
    %36 = vector.load %arg4[%c8, %c0_35, %c0_36] : memref<9x49x208xbf16, #tpu.memory_space<vmem>>, vector<1x49x208xbf16>
    %37 = vector.shape_cast %36 : vector<1x49x208xbf16> to vector<49x208xbf16>
    %cst_37 = arith.constant dense<0.000000e+00> : vector<49x16xf32>
    %38 = tpu.matmul %37, %11, %cst_37 {dimension_numbers = #tpu.dot_dimension_numbers<[1], [0], [0], [1], [0, 0, 1, 1], [], []>} : vector<49x208xbf16>, vector<208x16xbf16>, vector<49x16xf32> -> vector<49x16xf32>
    %39 = tpu.concatenate %14, %17, %20, %23, %26, %29, %32, %35, %38 in 1 : vector<49x16xf32>, vector<49x16xf32>, vector<49x16xf32>, vector<49x16xf32>, vector<49x16xf32>, vector<49x16xf32>, vector<49x16xf32>, vector<49x16xf32>, vector<49x16xf32> -> vector<49x144xf32>
    %40 = arith.truncf %39 : vector<49x144xf32> to vector<49x144xbf16>
    %cst_38 = arith.constant dense<0.000000e+00> : vector<49x128xf32>
    %41 = tpu.matmul %40, %9, %cst_38 {dimension_numbers = #tpu.dot_dimension_numbers<[1], [0], [0], [1], [0, 0, 1, 1], [], []>} : vector<49x144xbf16>, vector<144x128xbf16>, vector<49x128xf32> -> vector<49x128xf32>
    %42 = vector.broadcast %10 : vector<1x128xf32> to vector<49x128xf32>
    %43 = arith.addf %41, %42 : vector<49x128xf32>
    %cst_39 = arith.constant 0.000000e+00 : f32
    %44 = vector.broadcast %cst_39 : f32 to vector<49x128xf32>
    %45 = arith.maximumf %43, %44 : vector<49x128xf32>
    %c0_40 = arith.constant 0 : index
    %c0_41 = arith.constant 0 : index
    %c0_42 = arith.constant 0 : index
    %46 = vector.load %arg7[%c0_40, %c0_41, %c0_42] : memref<4x49x128xf32, #tpu.memory_space<vmem>>, vector<1x49x128xf32>
    %47 = vector.shape_cast %46 : vector<1x49x128xf32> to vector<49x128xf32>
    %48 = vector.shape_cast %45 : vector<49x128xf32> to vector<1x49x128xf32>
    tpu.vector_store %arg7[%c0_40, %c0_41, %c0_42], %48 {strides = array<i32>} : memref<4x49x128xf32, #tpu.memory_space<vmem>>, vector<1x49x128xf32>,
    %cst_43 = arith.constant dense<0.000000e+00> : vector<128xf32>
    %49 = vector.multi_reduction <add>, %45, %cst_43 [0] : vector<49x128xf32> to vector<128xf32>
    %50 = vector.shape_cast %49 : vector<128xf32> to vector<1x128xf32>
    %cst_44 = arith.constant 4.900000e+01 : f32
    %51 = vector.broadcast %cst_44 : f32 to vector<1x128xf32>
    %52 = arith.divf %50, %51 : vector<1x128xf32>
    %c0_45 = arith.constant 0 : index
    %c0_46 = arith.constant 0 : index
    %c0_47 = arith.constant 0 : index
    %53 = vector.load %arg8[%c0_45, %c0_46, %c0_47] : memref<4x1x128xf32, #tpu.memory_space<vmem>>, vector<1x1x128xf32>
    %54 = vector.shape_cast %53 : vector<1x1x128xf32> to vector<1x128xf32>
    %55 = vector.shape_cast %52 : vector<1x128xf32> to vector<1x1x128xf32>
    tpu.vector_store %arg8[%c0_45, %c0_46, %c0_47], %55 {strides = array<i32>} : memref<4x1x128xf32, #tpu.memory_space<vmem>>, vector<1x1x128xf32>,
    %56 = vector.extract_strided_slice %8 {offsets = [208, 0], sizes = [208, 16], strides = [1, 1]} : vector<832x16xbf16> to vector<208x16xbf16>
    %c0_48 = arith.constant 0 : index
    %c0_49 = arith.constant 0 : index
    %c0_50 = arith.constant 0 : index
    %57 = vector.load %arg4[%c0_48, %c0_49, %c0_50] : memref<9x49x208xbf16, #tpu.memory_space<vmem>>, vector<1x49x208xbf16>
    %58 = vector.shape_cast %57 : vector<1x49x208xbf16> to vector<49x208xbf16>
    %cst_51 = arith.constant dense<0.000000e+00> : vector<49x16xf32>
    %59 = tpu.matmul %58, %56, %cst_51 {dimension_numbers = #tpu.dot_dimension_numbers<[1], [0], [0], [1], [0, 0, 1, 1], [], []>} : vector<49x208xbf16>, vector<208x16xbf16>, vector<49x16xf32> -> vector<49x16xf32>
    %c1_52 = arith.constant 1 : index
    %c0_53 = arith.constant 0 : index
    %c0_54 = arith.constant 0 : index
    %60 = vector.load %arg4[%c1_52, %c0_53, %c0_54] : memref<9x49x208xbf16, #tpu.memory_space<vmem>>, vector<1x49x208xbf16>
    %61 = vector.shape_cast %60 : vector<1x49x208xbf16> to vector<49x208xbf16>
    %cst_55 = arith.constant dense<0.000000e+00> : vector<49x16xf32>
    %62 = tpu.matmul %61, %56, %cst_55 {dimension_numbers = #tpu.dot_dimension_numbers<[1], [0], [0], [1], [0, 0, 1, 1], [], []>} : vector<49x208xbf16>, vector<208x16xbf16>, vector<49x16xf32> -> vector<49x16xf32>
    %c2_56 = arith.constant 2 : index
    %c0_57 = arith.constant 0 : index
    %c0_58 = arith.constant 0 : index
    %63 = vector.load %arg4[%c2_56, %c0_57, %c0_58] : memref<9x49x208xbf16, #tpu.memory_space<vmem>>, vector<1x49x208xbf16>
    %64 = vector.shape_cast %63 : vector<1x49x208xbf16> to vector<49x208xbf16>
    %cst_59 = arith.constant dense<0.000000e+00> : vector<49x16xf32>
    %65 = tpu.matmul %64, %56, %cst_59 {dimension_numbers = #tpu.dot_dimension_numbers<[1], [0], [0], [1], [0, 0, 1, 1], [], []>} : vector<49x208xbf16>, vector<208x16xbf16>, vector<49x16xf32> -> vector<49x16xf32>
    %c3_60 = arith.constant 3 : index
    %c0_61 = arith.constant 0 : index
    %c0_62 = arith.constant 0 : index
    %66 = vector.load %arg4[%c3_60, %c0_61, %c0_62] : memref<9x49x208xbf16, #tpu.memory_space<vmem>>, vector<1x49x208xbf16>
    %67 = vector.shape_cast %66 : vector<1x49x208xbf16> to vector<49x208xbf16>
    %cst_63 = arith.constant dense<0.000000e+00> : vector<49x16xf32>
    %68 = tpu.matmul %67, %56, %cst_63 {dimension_numbers = #tpu.dot_dimension_numbers<[1], [0], [0], [1], [0, 0, 1, 1], [], []>} : vector<49x208xbf16>, vector<208x16xbf16>, vector<49x16xf32> -> vector<49x16xf32>
    %c4_64 = arith.constant 4 : index
    %c0_65 = arith.constant 0 : index
    %c0_66 = arith.constant 0 : index
    %69 = vector.load %arg4[%c4_64, %c0_65, %c0_66] : memref<9x49x208xbf16, #tpu.memory_space<vmem>>, vector<1x49x208xbf16>
    %70 = vector.shape_cast %69 : vector<1x49x208xbf16> to vector<49x208xbf16>
    %cst_67 = arith.constant dense<0.000000e+00> : vector<49x16xf32>
    %71 = tpu.matmul %70, %56, %cst_67 {dimension_numbers = #tpu.dot_dimension_numbers<[1], [0], [0], [1], [0, 0, 1, 1], [], []>} : vector<49x208xbf16>, vector<208x16xbf16>, vector<49x16xf32> -> vector<49x16xf32>
    %c5_68 = arith.constant 5 : index
    %c0_69 = arith.constant 0 : index
    %c0_70 = arith.constant 0 : index
    %72 = vector.load %arg4[%c5_68, %c0_69, %c0_70] : memref<9x49x208xbf16, #tpu.memory_space<vmem>>, vector<1x49x208xbf16>
    %73 = vector.shape_cast %72 : vector<1x49x208xbf16> to vector<49x208xbf16>
    %cst_71 = arith.constant dense<0.000000e+00> : vector<49x16xf32>
    %74 = tpu.matmul %73, %56, %cst_71 {dimension_numbers = #tpu.dot_dimension_numbers<[1], [0], [0], [1], [0, 0, 1, 1], [], []>} : vector<49x208xbf16>, vector<208x16xbf16>, vector<49x16xf32> -> vector<49x16xf32>
    %c6_72 = arith.constant 6 : index
    %c0_73 = arith.constant 0 : index
    %c0_74 = arith.constant 0 : index
    %75 = vector.load %arg4[%c6_72, %c0_73, %c0_74] : memref<9x49x208xbf16, #tpu.memory_space<vmem>>, vector<1x49x208xbf16>
    %76 = vector.shape_cast %75 : vector<1x49x208xbf16> to vector<49x208xbf16>
    %cst_75 = arith.constant dense<0.000000e+00> : vector<49x16xf32>
    %77 = tpu.matmul %76, %56, %cst_75 {dimension_numbers = #tpu.dot_dimension_numbers<[1], [0], [0], [1], [0, 0, 1, 1], [], []>} : vector<49x208xbf16>, vector<208x16xbf16>, vector<49x16xf32> -> vector<49x16xf32>
    %c7_76 = arith.constant 7 : index
    %c0_77 = arith.constant 0 : index
    %c0_78 = arith.constant 0 : index
    %78 = vector.load %arg4[%c7_76, %c0_77, %c0_78] : memref<9x49x208xbf16, #tpu.memory_space<vmem>>, vector<1x49x208xbf16>
    %79 = vector.shape_cast %78 : vector<1x49x208xbf16> to vector<49x208xbf16>
    %cst_79 = arith.constant dense<0.000000e+00> : vector<49x16xf32>
    %80 = tpu.matmul %79, %56, %cst_79 {dimension_numbers = #tpu.dot_dimension_numbers<[1], [0], [0], [1], [0, 0, 1, 1], [], []>} : vector<49x208xbf16>, vector<208x16xbf16>, vector<49x16xf32> -> vector<49x16xf32>
    %c8_80 = arith.constant 8 : index
    %c0_81 = arith.constant 0 : index
    %c0_82 = arith.constant 0 : index
    %81 = vector.load %arg4[%c8_80, %c0_81, %c0_82] : memref<9x49x208xbf16, #tpu.memory_space<vmem>>, vector<1x49x208xbf16>
    %82 = vector.shape_cast %81 : vector<1x49x208xbf16> to vector<49x208xbf16>
    %cst_83 = arith.constant dense<0.000000e+00> : vector<49x16xf32>
    %83 = tpu.matmul %82, %56, %cst_83 {dimension_numbers = #tpu.dot_dimension_numbers<[1], [0], [0], [1], [0, 0, 1, 1], [], []>} : vector<49x208xbf16>, vector<208x16xbf16>, vector<49x16xf32> -> vector<49x16xf32>
    %84 = tpu.concatenate %59, %62, %65, %68, %71, %74, %77, %80, %83 in 1 : vector<49x16xf32>, vector<49x16xf32>, vector<49x16xf32>, vector<49x16xf32>, vector<49x16xf32>, vector<49x16xf32>, vector<49x16xf32>, vector<49x16xf32>, vector<49x16xf32> -> vector<49x144xf32>
    %85 = arith.truncf %84 : vector<49x144xf32> to vector<49x144xbf16>
    %cst_84 = arith.constant dense<0.000000e+00> : vector<49x128xf32>
    %86 = tpu.matmul %85, %9, %cst_84 {dimension_numbers = #tpu.dot_dimension_numbers<[1], [0], [0], [1], [0, 0, 1, 1], [], []>} : vector<49x144xbf16>, vector<144x128xbf16>, vector<49x128xf32> -> vector<49x128xf32>
    %87 = vector.broadcast %10 : vector<1x128xf32> to vector<49x128xf32>
    %88 = arith.addf %86, %87 : vector<49x128xf32>
    %cst_85 = arith.constant 0.000000e+00 : f32
    %89 = vector.broadcast %cst_85 : f32 to vector<49x128xf32>
    %90 = arith.maximumf %88, %89 : vector<49x128xf32>
    %c1_86 = arith.constant 1 : index
    %c0_87 = arith.constant 0 : index
    %c0_88 = arith.constant 0 : index
    %91 = vector.load %arg7[%c1_86, %c0_87, %c0_88] : memref<4x49x128xf32, #tpu.memory_space<vmem>>, vector<1x49x128xf32>
    %92 = vector.shape_cast %91 : vector<1x49x128xf32> to vector<49x128xf32>
    %93 = vector.shape_cast %90 : vector<49x128xf32> to vector<1x49x128xf32>
    tpu.vector_store %arg7[%c1_86, %c0_87, %c0_88], %93 {strides = array<i32>} : memref<4x49x128xf32, #tpu.memory_space<vmem>>, vector<1x49x128xf32>,
    %cst_89 = arith.constant dense<0.000000e+00> : vector<128xf32>
    %94 = vector.multi_reduction <add>, %90, %cst_89 [0] : vector<49x128xf32> to vector<128xf32>
    %95 = vector.shape_cast %94 : vector<128xf32> to vector<1x128xf32>
    %cst_90 = arith.constant 4.900000e+01 : f32
    %96 = vector.broadcast %cst_90 : f32 to vector<1x128xf32>
    %97 = arith.divf %95, %96 : vector<1x128xf32>
    %c1_91 = arith.constant 1 : index
    %c0_92 = arith.constant 0 : index
    %c0_93 = arith.constant 0 : index
    %98 = vector.load %arg8[%c1_91, %c0_92, %c0_93] : memref<4x1x128xf32, #tpu.memory_space<vmem>>, vector<1x1x128xf32>
    %99 = vector.shape_cast %98 : vector<1x1x128xf32> to vector<1x128xf32>
    %100 = vector.shape_cast %97 : vector<1x128xf32> to vector<1x1x128xf32>
    tpu.vector_store %arg8[%c1_91, %c0_92, %c0_93], %100 {strides = array<i32>} : memref<4x1x128xf32, #tpu.memory_space<vmem>>, vector<1x1x128xf32>,
    %101 = vector.extract_strided_slice %8 {offsets = [416, 0], sizes = [208, 16], strides = [1, 1]} : vector<832x16xbf16> to vector<208x16xbf16>
    %c0_94 = arith.constant 0 : index
    %c0_95 = arith.constant 0 : index
    %c0_96 = arith.constant 0 : index
    %102 = vector.load %arg4[%c0_94, %c0_95, %c0_96] : memref<9x49x208xbf16, #tpu.memory_space<vmem>>, vector<1x49x208xbf16>
    %103 = vector.shape_cast %102 : vector<1x49x208xbf16> to vector<49x208xbf16>
    %cst_97 = arith.constant dense<0.000000e+00> : vector<49x16xf32>
    %104 = tpu.matmul %103, %101, %cst_97 {dimension_numbers = #tpu.dot_dimension_numbers<[1], [0], [0], [1], [0, 0, 1, 1], [], []>} : vector<49x208xbf16>, vector<208x16xbf16>, vector<49x16xf32> -> vector<49x16xf32>
    %c1_98 = arith.constant 1 : index
    %c0_99 = arith.constant 0 : index
    %c0_100 = arith.constant 0 : index
    %105 = vector.load %arg4[%c1_98, %c0_99, %c0_100] : memref<9x49x208xbf16, #tpu.memory_space<vmem>>, vector<1x49x208xbf16>
    %106 = vector.shape_cast %105 : vector<1x49x208xbf16> to vector<49x208xbf16>
    %cst_101 = arith.constant dense<0.000000e+00> : vector<49x16xf32>
    %107 = tpu.matmul %106, %101, %cst_101 {dimension_numbers = #tpu.dot_dimension_numbers<[1], [0], [0], [1], [0, 0, 1, 1], [], []>} : vector<49x208xbf16>, vector<208x16xbf16>, vector<49x16xf32> -> vector<49x16xf32>
    %c2_102 = arith.constant 2 : index
    %c0_103 = arith.constant 0 : index
    %c0_104 = arith.constant 0 : index
    %108 = vector.load %arg4[%c2_102, %c0_103, %c0_104] : memref<9x49x208xbf16, #tpu.memory_space<vmem>>, vector<1x49x208xbf16>
    %109 = vector.shape_cast %108 : vector<1x49x208xbf16> to vector<49x208xbf16>
    %cst_105 = arith.constant dense<0.000000e+00> : vector<49x16xf32>
    %110 = tpu.matmul %109, %101, %cst_105 {dimension_numbers = #tpu.dot_dimension_numbers<[1], [0], [0], [1], [0, 0, 1, 1], [], []>} : vector<49x208xbf16>, vector<208x16xbf16>, vector<49x16xf32> -> vector<49x16xf32>
    %c3_106 = arith.constant 3 : index
    %c0_107 = arith.constant 0 : index
    %c0_108 = arith.constant 0 : index
    %111 = vector.load %arg4[%c3_106, %c0_107, %c0_108] : memref<9x49x208xbf16, #tpu.memory_space<vmem>>, vector<1x49x208xbf16>
    %112 = vector.shape_cast %111 : vector<1x49x208xbf16> to vector<49x208xbf16>
    %cst_109 = arith.constant dense<0.000000e+00> : vector<49x16xf32>
    %113 = tpu.matmul %112, %101, %cst_109 {dimension_numbers = #tpu.dot_dimension_numbers<[1], [0], [0], [1], [0, 0, 1, 1], [], []>} : vector<49x208xbf16>, vector<208x16xbf16>, vector<49x16xf32> -> vector<49x16xf32>
    %c4_110 = arith.constant 4 : index
    %c0_111 = arith.constant 0 : index
    %c0_112 = arith.constant 0 : index
    %114 = vector.load %arg4[%c4_110, %c0_111, %c0_112] : memref<9x49x208xbf16, #tpu.memory_space<vmem>>, vector<1x49x208xbf16>
    %115 = vector.shape_cast %114 : vector<1x49x208xbf16> to vector<49x208xbf16>
    %cst_113 = arith.constant dense<0.000000e+00> : vector<49x16xf32>
    %116 = tpu.matmul %115, %101, %cst_113 {dimension_numbers = #tpu.dot_dimension_numbers<[1], [0], [0], [1], [0, 0, 1, 1], [], []>} : vector<49x208xbf16>, vector<208x16xbf16>, vector<49x16xf32> -> vector<49x16xf32>
    %c5_114 = arith.constant 5 : index
    %c0_115 = arith.constant 0 : index
    %c0_116 = arith.constant 0 : index
    %117 = vector.load %arg4[%c5_114, %c0_115, %c0_116] : memref<9x49x208xbf16, #tpu.memory_space<vmem>>, vector<1x49x208xbf16>
    %118 = vector.shape_cast %117 : vector<1x49x208xbf16> to vector<49x208xbf16>
    %cst_117 = arith.constant dense<0.000000e+00> : vector<49x16xf32>
    %119 = tpu.matmul %118, %101, %cst_117 {dimension_numbers = #tpu.dot_dimension_numbers<[1], [0], [0], [1], [0, 0, 1, 1], [], []>} : vector<49x208xbf16>, vector<208x16xbf16>, vector<49x16xf32> -> vector<49x16xf32>
    %c6_118 = arith.constant 6 : index
    %c0_119 = arith.constant 0 : index
    %c0_120 = arith.constant 0 : index
    %120 = vector.load %arg4[%c6_118, %c0_119, %c0_120] : memref<9x49x208xbf16, #tpu.memory_space<vmem>>, vector<1x49x208xbf16>
    %121 = vector.shape_cast %120 : vector<1x49x208xbf16> to vector<49x208xbf16>
    %cst_121 = arith.constant dense<0.000000e+00> : vector<49x16xf32>
    %122 = tpu.matmul %121, %101, %cst_121 {dimension_numbers = #tpu.dot_dimension_numbers<[1], [0], [0], [1], [0, 0, 1, 1], [], []>} : vector<49x208xbf16>, vector<208x16xbf16>, vector<49x16xf32> -> vector<49x16xf32>
    %c7_122 = arith.constant 7 : index
    %c0_123 = arith.constant 0 : index
    %c0_124 = arith.constant 0 : index
    %123 = vector.load %arg4[%c7_122, %c0_123, %c0_124] : memref<9x49x208xbf16, #tpu.memory_space<vmem>>, vector<1x49x208xbf16>
    %124 = vector.shape_cast %123 : vector<1x49x208xbf16> to vector<49x208xbf16>
    %cst_125 = arith.constant dense<0.000000e+00> : vector<49x16xf32>
    %125 = tpu.matmul %124, %101, %cst_125 {dimension_numbers = #tpu.dot_dimension_numbers<[1], [0], [0], [1], [0, 0, 1, 1], [], []>} : vector<49x208xbf16>, vector<208x16xbf16>, vector<49x16xf32> -> vector<49x16xf32>
    %c8_126 = arith.constant 8 : index
    %c0_127 = arith.constant 0 : index
    %c0_128 = arith.constant 0 : index
    %126 = vector.load %arg4[%c8_126, %c0_127, %c0_128] : memref<9x49x208xbf16, #tpu.memory_space<vmem>>, vector<1x49x208xbf16>
    %127 = vector.shape_cast %126 : vector<1x49x208xbf16> to vector<49x208xbf16>
    %cst_129 = arith.constant dense<0.000000e+00> : vector<49x16xf32>
    %128 = tpu.matmul %127, %101, %cst_129 {dimension_numbers = #tpu.dot_dimension_numbers<[1], [0], [0], [1], [0, 0, 1, 1], [], []>} : vector<49x208xbf16>, vector<208x16xbf16>, vector<49x16xf32> -> vector<49x16xf32>
    %129 = tpu.concatenate %104, %107, %110, %113, %116, %119, %122, %125, %128 in 1 : vector<49x16xf32>, vector<49x16xf32>, vector<49x16xf32>, vector<49x16xf32>, vector<49x16xf32>, vector<49x16xf32>, vector<49x16xf32>, vector<49x16xf32>, vector<49x16xf32> -> vector<49x144xf32>
    %130 = arith.truncf %129 : vector<49x144xf32> to vector<49x144xbf16>
    %cst_130 = arith.constant dense<0.000000e+00> : vector<49x128xf32>
    %131 = tpu.matmul %130, %9, %cst_130 {dimension_numbers = #tpu.dot_dimension_numbers<[1], [0], [0], [1], [0, 0, 1, 1], [], []>} : vector<49x144xbf16>, vector<144x128xbf16>, vector<49x128xf32> -> vector<49x128xf32>
    %132 = vector.broadcast %10 : vector<1x128xf32> to vector<49x128xf32>
    %133 = arith.addf %131, %132 : vector<49x128xf32>
    %cst_131 = arith.constant 0.000000e+00 : f32
    %134 = vector.broadcast %cst_131 : f32 to vector<49x128xf32>
    %135 = arith.maximumf %133, %134 : vector<49x128xf32>
    %c2_132 = arith.constant 2 : index
    %c0_133 = arith.constant 0 : index
    %c0_134 = arith.constant 0 : index
    %136 = vector.load %arg7[%c2_132, %c0_133, %c0_134] : memref<4x49x128xf32, #tpu.memory_space<vmem>>, vector<1x49x128xf32>
    %137 = vector.shape_cast %136 : vector<1x49x128xf32> to vector<49x128xf32>
    %138 = vector.shape_cast %135 : vector<49x128xf32> to vector<1x49x128xf32>
    tpu.vector_store %arg7[%c2_132, %c0_133, %c0_134], %138 {strides = array<i32>} : memref<4x49x128xf32, #tpu.memory_space<vmem>>, vector<1x49x128xf32>,
    %cst_135 = arith.constant dense<0.000000e+00> : vector<128xf32>
    %139 = vector.multi_reduction <add>, %135, %cst_135 [0] : vector<49x128xf32> to vector<128xf32>
    %140 = vector.shape_cast %139 : vector<128xf32> to vector<1x128xf32>
    %cst_136 = arith.constant 4.900000e+01 : f32
    %141 = vector.broadcast %cst_136 : f32 to vector<1x128xf32>
    %142 = arith.divf %140, %141 : vector<1x128xf32>
    %c2_137 = arith.constant 2 : index
    %c0_138 = arith.constant 0 : index
    %c0_139 = arith.constant 0 : index
    %143 = vector.load %arg8[%c2_137, %c0_138, %c0_139] : memref<4x1x128xf32, #tpu.memory_space<vmem>>, vector<1x1x128xf32>
    %144 = vector.shape_cast %143 : vector<1x1x128xf32> to vector<1x128xf32>
    %145 = vector.shape_cast %142 : vector<1x128xf32> to vector<1x1x128xf32>
    tpu.vector_store %arg8[%c2_137, %c0_138, %c0_139], %145 {strides = array<i32>} : memref<4x1x128xf32, #tpu.memory_space<vmem>>, vector<1x1x128xf32>,
    %146 = vector.extract_strided_slice %8 {offsets = [624, 0], sizes = [208, 16], strides = [1, 1]} : vector<832x16xbf16> to vector<208x16xbf16>
    %c0_140 = arith.constant 0 : index
    %c0_141 = arith.constant 0 : index
    %c0_142 = arith.constant 0 : index
    %147 = vector.load %arg4[%c0_140, %c0_141, %c0_142] : memref<9x49x208xbf16, #tpu.memory_space<vmem>>, vector<1x49x208xbf16>
    %148 = vector.shape_cast %147 : vector<1x49x208xbf16> to vector<49x208xbf16>
    %cst_143 = arith.constant dense<0.000000e+00> : vector<49x16xf32>
    %149 = tpu.matmul %148, %146, %cst_143 {dimension_numbers = #tpu.dot_dimension_numbers<[1], [0], [0], [1], [0, 0, 1, 1], [], []>} : vector<49x208xbf16>, vector<208x16xbf16>, vector<49x16xf32> -> vector<49x16xf32>
    %c1_144 = arith.constant 1 : index
    %c0_145 = arith.constant 0 : index
    %c0_146 = arith.constant 0 : index
    %150 = vector.load %arg4[%c1_144, %c0_145, %c0_146] : memref<9x49x208xbf16, #tpu.memory_space<vmem>>, vector<1x49x208xbf16>
    %151 = vector.shape_cast %150 : vector<1x49x208xbf16> to vector<49x208xbf16>
    %cst_147 = arith.constant dense<0.000000e+00> : vector<49x16xf32>
    %152 = tpu.matmul %151, %146, %cst_147 {dimension_numbers = #tpu.dot_dimension_numbers<[1], [0], [0], [1], [0, 0, 1, 1], [], []>} : vector<49x208xbf16>, vector<208x16xbf16>, vector<49x16xf32> -> vector<49x16xf32>
    %c2_148 = arith.constant 2 : index
    %c0_149 = arith.constant 0 : index
    %c0_150 = arith.constant 0 : index
    %153 = vector.load %arg4[%c2_148, %c0_149, %c0_150] : memref<9x49x208xbf16, #tpu.memory_space<vmem>>, vector<1x49x208xbf16>
    %154 = vector.shape_cast %153 : vector<1x49x208xbf16> to vector<49x208xbf16>
    %cst_151 = arith.constant dense<0.000000e+00> : vector<49x16xf32>
    %155 = tpu.matmul %154, %146, %cst_151 {dimension_numbers = #tpu.dot_dimension_numbers<[1], [0], [0], [1], [0, 0, 1, 1], [], []>} : vector<49x208xbf16>, vector<208x16xbf16>, vector<49x16xf32> -> vector<49x16xf32>
    %c3_152 = arith.constant 3 : index
    %c0_153 = arith.constant 0 : index
    %c0_154 = arith.constant 0 : index
    %156 = vector.load %arg4[%c3_152, %c0_153, %c0_154] : memref<9x49x208xbf16, #tpu.memory_space<vmem>>, vector<1x49x208xbf16>
    %157 = vector.shape_cast %156 : vector<1x49x208xbf16> to vector<49x208xbf16>
    %cst_155 = arith.constant dense<0.000000e+00> : vector<49x16xf32>
    %158 = tpu.matmul %157, %146, %cst_155 {dimension_numbers = #tpu.dot_dimension_numbers<[1], [0], [0], [1], [0, 0, 1, 1], [], []>} : vector<49x208xbf16>, vector<208x16xbf16>, vector<49x16xf32> -> vector<49x16xf32>
    %c4_156 = arith.constant 4 : index
    %c0_157 = arith.constant 0 : index
    %c0_158 = arith.constant 0 : index
    %159 = vector.load %arg4[%c4_156, %c0_157, %c0_158] : memref<9x49x208xbf16, #tpu.memory_space<vmem>>, vector<1x49x208xbf16>
    %160 = vector.shape_cast %159 : vector<1x49x208xbf16> to vector<49x208xbf16>
    %cst_159 = arith.constant dense<0.000000e+00> : vector<49x16xf32>
    %161 = tpu.matmul %160, %146, %cst_159 {dimension_numbers = #tpu.dot_dimension_numbers<[1], [0], [0], [1], [0, 0, 1, 1], [], []>} : vector<49x208xbf16>, vector<208x16xbf16>, vector<49x16xf32> -> vector<49x16xf32>
    %c5_160 = arith.constant 5 : index
    %c0_161 = arith.constant 0 : index
    %c0_162 = arith.constant 0 : index
    %162 = vector.load %arg4[%c5_160, %c0_161, %c0_162] : memref<9x49x208xbf16, #tpu.memory_space<vmem>>, vector<1x49x208xbf16>
    %163 = vector.shape_cast %162 : vector<1x49x208xbf16> to vector<49x208xbf16>
    %cst_163 = arith.constant dense<0.000000e+00> : vector<49x16xf32>
    %164 = tpu.matmul %163, %146, %cst_163 {dimension_numbers = #tpu.dot_dimension_numbers<[1], [0], [0], [1], [0, 0, 1, 1], [], []>} : vector<49x208xbf16>, vector<208x16xbf16>, vector<49x16xf32> -> vector<49x16xf32>
    %c6_164 = arith.constant 6 : index
    %c0_165 = arith.constant 0 : index
    %c0_166 = arith.constant 0 : index
    %165 = vector.load %arg4[%c6_164, %c0_165, %c0_166] : memref<9x49x208xbf16, #tpu.memory_space<vmem>>, vector<1x49x208xbf16>
    %166 = vector.shape_cast %165 : vector<1x49x208xbf16> to vector<49x208xbf16>
    %cst_167 = arith.constant dense<0.000000e+00> : vector<49x16xf32>
    %167 = tpu.matmul %166, %146, %cst_167 {dimension_numbers = #tpu.dot_dimension_numbers<[1], [0], [0], [1], [0, 0, 1, 1], [], []>} : vector<49x208xbf16>, vector<208x16xbf16>, vector<49x16xf32> -> vector<49x16xf32>
    %c7_168 = arith.constant 7 : index
    %c0_169 = arith.constant 0 : index
    %c0_170 = arith.constant 0 : index
    %168 = vector.load %arg4[%c7_168, %c0_169, %c0_170] : memref<9x49x208xbf16, #tpu.memory_space<vmem>>, vector<1x49x208xbf16>
    %169 = vector.shape_cast %168 : vector<1x49x208xbf16> to vector<49x208xbf16>
    %cst_171 = arith.constant dense<0.000000e+00> : vector<49x16xf32>
    %170 = tpu.matmul %169, %146, %cst_171 {dimension_numbers = #tpu.dot_dimension_numbers<[1], [0], [0], [1], [0, 0, 1, 1], [], []>} : vector<49x208xbf16>, vector<208x16xbf16>, vector<49x16xf32> -> vector<49x16xf32>
    %c8_172 = arith.constant 8 : index
    %c0_173 = arith.constant 0 : index
    %c0_174 = arith.constant 0 : index
    %171 = vector.load %arg4[%c8_172, %c0_173, %c0_174] : memref<9x49x208xbf16, #tpu.memory_space<vmem>>, vector<1x49x208xbf16>
    %172 = vector.shape_cast %171 : vector<1x49x208xbf16> to vector<49x208xbf16>
    %cst_175 = arith.constant dense<0.000000e+00> : vector<49x16xf32>
    %173 = tpu.matmul %172, %146, %cst_175 {dimension_numbers = #tpu.dot_dimension_numbers<[1], [0], [0], [1], [0, 0, 1, 1], [], []>} : vector<49x208xbf16>, vector<208x16xbf16>, vector<49x16xf32> -> vector<49x16xf32>
    %174 = tpu.concatenate %149, %152, %155, %158, %161, %164, %167, %170, %173 in 1 : vector<49x16xf32>, vector<49x16xf32>, vector<49x16xf32>, vector<49x16xf32>, vector<49x16xf32>, vector<49x16xf32>, vector<49x16xf32>, vector<49x16xf32>, vector<49x16xf32> -> vector<49x144xf32>
    %175 = arith.truncf %174 : vector<49x144xf32> to vector<49x144xbf16>
    %cst_176 = arith.constant dense<0.000000e+00> : vector<49x128xf32>
    %176 = tpu.matmul %175, %9, %cst_176 {dimension_numbers = #tpu.dot_dimension_numbers<[1], [0], [0], [1], [0, 0, 1, 1], [], []>} : vector<49x144xbf16>, vector<144x128xbf16>, vector<49x128xf32> -> vector<49x128xf32>
    %177 = vector.broadcast %10 : vector<1x128xf32> to vector<49x128xf32>
    %178 = arith.addf %176, %177 : vector<49x128xf32>
    %cst_177 = arith.constant 0.000000e+00 : f32
    %179 = vector.broadcast %cst_177 : f32 to vector<49x128xf32>
    %180 = arith.maximumf %178, %179 : vector<49x128xf32>
    %c3_178 = arith.constant 3 : index
    %c0_179 = arith.constant 0 : index
    %c0_180 = arith.constant 0 : index
    %181 = vector.load %arg7[%c3_178, %c0_179, %c0_180] : memref<4x49x128xf32, #tpu.memory_space<vmem>>, vector<1x49x128xf32>
    %182 = vector.shape_cast %181 : vector<1x49x128xf32> to vector<49x128xf32>
    %183 = vector.shape_cast %180 : vector<49x128xf32> to vector<1x49x128xf32>
    tpu.vector_store %arg7[%c3_178, %c0_179, %c0_180], %183 {strides = array<i32>} : memref<4x49x128xf32, #tpu.memory_space<vmem>>, vector<1x49x128xf32>,
    %cst_181 = arith.constant dense<0.000000e+00> : vector<128xf32>
    %184 = vector.multi_reduction <add>, %180, %cst_181 [0] : vector<49x128xf32> to vector<128xf32>
    %185 = vector.shape_cast %184 : vector<128xf32> to vector<1x128xf32>
    %cst_182 = arith.constant 4.900000e+01 : f32
    %186 = vector.broadcast %cst_182 : f32 to vector<1x128xf32>
    %187 = arith.divf %185, %186 : vector<1x128xf32>
    %c3_183 = arith.constant 3 : index
    %c0_184 = arith.constant 0 : index
    %c0_185 = arith.constant 0 : index
    %188 = vector.load %arg8[%c3_183, %c0_184, %c0_185] : memref<4x1x128xf32, #tpu.memory_space<vmem>>, vector<1x1x128xf32>
    %189 = vector.shape_cast %188 : vector<1x1x128xf32> to vector<1x128xf32>
    %190 = vector.shape_cast %187 : vector<1x128xf32> to vector<1x1x128xf32>
    tpu.vector_store %arg8[%c3_183, %c0_184, %c0_185], %190 {strides = array<i32>} : memref<4x1x128xf32, #tpu.memory_space<vmem>>, vector<1x1x128xf32>,
    return
  }
  func.func @transform_0(%arg0: i32) -> (i32, i32) {
    %c0_i32 = arith.constant 0 : i32
    %c0_i32_0 = arith.constant 0 : i32
    return %arg0, %c0_i32 : i32, i32
  }
  func.func @transform_1(%arg0: i32) -> (i32, i32) {
    %c0_i32 = arith.constant 0 : i32
    %c0_i32_0 = arith.constant 0 : i32
    %c0_i32_1 = arith.constant 0 : i32
    return %c0_i32, %c0_i32_0 : i32, i32
  }
  func.func @transform_2(%arg0: i32) -> (i32, i32) {
    %c0_i32 = arith.constant 0 : i32
    %c0_i32_0 = arith.constant 0 : i32
    %c0_i32_1 = arith.constant 0 : i32
    return %c0_i32, %c0_i32_0 : i32, i32
  }
  func.func @transform_3(%arg0: i32) -> (i32, i32, i32) {
    %c0_i32 = arith.constant 0 : i32
    %c0_i32_0 = arith.constant 0 : i32
    %c0_i32_1 = arith.constant 0 : i32
    %c0_i32_2 = arith.constant 0 : i32
    return %c0_i32, %c0_i32_0, %c0_i32_1 : i32, i32, i32
  }
  func.func @transform_4(%arg0: i32) -> (i32, i32) {
    %c0_i32 = arith.constant 0 : i32
    %c0_i32_0 = arith.constant 0 : i32
    %c0_i32_1 = arith.constant 0 : i32
    return %c0_i32, %c0_i32_0 : i32, i32
  }
  func.func @transform_5(%arg0: i32) -> (i32, i32) {
    %c0_i32 = arith.constant 0 : i32
    %c0_i32_0 = arith.constant 0 : i32
    %c0_i32_1 = arith.constant 0 : i32
    return %c0_i32, %c0_i32_0 : i32, i32
  }
  func.func @transform_6(%arg0: i32) -> (i32, i32, i32) {
    %c0_i32 = arith.constant 0 : i32
    %c0_i32_0 = arith.constant 0 : i32
    %c0_i32_1 = arith.constant 0 : i32
    return %arg0, %c0_i32, %c0_i32_0 : i32, i32, i32
  }
  func.func @transform_7(%arg0: i32) -> (i32, i32, i32) {
    %c0_i32 = arith.constant 0 : i32
    %c0_i32_0 = arith.constant 0 : i32
    %c0_i32_1 = arith.constant 0 : i32
    return %arg0, %c0_i32, %c0_i32_0 : i32, i32, i32
  }
}

</mosaic_0001>

<llo_original>
// kernel: _forward.1
$region0: #{_forward.1}
  #allocation0 [shape = 'u32[]', space=smem, size = 0x4, offset = 0x4, fixed_abs, tag = 'smem constant byte address 0x4 - core index']
  #allocation1 [shape = 'u32[144,128]{1,0:T(1,128)}', space=vmem, size = 0x12000, scoped, tag = 'internal scratch']
  %s0 = inlined_call_operand.vmem [shape: bf16[1664,27], index: 0, kind: input, shape index: {}]
  %s1 = inlined_call_operand.vmem [shape: bf16[27,16], index: 1, kind: input, shape index: {}]
  %s2 = inlined_call_operand.vmem [shape: f32[1,16], index: 2, kind: input, shape index: {}]
  %s3 = inlined_call_operand.vmem [shape: bf16[9,49,208], index: 3, kind: input, shape index: {}]
  %s4 = inlined_call_operand.vmem [shape: bf16[144,128], index: 4, kind: input, shape index: {}]
  %s5 = inlined_call_operand.vmem [shape: f32[1,128], index: 5, kind: input, shape index: {}]
  %s6 = inlined_call_operand.vmem [shape: f32[8,49,128], index: 6, kind: output, shape index: {0}]
  %s7 = inlined_call_operand.hbm [shape: f32[8,1,128], index: 7, kind: output, shape index: {1}]
  %8 = xla_tuple %s6, %s7
  %s9 = sld [smem:[#allocation0]]
  $region65: #{_forward.1} parent=0
    _
  %s11 = ssub.s32 1, %s9
  %s12 = scalar_select 0, %s11, %s9
  $region1: #{_forward.1} parent=0
    #allocation2 [shape = 'u8[4096]{0}', space=vmem, size = 0x1000, scoped, tag = 'output window, operand 1']
    #allocation3 [shape = 's32[2]{0}', space=sflag, size = 0x8, scoped, tag = 'scoped memory for _forward.1']
    %13 = vsyncpa [#allocation3], 0
    %s14 = scalar_lea.sflag [#allocation3], 1
    %15 = vsyncpa %s14, 0
    loop: start=0, step=1, limit=4
    $region2: #{_forward.1} parent=1 // loop_pre_header
      _
    $region3: #{_forward.1} parent=1 // loop_header
      %s17 = sphi 0, %s21
      %p18 = scmp.ge.s32.totalorder %s17, 4
      %s27 = sphi 0, %s29
      %s30 = sphi 0, %s27
      %s31 = sphi 0, %s30
      %s47 = sphi 0, %s31
      %s51 = sphi 0, %s51
      %s53 = sphi 0, %s51
      %s54 = sphi 0, %s53
      %s68 = sphi 0, %s54
      %s72 = sphi 0, %s72
      %s74 = sphi 0, %s72
      %s75 = sphi 0, %s74
      %s89 = sphi 0, %s75
      %s93 = sphi 0, %s93
      %s95 = sphi 0, %s93
      %s96 = sphi 0, %s95
      %s110 = sphi 0, %s96
      %s114 = sphi 0, %s114
      %s116 = sphi 0, %s114
      %s117 = sphi 0, %s116
      %s131 = sphi 0, %s117
      %s135 = sphi 0, %s135
      %s137 = sphi 0, %s135
      %s138 = sphi 0, %s137
      %s152 = sphi 0, %s138
      %s158 = sphi 0, %s160
      %s161 = sphi 0, %s158
      %s162 = sphi 0, %s161
      %s178 = sphi 0, %s162
      %s184 = sphi 0, %s186
      %s187 = sphi 0, %s184
      %s188 = sphi 0, %s187
      %s204 = sphi 0, %s188
    $region4: #{_forward.1} parent=1 // loop_header_branch
      %20 = sbr.rel (%p18) target = $region8
    $region5: #{_forward.1} parent=1 // loop_body
      %s22 = ssub.s32 %s17, 1
      %s23 = ssub.s32 %s17, 2
      %s24 = sadd.s32 %s17, 1
      %s25 = ssub.s32 %s17, %s24
      %p26 = scmp.eq.s32.totalorder %s25, 0
      %s28 = sadd.s32 %s27, 1
      %s29 = scalar_select %p26, %s27, %s28
      %p32 = pneg %p26
      %p33 = scmp.eq.s32.totalorder %s17, 1
      %p34 = por %p32, %p33
      %p35 = scmp.ne.s32.totalorder %s27, %s30
      %p36 = scmp.eq.s32.totalorder %s17, 0
      %p37 = por %p35, %p36
      %p38 = scmp.ne.s32.totalorder %s27, %s30
      %p39 = scmp.eq.s32.totalorder %s22, 1
      %p40 = por %p38, %p39
      %p41 = scmp.ne.s32.totalorder %s30, %s31
      %p42 = scmp.eq.s32.totalorder %s22, 0
      %p43 = por %p41, %p42
      %p44 = scmp.ne.s32.totalorder %s30, %s31
      %p45 = scmp.eq.s32.totalorder %s23, 1
      %p46 = por %p44, %p45
      %p48 = scmp.ne.s32.totalorder %s31, %s47
      %p49 = scmp.eq.s32.totalorder %s23, 0
      %p50 = por %p48, %p49
      %s52 = sadd.s32 %s51, 1
      %p55 = scmp.eq.s32.totalorder %s17, 1
      %p56 = scmp.ne.s32.totalorder %s51, %s53
      %p57 = scmp.eq.s32.totalorder %s17, 0
      %p58 = por %p56, %p57
      %p59 = scmp.ne.s32.totalorder %s51, %s53
      %p60 = scmp.eq.s32.totalorder %s22, 1
      %p61 = por %p59, %p60
      %p62 = scmp.ne.s32.totalorder %s53, %s54
      %p63 = scmp.eq.s32.totalorder %s22, 0
      %p64 = por %p62, %p63
      %p65 = scmp.ne.s32.totalorder %s53, %s54
      %p66 = scmp.eq.s32.totalorder %s23, 1
      %p67 = por %p65, %p66
      %p69 = scmp.ne.s32.totalorder %s54, %s68
      %p70 = scmp.eq.s32.totalorder %s23, 0
      %p71 = por %p69, %p70
      %s73 = sadd.s32 %s72, 1
      %p76 = scmp.eq.s32.totalorder %s17, 1
      %p77 = scmp.ne.s32.totalorder %s72, %s74
      %p78 = scmp.eq.s32.totalorder %s17, 0
      %p79 = por %p77, %p78
      %p80 = scmp.ne.s32.totalorder %s72, %s74
      %p81 = scmp.eq.s32.totalorder %s22, 1
      %p82 = por %p80, %p81
      %p83 = scmp.ne.s32.totalorder %s74, %s75
      %p84 = scmp.eq.s32.totalorder %s22, 0
      %p85 = por %p83, %p84
      %p86 = scmp.ne.s32.totalorder %s74, %s75
      %p87 = scmp.eq.s32.totalorder %s23, 1
      %p88 = por %p86, %p87
      %p90 = scmp.ne.s32.totalorder %s75, %s89
      %p91 = scmp.eq.s32.totalorder %s23, 0
      %p92 = por %p90, %p91
      %s94 = sadd.s32 %s93, 1
      %p97 = scmp.eq.s32.totalorder %s17, 1
      %p98 = scmp.ne.s32.totalorder %s93, %s95
      %p99 = scmp.eq.s32.totalorder %s17, 0
      %p100 = por %p98, %p99
      %p101 = scmp.ne.s32.totalorder %s93, %s95
      %p102 = scmp.eq.s32.totalorder %s22, 1
      %p103 = por %p101, %p102
      %p104 = scmp.ne.s32.totalorder %s95, %s96
      %p105 = scmp.eq.s32.totalorder %s22, 0
      %p106 = por %p104, %p105
      %p107 = scmp.ne.s32.totalorder %s95, %s96
      %p108 = scmp.eq.s32.totalorder %s23, 1
      %p109 = por %p107, %p108
      %p111 = scmp.ne.s32.totalorder %s96, %s110
      %p112 = scmp.eq.s32.totalorder %s23, 0
      %p113 = por %p111, %p112
      %s115 = sadd.s32 %s114, 1
      %p118 = scmp.eq.s32.totalorder %s17, 1
      %p119 = scmp.ne.s32.totalorder %s114, %s116
      %p120 = scmp.eq.s32.totalorder %s17, 0
      %p121 = por %p119, %p120
      %p122 = scmp.ne.s32.totalorder %s114, %s116
      %p123 = scmp.eq.s32.totalorder %s22, 1
      %p124 = por %p122, %p123
      %p125 = scmp.ne.s32.totalorder %s116, %s117
      %p126 = scmp.eq.s32.totalorder %s22, 0
      %p127 = por %p125, %p126
      %p128 = scmp.ne.s32.totalorder %s116, %s117
      %p129 = scmp.eq.s32.totalorder %s23, 1
      %p130 = por %p128, %p129
      %p132 = scmp.ne.s32.totalorder %s117, %s131
      %p133 = scmp.eq.s32.totalorder %s23, 0
      %p134 = por %p132, %p133
      %s136 = sadd.s32 %s135, 1
      %p139 = scmp.eq.s32.totalorder %s17, 1
      %p140 = scmp.ne.s32.totalorder %s135, %s137
      %p141 = scmp.eq.s32.totalorder %s17, 0
      %p142 = por %p140, %p141
      %p143 = scmp.ne.s32.totalorder %s135, %s137
      %p144 = scmp.eq.s32.totalorder %s22, 1
      %p145 = por %p143, %p144
      %p146 = scmp.ne.s32.totalorder %s137, %s138
      %p147 = scmp.eq.s32.totalorder %s22, 0
      %p148 = por %p146, %p147
      %p149 = scmp.ne.s32.totalorder %s137, %s138
      %p150 = scmp.eq.s32.totalorder %s23, 1
      %p151 = por %p149, %p150
      %p153 = scmp.ne.s32.totalorder %s138, %s152
      %p154 = scmp.eq.s32.totalorder %s23, 0
      %p155 = por %p153, %p154
      %s156 = ssub.s32 %s17, %s24
      %p157 = scmp.eq.s32.totalorder %s156, 0
      %s159 = sadd.s32 %s158, 1
      %s160 = scalar_select %p157, %s158, %s159
      %p163 = pneg %p157
      %p164 = scmp.eq.s32.totalorder %s17, 1
      %p165 = por %p163, %p164
      %p166 = scmp.ne.s32.totalorder %s158, %s161
      %p167 = scmp.eq.s32.totalorder %s17, 0
      %p168 = por %p166, %p167
      %p169 = scmp.ne.s32.totalorder %s158, %s161
      %p170 = scmp.eq.s32.totalorder %s22, 1
      %p171 = por %p169, %p170
      %p172 = scmp.ne.s32.totalorder %s161, %s162
      %p173 = scmp.eq.s32.totalorder %s22, 0
      %p174 = por %p172, %p173
      %p175 = scmp.ne.s32.totalorder %s161, %s162
      %p176 = scmp.eq.s32.totalorder %s23, 1
      %p177 = por %p175, %p176
      %p179 = scmp.ne.s32.totalorder %s162, %s178
      %p180 = scmp.eq.s32.totalorder %s23, 0
      %p181 = por %p179, %p180
      %s182 = ssub.s32 %s17, %s24
      %p183 = scmp.eq.s32.totalorder %s182, 0
      %s185 = sadd.s32 %s184, 1
      %s186 = scalar_select %p183, %s184, %s185
      %p189 = pneg %p183
      %p190 = scmp.eq.s32.totalorder %s17, 1
      %p191 = por %p189, %p190
      %p192 = scmp.ne.s32.totalorder %s184, %s187
      %p193 = scmp.eq.s32.totalorder %s17, 0
      %p194 = por %p192, %p193
      %p195 = scmp.ne.s32.totalorder %s184, %s187
      %p196 = scmp.eq.s32.totalorder %s22, 1
      %p197 = por %p195, %p196
      %p198 = scmp.ne.s32.totalorder %s187, %s188
      %p199 = scmp.eq.s32.totalorder %s22, 0
      %p200 = por %p198, %p199
      %p201 = scmp.ne.s32.totalorder %s187, %s188
      %p202 = scmp.eq.s32.totalorder %s23, 1
      %p203 = por %p201, %p202
      %p205 = scmp.ne.s32.totalorder %s188, %s204
      %p206 = scmp.eq.s32.totalorder %s23, 0
      %p207 = por %p205, %p206
      %p208 = scmp.le.s32.totalorder 1, %s17
      %p209 = scmp.lt.s32.totalorder %s17, 3
      %p210 = pnand %p208, %p209
      %p211 = pneg %p210
      // Predicated region
      $region9: #{_forward.1} parent=5 // pred_check
        _
      $region10: #{_forward.1} parent=5 // pred_check_branch
        %213 = sbr.rel (%p210) target = $region12
      $region11: #{_forward.1} parent=5 // pred_region
        %s214 = ssub.s32 %s17, 1
        // Predicated region
        $region13: #{_forward.1} parent=11 // pred_check
          %p215 = pneg %p64
        $region14: #{_forward.1} parent=11 // pred_check_branch
          %217 = sbr.rel (%p215) target = $region16
        $region15: #{_forward.1} parent=11 // pred_region
          _
        $region16: #{_forward.1} parent=11 // pred_fallthru
          _
        // Predicated region
        $region17: #{_forward.1} parent=11 // pred_check
          %p218 = pneg %p85
        $region18: #{_forward.1} parent=11 // pred_check_branch
          %220 = sbr.rel (%p218) target = $region20
        $region19: #{_forward.1} parent=11 // pred_region
          _
        $region20: #{_forward.1} parent=11 // pred_fallthru
          _
        // Predicated region
        $region21: #{_forward.1} parent=11 // pred_check
          %p221 = pneg %p106
        $region22: #{_forward.1} parent=11 // pred_check_branch
          %223 = sbr.rel (%p221) target = $region24
        $region23: #{_forward.1} parent=11 // pred_region
          _
        $region24: #{_forward.1} parent=11 // pred_fallthru
          _
        // Predicated region
        $region25: #{_forward.1} parent=11 // pred_check
          %p224 = pneg %p127
        $region26: #{_forward.1} parent=11 // pred_check_branch
          %226 = sbr.rel (%p224) target = $region28
        $region27: #{_forward.1} parent=11 // pred_region
          _
        $region28: #{_forward.1} parent=11 // pred_fallthru
          _
        // Predicated region
        $region29: #{_forward.1} parent=11 // pred_check
          %p227 = pneg %p148
        $region30: #{_forward.1} parent=11 // pred_check_branch
          %229 = sbr.rel (%p227) target = $region32
        $region31: #{_forward.1} parent=11 // pred_region
          _
        $region32: #{_forward.1} parent=11 // pred_fallthru
          _
      $region12: #{_forward.1} parent=5 // pred_fallthru
        _
      %p230 = scmp.lt.s32.totalorder %s17, 2
      // Predicated region
      $region33: #{_forward.1} parent=5 // pred_check
        %p231 = pneg %p230
      $region34: #{_forward.1} parent=5 // pred_check_branch
        %233 = sbr.rel (%p231) target = $region36
      $region35: #{_forward.1} parent=5 // pred_region
        // Predicated region
        $region37: #{_forward.1} parent=35 // pred_check
          %p234 = pneg %p37
        $region38: #{_forward.1} parent=35 // pred_check_branch
          %236 = sbr.rel (%p234) target = $region40
        $region39: #{_forward.1} parent=35 // pred_region
          %s237 = smul.u32 104, %s17
          %p238 = scmp.lt.s32.totalorder %s237, 207
          %s239 = scalar_select %p238, %s237, 207
          %s240 = smul.addr %s239, 4
          %s241 = scalar_lea.vmem %s0, %s240
          %s242 = smul.u32 104, %s17
        $region40: #{_forward.1} parent=35 // pred_fallthru
          _
      $region36: #{_forward.1} parent=5 // pred_fallthru
        _
      %p243 = scmp.le.s32.totalorder 1, %s17
      %p244 = scmp.lt.s32.totalorder %s17, 3
      %p245 = pnand %p243, %p244
      %p246 = pneg %p245
      // Predicated region
      $region41: #{_forward.1} parent=5 // pred_check
        _
      $region42: #{_forward.1} parent=5 // pred_check_branch
        %248 = sbr.rel (%p245) target = $region44
      $region43: #{_forward.1} parent=5 // pred_region
        %s249 = ssub.s32 %s17, 1
        %s250 = smul.u32 104, %s22
        %p251 = scmp.lt.s32.totalorder %s250, 207
        %s252 = scalar_select %p251, %s250, 207
        %s253 = smul.addr %s252, 4
        %s254 = scalar_lea.vmem %s0, %s253
        %p255 = pneg %p43
        %p256 = pneg %p40
        %p257 = pneg %p64
        %p258 = pneg %p61
        %p259 = pneg %p85
        %p260 = pneg %p82
        %p261 = pneg %p106
        %p262 = pneg %p103
        %p263 = pneg %p127
        %p264 = pneg %p124
        %p265 = pneg %p148
        %p266 = pneg %p145
        %p267 = pneg %p174
        %p268 = pneg %p171
        %s269 = smul.u32 4, %s22
        %p270 = scmp.lt.s32.totalorder %s269, 7
        %s271 = scalar_select %p270, %s269, 7
        %s272 = smul.addr %s271, 7
        %s273 = smul.addr %s272, 8
        %s274 = scalar_lea.vmem %s6, %s273
        %p275 = pneg %p200
        %p276 = pneg %p197
        %s277 = sand.u32 %s187, 1
        %s278 = scalar_lea.sflag [#allocation3], %s277
        %s279 = sand.u32 %s187, 1
        %s280 = smul.addr %s279, 4
        %s281 = scalar_lea.vmem [#allocation2], %s280
        %s282 = smul.u32 104, %s22
        %p283 = scmp.lt.s32.totalorder %s282, 207
        %s284 = scalar_select %p283, %s282, 207
        %s285 = smul.addr %s284, 4
        %s286 = scalar_lea.vmem %s0, %s285
        %s287 = smul.u32 104, %s22
        %s288 = smul.u32 4, %s22
        %p289 = scmp.lt.s32.totalorder %s288, 7
        %s290 = scalar_select %p289, %s288, 7
        %s291 = smul.addr %s290, 7
        %s292 = smul.addr %s291, 8
        %s293 = scalar_lea.vmem %s6, %s292
        %s294 = smul.u32 4, %s22
        %s295 = smul.u32 4, %s22
        %v297 = vld [vmem:[%s286] sm:$0xf]
        %v298 = vld [vmem:[%s286 + $0x4] sm:$0xf]
        %v299 = vld [vmem:[%s286 + $0x8] sm:$0xf]
        %v300 = vld [vmem:[%s286 + $0xc] sm:$0xf]
        %v301 = vld [vmem:[%s286 + $0x10] sm:$0xf]
        %v302 = vld [vmem:[%s286 + $0x14] sm:$0xf]
        %v303 = vld [vmem:[%s286 + $0x18] sm:$0xf]
        %v304 = vld [vmem:[%s286 + $0x1c] sm:$0xf]
        %v305 = vld [vmem:[%s286 + $0x20] sm:$0xf]
        %v306 = vld [vmem:[%s286 + $0x24] sm:$0xf]
        %v307 = vld [vmem:[%s286 + $0x28] sm:$0xf]
        %v308 = vld [vmem:[%s286 + $0x2c] sm:$0xf]
        %v309 = vld [vmem:[%s286 + $0x30] sm:$0xf]
        %v310 = vld [vmem:[%s286 + $0x34] sm:$0xf]
        %v311 = vld [vmem:[%s286 + $0x38] sm:$0xf]
        %v312 = vld [vmem:[%s286 + $0x3c] sm:$0xf]
        %v313 = vld [vmem:[%s286 + $0x40] sm:$0xf]
        %v314 = vld [vmem:[%s286 + $0x44] sm:$0xf]
        %v315 = vld [vmem:[%s286 + $0x48] sm:$0xf]
        %v316 = vld [vmem:[%s286 + $0x4c] sm:$0xf]
        %v317 = vld [vmem:[%s286 + $0x50] sm:$0xf]
        %v318 = vld [vmem:[%s286 + $0x54] sm:$0xf]
        %v319 = vld [vmem:[%s286 + $0x58] sm:$0xf]
        %v320 = vld [vmem:[%s286 + $0x5c] sm:$0xf]
        %v321 = vld [vmem:[%s286 + $0x60] sm:$0xf]
        %v322 = vld [vmem:[%s286 + $0x64] sm:$0xf]
        %v323 = vld [vmem:[%s286 + $0x68] sm:$0xf]
        %v324 = vld [vmem:[%s286 + $0x6c] sm:$0xf]
        %v325 = vld [vmem:[%s286 + $0x70] sm:$0xf]
        %v326 = vld [vmem:[%s286 + $0x74] sm:$0xf]
        %v327 = vld [vmem:[%s286 + $0x78] sm:$0xf]
        %v328 = vld [vmem:[%s286 + $0x7c] sm:$0xf]
        %v329 = vld [vmem:[%s286 + $0x80] sm:$0xf]
        %v330 = vld [vmem:[%s286 + $0x84] sm:$0xf]
        %v331 = vld [vmem:[%s286 + $0x88] sm:$0xf]
        %v332 = vld [vmem:[%s286 + $0x8c] sm:$0xf]
        %v333 = vld [vmem:[%s286 + $0x90] sm:$0xf]
        %v334 = vld [vmem:[%s286 + $0x94] sm:$0xf]
        %v335 = vld [vmem:[%s286 + $0x98] sm:$0xf]
        %v336 = vld [vmem:[%s286 + $0x9c] sm:$0xf]
        %v337 = vld [vmem:[%s286 + $0xa0] sm:$0xf]
        %v338 = vld [vmem:[%s286 + $0xa4] sm:$0xf]
        %v339 = vld [vmem:[%s286 + $0xa8] sm:$0xf]
        %v340 = vld [vmem:[%s286 + $0xac] sm:$0xf]
        %v341 = vld [vmem:[%s286 + $0xb0] sm:$0xf]
        %v342 = vld [vmem:[%s286 + $0xb4] sm:$0xf]
        %v343 = vld [vmem:[%s286 + $0xb8] sm:$0xf]
        %v344 = vld [vmem:[%s286 + $0xbc] sm:$0xf]
        %v345 = vld [vmem:[%s286 + $0xc0] sm:$0xf]
        %v346 = vld [vmem:[%s286 + $0xc4] sm:$0xf]
        %v347 = vld [vmem:[%s286 + $0xc8] sm:$0xf]
        %v348 = vld [vmem:[%s286 + $0xcc] sm:$0xf]
        %v349 = vld [vmem:[%s286 + $0xd0] sm:$0xf]
        %v350 = vld [vmem:[%s286 + $0xd4] sm:$0xf]
        %v351 = vld [vmem:[%s286 + $0xd8] sm:$0xf]
        %v352 = vld [vmem:[%s286 + $0xdc] sm:$0xf]
        %v353 = vld [vmem:[%s286 + $0xe0] sm:$0xf]
        %v354 = vld [vmem:[%s286 + $0xe4] sm:$0xf]
        %v355 = vld [vmem:[%s286 + $0xe8] sm:$0xf]
        %v356 = vld [vmem:[%s286 + $0xec] sm:$0xf]
        %v357 = vld [vmem:[%s286 + $0xf0] sm:$0xf]
        %v358 = vld [vmem:[%s286 + $0xf4] sm:$0xf]
        %v359 = vld [vmem:[%s286 + $0xf8] sm:$0xf]
        %v360 = vld [vmem:[%s286 + $0xfc] sm:$0xf]
        %v361 = vld [vmem:[%s286 + $0x100] sm:$0xf]
        %v362 = vld [vmem:[%s286 + $0x104] sm:$0xf]
        %v363 = vld [vmem:[%s286 + $0x108] sm:$0xf]
        %v364 = vld [vmem:[%s286 + $0x10c] sm:$0xf]
        %v365 = vld [vmem:[%s286 + $0x110] sm:$0xf]
        %v366 = vld [vmem:[%s286 + $0x114] sm:$0xf]
        %v367 = vld [vmem:[%s286 + $0x118] sm:$0xf]
        %v368 = vld [vmem:[%s286 + $0x11c] sm:$0xf]
        %v369 = vld [vmem:[%s286 + $0x120] sm:$0xf]
        %v370 = vld [vmem:[%s286 + $0x124] sm:$0xf]
        %v371 = vld [vmem:[%s286 + $0x128] sm:$0xf]
        %v372 = vld [vmem:[%s286 + $0x12c] sm:$0xf]
        %v373 = vld [vmem:[%s286 + $0x130] sm:$0xf]
        %v374 = vld [vmem:[%s286 + $0x134] sm:$0xf]
        %v375 = vld [vmem:[%s286 + $0x138] sm:$0xf]
        %v376 = vld [vmem:[%s286 + $0x13c] sm:$0xf]
        %v377 = vld [vmem:[%s286 + $0x140] sm:$0xf]
        %v378 = vld [vmem:[%s286 + $0x144] sm:$0xf]
        %v379 = vld [vmem:[%s286 + $0x148] sm:$0xf]
        %v380 = vld [vmem:[%s286 + $0x14c] sm:$0xf]
        %v381 = vld [vmem:[%s286 + $0x150] sm:$0xf]
        %v382 = vld [vmem:[%s286 + $0x154] sm:$0xf]
        %v383 = vld [vmem:[%s286 + $0x158] sm:$0xf]
        %v384 = vld [vmem:[%s286 + $0x15c] sm:$0xf]
        %v385 = vld [vmem:[%s286 + $0x160] sm:$0xf]
        %v386 = vld [vmem:[%s286 + $0x164] sm:$0xf]
        %v387 = vld [vmem:[%s286 + $0x168] sm:$0xf]
        %v388 = vld [vmem:[%s286 + $0x16c] sm:$0xf]
        %v389 = vld [vmem:[%s286 + $0x170] sm:$0xf]
        %v390 = vld [vmem:[%s286 + $0x174] sm:$0xf]
        %v391 = vld [vmem:[%s286 + $0x178] sm:$0xf]
        %v392 = vld [vmem:[%s286 + $0x17c] sm:$0xf]
        %v393 = vld [vmem:[%s286 + $0x180] sm:$0xf]
        %v394 = vld [vmem:[%s286 + $0x184] sm:$0xf]
        %v395 = vld [vmem:[%s286 + $0x188] sm:$0xf]
        %v396 = vld [vmem:[%s286 + $0x18c] sm:$0xf]
        %v397 = vld [vmem:[%s286 + $0x190] sm:$0xf]
        %v398 = vld [vmem:[%s286 + $0x194] sm:$0xf]
        %v399 = vld [vmem:[%s286 + $0x198] sm:$0xf]
        %v400 = vld [vmem:[%s286 + $0x19c] sm:$0xf]
        %v401 = vld [vmem:[%s1] sm:$0xf]
        %v402 = vld [vmem:[%s1 + $0x4] sm:$0xf]
        %v403 = vld [vmem:[%s1 + $0x8] sm:$0xf]
        %v404 = vld [vmem:[%s1 + $0xc] sm:$0x3]
        %v405 = vld [vmem:[%s2] sm:$0x1]
        %v407 = vlaneseq
        %v408 = vshrl.u32 %v407, 7
        %v409 = vsub.s32 0, %v408
        %v410 = vrot.slane %v405, %v409
        %v516 = vunpack.c.l.b16 %v297
        %v517 = vunpack.c.l.b16 %v298
        %v518 = vunpack.c.l.b16 %v299
        %v519 = vunpack.c.l.b16 %v300
        %v520 = vunpack.c.l.b16 %v301
        %v521 = vunpack.c.l.b16 %v302
        %v522 = vunpack.c.l.b16 %v303
        %v523 = vunpack.c.l.b16 %v304
        %v524 = vunpack.c.l.b16 %v305
        %v525 = vunpack.c.l.b16 %v306
        %v526 = vunpack.c.l.b16 %v307
        %v527 = vunpack.c.l.b16 %v308
        %v528 = vunpack.c.l.b16 %v309
        %v529 = vunpack.c.l.b16 %v310
        %v530 = vunpack.c.l.b16 %v311
        %v531 = vunpack.c.l.b16 %v312
        %v532 = vunpack.c.l.b16 %v313
        %v533 = vunpack.c.l.b16 %v314
        %v534 = vunpack.c.l.b16 %v315
        %v535 = vunpack.c.l.b16 %v316
        %v536 = vunpack.c.l.b16 %v317
        %v537 = vunpack.c.l.b16 %v318
        %v538 = vunpack.c.l.b16 %v319
        %v539 = vunpack.c.l.b16 %v320
        %v540 = vunpack.c.l.b16 %v321
        %v541 = vunpack.c.l.b16 %v322
        %v542 = vunpack.c.l.b16 %v323
        %v543 = vunpack.c.l.b16 %v324
        %v544 = vunpack.c.l.b16 %v325
        %v545 = vunpack.c.l.b16 %v326
        %v546 = vunpack.c.l.b16 %v327
        %v547 = vunpack.c.l.b16 %v328
        %v548 = vunpack.c.l.b16 %v329
        %v549 = vunpack.c.l.b16 %v330
        %v550 = vunpack.c.l.b16 %v331
        %v551 = vunpack.c.l.b16 %v332
        %v552 = vunpack.c.l.b16 %v333
        %v553 = vunpack.c.l.b16 %v334
        %v554 = vunpack.c.l.b16 %v335
        %v555 = vunpack.c.l.b16 %v336
        %v556 = vunpack.c.l.b16 %v337
        %v557 = vunpack.c.l.b16 %v338
        %v558 = vunpack.c.l.b16 %v339
        %v559 = vunpack.c.l.b16 %v340
        %v560 = vunpack.c.l.b16 %v341
        %v561 = vunpack.c.l.b16 %v342
        %v562 = vunpack.c.l.b16 %v343
        %v563 = vunpack.c.l.b16 %v344
        %v564 = vunpack.c.l.b16 %v345
        %v565 = vunpack.c.l.b16 %v346
        %v566 = vunpack.c.l.b16 %v347
        %v567 = vunpack.c.l.b16 %v348
        %v568 = vunpack.c.l.b16 %v349
        %v569 = vunpack.c.l.b16 %v350
        %v570 = vunpack.c.l.b16 %v351
        %v571 = vunpack.c.l.b16 %v352
        %v572 = vunpack.c.l.b16 %v353
        %v573 = vunpack.c.l.b16 %v354
        %v574 = vunpack.c.l.b16 %v355
        %v575 = vunpack.c.l.b16 %v356
        %v576 = vunpack.c.l.b16 %v357
        %v577 = vunpack.c.l.b16 %v358
        %v578 = vunpack.c.l.b16 %v359
        %v579 = vunpack.c.l.b16 %v360
        %v580 = vunpack.c.l.b16 %v361
        %v581 = vunpack.c.l.b16 %v362
        %v582 = vunpack.c.l.b16 %v363
        %v583 = vunpack.c.l.b16 %v364
        %v584 = vunpack.c.l.b16 %v365
        %v585 = vunpack.c.l.b16 %v366
        %v586 = vunpack.c.l.b16 %v367
        %v587 = vunpack.c.l.b16 %v368
        %v588 = vunpack.c.l.b16 %v369
        %v589 = vunpack.c.l.b16 %v370
        %v590 = vunpack.c.l.b16 %v371
        %v591 = vunpack.c.l.b16 %v372
        %v592 = vunpack.c.l.b16 %v373
        %v593 = vunpack.c.l.b16 %v374
        %v594 = vunpack.c.l.b16 %v375
        %v595 = vunpack.c.l.b16 %v376
        %v596 = vunpack.c.l.b16 %v377
        %v597 = vunpack.c.l.b16 %v378
        %v598 = vunpack.c.l.b16 %v379
        %v599 = vunpack.c.l.b16 %v380
        %v600 = vunpack.c.l.b16 %v381
        %v601 = vunpack.c.l.b16 %v382
        %v602 = vunpack.c.l.b16 %v383
        %v603 = vunpack.c.l.b16 %v384
        %v604 = vunpack.c.l.b16 %v385
        %v605 = vunpack.c.l.b16 %v386
        %v606 = vunpack.c.l.b16 %v387
        %v607 = vunpack.c.l.b16 %v388
        %v608 = vunpack.c.l.b16 %v389
        %v609 = vunpack.c.l.b16 %v390
        %v610 = vunpack.c.l.b16 %v391
        %v611 = vunpack.c.l.b16 %v392
        %v612 = vunpack.c.l.b16 %v393
        %v613 = vunpack.c.l.b16 %v394
        %v614 = vunpack.c.l.b16 %v395
        %v615 = vunpack.c.l.b16 %v396
        %v616 = vunpack.c.l.b16 %v397
        %v617 = vunpack.c.l.b16 %v398
        %v618 = vunpack.c.l.b16 %v399
        %v619 = vunpack.c.l.b16 %v400
        %v620 = vpack.c.b16 %v517, %v516
        %v621 = vpack.c.b16 %v519, %v518
        %v622 = vpack.c.b16 %v521, %v520
        %v623 = vpack.c.b16 %v523, %v522
        %v624 = vpack.c.b16 %v525, %v524
        %v625 = vpack.c.b16 %v527, %v526
        %v626 = vpack.c.b16 %v529, %v528
        %v627 = vpack.c.b16 %v531, %v530
        %v628 = vpack.c.b16 %v533, %v532
        %v629 = vpack.c.b16 %v535, %v534
        %v630 = vpack.c.b16 %v537, %v536
        %v631 = vpack.c.b16 %v539, %v538
        %v632 = vpack.c.b16 %v541, %v540
        %v633 = vpack.c.b16 %v543, %v542
        %v634 = vpack.c.b16 %v545, %v544
        %v635 = vpack.c.b16 %v547, %v546
        %v636 = vpack.c.b16 %v549, %v548
        %v637 = vpack.c.b16 %v551, %v550
        %v638 = vpack.c.b16 %v553, %v552
        %v639 = vpack.c.b16 %v555, %v554
        %v640 = vpack.c.b16 %v557, %v556
        %v641 = vpack.c.b16 %v559, %v558
        %v642 = vpack.c.b16 %v561, %v560
        %v643 = vpack.c.b16 %v563, %v562
        %v644 = vpack.c.b16 %v565, %v564
        %v645 = vpack.c.b16 %v567, %v566
        %v646 = vpack.c.b16 %v569, %v568
        %v647 = vpack.c.b16 %v571, %v570
        %v648 = vpack.c.b16 %v573, %v572
        %v649 = vpack.c.b16 %v575, %v574
        %v650 = vpack.c.b16 %v577, %v576
        %v651 = vpack.c.b16 %v579, %v578
        %v652 = vpack.c.b16 %v581, %v580
        %v653 = vpack.c.b16 %v583, %v582
        %v654 = vpack.c.b16 %v585, %v584
        %v655 = vpack.c.b16 %v587, %v586
        %v656 = vpack.c.b16 %v589, %v588
        %v657 = vpack.c.b16 %v591, %v590
        %v658 = vpack.c.b16 %v593, %v592
        %v659 = vpack.c.b16 %v595, %v594
        %v660 = vpack.c.b16 %v597, %v596
        %v661 = vpack.c.b16 %v599, %v598
        %v662 = vpack.c.b16 %v601, %v600
        %v663 = vpack.c.b16 %v603, %v602
        %v664 = vpack.c.b16 %v605, %v604
        %v665 = vpack.c.b16 %v607, %v606
        %v666 = vpack.c.b16 %v609, %v608
        %v667 = vpack.c.b16 %v611, %v610
        %v668 = vpack.c.b16 %v613, %v612
        %v669 = vpack.c.b16 %v615, %v614
        %v670 = vpack.c.b16 %v617, %v616
        %v671 = vpack.c.b16 %v619, %v618
        %v676 = vunpack.c.l.b16 %v401
        %v677 = vunpack.c.l.b16 %v402
        %v678 = vunpack.c.l.b16 %v403
        %v679 = vunpack.c.l.b16 %v404
        %v680 = vpack.c.b16 %v677, %v676
        %v681 = vpack.c.b16 %v679, %v678
        %vm683 = vcmask 220160
        %v685 = vsel %vm683, %v620, 0
        %v688 = vsel %vm683, %v621, 0
        %v691 = vsel %vm683, %v622, 0
        %v694 = vsel %vm683, %v623, 0
        %v697 = vsel %vm683, %v624, 0
        %v700 = vsel %vm683, %v625, 0
        %v703 = vsel %vm683, %v626, 0
        %v706 = vsel %vm683, %v627, 0
        %v709 = vsel %vm683, %v628, 0
        %v712 = vsel %vm683, %v629, 0
        %v715 = vsel %vm683, %v630, 0
        %v718 = vsel %vm683, %v631, 0
        %v721 = vsel %vm683, %v632, 0
        %v724 = vsel %vm683, %v633, 0
        %v727 = vsel %vm683, %v634, 0
        %v730 = vsel %vm683, %v635, 0
        %v733 = vsel %vm683, %v636, 0
        %v736 = vsel %vm683, %v637, 0
        %v739 = vsel %vm683, %v638, 0
        %v742 = vsel %vm683, %v639, 0
        %v745 = vsel %vm683, %v640, 0
        %v748 = vsel %vm683, %v641, 0
        %v751 = vsel %vm683, %v642, 0
        %v754 = vsel %vm683, %v643, 0
        %v757 = vsel %vm683, %v644, 0
        %v760 = vsel %vm683, %v645, 0
        %v763 = vsel %vm683, %v646, 0
        %v766 = vsel %vm683, %v647, 0
        %v769 = vsel %vm683, %v648, 0
        %v772 = vsel %vm683, %v649, 0
        %v775 = vsel %vm683, %v650, 0
        %v778 = vsel %vm683, %v651, 0
        %v781 = vsel %vm683, %v652, 0
        %v784 = vsel %vm683, %v653, 0
        %v787 = vsel %vm683, %v654, 0
        %v790 = vsel %vm683, %v655, 0
        %v793 = vsel %vm683, %v656, 0
        %v796 = vsel %vm683, %v657, 0
        %v799 = vsel %vm683, %v658, 0
        %v802 = vsel %vm683, %v659, 0
        %v805 = vsel %vm683, %v660, 0
        %v808 = vsel %vm683, %v661, 0
        %v811 = vsel %vm683, %v662, 0
        %v814 = vsel %vm683, %v663, 0
        %v817 = vsel %vm683, %v664, 0
        %v820 = vsel %vm683, %v665, 0
        %v823 = vsel %vm683, %v666, 0
        %v826 = vsel %vm683, %v667, 0
        %v829 = vsel %vm683, %v668, 0
        %v832 = vsel %vm683, %v669, 0
        %v835 = vsel %vm683, %v670, 0
        %v838 = vsel %vm683, %v671, 0
        %vm840 = vcmask 1044480
        %vm841 = vcmask 1045504
        %v842 = vsel %vm840, 4294967295, 65535
        %v843 = vsel %vm841, %v842, 0
        %v845 = vand.u32 %v681, %v843
        %847 = vmatprep.subr.bf16.mxu0 0
        %848 = vmatpush1.bf16.msra.mxu0 %v680
        %849 = vmatprep.subr.bf16.mxu0 0
        %850 = vmatpush1.bf16.msra.mxu0 %v845
        %851 = vmatprep.subr.bf16.mxu0 0
        %852 = vmatpush1.bf16.msra.mxu0 0
        %853 = vmatprep.subr.bf16.mxu0 0
        %854 = vmatpush1.bf16.msra.mxu0 0
        %855 = vmatprep.subr.bf16.mxu0 0
        %856 = vmatpush1.bf16.msra.mxu0 0
        %857 = vmatprep.subr.bf16.mxu0 0
        %858 = vmatpush1.bf16.msra.mxu0 0
        %859 = vmatprep.subr.bf16.mxu0 0
        %860 = vmatpush1.bf16.msra.mxu0 0
        %861 = vmatprep.subr.bf16.mxu0 0
        %862 = vmatpush1.bf16.msra.mxu0 0
        %863 = vmatprep.subr.bf16.mxu0 0
        %864 = vmatpush1.bf16.msra.mxu0 0
        %865 = vmatprep.subr.bf16.mxu0 0
        %866 = vmatpush1.bf16.msra.mxu0 0
        %867 = vmatprep.subr.bf16.mxu0 0
        %868 = vmatpush1.bf16.msra.mxu0 0
        %869 = vmatprep.subr.bf16.mxu0 0
        %870 = vmatpush1.bf16.msra.mxu0 0
        %871 = vmatprep.subr.bf16.mxu0 0
        %872 = vmatpush1.bf16.msra.mxu0 0
        %873 = vmatprep.subr.bf16.mxu0 0
        %874 = vmatpush1.bf16.msra.mxu0 0
        %875 = vmatprep.subr.bf16.mxu0 0
        %876 = vmatpush1.bf16.msra.mxu0 0
        %877 = vmatprep.subr.bf16.mxu0 0
        %878 = vmatpush1.bf16.msra.mxu0 0
        %879 = vmatprep.mubr.bf16.mxu0 0
        %880 = vmatmul.mubr.bf16.gmra.mrb[0].mxu0 %v685
        %v881 = vpop.f32.mrb[0].mxu0
        %v882 = vadd.f32 %v410, %v881
        %v883 = vpop.f32.mrb[0].mxu0
        %v884 = vpop.f32.mrb[0].mxu0
        %v885 = vadd.f32 %v410, %v884
        %v886 = vpop.f32.mrb[0].mxu0
        %887 = vmatprep.mubr.bf16.mxu0 0
        %888 = vmatmul.mubr.bf16.gmra.mrb[0].mxu0 %v688
        %v889 = vpop.f32.mrb[0].mxu0
        %v890 = vadd.f32 %v410, %v889
        %v891 = vpop.f32.mrb[0].mxu0
        %v892 = vpop.f32.mrb[0].mxu0
        %v893 = vadd.f32 %v410, %v892
        %v894 = vpop.f32.mrb[0].mxu0
        %895 = vmatprep.mubr.bf16.mxu0 0
        %896 = vmatmul.mubr.bf16.gmra.mrb[0].mxu0 %v691
        %v897 = vpop.f32.mrb[0].mxu0
        %v898 = vadd.f32 %v410, %v897
        %v899 = vpop.f32.mrb[0].mxu0
        %v900 = vpop.f32.mrb[0].mxu0
        %v901 = vadd.f32 %v410, %v900
        %v902 = vpop.f32.mrb[0].mxu0
        %903 = vmatprep.mubr.bf16.mxu0 0
        %904 = vmatmul.mubr.bf16.gmra.mrb[0].mxu0 %v694
        %v905 = vpop.f32.mrb[0].mxu0
        %v906 = vadd.f32 %v410, %v905
        %v907 = vpop.f32.mrb[0].mxu0
        %v908 = vpop.f32.mrb[0].mxu0
        %v909 = vadd.f32 %v410, %v908
        %v910 = vpop.f32.mrb[0].mxu0
        %911 = vmatprep.mubr.bf16.mxu0 0
        %912 = vmatmul.mubr.bf16.gmra.mrb[0].mxu0 %v697
        %v913 = vpop.f32.mrb[0].mxu0
        %v914 = vadd.f32 %v410, %v913
        %v915 = vpop.f32.mrb[0].mxu0
        %v916 = vpop.f32.mrb[0].mxu0
        %v917 = vadd.f32 %v410, %v916
        %v918 = vpop.f32.mrb[0].mxu0
        %919 = vmatprep.mubr.bf16.mxu0 0
        %920 = vmatmul.mubr.bf16.gmra.mrb[0].mxu0 %v700
        %v921 = vpop.f32.mrb[0].mxu0
        %v922 = vadd.f32 %v410, %v921
        %v923 = vpop.f32.mrb[0].mxu0
        %v924 = vpop.f32.mrb[0].mxu0
        %v925 = vadd.f32 %v410, %v924
        %v926 = vpop.f32.mrb[0].mxu0
        %927 = vmatprep.mubr.bf16.mxu0 0
        %928 = vmatmul.mubr.bf16.gmra.mrb[0].mxu0 %v703
        %v929 = vpop.f32.mrb[0].mxu0
        %v930 = vadd.f32 %v410, %v929
        %v931 = vpop.f32.mrb[0].mxu0
        %v932 = vpop.f32.mrb[0].mxu0
        %v933 = vadd.f32 %v410, %v932
        %v934 = vpop.f32.mrb[0].mxu0
        %935 = vmatprep.mubr.bf16.mxu0 0
        %936 = vmatmul.mubr.bf16.gmra.mrb[0].mxu0 %v706
        %v937 = vpop.f32.mrb[0].mxu0
        %v938 = vadd.f32 %v410, %v937
        %v939 = vpop.f32.mrb[0].mxu0
        %v940 = vpop.f32.mrb[0].mxu0
        %v941 = vadd.f32 %v410, %v940
        %v942 = vpop.f32.mrb[0].mxu0
        %943 = vmatprep.mubr.bf16.mxu0 0
        %944 = vmatmul.mubr.bf16.gmra.mrb[0].mxu0 %v709
        %v945 = vpop.f32.mrb[0].mxu0
        %v946 = vadd.f32 %v410, %v945
        %v947 = vpop.f32.mrb[0].mxu0
        %v948 = vpop.f32.mrb[0].mxu0
        %v949 = vadd.f32 %v410, %v948
        %v950 = vpop.f32.mrb[0].mxu0
        %951 = vmatprep.mubr.bf16.mxu0 0
        %952 = vmatmul.mubr.bf16.gmra.mrb[0].mxu0 %v712
        %v953 = vpop.f32.mrb[0].mxu0
        %v954 = vadd.f32 %v410, %v953
        %v955 = vpop.f32.mrb[0].mxu0
        %v956 = vpop.f32.mrb[0].mxu0
        %v957 = vadd.f32 %v410, %v956
        %v958 = vpop.f32.mrb[0].mxu0
        %959 = vmatprep.mubr.bf16.mxu0 0
        %960 = vmatmul.mubr.bf16.gmra.mrb[0].mxu0 %v715
        %v961 = vpop.f32.mrb[0].mxu0
        %v962 = vadd.f32 %v410, %v961
        %v963 = vpop.f32.mrb[0].mxu0
        %v964 = vpop.f32.mrb[0].mxu0
        %v965 = vadd.f32 %v410, %v964
        %v966 = vpop.f32.mrb[0].mxu0
        %967 = vmatprep.mubr.bf16.mxu0 0
        %968 = vmatmul.mubr.bf16.gmra.mrb[0].mxu0 %v718
        %v969 = vpop.f32.mrb[0].mxu0
        %v970 = vadd.f32 %v410, %v969
        %v971 = vpop.f32.mrb[0].mxu0
        %v972 = vpop.f32.mrb[0].mxu0
        %v973 = vadd.f32 %v410, %v972
        %v974 = vpop.f32.mrb[0].mxu0
        %975 = vmatprep.mubr.bf16.mxu0 0
        %976 = vmatmul.mubr.bf16.gmra.mrb[0].mxu0 %v721
        %v977 = vpop.f32.mrb[0].mxu0
        %v978 = vadd.f32 %v410, %v977
        %v979 = vpop.f32.mrb[0].mxu0
        %v980 = vpop.f32.mrb[0].mxu0
        %v981 = vadd.f32 %v410, %v980
        %v982 = vpop.f32.mrb[0].mxu0
        %983 = vmatprep.mubr.bf16.mxu0 0
        %984 = vmatmul.mubr.bf16.gmra.mrb[0].mxu0 %v724
        %v985 = vpop.f32.mrb[0].mxu0
        %v986 = vadd.f32 %v410, %v985
        %v987 = vpop.f32.mrb[0].mxu0
        %v988 = vpop.f32.mrb[0].mxu0
        %v989 = vadd.f32 %v410, %v988
        %v990 = vpop.f32.mrb[0].mxu0
        %991 = vmatprep.mubr.bf16.mxu0 0
        %992 = vmatmul.mubr.bf16.gmra.mrb[0].mxu0 %v727
        %v993 = vpop.f32.mrb[0].mxu0
        %v994 = vadd.f32 %v410, %v993
        %v995 = vpop.f32.mrb[0].mxu0
        %v996 = vpop.f32.mrb[0].mxu0
        %v997 = vadd.f32 %v410, %v996
        %v998 = vpop.f32.mrb[0].mxu0
        %999 = vmatprep.mubr.bf16.mxu0 0
        %1000 = vmatmul.mubr.bf16.gmra.mrb[0].mxu0 %v730
        %v1001 = vpop.f32.mrb[0].mxu0
        %v1002 = vadd.f32 %v410, %v1001
        %v1003 = vpop.f32.mrb[0].mxu0
        %v1004 = vpop.f32.mrb[0].mxu0
        %v1005 = vadd.f32 %v410, %v1004
        %v1006 = vpop.f32.mrb[0].mxu0
        %1007 = vmatprep.mubr.bf16.mxu0 0
        %1008 = vmatmul.mubr.bf16.gmra.mrb[0].mxu0 %v733
        %v1009 = vpop.f32.mrb[0].mxu0
        %v1010 = vadd.f32 %v410, %v1009
        %v1011 = vpop.f32.mrb[0].mxu0
        %v1012 = vpop.f32.mrb[0].mxu0
        %v1013 = vadd.f32 %v410, %v1012
        %v1014 = vpop.f32.mrb[0].mxu0
        %1015 = vmatprep.mubr.bf16.mxu0 0
        %1016 = vmatmul.mubr.bf16.gmra.mrb[0].mxu0 %v736
        %v1017 = vpop.f32.mrb[0].mxu0
        %v1018 = vadd.f32 %v410, %v1017
        %v1019 = vpop.f32.mrb[0].mxu0
        %v1020 = vpop.f32.mrb[0].mxu0
        %v1021 = vadd.f32 %v410, %v1020
        %v1022 = vpop.f32.mrb[0].mxu0
        %1023 = vmatprep.mubr.bf16.mxu0 0
        %1024 = vmatmul.mubr.bf16.gmra.mrb[0].mxu0 %v739
        %v1025 = vpop.f32.mrb[0].mxu0
        %v1026 = vadd.f32 %v410, %v1025
        %v1027 = vpop.f32.mrb[0].mxu0
        %v1028 = vpop.f32.mrb[0].mxu0
        %v1029 = vadd.f32 %v410, %v1028
        %v1030 = vpop.f32.mrb[0].mxu0
        %1031 = vmatprep.mubr.bf16.mxu0 0
        %1032 = vmatmul.mubr.bf16.gmra.mrb[0].mxu0 %v742
        %v1033 = vpop.f32.mrb[0].mxu0
        %v1034 = vadd.f32 %v410, %v1033
        %v1035 = vpop.f32.mrb[0].mxu0
        %v1036 = vpop.f32.mrb[0].mxu0
        %v1037 = vadd.f32 %v410, %v1036
        %v1038 = vpop.f32.mrb[0].mxu0
        %1039 = vmatprep.mubr.bf16.mxu0 0
        %1040 = vmatmul.mubr.bf16.gmra.mrb[0].mxu0 %v745
        %v1041 = vpop.f32.mrb[0].mxu0
        %v1042 = vadd.f32 %v410, %v1041
        %v1043 = vpop.f32.mrb[0].mxu0
        %v1044 = vpop.f32.mrb[0].mxu0
        %v1045 = vadd.f32 %v410, %v1044
        %v1046 = vpop.f32.mrb[0].mxu0
        %1047 = vmatprep.mubr.bf16.mxu0 0
        %1048 = vmatmul.mubr.bf16.gmra.mrb[0].mxu0 %v748
        %v1049 = vpop.f32.mrb[0].mxu0
        %v1050 = vadd.f32 %v410, %v1049
        %v1051 = vpop.f32.mrb[0].mxu0
        %v1052 = vpop.f32.mrb[0].mxu0
        %v1053 = vadd.f32 %v410, %v1052
        %v1054 = vpop.f32.mrb[0].mxu0
        %1055 = vmatprep.mubr.bf16.mxu0 0
        %1056 = vmatmul.mubr.bf16.gmra.mrb[0].mxu0 %v751
        %v1057 = vpop.f32.mrb[0].mxu0
        %v1058 = vadd.f32 %v410, %v1057
        %v1059 = vpop.f32.mrb[0].mxu0
        %v1060 = vpop.f32.mrb[0].mxu0
        %v1061 = vadd.f32 %v410, %v1060
        %v1062 = vpop.f32.mrb[0].mxu0
        %1063 = vmatprep.mubr.bf16.mxu0 0
        %1064 = vmatmul.mubr.bf16.gmra.mrb[0].mxu0 %v754
        %v1065 = vpop.f32.mrb[0].mxu0
        %v1066 = vadd.f32 %v410, %v1065
        %v1067 = vpop.f32.mrb[0].mxu0
        %v1068 = vpop.f32.mrb[0].mxu0
        %v1069 = vadd.f32 %v410, %v1068
        %v1070 = vpop.f32.mrb[0].mxu0
        %1071 = vmatprep.mubr.bf16.mxu0 0
        %1072 = vmatmul.mubr.bf16.gmra.mrb[0].mxu0 %v757
        %v1073 = vpop.f32.mrb[0].mxu0
        %v1074 = vadd.f32 %v410, %v1073
        %v1075 = vpop.f32.mrb[0].mxu0
        %v1076 = vpop.f32.mrb[0].mxu0
        %v1077 = vadd.f32 %v410, %v1076
        %v1078 = vpop.f32.mrb[0].mxu0
        %1079 = vmatprep.mubr.bf16.mxu0 0
        %1080 = vmatmul.mubr.bf16.gmra.mrb[0].mxu0 %v760
        %v1081 = vpop.f32.mrb[0].mxu0
        %v1082 = vadd.f32 %v410, %v1081
        %v1083 = vpop.f32.mrb[0].mxu0
        %v1084 = vpop.f32.mrb[0].mxu0
        %v1085 = vadd.f32 %v410, %v1084
        %v1086 = vpop.f32.mrb[0].mxu0
        %1087 = vmatprep.mubr.bf16.mxu0 0
        %1088 = vmatmul.mubr.bf16.gmra.mrb[0].mxu0 %v763
        %v1089 = vpop.f32.mrb[0].mxu0
        %v1090 = vadd.f32 %v410, %v1089
        %v1091 = vpop.f32.mrb[0].mxu0
        %v1092 = vpop.f32.mrb[0].mxu0
        %v1093 = vadd.f32 %v410, %v1092
        %v1094 = vpop.f32.mrb[0].mxu0
        %1095 = vmatprep.mubr.bf16.mxu0 0
        %1096 = vmatmul.mubr.bf16.gmra.mrb[0].mxu0 %v766
        %v1097 = vpop.f32.mrb[0].mxu0
        %v1098 = vadd.f32 %v410, %v1097
        %v1099 = vpop.f32.mrb[0].mxu0
        %v1100 = vpop.f32.mrb[0].mxu0
        %v1101 = vadd.f32 %v410, %v1100
        %v1102 = vpop.f32.mrb[0].mxu0
        %1103 = vmatprep.mubr.bf16.mxu0 0
        %1104 = vmatmul.mubr.bf16.gmra.mrb[0].mxu0 %v769
        %v1105 = vpop.f32.mrb[0].mxu0
        %v1106 = vadd.f32 %v410, %v1105
        %v1107 = vpop.f32.mrb[0].mxu0
        %v1108 = vpop.f32.mrb[0].mxu0
        %v1109 = vadd.f32 %v410, %v1108
        %v1110 = vpop.f32.mrb[0].mxu0
        %1111 = vmatprep.mubr.bf16.mxu0 0
        %1112 = vmatmul.mubr.bf16.gmra.mrb[0].mxu0 %v772
        %v1113 = vpop.f32.mrb[0].mxu0
        %v1114 = vadd.f32 %v410, %v1113
        %v1115 = vpop.f32.mrb[0].mxu0
        %v1116 = vpop.f32.mrb[0].mxu0
        %v1117 = vadd.f32 %v410, %v1116
        %v1118 = vpop.f32.mrb[0].mxu0
        %1119 = vmatprep.mubr.bf16.mxu0 0
        %1120 = vmatmul.mubr.bf16.gmra.mrb[0].mxu0 %v775
        %v1121 = vpop.f32.mrb[0].mxu0
        %v1122 = vadd.f32 %v410, %v1121
        %v1123 = vpop.f32.mrb[0].mxu0
        %v1124 = vpop.f32.mrb[0].mxu0
        %v1125 = vadd.f32 %v410, %v1124
        %v1126 = vpop.f32.mrb[0].mxu0
        %1127 = vmatprep.mubr.bf16.mxu0 0
        %1128 = vmatmul.mubr.bf16.gmra.mrb[0].mxu0 %v778
        %v1129 = vpop.f32.mrb[0].mxu0
        %v1130 = vadd.f32 %v410, %v1129
        %v1131 = vpop.f32.mrb[0].mxu0
        %v1132 = vpop.f32.mrb[0].mxu0
        %v1133 = vadd.f32 %v410, %v1132
        %v1134 = vpop.f32.mrb[0].mxu0
        %1135 = vmatprep.mubr.bf16.mxu0 0
        %1136 = vmatmul.mubr.bf16.gmra.mrb[0].mxu0 %v781
        %v1137 = vpop.f32.mrb[0].mxu0
        %v1138 = vadd.f32 %v410, %v1137
        %v1139 = vpop.f32.mrb[0].mxu0
        %v1140 = vpop.f32.mrb[0].mxu0
        %v1141 = vadd.f32 %v410, %v1140
        %v1142 = vpop.f32.mrb[0].mxu0
        %1143 = vmatprep.mubr.bf16.mxu0 0
        %1144 = vmatmul.mubr.bf16.gmra.mrb[0].mxu0 %v784
        %v1145 = vpop.f32.mrb[0].mxu0
        %v1146 = vadd.f32 %v410, %v1145
        %v1147 = vpop.f32.mrb[0].mxu0
        %v1148 = vpop.f32.mrb[0].mxu0
        %v1149 = vadd.f32 %v410, %v1148
        %v1150 = vpop.f32.mrb[0].mxu0
        %1151 = vmatprep.mubr.bf16.mxu0 0
        %1152 = vmatmul.mubr.bf16.gmra.mrb[0].mxu0 %v787
        %v1153 = vpop.f32.mrb[0].mxu0
        %v1154 = vadd.f32 %v410, %v1153
        %v1155 = vpop.f32.mrb[0].mxu0
        %v1156 = vpop.f32.mrb[0].mxu0
        %v1157 = vadd.f32 %v410, %v1156
        %v1158 = vpop.f32.mrb[0].mxu0
        %1159 = vmatprep.mubr.bf16.mxu0 0
        %1160 = vmatmul.mubr.bf16.gmra.mrb[0].mxu0 %v790
        %v1161 = vpop.f32.mrb[0].mxu0
        %v1162 = vadd.f32 %v410, %v1161
        %v1163 = vpop.f32.mrb[0].mxu0
        %v1164 = vpop.f32.mrb[0].mxu0
        %v1165 = vadd.f32 %v410, %v1164
        %v1166 = vpop.f32.mrb[0].mxu0
        %1167 = vmatprep.mubr.bf16.mxu0 0
        %1168 = vmatmul.mubr.bf16.gmra.mrb[0].mxu0 %v793
        %v1169 = vpop.f32.mrb[0].mxu0
        %v1170 = vadd.f32 %v410, %v1169
        %v1171 = vpop.f32.mrb[0].mxu0
        %v1172 = vpop.f32.mrb[0].mxu0
        %v1173 = vadd.f32 %v410, %v1172
        %v1174 = vpop.f32.mrb[0].mxu0
        %1175 = vmatprep.mubr.bf16.mxu0 0
        %1176 = vmatmul.mubr.bf16.gmra.mrb[0].mxu0 %v796
        %v1177 = vpop.f32.mrb[0].mxu0
        %v1178 = vadd.f32 %v410, %v1177
        %v1179 = vpop.f32.mrb[0].mxu0
        %v1180 = vpop.f32.mrb[0].mxu0
        %v1181 = vadd.f32 %v410, %v1180
        %v1182 = vpop.f32.mrb[0].mxu0
        %1183 = vmatprep.mubr.bf16.mxu0 0
        %1184 = vmatmul.mubr.bf16.gmra.mrb[0].mxu0 %v799
        %v1185 = vpop.f32.mrb[0].mxu0
        %v1186 = vadd.f32 %v410, %v1185
        %v1187 = vpop.f32.mrb[0].mxu0
        %v1188 = vpop.f32.mrb[0].mxu0
        %v1189 = vadd.f32 %v410, %v1188
        %v1190 = vpop.f32.mrb[0].mxu0
        %1191 = vmatprep.mubr.bf16.mxu0 0
        %1192 = vmatmul.mubr.bf16.gmra.mrb[0].mxu0 %v802
        %v1193 = vpop.f32.mrb[0].mxu0
        %v1194 = vadd.f32 %v410, %v1193
        %v1195 = vpop.f32.mrb[0].mxu0
        %v1196 = vpop.f32.mrb[0].mxu0
        %v1197 = vadd.f32 %v410, %v1196
        %v1198 = vpop.f32.mrb[0].mxu0
        %1199 = vmatprep.mubr.bf16.mxu0 0
        %1200 = vmatmul.mubr.bf16.gmra.mrb[0].mxu0 %v805
        %v1201 = vpop.f32.mrb[0].mxu0
        %v1202 = vadd.f32 %v410, %v1201
        %v1203 = vpop.f32.mrb[0].mxu0
        %v1204 = vpop.f32.mrb[0].mxu0
        %v1205 = vadd.f32 %v410, %v1204
        %v1206 = vpop.f32.mrb[0].mxu0
        %1207 = vmatprep.mubr.bf16.mxu0 0
        %1208 = vmatmul.mubr.bf16.gmra.mrb[0].mxu0 %v808
        %v1209 = vpop.f32.mrb[0].mxu0
        %v1210 = vadd.f32 %v410, %v1209
        %v1211 = vpop.f32.mrb[0].mxu0
        %v1212 = vpop.f32.mrb[0].mxu0
        %v1213 = vadd.f32 %v410, %v1212
        %v1214 = vpop.f32.mrb[0].mxu0
        %1215 = vmatprep.mubr.bf16.mxu0 0
        %1216 = vmatmul.mubr.bf16.gmra.mrb[0].mxu0 %v811
        %v1217 = vpop.f32.mrb[0].mxu0
        %v1218 = vadd.f32 %v410, %v1217
        %v1219 = vpop.f32.mrb[0].mxu0
        %v1220 = vpop.f32.mrb[0].mxu0
        %v1221 = vadd.f32 %v410, %v1220
        %v1222 = vpop.f32.mrb[0].mxu0
        %1223 = vmatprep.mubr.bf16.mxu0 0
        %1224 = vmatmul.mubr.bf16.gmra.mrb[0].mxu0 %v814
        %v1225 = vpop.f32.mrb[0].mxu0
        %v1226 = vadd.f32 %v410, %v1225
        %v1227 = vpop.f32.mrb[0].mxu0
        %v1228 = vpop.f32.mrb[0].mxu0
        %v1229 = vadd.f32 %v410, %v1228
        %v1230 = vpop.f32.mrb[0].mxu0
        %1231 = vmatprep.mubr.bf16.mxu0 0
        %1232 = vmatmul.mubr.bf16.gmra.mrb[0].mxu0 %v817
        %v1233 = vpop.f32.mrb[0].mxu0
        %v1234 = vadd.f32 %v410, %v1233
        %v1235 = vpop.f32.mrb[0].mxu0
        %v1236 = vpop.f32.mrb[0].mxu0
        %v1237 = vadd.f32 %v410, %v1236
        %v1238 = vpop.f32.mrb[0].mxu0
        %1239 = vmatprep.mubr.bf16.mxu0 0
        %1240 = vmatmul.mubr.bf16.gmra.mrb[0].mxu0 %v820
        %v1241 = vpop.f32.mrb[0].mxu0
        %v1242 = vadd.f32 %v410, %v1241
        %v1243 = vpop.f32.mrb[0].mxu0
        %v1244 = vpop.f32.mrb[0].mxu0
        %v1245 = vadd.f32 %v410, %v1244
        %v1246 = vpop.f32.mrb[0].mxu0
        %1247 = vmatprep.mubr.bf16.mxu0 0
        %1248 = vmatmul.mubr.bf16.gmra.mrb[0].mxu0 %v823
        %v1249 = vpop.f32.mrb[0].mxu0
        %v1250 = vadd.f32 %v410, %v1249
        %v1251 = vpop.f32.mrb[0].mxu0
        %v1252 = vpop.f32.mrb[0].mxu0
        %v1253 = vadd.f32 %v410, %v1252
        %v1254 = vpop.f32.mrb[0].mxu0
        %1255 = vmatprep.mubr.bf16.mxu0 0
        %1256 = vmatmul.mubr.bf16.gmra.mrb[0].mxu0 %v826
        %v1257 = vpop.f32.mrb[0].mxu0
        %v1258 = vadd.f32 %v410, %v1257
        %v1259 = vpop.f32.mrb[0].mxu0
        %v1260 = vpop.f32.mrb[0].mxu0
        %v1261 = vadd.f32 %v410, %v1260
        %v1262 = vpop.f32.mrb[0].mxu0
        %1263 = vmatprep.mubr.bf16.mxu0 0
        %1264 = vmatmul.mubr.bf16.gmra.mrb[0].mxu0 %v829
        %v1265 = vpop.f32.mrb[0].mxu0
        %v1266 = vadd.f32 %v410, %v1265
        %v1267 = vpop.f32.mrb[0].mxu0
        %v1268 = vpop.f32.mrb[0].mxu0
        %v1269 = vadd.f32 %v410, %v1268
        %v1270 = vpop.f32.mrb[0].mxu0
        %1271 = vmatprep.mubr.bf16.mxu0 0
        %1272 = vmatmul.mubr.bf16.gmra.mrb[0].mxu0 %v832
        %v1273 = vpop.f32.mrb[0].mxu0
        %v1274 = vadd.f32 %v410, %v1273
        %v1275 = vpop.f32.mrb[0].mxu0
        %v1276 = vpop.f32.mrb[0].mxu0
        %v1277 = vadd.f32 %v410, %v1276
        %v1278 = vpop.f32.mrb[0].mxu0
        %1279 = vmatprep.mubr.bf16.mxu0 0
        %1280 = vmatmul.mubr.bf16.gmra.mrb[0].mxu0 %v835
        %v1281 = vpop.f32.mrb[0].mxu0
        %v1282 = vadd.f32 %v410, %v1281
        %v1283 = vpop.f32.mrb[0].mxu0
        %v1284 = vpop.f32.mrb[0].mxu0
        %v1285 = vadd.f32 %v410, %v1284
        %v1286 = vpop.f32.mrb[0].mxu0
        %1287 = vmatprep.mubr.bf16.mxu0 0
        %1288 = vmatmul.mubr.bf16.gmra.mrb[0].mxu0 %v838
        %v1289 = vpop.f32.mrb[0].mxu0
        %v1290 = vadd.f32 %v410, %v1289
        %v1291 = vpop.f32.mrb[0].mxu0
        %v1292 = vpop.f32.mrb[0].mxu0
        %v1293 = vadd.f32 %v410, %v1292
        %v1294 = vpop.f32.mrb[0].mxu0
        %1295 = vdwg.mxu0
        %v1296 = vmax.f32 %v882, 0.0
        %v1297 = vmax.f32 %v885, 0.0
        %v1298 = vmax.f32 %v890, 0.0
        %v1299 = vmax.f32 %v893, 0.0
        %v1300 = vmax.f32 %v898, 0.0
        %v1301 = vmax.f32 %v901, 0.0
        %v1302 = vmax.f32 %v906, 0.0
        %v1303 = vmax.f32 %v909, 0.0
        %v1304 = vmax.f32 %v914, 0.0
        %v1305 = vmax.f32 %v917, 0.0
        %v1306 = vmax.f32 %v922, 0.0
        %v1307 = vmax.f32 %v925, 0.0
        %v1308 = vmax.f32 %v930, 0.0
        %v1309 = vmax.f32 %v933, 0.0
        %v1310 = vmax.f32 %v938, 0.0
        %v1311 = vmax.f32 %v941, 0.0
        %v1312 = vmax.f32 %v946, 0.0
        %v1313 = vmax.f32 %v949, 0.0
        %v1314 = vmax.f32 %v954, 0.0
        %v1315 = vmax.f32 %v957, 0.0
        %v1316 = vmax.f32 %v962, 0.0
        %v1317 = vmax.f32 %v965, 0.0
        %v1318 = vmax.f32 %v970, 0.0
        %v1319 = vmax.f32 %v973, 0.0
        %v1320 = vmax.f32 %v978, 0.0
        %v1321 = vmax.f32 %v981, 0.0
        %v1322 = vmax.f32 %v986, 0.0
        %v1323 = vmax.f32 %v989, 0.0
        %v1324 = vmax.f32 %v994, 0.0
        %v1325 = vmax.f32 %v997, 0.0
        %v1326 = vmax.f32 %v1002, 0.0
        %v1327 = vmax.f32 %v1005, 0.0
        %v1328 = vmax.f32 %v1010, 0.0
        %v1329 = vmax.f32 %v1013, 0.0
        %v1330 = vmax.f32 %v1018, 0.0
        %v1331 = vmax.f32 %v1021, 0.0
        %v1332 = vmax.f32 %v1026, 0.0
        %v1333 = vmax.f32 %v1029, 0.0
        %v1334 = vmax.f32 %v1034, 0.0
        %v1335 = vmax.f32 %v1037, 0.0
        %v1336 = vmax.f32 %v1042, 0.0
        %v1337 = vmax.f32 %v1045, 0.0
        %v1338 = vmax.f32 %v1050, 0.0
        %v1339 = vmax.f32 %v1053, 0.0
        %v1340 = vmax.f32 %v1058, 0.0
        %v1341 = vmax.f32 %v1061, 0.0
        %v1342 = vmax.f32 %v1066, 0.0
        %v1343 = vmax.f32 %v1069, 0.0
        %v1344 = vmax.f32 %v1074, 0.0
        %v1345 = vmax.f32 %v1077, 0.0
        %v1346 = vmax.f32 %v1082, 0.0
        %v1347 = vmax.f32 %v1085, 0.0
        %v1348 = vmax.f32 %v1090, 0.0
        %v1349 = vmax.f32 %v1093, 0.0
        %v1350 = vmax.f32 %v1098, 0.0
        %v1351 = vmax.f32 %v1101, 0.0
        %v1352 = vmax.f32 %v1106, 0.0
        %v1353 = vmax.f32 %v1109, 0.0
        %v1354 = vmax.f32 %v1114, 0.0
        %v1355 = vmax.f32 %v1117, 0.0
        %v1356 = vmax.f32 %v1122, 0.0
        %v1357 = vmax.f32 %v1125, 0.0
        %v1358 = vmax.f32 %v1130, 0.0
        %v1359 = vmax.f32 %v1133, 0.0
        %v1360 = vmax.f32 %v1138, 0.0
        %v1361 = vmax.f32 %v1141, 0.0
        %v1362 = vmax.f32 %v1146, 0.0
        %v1363 = vmax.f32 %v1149, 0.0
        %v1364 = vmax.f32 %v1154, 0.0
        %v1365 = vmax.f32 %v1157, 0.0
        %v1366 = vmax.f32 %v1162, 0.0
        %v1367 = vmax.f32 %v1165, 0.0
        %v1368 = vmax.f32 %v1170, 0.0
        %v1369 = vmax.f32 %v1173, 0.0
        %v1370 = vmax.f32 %v1178, 0.0
        %v1371 = vmax.f32 %v1181, 0.0
        %v1372 = vmax.f32 %v1186, 0.0
        %v1373 = vmax.f32 %v1189, 0.0
        %v1374 = vmax.f32 %v1194, 0.0
        %v1375 = vmax.f32 %v1197, 0.0
        %v1376 = vmax.f32 %v1202, 0.0
        %v1377 = vmax.f32 %v1205, 0.0
        %v1378 = vmax.f32 %v1210, 0.0
        %v1379 = vmax.f32 %v1213, 0.0
        %v1380 = vmax.f32 %v1218, 0.0
        %v1381 = vmax.f32 %v1221, 0.0
        %v1382 = vmax.f32 %v1226, 0.0
        %v1383 = vmax.f32 %v1229, 0.0
        %v1384 = vmax.f32 %v1234, 0.0
        %v1385 = vmax.f32 %v1237, 0.0
        %v1386 = vmax.f32 %v1242, 0.0
        %v1387 = vmax.f32 %v1245, 0.0
        %v1388 = vmax.f32 %v1250, 0.0
        %v1389 = vmax.f32 %v1253, 0.0
        %v1390 = vmax.f32 %v1258, 0.0
        %v1391 = vmax.f32 %v1261, 0.0
        %v1392 = vmax.f32 %v1266, 0.0
        %v1393 = vmax.f32 %v1269, 0.0
        %v1394 = vmax.f32 %v1274, 0.0
        %v1395 = vmax.f32 %v1277, 0.0
        %v1396 = vmax.f32 %v1282, 0.0
        %v1397 = vmax.f32 %v1285, 0.0
        %v1398 = vmax.f32 %v1290, 0.0
        %v1399 = vmax.f32 %v1293, 0.0
        %v1400 = vpack.c.bf16 %v1297, %v1296
        %v1401 = vpack.c.bf16 %v1299, %v1298
        %v1402 = vpack.c.bf16 %v1301, %v1300
        %v1403 = vpack.c.bf16 %v1303, %v1302
        %v1404 = vpack.c.bf16 %v1305, %v1304
        %v1405 = vpack.c.bf16 %v1307, %v1306
        %v1406 = vpack.c.bf16 %v1309, %v1308
        %v1407 = vpack.c.bf16 %v1311, %v1310
        %v1408 = vpack.c.bf16 %v1313, %v1312
        %v1409 = vpack.c.bf16 %v1315, %v1314
        %v1410 = vpack.c.bf16 %v1317, %v1316
        %v1411 = vpack.c.bf16 %v1319, %v1318
        %v1412 = vpack.c.bf16 %v1321, %v1320
        %v1413 = vpack.c.bf16 %v1323, %v1322
        %v1414 = vpack.c.bf16 %v1325, %v1324
        %v1415 = vpack.c.bf16 %v1327, %v1326
        %v1416 = vpack.c.bf16 %v1329, %v1328
        %v1417 = vpack.c.bf16 %v1331, %v1330
        %v1418 = vpack.c.bf16 %v1333, %v1332
        %v1419 = vpack.c.bf16 %v1335, %v1334
        %v1420 = vpack.c.bf16 %v1337, %v1336
        %v1421 = vpack.c.bf16 %v1339, %v1338
        %v1422 = vpack.c.bf16 %v1341, %v1340
        %v1423 = vpack.c.bf16 %v1343, %v1342
        %v1424 = vpack.c.bf16 %v1345, %v1344
        %v1425 = vpack.c.bf16 %v1347, %v1346
        %v1426 = vpack.c.bf16 %v1349, %v1348
        %v1427 = vpack.c.bf16 %v1351, %v1350
        %v1428 = vpack.c.bf16 %v1353, %v1352
        %v1429 = vpack.c.bf16 %v1355, %v1354
        %v1430 = vpack.c.bf16 %v1357, %v1356
        %v1431 = vpack.c.bf16 %v1359, %v1358
        %v1432 = vpack.c.bf16 %v1361, %v1360
        %v1433 = vpack.c.bf16 %v1363, %v1362
        %v1434 = vpack.c.bf16 %v1365, %v1364
        %v1435 = vpack.c.bf16 %v1367, %v1366
        %v1436 = vpack.c.bf16 %v1369, %v1368
        %v1437 = vpack.c.bf16 %v1371, %v1370
        %v1438 = vpack.c.bf16 %v1373, %v1372
        %v1439 = vpack.c.bf16 %v1375, %v1374
        %v1440 = vpack.c.bf16 %v1377, %v1376
        %v1441 = vpack.c.bf16 %v1379, %v1378
        %v1442 = vpack.c.bf16 %v1381, %v1380
        %v1443 = vpack.c.bf16 %v1383, %v1382
        %v1444 = vpack.c.bf16 %v1385, %v1384
        %v1445 = vpack.c.bf16 %v1387, %v1386
        %v1446 = vpack.c.bf16 %v1389, %v1388
        %v1447 = vpack.c.bf16 %v1391, %v1390
        %v1448 = vpack.c.bf16 %v1393, %v1392
        %v1449 = vpack.c.bf16 %v1395, %v1394
        %v1450 = vpack.c.bf16 %v1397, %v1396
        %v1451 = vpack.c.bf16 %v1399, %v1398
        %v1452 = vld [vmem:[%s4] sm:$0xf]
        %v1453 = vld [vmem:[%s4 + $0x4] sm:$0xf]
        %v1454 = vld [vmem:[%s4 + $0x8] sm:$0xf]
        %v1455 = vld [vmem:[%s4 + $0xc] sm:$0xf]
        %v1456 = vld [vmem:[%s4 + $0x10] sm:$0xf]
        %v1457 = vld [vmem:[%s4 + $0x14] sm:$0xf]
        %v1458 = vld [vmem:[%s4 + $0x18] sm:$0xf]
        %v1459 = vld [vmem:[%s4 + $0x1c] sm:$0xf]
        %v1460 = vld [vmem:[%s4 + $0x20] sm:$0xf]
        %v1461 = vld [vmem:[%s4 + $0x24] sm:$0xf]
        %v1462 = vld [vmem:[%s4 + $0x28] sm:$0xf]
        %v1463 = vld [vmem:[%s4 + $0x2c] sm:$0xf]
        %v1464 = vld [vmem:[%s4 + $0x30] sm:$0xf]
        %v1465 = vld [vmem:[%s4 + $0x34] sm:$0xf]
        %v1466 = vld [vmem:[%s4 + $0x38] sm:$0xf]
        %v1467 = vld [vmem:[%s4 + $0x3c] sm:$0xf]
        %v1468 = vld [vmem:[%s4 + $0x40] sm:$0xf]
        %v1469 = vld [vmem:[%s4 + $0x44] sm:$0xf]
        %v1470 = vld [vmem:[%s5] sm:$0x1]
        %v1471 = vld [vmem:[%s3] sm:$0xff]
        %v1472 = vld [vmem:[%s3 + $0x8] sm:$0xff]
        %v1473 = vld [vmem:[%s3 + $0x10] sm:$0xff]
        %v1474 = vld [vmem:[%s3 + $0x18] sm:$0xff]
        %v1475 = vld [vmem:[%s3 + $0x20] sm:$0xff]
        %v1476 = vld [vmem:[%s3 + $0x28] sm:$0xff]
        %v1477 = vld [vmem:[%s3 + $0x30] sm:$0x11]
        %v1485 = vunpack.c.l.b16 %v1471
        %v1486 = vunpack.c.h.b16 %v1471
        %v1487 = vunpack.c.l.b16 %v1472
        %v1488 = vunpack.c.h.b16 %v1472
        %v1489 = vunpack.c.l.b16 %v1473
        %v1490 = vunpack.c.h.b16 %v1473
        %v1491 = vunpack.c.l.b16 %v1474
        %v1492 = vunpack.c.h.b16 %v1474
        %v1493 = vunpack.c.l.b16 %v1475
        %v1494 = vunpack.c.h.b16 %v1475
        %v1495 = vunpack.c.l.b16 %v1476
        %v1496 = vunpack.c.h.b16 %v1476
        %v1497 = vunpack.c.l.b16 %v1477
        %v1498 = vunpack.c.h.b16 %v1477
        %v1499 = vpack.c.b16 %v1487, %v1485
        %v1500 = vpack.c.b16 %v1488, %v1486
        %v1501 = vpack.c.b16 %v1491, %v1489
        %v1502 = vpack.c.b16 %v1492, %v1490
        %v1503 = vpack.c.b16 %v1495, %v1493
        %v1504 = vpack.c.b16 %v1496, %v1494
        %v1505 = vpack.c.b16 %v1497, %v1497
        %v1506 = vpack.c.b16 %v1498, %v1498
        %vm1511 = vcmask 654336
        %v1513 = vsel %vm1511, %v1500, 0
        %v1516 = vsel %vm1511, %v1502, 0
        %v1519 = vsel %vm1511, %v1504, 0
        %v1522 = vsel %vm1511, %v1506, 0
        %1524 = vmatprep.subr.bf16.mxu0 0
        %1525 = vmatpush1.bf16.msra.mxu0 %v1400
        %1526 = vmatprep.subr.bf16.mxu0 0
        %1527 = vmatpush1.bf16.msra.mxu0 %v1401
        %1528 = vmatprep.subr.bf16.mxu0 0
        %1529 = vmatpush1.bf16.msra.mxu0 %v1402
        %1530 = vmatprep.subr.bf16.mxu0 0
        %1531 = vmatpush1.bf16.msra.mxu0 %v1403
        %1532 = vmatprep.subr.bf16.mxu0 0
        %1533 = vmatpush1.bf16.msra.mxu0 %v1404
        %1534 = vmatprep.subr.bf16.mxu0 0
        %1535 = vmatpush1.bf16.msra.mxu0 %v1405
        %1536 = vmatprep.subr.bf16.mxu0 0
        %1537 = vmatpush1.bf16.msra.mxu0 %v1406
        %1538 = vmatprep.subr.bf16.mxu0 0
        %1539 = vmatpush1.bf16.msra.mxu0 %v1407
        %1540 = vmatprep.subr.bf16.mxu0 0
        %1541 = vmatpush1.bf16.msra.mxu0 %v1408
        %1542 = vmatprep.subr.bf16.mxu0 0
        %1543 = vmatpush1.bf16.msra.mxu0 %v1409
        %1544 = vmatprep.subr.bf16.mxu0 0
        %1545 = vmatpush1.bf16.msra.mxu0 %v1410
        %1546 = vmatprep.subr.bf16.mxu0 0
        %1547 = vmatpush1.bf16.msra.mxu0 %v1411
        %1548 = vmatprep.subr.bf16.mxu0 0
        %1549 = vmatpush1.bf16.msra.mxu0 %v1412
        %1550 = vmatprep.subr.bf16.mxu0 0
        %1551 = vmatpush1.bf16.msra.mxu0 0
        %1552 = vmatprep.subr.bf16.mxu0 0
        %1553 = vmatpush1.bf16.msra.mxu0 0
        %1554 = vmatprep.subr.bf16.mxu0 0
        %1555 = vmatpush1.bf16.msra.mxu0 0
        %1556 = vmatprep.mubr.bf16.mxu0 %v1513
        %1557 = vmatmul.mubr.bf16.gmra.mrb[0].mxu0 %v1499
        %v1558 = vpop.f32.mrb[0].mxu0
        %v1559 = vadd.f32 0.0, %v1558
        %v1560 = vpop.f32.mrb[0].mxu0
        %v1561 = vpop.f32.mrb[0].mxu0
        %v1562 = vadd.f32 0.0, %v1561
        %v1563 = vpop.f32.mrb[0].mxu0
        %1564 = vmatprep.mubr.bf16.mxu0 %v1516
        %1565 = vmatmul.mubr.bf16.gmra.mrb[0].mxu0 %v1501
        %v1566 = vpop.f32.mrb[0].mxu0
        %v1567 = vadd.f32 0.0, %v1566
        %v1568 = vpop.f32.mrb[0].mxu0
        %v1569 = vpop.f32.mrb[0].mxu0
        %v1570 = vadd.f32 0.0, %v1569
        %v1571 = vpop.f32.mrb[0].mxu0
        %1572 = vmatprep.mubr.bf16.mxu0 %v1519
        %1573 = vmatmul.mubr.bf16.gmra.mrb[0].mxu0 %v1503
        %v1574 = vpop.f32.mrb[0].mxu0
        %v1575 = vadd.f32 0.0, %v1574
        %v1576 = vpop.f32.mrb[0].mxu0
        %v1577 = vpop.f32.mrb[0].mxu0
        %v1578 = vadd.f32 0.0, %v1577
        %v1579 = vpop.f32.mrb[0].mxu0
        %1580 = vmatprep.mubr.bf16.mxu0 %v1522
        %1581 = vmatmul.mubr.bf16.gmra.mrb[0].mxu0 %v1505
        %v1582 = vpop.f32.mrb[0].mxu0
        %v1583 = vadd.f32 0.0, %v1582
        %v1584 = vpop.f32.mrb[0].mxu0
        %v1585 = vpop.f32.mrb[0].mxu0
        %v1586 = vpop.f32.mrb[0].mxu0
        %1587 = vdwg.mxu0
        %s1588 = scalar_lea.vmem %s3, 56
        %v1589 = vld [vmem:[%s1588] sm:$0xff]
        %v1590 = vld [vmem:[%s1588 + $0x8] sm:$0xff]
        %v1591 = vld [vmem:[%s1588 + $0x10] sm:$0xff]
        %v1592 = vld [vmem:[%s1588 + $0x18] sm:$0xff]
        %v1593 = vld [vmem:[%s1588 + $0x20] sm:$0xff]
        %v1594 = vld [vmem:[%s1588 + $0x28] sm:$0xff]
        %v1595 = vld [vmem:[%s1588 + $0x30] sm:$0x11]
        %v1603 = vunpack.c.l.b16 %v1589
        %v1604 = vunpack.c.h.b16 %v1589
        %v1605 = vunpack.c.l.b16 %v1590
        %v1606 = vunpack.c.h.b16 %v1590
        %v1607 = vunpack.c.l.b16 %v1591
        %v1608 = vunpack.c.h.b16 %v1591
        %v1609 = vunpack.c.l.b16 %v1592
        %v1610 = vunpack.c.h.b16 %v1592
        %v1611 = vunpack.c.l.b16 %v1593
        %v1612 = vunpack.c.h.b16 %v1593
        %v1613 = vunpack.c.l.b16 %v1594
        %v1614 = vunpack.c.h.b16 %v1594
        %v1615 = vunpack.c.l.b16 %v1595
        %v1616 = vunpack.c.h.b16 %v1595
        %v1617 = vpack.c.b16 %v1605, %v1603
        %v1618 = vpack.c.b16 %v1606, %v1604
        %v1619 = vpack.c.b16 %v1609, %v1607
        %v1620 = vpack.c.b16 %v1610, %v1608
        %v1621 = vpack.c.b16 %v1613, %v1611
        %v1622 = vpack.c.b16 %v1614, %v1612
        %v1623 = vpack.c.b16 %v1615, %v1615
        %v1624 = vpack.c.b16 %v1616, %v1616
        %v1630 = vsel %vm1511, %v1618, 0
        %v1633 = vsel %vm1511, %v1620, 0
        %v1636 = vsel %vm1511, %v1622, 0
        %v1639 = vsel %vm1511, %v1624, 0
        %1641 = vmatprep.subr.bf16.mxu0 0
        %1642 = vmatpush1.bf16.msra.mxu0 %v1400
        %1643 = vmatprep.subr.bf16.mxu0 0
        %1644 = vmatpush1.bf16.msra.mxu0 %v1401
        %1645 = vmatprep.subr.bf16.mxu0 0
        %1646 = vmatpush1.bf16.msra.mxu0 %v1402
        %1647 = vmatprep.subr.bf16.mxu0 0
        %1648 = vmatpush1.bf16.msra.mxu0 %v1403
        %1649 = vmatprep.subr.bf16.mxu0 0
        %1650 = vmatpush1.bf16.msra.mxu0 %v1404
        %1651 = vmatprep.subr.bf16.mxu0 0
        %1652 = vmatpush1.bf16.msra.mxu0 %v1405
        %1653 = vmatprep.subr.bf16.mxu0 0
        %1654 = vmatpush1.bf16.msra.mxu0 %v1406
        %1655 = vmatprep.subr.bf16.mxu0 0
        %1656 = vmatpush1.bf16.msra.mxu0 %v1407
        %1657 = vmatprep.subr.bf16.mxu0 0
        %1658 = vmatpush1.bf16.msra.mxu0 %v1408
        %1659 = vmatprep.subr.bf16.mxu0 0
        %1660 = vmatpush1.bf16.msra.mxu0 %v1409
        %1661 = vmatprep.subr.bf16.mxu0 0
        %1662 = vmatpush1.bf16.msra.mxu0 %v1410
        %1663 = vmatprep.subr.bf16.mxu0 0
        %1664 = vmatpush1.bf16.msra.mxu0 %v1411
        %1665 = vmatprep.subr.bf16.mxu0 0
        %1666 = vmatpush1.bf16.msra.mxu0 %v1412
        %1667 = vmatprep.subr.bf16.mxu0 0
        %1668 = vmatpush1.bf16.msra.mxu0 0
        %1669 = vmatprep.subr.bf16.mxu0 0
        %1670 = vmatpush1.bf16.msra.mxu0 0
        %1671 = vmatprep.subr.bf16.mxu0 0
        %1672 = vmatpush1.bf16.msra.mxu0 0
        %1673 = vmatprep.mubr.bf16.mxu0 %v1630
        %1674 = vmatmul.mubr.bf16.gmra.mrb[0].mxu0 %v1617
        %v1675 = vpop.f32.mrb[0].mxu0
        %v1676 = vadd.f32 0.0, %v1675
        %v1677 = vpop.f32.mrb[0].mxu0
        %v1678 = vpop.f32.mrb[0].mxu0
        %v1679 = vadd.f32 0.0, %v1678
        %v1680 = vpop.f32.mrb[0].mxu0
        %1681 = vmatprep.mubr.bf16.mxu0 %v1633
        %1682 = vmatmul.mubr.bf16.gmra.mrb[0].mxu0 %v1619
        %v1683 = vpop.f32.mrb[0].mxu0
        %v1684 = vadd.f32 0.0, %v1683
        %v1685 = vpop.f32.mrb[0].mxu0
        %v1686 = vpop.f32.mrb[0].mxu0
        %v1687 = vadd.f32 0.0, %v1686
        %v1688 = vpop.f32.mrb[0].mxu0
        %1689 = vmatprep.mubr.bf16.mxu0 %v1636
        %1690 = vmatmul.mubr.bf16.gmra.mrb[0].mxu0 %v1621
        %v1691 = vpop.f32.mrb[0].mxu0
        %v1692 = vadd.f32 0.0, %v1691
        %v1693 = vpop.f32.mrb[0].mxu0
        %v1694 = vpop.f32.mrb[0].mxu0
        %v1695 = vadd.f32 0.0, %v1694
        %v1696 = vpop.f32.mrb[0].mxu0
        %1697 = vmatprep.mubr.bf16.mxu0 %v1639
        %1698 = vmatmul.mubr.bf16.gmra.mrb[0].mxu0 %v1623
        %v1699 = vpop.f32.mrb[0].mxu0
        %v1700 = vadd.f32 0.0, %v1699
        %v1701 = vpop.f32.mrb[0].mxu0
        %v1702 = vpop.f32.mrb[0].mxu0
        %v1703 = vpop.f32.mrb[0].mxu0
        %1704 = vdwg.mxu0
        %s1705 = scalar_lea.vmem %s3, 112
        %v1706 = vld [vmem:[%s1705] sm:$0xff]
        %v1707 = vld [vmem:[%s1705 + $0x8] sm:$0xff]
        %v1708 = vld [vmem:[%s1705 + $0x10] sm:$0xff]
        %v1709 = vld [vmem:[%s1705 + $0x18] sm:$0xff]
        %v1710 = vld [vmem:[%s1705 + $0x20] sm:$0xff]
        %v1711 = vld [vmem:[%s1705 + $0x28] sm:$0xff]
        %v1712 = vld [vmem:[%s1705 + $0x30] sm:$0x11]
        %v1720 = vunpack.c.l.b16 %v1706
        %v1721 = vunpack.c.h.b16 %v1706
        %v1722 = vunpack.c.l.b16 %v1707
        %v1723 = vunpack.c.h.b16 %v1707
        %v1724 = vunpack.c.l.b16 %v1708
        %v1725 = vunpack.c.h.b16 %v1708
        %v1726 = vunpack.c.l.b16 %v1709
        %v1727 = vunpack.c.h.b16 %v1709
        %v1728 = vunpack.c.l.b16 %v1710
        %v1729 = vunpack.c.h.b16 %v1710
        %v1730 = vunpack.c.l.b16 %v1711
        %v1731 = vunpack.c.h.b16 %v1711
        %v1732 = vunpack.c.l.b16 %v1712
        %v1733 = vunpack.c.h.b16 %v1712
        %v1734 = vpack.c.b16 %v1722, %v1720
        %v1735 = vpack.c.b16 %v1723, %v1721
        %v1736 = vpack.c.b16 %v1726, %v1724
        %v1737 = vpack.c.b16 %v1727, %v1725
        %v1738 = vpack.c.b16 %v1730, %v1728
        %v1739 = vpack.c.b16 %v1731, %v1729
        %v1740 = vpack.c.b16 %v1732, %v1732
        %v1741 = vpack.c.b16 %v1733, %v1733
        %v1747 = vsel %vm1511, %v1735, 0
        %v1750 = vsel %vm1511, %v1737, 0
        %v1753 = vsel %vm1511, %v1739, 0
        %v1756 = vsel %vm1511, %v1741, 0
        %1758 = vmatprep.subr.bf16.mxu0 0
        %1759 = vmatpush1.bf16.msra.mxu0 %v1400
        %1760 = vmatprep.subr.bf16.mxu0 0
        %1761 = vmatpush1.bf16.msra.mxu0 %v1401
        %1762 = vmatprep.subr.bf16.mxu0 0
        %1763 = vmatpush1.bf16.msra.mxu0 %v1402
        %1764 = vmatprep.subr.bf16.mxu0 0
        %1765 = vmatpush1.bf16.msra.mxu0 %v1403
        %1766 = vmatprep.subr.bf16.mxu0 0
        %1767 = vmatpush1.bf16.msra.mxu0 %v1404
        %1768 = vmatprep.subr.bf16.mxu0 0
        %1769 = vmatpush1.bf16.msra.mxu0 %v1405
        %1770 = vmatprep.subr.bf16.mxu0 0
        %1771 = vmatpush1.bf16.msra.mxu0 %v1406
        %1772 = vmatprep.subr.bf16.mxu0 0
        %1773 = vmatpush1.bf16.msra.mxu0 %v1407
        %1774 = vmatprep.subr.bf16.mxu0 0
        %1775 = vmatpush1.bf16.msra.mxu0 %v1408
        %1776 = vmatprep.subr.bf16.mxu0 0
        %1777 = vmatpush1.bf16.msra.mxu0 %v1409
        %1778 = vmatprep.subr.bf16.mxu0 0
        %1779 = vmatpush1.bf16.msra.mxu0 %v1410
        %1780 = vmatprep.subr.bf16.mxu0 0
        %1781 = vmatpush1.bf16.msra.mxu0 %v1411
        %1782 = vmatprep.subr.bf16.mxu0 0
        %1783 = vmatpush1.bf16.msra.mxu0 %v1412
        %1784 = vmatprep.subr.bf16.mxu0 0
        %1785 = vmatpush1.bf16.msra.mxu0 0
        %1786 = vmatprep.subr.bf16.mxu0 0
        %1787 = vmatpush1.bf16.msra.mxu0 0
        %1788 = vmatprep.subr.bf16.mxu0 0
        %1789 = vmatpush1.bf16.msra.mxu0 0
        %1790 = vmatprep.mubr.bf16.mxu0 %v1747
        %1791 = vmatmul.mubr.bf16.gmra.mrb[0].mxu0 %v1734
        %v1792 = vpop.f32.mrb[0].mxu0
        %v1793 = vadd.f32 0.0, %v1792
        %v1794 = vpop.f32.mrb[0].mxu0
        %v1795 = vpop.f32.mrb[0].mxu0
        %v1796 = vadd.f32 0.0, %v1795
        %v1797 = vpop.f32.mrb[0].mxu0
        %1798 = vmatprep.mubr.bf16.mxu0 %v1750
        %1799 = vmatmul.mubr.bf16.gmra.mrb[0].mxu0 %v1736
        %v1800 = vpop.f32.mrb[0].mxu0
        %v1801 = vadd.f32 0.0, %v1800
        %v1802 = vpop.f32.mrb[0].mxu0
        %v1803 = vpop.f32.mrb[0].mxu0
        %v1804 = vadd.f32 0.0, %v1803
        %v1805 = vpop.f32.mrb[0].mxu0
        %1806 = vmatprep.mubr.bf16.mxu0 %v1753
        %1807 = vmatmul.mubr.bf16.gmra.mrb[0].mxu0 %v1738
        %v1808 = vpop.f32.mrb[0].mxu0
        %v1809 = vadd.f32 0.0, %v1808
        %v1810 = vpop.f32.mrb[0].mxu0
        %v1811 = vpop.f32.mrb[0].mxu0
        %v1812 = vadd.f32 0.0, %v1811
        %v1813 = vpop.f32.mrb[0].mxu0
        %1814 = vmatprep.mubr.bf16.mxu0 %v1756
        %1815 = vmatmul.mubr.bf16.gmra.mrb[0].mxu0 %v1740
        %v1816 = vpop.f32.mrb[0].mxu0
        %v1817 = vadd.f32 0.0, %v1816
        %v1818 = vpop.f32.mrb[0].mxu0
        %v1819 = vpop.f32.mrb[0].mxu0
        %v1820 = vpop.f32.mrb[0].mxu0
        %1821 = vdwg.mxu0
        %s1822 = scalar_lea.vmem %s3, 168
        %v1823 = vld [vmem:[%s1822] sm:$0xff]
        %v1824 = vld [vmem:[%s1822 + $0x8] sm:$0xff]
        %v1825 = vld [vmem:[%s1822 + $0x10] sm:$0xff]
        %v1826 = vld [vmem:[%s1822 + $0x18] sm:$0xff]
        %v1827 = vld [vmem:[%s1822 + $0x20] sm:$0xff]
        %v1828 = vld [vmem:[%s1822 + $0x28] sm:$0xff]
        %v1829 = vld [vmem:[%s1822 + $0x30] sm:$0x11]
        %v1837 = vunpack.c.l.b16 %v1823
        %v1838 = vunpack.c.h.b16 %v1823
        %v1839 = vunpack.c.l.b16 %v1824
        %v1840 = vunpack.c.h.b16 %v1824
        %v1841 = vunpack.c.l.b16 %v1825
        %v1842 = vunpack.c.h.b16 %v1825
        %v1843 = vunpack.c.l.b16 %v1826
        %v1844 = vunpack.c.h.b16 %v1826
        %v1845 = vunpack.c.l.b16 %v1827
        %v1846 = vunpack.c.h.b16 %v1827
        %v1847 = vunpack.c.l.b16 %v1828
        %v1848 = vunpack.c.h.b16 %v1828
        %v1849 = vunpack.c.l.b16 %v1829
        %v1850 = vunpack.c.h.b16 %v1829
        %v1851 = vpack.c.b16 %v1839, %v1837
        %v1852 = vpack.c.b16 %v1840, %v1838
        %v1853 = vpack.c.b16 %v1843, %v1841
        %v1854 = vpack.c.b16 %v1844, %v1842
        %v1855 = vpack.c.b16 %v1847, %v1845
        %v1856 = vpack.c.b16 %v1848, %v1846
        %v1857 = vpack.c.b16 %v1849, %v1849
        %v1858 = vpack.c.b16 %v1850, %v1850
        %v1864 = vsel %vm1511, %v1852, 0
        %v1867 = vsel %vm1511, %v1854, 0
        %v1870 = vsel %vm1511, %v1856, 0
        %v1873 = vsel %vm1511, %v1858, 0
        %1875 = vmatprep.subr.bf16.mxu0 0
        %1876 = vmatpush1.bf16.msra.mxu0 %v1400
        %1877 = vmatprep.subr.bf16.mxu0 0
        %1878 = vmatpush1.bf16.msra.mxu0 %v1401
        %1879 = vmatprep.subr.bf16.mxu0 0
        %1880 = vmatpush1.bf16.msra.mxu0 %v1402
        %1881 = vmatprep.subr.bf16.mxu0 0
        %1882 = vmatpush1.bf16.msra.mxu0 %v1403
        %1883 = vmatprep.subr.bf16.mxu0 0
        %1884 = vmatpush1.bf16.msra.mxu0 %v1404
        %1885 = vmatprep.subr.bf16.mxu0 0
        %1886 = vmatpush1.bf16.msra.mxu0 %v1405
        %1887 = vmatprep.subr.bf16.mxu0 0
        %1888 = vmatpush1.bf16.msra.mxu0 %v1406
        %1889 = vmatprep.subr.bf16.mxu0 0
        %1890 = vmatpush1.bf16.msra.mxu0 %v1407
        %1891 = vmatprep.subr.bf16.mxu0 0
        %1892 = vmatpush1.bf16.msra.mxu0 %v1408
        %1893 = vmatprep.subr.bf16.mxu0 0
        %1894 = vmatpush1.bf16.msra.mxu0 %v1409
        %1895 = vmatprep.subr.bf16.mxu0 0
        %1896 = vmatpush1.bf16.msra.mxu0 %v1410
        %1897 = vmatprep.subr.bf16.mxu0 0
        %1898 = vmatpush1.bf16.msra.mxu0 %v1411
        %1899 = vmatprep.subr.bf16.mxu0 0
        %1900 = vmatpush1.bf16.msra.mxu0 %v1412
        %1901 = vmatprep.subr.bf16.mxu0 0
        %1902 = vmatpush1.bf16.msra.mxu0 0
        %1903 = vmatprep.subr.bf16.mxu0 0
        %1904 = vmatpush1.bf16.msra.mxu0 0
        %1905 = vmatprep.subr.bf16.mxu0 0
        %1906 = vmatpush1.bf16.msra.mxu0 0
        %1907 = vmatprep.mubr.bf16.mxu0 %v1864
        %1908 = vmatmul.mubr.bf16.gmra.mrb[0].mxu0 %v1851
        %v1909 = vpop.f32.mrb[0].mxu0
        %v1910 = vadd.f32 0.0, %v1909
        %v1911 = vpop.f32.mrb[0].mxu0
        %v1912 = vpop.f32.mrb[0].mxu0
        %v1913 = vadd.f32 0.0, %v1912
        %v1914 = vpop.f32.mrb[0].mxu0
        %1915 = vmatprep.mubr.bf16.mxu0 %v1867
        %1916 = vmatmul.mubr.bf16.gmra.mrb[0].mxu0 %v1853
        %v1917 = vpop.f32.mrb[0].mxu0
        %v1918 = vadd.f32 0.0, %v1917
        %v1919 = vpop.f32.mrb[0].mxu0
        %v1920 = vpop.f32.mrb[0].mxu0
        %v1921 = vadd.f32 0.0, %v1920
        %v1922 = vpop.f32.mrb[0].mxu0
        %1923 = vmatprep.mubr.bf16.mxu0 %v1870
        %1924 = vmatmul.mubr.bf16.gmra.mrb[0].mxu0 %v1855
        %v1925 = vpop.f32.mrb[0].mxu0
        %v1926 = vadd.f32 0.0, %v1925
        %v1927 = vpop.f32.mrb[0].mxu0
        %v1928 = vpop.f32.mrb[0].mxu0
        %v1929 = vadd.f32 0.0, %v1928
        %v1930 = vpop.f32.mrb[0].mxu0
        %1931 = vmatprep.mubr.bf16.mxu0 %v1873
        %1932 = vmatmul.mubr.bf16.gmra.mrb[0].mxu0 %v1857
        %v1933 = vpop.f32.mrb[0].mxu0
        %v1934 = vadd.f32 0.0, %v1933
        %v1935 = vpop.f32.mrb[0].mxu0
        %v1936 = vpop.f32.mrb[0].mxu0
        %v1937 = vpop.f32.mrb[0].mxu0
        %1938 = vdwg.mxu0
        %s1939 = scalar_lea.vmem %s3, 224
        %v1940 = vld [vmem:[%s1939] sm:$0xff]
        %v1941 = vld [vmem:[%s1939 + $0x8] sm:$0xff]
        %v1942 = vld [vmem:[%s1939 + $0x10] sm:$0xff]
        %v1943 = vld [vmem:[%s1939 + $0x18] sm:$0xff]
        %v1944 = vld [vmem:[%s1939 + $0x20] sm:$0xff]
        %v1945 = vld [vmem:[%s1939 + $0x28] sm:$0xff]
        %v1946 = vld [vmem:[%s1939 + $0x30] sm:$0x11]
        %v1954 = vunpack.c.l.b16 %v1940
        %v1955 = vunpack.c.h.b16 %v1940
        %v1956 = vunpack.c.l.b16 %v1941
        %v1957 = vunpack.c.h.b16 %v1941
        %v1958 = vunpack.c.l.b16 %v1942
        %v1959 = vunpack.c.h.b16 %v1942
        %v1960 = vunpack.c.l.b16 %v1943
        %v1961 = vunpack.c.h.b16 %v1943
        %v1962 = vunpack.c.l.b16 %v1944
        %v1963 = vunpack.c.h.b16 %v1944
        %v1964 = vunpack.c.l.b16 %v1945
        %v1965 = vunpack.c.h.b16 %v1945
        %v1966 = vunpack.c.l.b16 %v1946
        %v1967 = vunpack.c.h.b16 %v1946
        %v1968 = vpack.c.b16 %v1956, %v1954
        %v1969 = vpack.c.b16 %v1957, %v1955
        %v1970 = vpack.c.b16 %v1960, %v1958
        %v1971 = vpack.c.b16 %v1961, %v1959
        %v1972 = vpack.c.b16 %v1964, %v1962
        %v1973 = vpack.c.b16 %v1965, %v1963
        %v1974 = vpack.c.b16 %v1966, %v1966
        %v1975 = vpack.c.b16 %v1967, %v1967
        %v1981 = vsel %vm1511, %v1969, 0
        %v1984 = vsel %vm1511, %v1971, 0
        %v1987 = vsel %vm1511, %v1973, 0
        %v1990 = vsel %vm1511, %v1975, 0
        %1992 = vmatprep.subr.bf16.mxu0 0
        %1993 = vmatpush1.bf16.msra.mxu0 %v1400
        %1994 = vmatprep.subr.bf16.mxu0 0
        %1995 = vmatpush1.bf16.msra.mxu0 %v1401
        %1996 = vmatprep.subr.bf16.mxu0 0
        %1997 = vmatpush1.bf16.msra.mxu0 %v1402
        %1998 = vmatprep.subr.bf16.mxu0 0
        %1999 = vmatpush1.bf16.msra.mxu0 %v1403
        %2000 = vmatprep.subr.bf16.mxu0 0
        %2001 = vmatpush1.bf16.msra.mxu0 %v1404
        %2002 = vmatprep.subr.bf16.mxu0 0
        %2003 = vmatpush1.bf16.msra.mxu0 %v1405
        %2004 = vmatprep.subr.bf16.mxu0 0
        %2005 = vmatpush1.bf16.msra.mxu0 %v1406
        %2006 = vmatprep.subr.bf16.mxu0 0
        %2007 = vmatpush1.bf16.msra.mxu0 %v1407
        %2008 = vmatprep.subr.bf16.mxu0 0
        %2009 = vmatpush1.bf16.msra.mxu0 %v1408
        %2010 = vmatprep.subr.bf16.mxu0 0
        %2011 = vmatpush1.bf16.msra.mxu0 %v1409
        %2012 = vmatprep.subr.bf16.mxu0 0
        %2013 = vmatpush1.bf16.msra.mxu0 %v1410
        %2014 = vmatprep.subr.bf16.mxu0 0
        %2015 = vmatpush1.bf16.msra.mxu0 %v1411
        %2016 = vmatprep.subr.bf16.mxu0 0
        %2017 = vmatpush1.bf16.msra.mxu0 %v1412
        %2018 = vmatprep.subr.bf16.mxu0 0
        %2019 = vmatpush1.bf16.msra.mxu0 0
        %2020 = vmatprep.subr.bf16.mxu0 0
        %2021 = vmatpush1.bf16.msra.mxu0 0
        %2022 = vmatprep.subr.bf16.mxu0 0
        %2023 = vmatpush1.bf16.msra.mxu0 0
        %2024 = vmatprep.mubr.bf16.mxu0 %v1981
        %2025 = vmatmul.mubr.bf16.gmra.mrb[0].mxu0 %v1968
        %v2026 = vpop.f32.mrb[0].mxu0
        %v2027 = vadd.f32 0.0, %v2026
        %v2028 = vpop.f32.mrb[0].mxu0
        %v2029 = vpop.f32.mrb[0].mxu0
        %v2030 = vadd.f32 0.0, %v2029
        %v2031 = vpop.f32.mrb[0].mxu0
        %2032 = vmatprep.mubr.bf16.mxu0 %v1984
        %2033 = vmatmul.mubr.bf16.gmra.mrb[0].mxu0 %v1970
        %v2034 = vpop.f32.mrb[0].mxu0
        %v2035 = vadd.f32 0.0, %v2034
        %v2036 = vpop.f32.mrb[0].mxu0
        %v2037 = vpop.f32.mrb[0].mxu0
        %v2038 = vadd.f32 0.0, %v2037
        %v2039 = vpop.f32.mrb[0].mxu0
        %2040 = vmatprep.mubr.bf16.mxu0 %v1987
        %2041 = vmatmul.mubr.bf16.gmra.mrb[0].mxu0 %v1972
        %v2042 = vpop.f32.mrb[0].mxu0
        %v2043 = vadd.f32 0.0, %v2042
        %v2044 = vpop.f32.mrb[0].mxu0
        %v2045 = vpop.f32.mrb[0].mxu0
        %v2046 = vadd.f32 0.0, %v2045
        %v2047 = vpop.f32.mrb[0].mxu0
        %2048 = vmatprep.mubr.bf16.mxu0 %v1990
        %2049 = vmatmul.mubr.bf16.gmra.mrb[0].mxu0 %v1974
        %v2050 = vpop.f32.mrb[0].mxu0
        %v2051 = vadd.f32 0.0, %v2050
        %v2052 = vpop.f32.mrb[0].mxu0
        %v2053 = vpop.f32.mrb[0].mxu0
        %v2054 = vpop.f32.mrb[0].mxu0
        %2055 = vdwg.mxu0
        %s2056 = scalar_lea.vmem %s3, 280
        %v2057 = vld [vmem:[%s2056] sm:$0xff]
        %v2058 = vld [vmem:[%s2056 + $0x8] sm:$0xff]
        %v2059 = vld [vmem:[%s2056 + $0x10] sm:$0xff]
        %v2060 = vld [vmem:[%s2056 + $0x18] sm:$0xff]
        %v2061 = vld [vmem:[%s2056 + $0x20] sm:$0xff]
        %v2062 = vld [vmem:[%s2056 + $0x28] sm:$0xff]
        %v2063 = vld [vmem:[%s2056 + $0x30] sm:$0x11]
        %v2071 = vunpack.c.l.b16 %v2057
        %v2072 = vunpack.c.h.b16 %v2057
        %v2073 = vunpack.c.l.b16 %v2058
        %v2074 = vunpack.c.h.b16 %v2058
        %v2075 = vunpack.c.l.b16 %v2059
        %v2076 = vunpack.c.h.b16 %v2059
        %v2077 = vunpack.c.l.b16 %v2060
        %v2078 = vunpack.c.h.b16 %v2060
        %v2079 = vunpack.c.l.b16 %v2061
        %v2080 = vunpack.c.h.b16 %v2061
        %v2081 = vunpack.c.l.b16 %v2062
        %v2082 = vunpack.c.h.b16 %v2062
        %v2083 = vunpack.c.l.b16 %v2063
        %v2084 = vunpack.c.h.b16 %v2063
        %v2085 = vpack.c.b16 %v2073, %v2071
        %v2086 = vpack.c.b16 %v2074, %v2072
        %v2087 = vpack.c.b16 %v2077, %v2075
        %v2088 = vpack.c.b16 %v2078, %v2076
        %v2089 = vpack.c.b16 %v2081, %v2079
        %v2090 = vpack.c.b16 %v2082, %v2080
        %v2091 = vpack.c.b16 %v2083, %v2083
        %v2092 = vpack.c.b16 %v2084, %v2084
        %v2098 = vsel %vm1511, %v2086, 0
        %v2101 = vsel %vm1511, %v2088, 0
        %v2104 = vsel %vm1511, %v2090, 0
        %v2107 = vsel %vm1511, %v2092, 0
        %2109 = vmatprep.subr.bf16.mxu0 0
        %2110 = vmatpush1.bf16.msra.mxu0 %v1400
        %2111 = vmatprep.subr.bf16.mxu0 0
        %2112 = vmatpush1.bf16.msra.mxu0 %v1401
        %2113 = vmatprep.subr.bf16.mxu0 0
        %2114 = vmatpush1.bf16.msra.mxu0 %v1402
        %2115 = vmatprep.subr.bf16.mxu0 0
        %2116 = vmatpush1.bf16.msra.mxu0 %v1403
        %2117 = vmatprep.subr.bf16.mxu0 0
        %2118 = vmatpush1.bf16.msra.mxu0 %v1404
        %2119 = vmatprep.subr.bf16.mxu0 0
        %2120 = vmatpush1.bf16.msra.mxu0 %v1405
        %2121 = vmatprep.subr.bf16.mxu0 0
        %2122 = vmatpush1.bf16.msra.mxu0 %v1406
        %2123 = vmatprep.subr.bf16.mxu0 0
        %2124 = vmatpush1.bf16.msra.mxu0 %v1407
        %2125 = vmatprep.subr.bf16.mxu0 0
        %2126 = vmatpush1.bf16.msra.mxu0 %v1408
        %2127 = vmatprep.subr.bf16.mxu0 0
        %2128 = vmatpush1.bf16.msra.mxu0 %v1409
        %2129 = vmatprep.subr.bf16.mxu0 0
        %2130 = vmatpush1.bf16.msra.mxu0 %v1410
        %2131 = vmatprep.subr.bf16.mxu0 0
        %2132 = vmatpush1.bf16.msra.mxu0 %v1411
        %2133 = vmatprep.subr.bf16.mxu0 0
        %2134 = vmatpush1.bf16.msra.mxu0 %v1412
        %2135 = vmatprep.subr.bf16.mxu0 0
        %2136 = vmatpush1.bf16.msra.mxu0 0
        %2137 = vmatprep.subr.bf16.mxu0 0
        %2138 = vmatpush1.bf16.msra.mxu0 0
        %2139 = vmatprep.subr.bf16.mxu0 0
        %2140 = vmatpush1.bf16.msra.mxu0 0
        %2141 = vmatprep.mubr.bf16.mxu0 %v2098
        %2142 = vmatmul.mubr.bf16.gmra.mrb[0].mxu0 %v2085
        %v2143 = vpop.f32.mrb[0].mxu0
        %v2144 = vadd.f32 0.0, %v2143
        %v2145 = vpop.f32.mrb[0].mxu0
        %v2146 = vpop.f32.mrb[0].mxu0
        %v2147 = vadd.f32 0.0, %v2146
        %v2148 = vpop.f32.mrb[0].mxu0
        %2149 = vmatprep.mubr.bf16.mxu0 %v2101
        %2150 = vmatmul.mubr.bf16.gmra.mrb[0].mxu0 %v2087
        %v2151 = vpop.f32.mrb[0].mxu0
        %v2152 = vadd.f32 0.0, %v2151
        %v2153 = vpop.f32.mrb[0].mxu0
        %v2154 = vpop.f32.mrb[0].mxu0
        %v2155 = vadd.f32 0.0, %v2154
        %v2156 = vpop.f32.mrb[0].mxu0
        %2157 = vmatprep.mubr.bf16.mxu0 %v2104
        %2158 = vmatmul.mubr.bf16.gmra.mrb[0].mxu0 %v2089
        %v2159 = vpop.f32.mrb[0].mxu0
        %v2160 = vadd.f32 0.0, %v2159
        %v2161 = vpop.f32.mrb[0].mxu0
        %v2162 = vpop.f32.mrb[0].mxu0
        %v2163 = vadd.f32 0.0, %v2162
        %v2164 = vpop.f32.mrb[0].mxu0
        %2165 = vmatprep.mubr.bf16.mxu0 %v2107
        %2166 = vmatmul.mubr.bf16.gmra.mrb[0].mxu0 %v2091
        %v2167 = vpop.f32.mrb[0].mxu0
        %v2168 = vadd.f32 0.0, %v2167
        %v2169 = vpop.f32.mrb[0].mxu0
        %v2170 = vpop.f32.mrb[0].mxu0
        %v2171 = vpop.f32.mrb[0].mxu0
        %2172 = vdwg.mxu0
        %s2173 = scalar_lea.vmem %s3, 336
        %v2174 = vld [vmem:[%s2173] sm:$0xff]
        %v2175 = vld [vmem:[%s2173 + $0x8] sm:$0xff]
        %v2176 = vld [vmem:[%s2173 + $0x10] sm:$0xff]
        %v2177 = vld [vmem:[%s2173 + $0x18] sm:$0xff]
        %v2178 = vld [vmem:[%s2173 + $0x20] sm:$0xff]
        %v2179 = vld [vmem:[%s2173 + $0x28] sm:$0xff]
        %v2180 = vld [vmem:[%s2173 + $0x30] sm:$0x11]
        %v2188 = vunpack.c.l.b16 %v2174
        %v2189 = vunpack.c.h.b16 %v2174
        %v2190 = vunpack.c.l.b16 %v2175
        %v2191 = vunpack.c.h.b16 %v2175
        %v2192 = vunpack.c.l.b16 %v2176
        %v2193 = vunpack.c.h.b16 %v2176
        %v2194 = vunpack.c.l.b16 %v2177
        %v2195 = vunpack.c.h.b16 %v2177
        %v2196 = vunpack.c.l.b16 %v2178
        %v2197 = vunpack.c.h.b16 %v2178
        %v2198 = vunpack.c.l.b16 %v2179
        %v2199 = vunpack.c.h.b16 %v2179
        %v2200 = vunpack.c.l.b16 %v2180
        %v2201 = vunpack.c.h.b16 %v2180
        %v2202 = vpack.c.b16 %v2190, %v2188
        %v2203 = vpack.c.b16 %v2191, %v2189
        %v2204 = vpack.c.b16 %v2194, %v2192
        %v2205 = vpack.c.b16 %v2195, %v2193
        %v2206 = vpack.c.b16 %v2198, %v2196
        %v2207 = vpack.c.b16 %v2199, %v2197
        %v2208 = vpack.c.b16 %v2200, %v2200
        %v2209 = vpack.c.b16 %v2201, %v2201
        %v2215 = vsel %vm1511, %v2203, 0
        %v2218 = vsel %vm1511, %v2205, 0
        %v2221 = vsel %vm1511, %v2207, 0
        %v2224 = vsel %vm1511, %v2209, 0
        %2226 = vmatprep.subr.bf16.mxu0 0
        %2227 = vmatpush1.bf16.msra.mxu0 %v1400
        %2228 = vmatprep.subr.bf16.mxu0 0
        %2229 = vmatpush1.bf16.msra.mxu0 %v1401
        %2230 = vmatprep.subr.bf16.mxu0 0
        %2231 = vmatpush1.bf16.msra.mxu0 %v1402
        %2232 = vmatprep.subr.bf16.mxu0 0
        %2233 = vmatpush1.bf16.msra.mxu0 %v1403
        %2234 = vmatprep.subr.bf16.mxu0 0
        %2235 = vmatpush1.bf16.msra.mxu0 %v1404
        %2236 = vmatprep.subr.bf16.mxu0 0
        %2237 = vmatpush1.bf16.msra.mxu0 %v1405
        %2238 = vmatprep.subr.bf16.mxu0 0
        %2239 = vmatpush1.bf16.msra.mxu0 %v1406
        %2240 = vmatprep.subr.bf16.mxu0 0
        %2241 = vmatpush1.bf16.msra.mxu0 %v1407
        %2242 = vmatprep.subr.bf16.mxu0 0
        %2243 = vmatpush1.bf16.msra.mxu0 %v1408
        %2244 = vmatprep.subr.bf16.mxu0 0
        %2245 = vmatpush1.bf16.msra.mxu0 %v1409
        %2246 = vmatprep.subr.bf16.mxu0 0
        %2247 = vmatpush1.bf16.msra.mxu0 %v1410
        %2248 = vmatprep.subr.bf16.mxu0 0
        %2249 = vmatpush1.bf16.msra.mxu0 %v1411
        %2250 = vmatprep.subr.bf16.mxu0 0
        %2251 = vmatpush1.bf16.msra.mxu0 %v1412
        %2252 = vmatprep.subr.bf16.mxu0 0
        %2253 = vmatpush1.bf16.msra.mxu0 0
        %2254 = vmatprep.subr.bf16.mxu0 0
        %2255 = vmatpush1.bf16.msra.mxu0 0
        %2256 = vmatprep.subr.bf16.mxu0 0
        %2257 = vmatpush1.bf16.msra.mxu0 0
        %2258 = vmatprep.mubr.bf16.mxu0 %v2215
        %2259 = vmatmul.mubr.bf16.gmra.mrb[0].mxu0 %v2202
        %v2260 = vpop.f32.mrb[0].mxu0
        %v2261 = vadd.f32 0.0, %v2260
        %v2262 = vpop.f32.mrb[0].mxu0
        %v2263 = vpop.f32.mrb[0].mxu0
        %v2264 = vadd.f32 0.0, %v2263
        %v2265 = vpop.f32.mrb[0].mxu0
        %2266 = vmatprep.mubr.bf16.mxu0 %v2218
        %2267 = vmatmul.mubr.bf16.gmra.mrb[0].mxu0 %v2204
        %v2268 = vpop.f32.mrb[0].mxu0
        %v2269 = vadd.f32 0.0, %v2268
        %v2270 = vpop.f32.mrb[0].mxu0
        %v2271 = vpop.f32.mrb[0].mxu0
        %v2272 = vadd.f32 0.0, %v2271
        %v2273 = vpop.f32.mrb[0].mxu0
        %2274 = vmatprep.mubr.bf16.mxu0 %v2221
        %2275 = vmatmul.mubr.bf16.gmra.mrb[0].mxu0 %v2206
        %v2276 = vpop.f32.mrb[0].mxu0
        %v2277 = vadd.f32 0.0, %v2276
        %v2278 = vpop.f32.mrb[0].mxu0
        %v2279 = vpop.f32.mrb[0].mxu0
        %v2280 = vadd.f32 0.0, %v2279
        %v2281 = vpop.f32.mrb[0].mxu0
        %2282 = vmatprep.mubr.bf16.mxu0 %v2224
        %2283 = vmatmul.mubr.bf16.gmra.mrb[0].mxu0 %v2208
        %v2284 = vpop.f32.mrb[0].mxu0
        %v2285 = vadd.f32 0.0, %v2284
        %v2286 = vpop.f32.mrb[0].mxu0
        %v2287 = vpop.f32.mrb[0].mxu0
        %v2288 = vpop.f32.mrb[0].mxu0
        %2289 = vdwg.mxu0
        %s2290 = scalar_lea.vmem %s3, 392
        %v2291 = vld [vmem:[%s2290] sm:$0xff]
        %v2292 = vld [vmem:[%s2290 + $0x8] sm:$0xff]
        %v2293 = vld [vmem:[%s2290 + $0x10] sm:$0xff]
        %v2294 = vld [vmem:[%s2290 + $0x18] sm:$0xff]
        %v2295 = vld [vmem:[%s2290 + $0x20] sm:$0xff]
        %v2296 = vld [vmem:[%s2290 + $0x28] sm:$0xff]
        %v2297 = vld [vmem:[%s2290 + $0x30] sm:$0x11]
        %v2305 = vunpack.c.l.b16 %v2291
        %v2306 = vunpack.c.h.b16 %v2291
        %v2307 = vunpack.c.l.b16 %v2292
        %v2308 = vunpack.c.h.b16 %v2292
        %v2309 = vunpack.c.l.b16 %v2293
        %v2310 = vunpack.c.h.b16 %v2293
        %v2311 = vunpack.c.l.b16 %v2294
        %v2312 = vunpack.c.h.b16 %v2294
        %v2313 = vunpack.c.l.b16 %v2295
        %v2314 = vunpack.c.h.b16 %v2295
        %v2315 = vunpack.c.l.b16 %v2296
        %v2316 = vunpack.c.h.b16 %v2296
        %v2317 = vunpack.c.l.b16 %v2297
        %v2318 = vunpack.c.h.b16 %v2297
        %v2319 = vpack.c.b16 %v2307, %v2305
        %v2320 = vpack.c.b16 %v2308, %v2306
        %v2321 = vpack.c.b16 %v2311, %v2309
        %v2322 = vpack.c.b16 %v2312, %v2310
        %v2323 = vpack.c.b16 %v2315, %v2313
        %v2324 = vpack.c.b16 %v2316, %v2314
        %v2325 = vpack.c.b16 %v2317, %v2317
        %v2326 = vpack.c.b16 %v2318, %v2318
        %v2332 = vsel %vm1511, %v2320, 0
        %v2335 = vsel %vm1511, %v2322, 0
        %v2338 = vsel %vm1511, %v2324, 0
        %v2341 = vsel %vm1511, %v2326, 0
        %2343 = vmatprep.subr.bf16.mxu0 0
        %2344 = vmatpush1.bf16.msra.mxu0 %v1400
        %2345 = vmatprep.subr.bf16.mxu0 0
        %2346 = vmatpush1.bf16.msra.mxu0 %v1401
        %2347 = vmatprep.subr.bf16.mxu0 0
        %2348 = vmatpush1.bf16.msra.mxu0 %v1402
        %2349 = vmatprep.subr.bf16.mxu0 0
        %2350 = vmatpush1.bf16.msra.mxu0 %v1403
        %2351 = vmatprep.subr.bf16.mxu0 0
        %2352 = vmatpush1.bf16.msra.mxu0 %v1404
        %2353 = vmatprep.subr.bf16.mxu0 0
        %2354 = vmatpush1.bf16.msra.mxu0 %v1405
        %2355 = vmatprep.subr.bf16.mxu0 0
        %2356 = vmatpush1.bf16.msra.mxu0 %v1406
        %2357 = vmatprep.subr.bf16.mxu0 0
        %2358 = vmatpush1.bf16.msra.mxu0 %v1407
        %2359 = vmatprep.subr.bf16.mxu0 0
        %2360 = vmatpush1.bf16.msra.mxu0 %v1408
        %2361 = vmatprep.subr.bf16.mxu0 0
        %2362 = vmatpush1.bf16.msra.mxu0 %v1409
        %2363 = vmatprep.subr.bf16.mxu0 0
        %2364 = vmatpush1.bf16.msra.mxu0 %v1410
        %2365 = vmatprep.subr.bf16.mxu0 0
        %2366 = vmatpush1.bf16.msra.mxu0 %v1411
        %2367 = vmatprep.subr.bf16.mxu0 0
        %2368 = vmatpush1.bf16.msra.mxu0 %v1412
        %2369 = vmatprep.subr.bf16.mxu0 0
        %2370 = vmatpush1.bf16.msra.mxu0 0
        %2371 = vmatprep.subr.bf16.mxu0 0
        %2372 = vmatpush1.bf16.msra.mxu0 0
        %2373 = vmatprep.subr.bf16.mxu0 0
        %2374 = vmatpush1.bf16.msra.mxu0 0
        %2375 = vmatprep.mubr.bf16.mxu0 %v2332
        %2376 = vmatmul.mubr.bf16.gmra.mrb[0].mxu0 %v2319
        %v2377 = vpop.f32.mrb[0].mxu0
        %v2378 = vadd.f32 0.0, %v2377
        %v2379 = vpop.f32.mrb[0].mxu0
        %v2380 = vpop.f32.mrb[0].mxu0
        %v2381 = vadd.f32 0.0, %v2380
        %v2382 = vpop.f32.mrb[0].mxu0
        %2383 = vmatprep.mubr.bf16.mxu0 %v2335
        %2384 = vmatmul.mubr.bf16.gmra.mrb[0].mxu0 %v2321
        %v2385 = vpop.f32.mrb[0].mxu0
        %v2386 = vadd.f32 0.0, %v2385
        %v2387 = vpop.f32.mrb[0].mxu0
        %v2388 = vpop.f32.mrb[0].mxu0
        %v2389 = vadd.f32 0.0, %v2388
        %v2390 = vpop.f32.mrb[0].mxu0
        %2391 = vmatprep.mubr.bf16.mxu0 %v2338
        %2392 = vmatmul.mubr.bf16.gmra.mrb[0].mxu0 %v2323
        %v2393 = vpop.f32.mrb[0].mxu0
        %v2394 = vadd.f32 0.0, %v2393
        %v2395 = vpop.f32.mrb[0].mxu0
        %v2396 = vpop.f32.mrb[0].mxu0
        %v2397 = vadd.f32 0.0, %v2396
        %v2398 = vpop.f32.mrb[0].mxu0
        %2399 = vmatprep.mubr.bf16.mxu0 %v2341
        %2400 = vmatmul.mubr.bf16.gmra.mrb[0].mxu0 %v2325
        %v2401 = vpop.f32.mrb[0].mxu0
        %v2402 = vadd.f32 0.0, %v2401
        %v2403 = vpop.f32.mrb[0].mxu0
        %v2404 = vpop.f32.mrb[0].mxu0
        %v2405 = vpop.f32.mrb[0].mxu0
        %2406 = vdwg.mxu0
        %s2407 = scalar_lea.vmem %s3, 448
        %v2408 = vld [vmem:[%s2407] sm:$0xff]
        %v2409 = vld [vmem:[%s2407 + $0x8] sm:$0xff]
        %v2410 = vld [vmem:[%s2407 + $0x10] sm:$0xff]
        %v2411 = vld [vmem:[%s2407 + $0x18] sm:$0xff]
        %v2412 = vld [vmem:[%s2407 + $0x20] sm:$0xff]
        %v2413 = vld [vmem:[%s2407 + $0x28] sm:$0xff]
        %v2414 = vld [vmem:[%s2407 + $0x30] sm:$0x11]
        %v2422 = vunpack.c.l.b16 %v2408
        %v2423 = vunpack.c.h.b16 %v2408
        %v2424 = vunpack.c.l.b16 %v2409
        %v2425 = vunpack.c.h.b16 %v2409
        %v2426 = vunpack.c.l.b16 %v2410
        %v2427 = vunpack.c.h.b16 %v2410
        %v2428 = vunpack.c.l.b16 %v2411
        %v2429 = vunpack.c.h.b16 %v2411
        %v2430 = vunpack.c.l.b16 %v2412
        %v2431 = vunpack.c.h.b16 %v2412
        %v2432 = vunpack.c.l.b16 %v2413
        %v2433 = vunpack.c.h.b16 %v2413
        %v2434 = vunpack.c.l.b16 %v2414
        %v2435 = vunpack.c.h.b16 %v2414
        %v2436 = vpack.c.b16 %v2424, %v2422
        %v2437 = vpack.c.b16 %v2425, %v2423
        %v2438 = vpack.c.b16 %v2428, %v2426
        %v2439 = vpack.c.b16 %v2429, %v2427
        %v2440 = vpack.c.b16 %v2432, %v2430
        %v2441 = vpack.c.b16 %v2433, %v2431
        %v2442 = vpack.c.b16 %v2434, %v2434
        %v2443 = vpack.c.b16 %v2435, %v2435
        %v2449 = vsel %vm1511, %v2437, 0
        %v2452 = vsel %vm1511, %v2439, 0
        %v2455 = vsel %vm1511, %v2441, 0
        %v2458 = vsel %vm1511, %v2443, 0
        %2460 = vmatprep.subr.bf16.mxu0 0
        %2461 = vmatpush1.bf16.msra.mxu0 %v1400
        %2462 = vmatprep.subr.bf16.mxu0 0
        %2463 = vmatpush1.bf16.msra.mxu0 %v1401
        %2464 = vmatprep.subr.bf16.mxu0 0
        %2465 = vmatpush1.bf16.msra.mxu0 %v1402
        %2466 = vmatprep.subr.bf16.mxu0 0
        %2467 = vmatpush1.bf16.msra.mxu0 %v1403
        %2468 = vmatprep.subr.bf16.mxu0 0
        %2469 = vmatpush1.bf16.msra.mxu0 %v1404
        %2470 = vmatprep.subr.bf16.mxu0 0
        %2471 = vmatpush1.bf16.msra.mxu0 %v1405
        %2472 = vmatprep.subr.bf16.mxu0 0
        %2473 = vmatpush1.bf16.msra.mxu0 %v1406
        %2474 = vmatprep.subr.bf16.mxu0 0
        %2475 = vmatpush1.bf16.msra.mxu0 %v1407
        %2476 = vmatprep.subr.bf16.mxu0 0
        %2477 = vmatpush1.bf16.msra.mxu0 %v1408
        %2478 = vmatprep.subr.bf16.mxu0 0
        %2479 = vmatpush1.bf16.msra.mxu0 %v1409
        %2480 = vmatprep.subr.bf16.mxu0 0
        %2481 = vmatpush1.bf16.msra.mxu0 %v1410
        %2482 = vmatprep.subr.bf16.mxu0 0
        %2483 = vmatpush1.bf16.msra.mxu0 %v1411
        %2484 = vmatprep.subr.bf16.mxu0 0
        %2485 = vmatpush1.bf16.msra.mxu0 %v1412
        %2486 = vmatprep.subr.bf16.mxu0 0
        %2487 = vmatpush1.bf16.msra.mxu0 0
        %2488 = vmatprep.subr.bf16.mxu0 0
        %2489 = vmatpush1.bf16.msra.mxu0 0
        %2490 = vmatprep.subr.bf16.mxu0 0
        %2491 = vmatpush1.bf16.msra.mxu0 0
        %2492 = vmatprep.mubr.bf16.mxu0 %v2449
        %2493 = vmatmul.mubr.bf16.gmra.mrb[0].mxu0 %v2436
        %v2494 = vpop.f32.mrb[0].mxu0
        %v2495 = vadd.f32 0.0, %v2494
        %v2496 = vpop.f32.mrb[0].mxu0
        %v2497 = vpop.f32.mrb[0].mxu0
        %v2498 = vadd.f32 0.0, %v2497
        %v2499 = vpop.f32.mrb[0].mxu0
        %2500 = vmatprep.mubr.bf16.mxu0 %v2452
        %2501 = vmatmul.mubr.bf16.gmra.mrb[0].mxu0 %v2438
        %v2502 = vpop.f32.mrb[0].mxu0
        %v2503 = vadd.f32 0.0, %v2502
        %v2504 = vpop.f32.mrb[0].mxu0
        %v2505 = vpop.f32.mrb[0].mxu0
        %v2506 = vadd.f32 0.0, %v2505
        %v2507 = vpop.f32.mrb[0].mxu0
        %2508 = vmatprep.mubr.bf16.mxu0 %v2455
        %2509 = vmatmul.mubr.bf16.gmra.mrb[0].mxu0 %v2440
        %v2510 = vpop.f32.mrb[0].mxu0
        %v2511 = vadd.f32 0.0, %v2510
        %v2512 = vpop.f32.mrb[0].mxu0
        %v2513 = vpop.f32.mrb[0].mxu0
        %v2514 = vadd.f32 0.0, %v2513
        %v2515 = vpop.f32.mrb[0].mxu0
        %2516 = vmatprep.mubr.bf16.mxu0 %v2458
        %2517 = vmatmul.mubr.bf16.gmra.mrb[0].mxu0 %v2442
        %v2518 = vpop.f32.mrb[0].mxu0
        %v2519 = vadd.f32 0.0, %v2518
        %v2520 = vpop.f32.mrb[0].mxu0
        %v2521 = vpop.f32.mrb[0].mxu0
        %v2522 = vpop.f32.mrb[0].mxu0
        %2523 = vdwg.mxu0
        %2531 = vrot.lane.b32.xlu0 %v1676, 16
        %v2532 = vpop.permute.xlu0 %2531
        %2533 = vrot.lane.b32.xlu0 %v1679, 16
        %v2534 = vpop.permute.xlu0 %2533
        %2535 = vrot.lane.b32.xlu0 %v1684, 16
        %v2536 = vpop.permute.xlu0 %2535
        %2537 = vrot.lane.b32.xlu0 %v1687, 16
        %v2538 = vpop.permute.xlu0 %2537
        %2539 = vrot.lane.b32.xlu0 %v1692, 16
        %v2540 = vpop.permute.xlu0 %2539
        %2541 = vrot.lane.b32.xlu0 %v1695, 16
        %v2542 = vpop.permute.xlu0 %2541
        %2543 = vrot.lane.b32.xlu0 %v1700, 16
        %v2544 = vpop.permute.xlu0 %2543
        %2559 = vrot.lane.b32.xlu0 %v1793, 32
        %v2560 = vpop.permute.xlu0 %2559
        %2561 = vrot.lane.b32.xlu0 %v1796, 32
        %v2562 = vpop.permute.xlu0 %2561
        %2563 = vrot.lane.b32.xlu0 %v1801, 32
        %v2564 = vpop.permute.xlu0 %2563
        %2565 = vrot.lane.b32.xlu0 %v1804, 32
        %v2566 = vpop.permute.xlu0 %2565
        %2567 = vrot.lane.b32.xlu0 %v1809, 32
        %v2568 = vpop.permute.xlu0 %2567
        %2569 = vrot.lane.b32.xlu0 %v1812, 32
        %v2570 = vpop.permute.xlu0 %2569
        %2571 = vrot.lane.b32.xlu0 %v1817, 32
        %v2572 = vpop.permute.xlu0 %2571
        %2587 = vrot.lane.b32.xlu0 %v1910, 48
        %v2588 = vpop.permute.xlu0 %2587
        %2589 = vrot.lane.b32.xlu0 %v1913, 48
        %v2590 = vpop.permute.xlu0 %2589
        %2591 = vrot.lane.b32.xlu0 %v1918, 48
        %v2592 = vpop.permute.xlu0 %2591
        %2593 = vrot.lane.b32.xlu0 %v1921, 48
        %v2594 = vpop.permute.xlu0 %2593
        %2595 = vrot.lane.b32.xlu0 %v1926, 48
        %v2596 = vpop.permute.xlu0 %2595
        %2597 = vrot.lane.b32.xlu0 %v1929, 48
        %v2598 = vpop.permute.xlu0 %2597
        %2599 = vrot.lane.b32.xlu0 %v1934, 48
        %v2600 = vpop.permute.xlu0 %2599
        %2615 = vrot.lane.b32.xlu0 %v2027, 64
        %v2616 = vpop.permute.xlu0 %2615
        %2617 = vrot.lane.b32.xlu0 %v2030, 64
        %v2618 = vpop.permute.xlu0 %2617
        %2619 = vrot.lane.b32.xlu0 %v2035, 64
        %v2620 = vpop.permute.xlu0 %2619
        %2621 = vrot.lane.b32.xlu0 %v2038, 64
        %v2622 = vpop.permute.xlu0 %2621
        %2623 = vrot.lane.b32.xlu0 %v2043, 64
        %v2624 = vpop.permute.xlu0 %2623
        %2625 = vrot.lane.b32.xlu0 %v2046, 64
        %v2626 = vpop.permute.xlu0 %2625
        %2627 = vrot.lane.b32.xlu0 %v2051, 64
        %v2628 = vpop.permute.xlu0 %2627
        %2643 = vrot.lane.b32.xlu0 %v2144, 80
        %v2644 = vpop.permute.xlu0 %2643
        %2645 = vrot.lane.b32.xlu0 %v2147, 80
        %v2646 = vpop.permute.xlu0 %2645
        %2647 = vrot.lane.b32.xlu0 %v2152, 80
        %v2648 = vpop.permute.xlu0 %2647
        %2649 = vrot.lane.b32.xlu0 %v2155, 80
        %v2650 = vpop.permute.xlu0 %2649
        %2651 = vrot.lane.b32.xlu0 %v2160, 80
        %v2652 = vpop.permute.xlu0 %2651
        %2653 = vrot.lane.b32.xlu0 %v2163, 80
        %v2654 = vpop.permute.xlu0 %2653
        %2655 = vrot.lane.b32.xlu0 %v2168, 80
        %v2656 = vpop.permute.xlu0 %2655
        %2671 = vrot.lane.b32.xlu0 %v2261, 96
        %v2672 = vpop.permute.xlu0 %2671
        %2673 = vrot.lane.b32.xlu0 %v2264, 96
        %v2674 = vpop.permute.xlu0 %2673
        %2675 = vrot.lane.b32.xlu0 %v2269, 96
        %v2676 = vpop.permute.xlu0 %2675
        %2677 = vrot.lane.b32.xlu0 %v2272, 96
        %v2678 = vpop.permute.xlu0 %2677
        %2679 = vrot.lane.b32.xlu0 %v2277, 96
        %v2680 = vpop.permute.xlu0 %2679
        %2681 = vrot.lane.b32.xlu0 %v2280, 96
        %v2682 = vpop.permute.xlu0 %2681
        %2683 = vrot.lane.b32.xlu0 %v2285, 96
        %v2684 = vpop.permute.xlu0 %2683
        %2699 = vrot.lane.b32.xlu0 %v2378, 112
        %v2700 = vpop.permute.xlu0 %2699
        %2701 = vrot.lane.b32.xlu0 %v2381, 112
        %v2702 = vpop.permute.xlu0 %2701
        %2703 = vrot.lane.b32.xlu0 %v2386, 112
        %v2704 = vpop.permute.xlu0 %2703
        %2705 = vrot.lane.b32.xlu0 %v2389, 112
        %v2706 = vpop.permute.xlu0 %2705
        %2707 = vrot.lane.b32.xlu0 %v2394, 112
        %v2708 = vpop.permute.xlu0 %2707
        %2709 = vrot.lane.b32.xlu0 %v2397, 112
        %v2710 = vpop.permute.xlu0 %2709
        %2711 = vrot.lane.b32.xlu0 %v2402, 112
        %v2712 = vpop.permute.xlu0 %2711
        %vm2720 = vcmask 130048
        %v2721 = vsel %vm2720, %v1559, %v2532
        %v2722 = vsel %vm2720, %v1562, %v2534
        %v2723 = vsel %vm2720, %v1567, %v2536
        %v2724 = vsel %vm2720, %v1570, %v2538
        %v2725 = vsel %vm2720, %v1575, %v2540
        %v2726 = vsel %vm2720, %v1578, %v2542
        %v2727 = vsel %vm2720, %v1583, %v2544
        %vm2728 = vcmask 261120
        %v2729 = vsel %vm2728, %v2721, %v2560
        %v2730 = vsel %vm2728, %v2722, %v2562
        %v2731 = vsel %vm2728, %v2723, %v2564
        %v2732 = vsel %vm2728, %v2724, %v2566
        %v2733 = vsel %vm2728, %v2725, %v2568
        %v2734 = vsel %vm2728, %v2726, %v2570
        %v2735 = vsel %vm2728, %v2727, %v2572
        %vm2736 = vcmask 392192
        %v2737 = vsel %vm2736, %v2729, %v2588
        %v2738 = vsel %vm2736, %v2730, %v2590
        %v2739 = vsel %vm2736, %v2731, %v2592
        %v2740 = vsel %vm2736, %v2732, %v2594
        %v2741 = vsel %vm2736, %v2733, %v2596
        %v2742 = vsel %vm2736, %v2734, %v2598
        %v2743 = vsel %vm2736, %v2735, %v2600
        %vm2744 = vcmask 523264
        %v2745 = vsel %vm2744, %v2737, %v2616
        %v2746 = vsel %vm2744, %v2738, %v2618
        %v2747 = vsel %vm2744, %v2739, %v2620
        %v2748 = vsel %vm2744, %v2740, %v2622
        %v2749 = vsel %vm2744, %v2741, %v2624
        %v2750 = vsel %vm2744, %v2742, %v2626
        %v2751 = vsel %vm2744, %v2743, %v2628
        %v2752 = vsel %vm1511, %v2745, %v2644
        %v2753 = vsel %vm1511, %v2746, %v2646
        %v2754 = vsel %vm1511, %v2747, %v2648
        %v2755 = vsel %vm1511, %v2748, %v2650
        %v2756 = vsel %vm1511, %v2749, %v2652
        %v2757 = vsel %vm1511, %v2750, %v2654
        %v2758 = vsel %vm1511, %v2751, %v2656
        %vm2759 = vcmask 785408
        %v2760 = vsel %vm2759, %v2752, %v2672
        %v2761 = vsel %vm2759, %v2753, %v2674
        %v2762 = vsel %vm2759, %v2754, %v2676
        %v2763 = vsel %vm2759, %v2755, %v2678
        %v2764 = vsel %vm2759, %v2756, %v2680
        %v2765 = vsel %vm2759, %v2757, %v2682
        %v2766 = vsel %vm2759, %v2758, %v2684
        %vm2767 = vcmask 916480
        %v2768 = vsel %vm2767, %v2760, %v2700
        %v2769 = vsel %vm2767, %v2761, %v2702
        %v2770 = vsel %vm2767, %v2762, %v2704
        %v2771 = vsel %vm2767, %v2763, %v2706
        %v2772 = vsel %vm2767, %v2764, %v2708
        %v2773 = vsel %vm2767, %v2765, %v2710
        %v2774 = vsel %vm2767, %v2766, %v2712
        %v2775 = vpack.c.bf16 %v2769, %v2768
        %v2776 = vpack.c.bf16 %v2498, %v2495
        %v2777 = vpack.c.bf16 %v2771, %v2770
        %v2778 = vpack.c.bf16 %v2506, %v2503
        %v2779 = vpack.c.bf16 %v2773, %v2772
        %v2780 = vpack.c.bf16 %v2514, %v2511
        %v2781 = vpack.c.bf16 %v2774, %v2774
        %v2782 = vpack.c.bf16 %v2519, %v2519
        %v2784 = vlaneseq
        %v2785 = vshrl.u32 %v2784, 7
        %v2786 = vsub.s32 0, %v2785
        %v2787 = vrot.slane %v1470, %v2786
        %v2807 = vunpack.c.l.b16 %v1452
        %v2808 = vunpack.c.l.b16 %v1453
        %v2809 = vunpack.c.l.b16 %v1454
        %v2810 = vunpack.c.l.b16 %v1455
        %v2811 = vunpack.c.l.b16 %v1456
        %v2812 = vunpack.c.l.b16 %v1457
        %v2813 = vunpack.c.l.b16 %v1458
        %v2814 = vunpack.c.l.b16 %v1459
        %v2815 = vunpack.c.l.b16 %v1460
        %v2816 = vunpack.c.l.b16 %v1461
        %v2817 = vunpack.c.l.b16 %v1462
        %v2818 = vunpack.c.l.b16 %v1463
        %v2819 = vunpack.c.l.b16 %v1464
        %v2820 = vunpack.c.l.b16 %v1465
        %v2821 = vunpack.c.l.b16 %v1466
        %v2822 = vunpack.c.l.b16 %v1467
        %v2823 = vunpack.c.l.b16 %v1468
        %v2824 = vunpack.c.l.b16 %v1469
        %v2825 = vpack.c.b16 %v2808, %v2807
        %v2826 = vpack.c.b16 %v2810, %v2809
        %v2827 = vpack.c.b16 %v2812, %v2811
        %v2828 = vpack.c.b16 %v2814, %v2813
        %v2829 = vpack.c.b16 %v2816, %v2815
        %v2830 = vpack.c.b16 %v2818, %v2817
        %v2831 = vpack.c.b16 %v2820, %v2819
        %v2832 = vpack.c.b16 %v2822, %v2821
        %v2833 = vpack.c.b16 %v2824, %v2823
        %v2844 = vsel %vm2720, %v2776, 0
        %v2847 = vsel %vm2720, %v2778, 0
        %v2850 = vsel %vm2720, %v2780, 0
        %v2853 = vsel %vm2720, %v2782, 0
        %2855 = vmatprep.subr.bf16.mxu0 0
        %2856 = vmatpush1.bf16.msra.mxu0 %v2825
        %2857 = vmatprep.subr.bf16.mxu0 0
        %2858 = vmatpush1.bf16.msra.mxu0 %v2826
        %2859 = vmatprep.subr.bf16.mxu0 0
        %2860 = vmatpush1.bf16.msra.mxu0 %v2827
        %2861 = vmatprep.subr.bf16.mxu0 0
        %2862 = vmatpush1.bf16.msra.mxu0 %v2828
        %2863 = vmatprep.subr.bf16.mxu0 0
        %2864 = vmatpush1.bf16.msra.mxu0 %v2829
        %2865 = vmatprep.subr.bf16.mxu0 0
        %2866 = vmatpush1.bf16.msra.mxu0 %v2830
        %2867 = vmatprep.subr.bf16.mxu0 0
        %2868 = vmatpush1.bf16.msra.mxu0 %v2831
        %2869 = vmatprep.subr.bf16.mxu0 0
        %2870 = vmatpush1.bf16.msra.mxu0 %v2832
        %2871 = vmatprep.subr.bf16.mxu0 0
        %2872 = vmatpush1.bf16.msra.mxu0 %v2833
        %2873 = vmatprep.subr.bf16.mxu0 0
        %2874 = vmatpush1.bf16.msra.mxu0 0
        %2875 = vmatprep.subr.bf16.mxu0 0
        %2876 = vmatpush1.bf16.msra.mxu0 0
        %2877 = vmatprep.subr.bf16.mxu0 0
        %2878 = vmatpush1.bf16.msra.mxu0 0
        %2879 = vmatprep.subr.bf16.mxu0 0
        %2880 = vmatpush1.bf16.msra.mxu0 0
        %2881 = vmatprep.subr.bf16.mxu0 0
        %2882 = vmatpush1.bf16.msra.mxu0 0
        %2883 = vmatprep.subr.bf16.mxu0 0
        %2884 = vmatpush1.bf16.msra.mxu0 0
        %2885 = vmatprep.subr.bf16.mxu0 0
        %2886 = vmatpush1.bf16.msra.mxu0 0
        %2887 = vmatprep.mubr.bf16.mxu0 %v2844
        %2888 = vmatmul.mubr.bf16.gmra.mrb[0].mxu0 %v2775
        %v2889 = vpop.f32.mrb[0].mxu0
        %v2890 = vadd.f32 %v2787, %v2889
        %v2891 = vpop.f32.mrb[0].mxu0
        %v2892 = vpop.f32.mrb[0].mxu0
        %v2893 = vadd.f32 %v2787, %v2892
        %v2894 = vpop.f32.mrb[0].mxu0
        %2895 = vmatprep.mubr.bf16.mxu0 %v2847
        %2896 = vmatmul.mubr.bf16.gmra.mrb[0].mxu0 %v2777
        %v2897 = vpop.f32.mrb[0].mxu0
        %v2898 = vadd.f32 %v2787, %v2897
        %v2899 = vpop.f32.mrb[0].mxu0
        %v2900 = vpop.f32.mrb[0].mxu0
        %v2901 = vadd.f32 %v2787, %v2900
        %v2902 = vpop.f32.mrb[0].mxu0
        %2903 = vmatprep.mubr.bf16.mxu0 %v2850
        %2904 = vmatmul.mubr.bf16.gmra.mrb[0].mxu0 %v2779
        %v2905 = vpop.f32.mrb[0].mxu0
        %v2906 = vadd.f32 %v2787, %v2905
        %v2907 = vpop.f32.mrb[0].mxu0
        %v2908 = vpop.f32.mrb[0].mxu0
        %v2909 = vadd.f32 %v2787, %v2908
        %v2910 = vpop.f32.mrb[0].mxu0
        %2911 = vmatprep.mubr.bf16.mxu0 %v2853
        %2912 = vmatmul.mubr.bf16.gmra.mrb[0].mxu0 %v2781
        %v2913 = vpop.f32.mrb[0].mxu0
        %v2914 = vadd.f32 %v2787, %v2913
        %v2915 = vpop.f32.mrb[0].mxu0
        %v2916 = vpop.f32.mrb[0].mxu0
        %v2917 = vpop.f32.mrb[0].mxu0
        %2918 = vdwg.mxu0
        %v2919 = vmax.f32 %v2890, 0.0
        %v2920 = vmax.f32 %v2893, 0.0
        %v2921 = vmax.f32 %v2898, 0.0
        %v2922 = vmax.f32 %v2901, 0.0
        %v2923 = vmax.f32 %v2906, 0.0
        %v2924 = vmax.f32 %v2909, 0.0
        %v2925 = vmax.f32 %v2914, 0.0
        %2926 = vst [vmem:[%s293] sm:$0xff] %v2919
        %2927 = vst [vmem:[%s293 + $0x8] sm:$0xff] %v2920
        %2928 = vst [vmem:[%s293 + $0x10] sm:$0xff] %v2921
        %2929 = vst [vmem:[%s293 + $0x18] sm:$0xff] %v2922
        %2930 = vst [vmem:[%s293 + $0x20] sm:$0xff] %v2923
        %2931 = vst [vmem:[%s293 + $0x28] sm:$0xff] %v2924
        %2932 = vst [vmem:[%s293 + $0x30] sm:$0x1] %v2925
        %v2933 = vadd.f32 %v2919, %v2920
        %v2934 = vadd.f32 %v2933, %v2921
        %v2935 = vadd.f32 %v2934, %v2922
        %v2936 = vadd.f32 %v2935, %v2923
        %v2937 = vadd.f32 %v2936, %v2924
        %vm2938 = vcmask 1040384
        %v2939 = vsel %vm2938, %v2925, 0.0
        %v2940 = vadd.f32 %v2937, %v2939
        %v2941 = vrot.slane %v2940, 4
        %v2942 = vadd.f32 %v2940, %v2941
        %v2943 = vrot.slane %v2942, 2
        %v2944 = vadd.f32 %v2942, %v2943
        %v2945 = vrot.slane %v2944, 1
        %v2946 = vadd.f32 %v2944, %v2945
        %v2947 = vrcp.pop 49.0
        %v2948 = vmul.f32 %v2946, %v2947
        %2949 = vst [vmem:[%s281] sm:$0x1] %v2948
        %v2950 = vld [vmem:[%s3] sm:$0xff]
        %v2951 = vld [vmem:[%s3 + $0x8] sm:$0xff]
        %v2952 = vld [vmem:[%s3 + $0x10] sm:$0xff]
        %v2953 = vld [vmem:[%s3 + $0x18] sm:$0xff]
        %v2954 = vld [vmem:[%s3 + $0x20] sm:$0xff]
        %v2955 = vld [vmem:[%s3 + $0x28] sm:$0xff]
        %v2956 = vld [vmem:[%s3 + $0x30] sm:$0x11]
        %v2964 = vunpack.c.l.b16 %v2950
        %v2965 = vunpack.c.h.b16 %v2950
        %v2966 = vunpack.c.l.b16 %v2951
        %v2967 = vunpack.c.h.b16 %v2951
        %v2968 = vunpack.c.l.b16 %v2952
        %v2969 = vunpack.c.h.b16 %v2952
        %v2970 = vunpack.c.l.b16 %v2953
        %v2971 = vunpack.c.h.b16 %v2953
        %v2972 = vunpack.c.l.b16 %v2954
        %v2973 = vunpack.c.h.b16 %v2954
        %v2974 = vunpack.c.l.b16 %v2955
        %v2975 = vunpack.c.h.b16 %v2955
        %v2976 = vunpack.c.l.b16 %v2956
        %v2977 = vunpack.c.h.b16 %v2956
        %v2978 = vpack.c.b16 %v2966, %v2964
        %v2979 = vpack.c.b16 %v2967, %v2965
        %v2980 = vpack.c.b16 %v2970, %v2968
        %v2981 = vpack.c.b16 %v2971, %v2969
        %v2982 = vpack.c.b16 %v2974, %v2972
        %v2983 = vpack.c.b16 %v2975, %v2973
        %v2984 = vpack.c.b16 %v2976, %v2976
        %v2985 = vpack.c.b16 %v2977, %v2977
        %v2991 = vsel %vm1511, %v2979, 0
        %v2994 = vsel %vm1511, %v2981, 0
        %v2997 = vsel %vm1511, %v2983, 0
        %v3000 = vsel %vm1511, %v2985, 0
        %3002 = vmatprep.subr.bf16.mxu0 0
        %3003 = vmatpush1.bf16.msra.mxu0 %v1413
        %3004 = vmatprep.subr.bf16.mxu0 0
        %3005 = vmatpush1.bf16.msra.mxu0 %v1414
        %3006 = vmatprep.subr.bf16.mxu0 0
        %3007 = vmatpush1.bf16.msra.mxu0 %v1415
        %3008 = vmatprep.subr.bf16.mxu0 0
        %3009 = vmatpush1.bf16.msra.mxu0 %v1416
        %3010 = vmatprep.subr.bf16.mxu0 0
        %3011 = vmatpush1.bf16.msra.mxu0 %v1417
        %3012 = vmatprep.subr.bf16.mxu0 0
        %3013 = vmatpush1.bf16.msra.mxu0 %v1418
        %3014 = vmatprep.subr.bf16.mxu0 0
        %3015 = vmatpush1.bf16.msra.mxu0 %v1419
        %3016 = vmatprep.subr.bf16.mxu0 0
        %3017 = vmatpush1.bf16.msra.mxu0 %v1420
        %3018 = vmatprep.subr.bf16.mxu0 0
        %3019 = vmatpush1.bf16.msra.mxu0 %v1421
        %3020 = vmatprep.subr.bf16.mxu0 0
        %3021 = vmatpush1.bf16.msra.mxu0 %v1422
        %3022 = vmatprep.subr.bf16.mxu0 0
        %3023 = vmatpush1.bf16.msra.mxu0 %v1423
        %3024 = vmatprep.subr.bf16.mxu0 0
        %3025 = vmatpush1.bf16.msra.mxu0 %v1424
        %3026 = vmatprep.subr.bf16.mxu0 0
        %3027 = vmatpush1.bf16.msra.mxu0 %v1425
        %3028 = vmatprep.subr.bf16.mxu0 0
        %3029 = vmatpush1.bf16.msra.mxu0 0
        %3030 = vmatprep.subr.bf16.mxu0 0
        %3031 = vmatpush1.bf16.msra.mxu0 0
        %3032 = vmatprep.subr.bf16.mxu0 0
        %3033 = vmatpush1.bf16.msra.mxu0 0
        %3034 = vmatprep.mubr.bf16.mxu0 %v2991
        %3035 = vmatmul.mubr.bf16.gmra.mrb[0].mxu0 %v2978
        %v3036 = vpop.f32.mrb[0].mxu0
        %v3037 = vadd.f32 0.0, %v3036
        %v3038 = vpop.f32.mrb[0].mxu0
        %v3039 = vpop.f32.mrb[0].mxu0
        %v3040 = vadd.f32 0.0, %v3039
        %v3041 = vpop.f32.mrb[0].mxu0
        %3042 = vmatprep.mubr.bf16.mxu0 %v2994
        %3043 = vmatmul.mubr.bf16.gmra.mrb[0].mxu0 %v2980
        %v3044 = vpop.f32.mrb[0].mxu0
        %v3045 = vadd.f32 0.0, %v3044
        %v3046 = vpop.f32.mrb[0].mxu0
        %v3047 = vpop.f32.mrb[0].mxu0
        %v3048 = vadd.f32 0.0, %v3047
        %v3049 = vpop.f32.mrb[0].mxu0
        %3050 = vmatprep.mubr.bf16.mxu0 %v2997
        %3051 = vmatmul.mubr.bf16.gmra.mrb[0].mxu0 %v2982
        %v3052 = vpop.f32.mrb[0].mxu0
        %v3053 = vadd.f32 0.0, %v3052
        %v3054 = vpop.f32.mrb[0].mxu0
        %v3055 = vpop.f32.mrb[0].mxu0
        %v3056 = vadd.f32 0.0, %v3055
        %v3057 = vpop.f32.mrb[0].mxu0
        %3058 = vmatprep.mubr.bf16.mxu0 %v3000
        %3059 = vmatmul.mubr.bf16.gmra.mrb[0].mxu0 %v2984
        %v3060 = vpop.f32.mrb[0].mxu0
        %v3061 = vadd.f32 0.0, %v3060
        %v3062 = vpop.f32.mrb[0].mxu0
        %v3063 = vpop.f32.mrb[0].mxu0
        %v3064 = vpop.f32.mrb[0].mxu0
        %3065 = vdwg.mxu0
        %v3066 = vld [vmem:[%s1588] sm:$0xff]
        %v3067 = vld [vmem:[%s1588 + $0x8] sm:$0xff]
        %v3068 = vld [vmem:[%s1588 + $0x10] sm:$0xff]
        %v3069 = vld [vmem:[%s1588 + $0x18] sm:$0xff]
        %v3070 = vld [vmem:[%s1588 + $0x20] sm:$0xff]
        %v3071 = vld [vmem:[%s1588 + $0x28] sm:$0xff]
        %v3072 = vld [vmem:[%s1588 + $0x30] sm:$0x11]
        %v3080 = vunpack.c.l.b16 %v3066
        %v3081 = vunpack.c.h.b16 %v3066
        %v3082 = vunpack.c.l.b16 %v3067
        %v3083 = vunpack.c.h.b16 %v3067
        %v3084 = vunpack.c.l.b16 %v3068
        %v3085 = vunpack.c.h.b16 %v3068
        %v3086 = vunpack.c.l.b16 %v3069
        %v3087 = vunpack.c.h.b16 %v3069
        %v3088 = vunpack.c.l.b16 %v3070
        %v3089 = vunpack.c.h.b16 %v3070
        %v3090 = vunpack.c.l.b16 %v3071
        %v3091 = vunpack.c.h.b16 %v3071
        %v3092 = vunpack.c.l.b16 %v3072
        %v3093 = vunpack.c.h.b16 %v3072
        %v3094 = vpack.c.b16 %v3082, %v3080
        %v3095 = vpack.c.b16 %v3083, %v3081
        %v3096 = vpack.c.b16 %v3086, %v3084
        %v3097 = vpack.c.b16 %v3087, %v3085
        %v3098 = vpack.c.b16 %v3090, %v3088
        %v3099 = vpack.c.b16 %v3091, %v3089
        %v3100 = vpack.c.b16 %v3092, %v3092
        %v3101 = vpack.c.b16 %v3093, %v3093
        %v3107 = vsel %vm1511, %v3095, 0
        %v3110 = vsel %vm1511, %v3097, 0
        %v3113 = vsel %vm1511, %v3099, 0
        %v3116 = vsel %vm1511, %v3101, 0
        %3118 = vmatprep.subr.bf16.mxu0 0
        %3119 = vmatpush1.bf16.msra.mxu0 %v1413
        %3120 = vmatprep.subr.bf16.mxu0 0
        %3121 = vmatpush1.bf16.msra.mxu0 %v1414
        %3122 = vmatprep.subr.bf16.mxu0 0
        %3123 = vmatpush1.bf16.msra.mxu0 %v1415
        %3124 = vmatprep.subr.bf16.mxu0 0
        %3125 = vmatpush1.bf16.msra.mxu0 %v1416
        %3126 = vmatprep.subr.bf16.mxu0 0
        %3127 = vmatpush1.bf16.msra.mxu0 %v1417
        %3128 = vmatprep.subr.bf16.mxu0 0
        %3129 = vmatpush1.bf16.msra.mxu0 %v1418
        %3130 = vmatprep.subr.bf16.mxu0 0
        %3131 = vmatpush1.bf16.msra.mxu0 %v1419
        %3132 = vmatprep.subr.bf16.mxu0 0
        %3133 = vmatpush1.bf16.msra.mxu0 %v1420
        %3134 = vmatprep.subr.bf16.mxu0 0
        %3135 = vmatpush1.bf16.msra.mxu0 %v1421
        %3136 = vmatprep.subr.bf16.mxu0 0
        %3137 = vmatpush1.bf16.msra.mxu0 %v1422
        %3138 = vmatprep.subr.bf16.mxu0 0
        %3139 = vmatpush1.bf16.msra.mxu0 %v1423
        %3140 = vmatprep.subr.bf16.mxu0 0
        %3141 = vmatpush1.bf16.msra.mxu0 %v1424
        %3142 = vmatprep.subr.bf16.mxu0 0
        %3143 = vmatpush1.bf16.msra.mxu0 %v1425
        %3144 = vmatprep.subr.bf16.mxu0 0
        %3145 = vmatpush1.bf16.msra.mxu0 0
        %3146 = vmatprep.subr.bf16.mxu0 0
        %3147 = vmatpush1.bf16.msra.mxu0 0
        %3148 = vmatprep.subr.bf16.mxu0 0
        %3149 = vmatpush1.bf16.msra.mxu0 0
        %3150 = vmatprep.mubr.bf16.mxu0 %v3107
        %3151 = vmatmul.mubr.bf16.gmra.mrb[0].mxu0 %v3094
        %v3152 = vpop.f32.mrb[0].mxu0
        %v3153 = vadd.f32 0.0, %v3152
        %v3154 = vpop.f32.mrb[0].mxu0
        %v3155 = vpop.f32.mrb[0].mxu0
        %v3156 = vadd.f32 0.0, %v3155
        %v3157 = vpop.f32.mrb[0].mxu0
        %3158 = vmatprep.mubr.bf16.mxu0 %v3110
        %3159 = vmatmul.mubr.bf16.gmra.mrb[0].mxu0 %v3096
        %v3160 = vpop.f32.mrb[0].mxu0
        %v3161 = vadd.f32 0.0, %v3160
        %v3162 = vpop.f32.mrb[0].mxu0
        %v3163 = vpop.f32.mrb[0].mxu0
        %v3164 = vadd.f32 0.0, %v3163
        %v3165 = vpop.f32.mrb[0].mxu0
        %3166 = vmatprep.mubr.bf16.mxu0 %v3113
        %3167 = vmatmul.mubr.bf16.gmra.mrb[0].mxu0 %v3098
        %v3168 = vpop.f32.mrb[0].mxu0
        %v3169 = vadd.f32 0.0, %v3168
        %v3170 = vpop.f32.mrb[0].mxu0
        %v3171 = vpop.f32.mrb[0].mxu0
        %v3172 = vadd.f32 0.0, %v3171
        %v3173 = vpop.f32.mrb[0].mxu0
        %3174 = vmatprep.mubr.bf16.mxu0 %v3116
        %3175 = vmatmul.mubr.bf16.gmra.mrb[0].mxu0 %v3100
        %v3176 = vpop.f32.mrb[0].mxu0
        %v3177 = vadd.f32 0.0, %v3176
        %v3178 = vpop.f32.mrb[0].mxu0
        %v3179 = vpop.f32.mrb[0].mxu0
        %v3180 = vpop.f32.mrb[0].mxu0
        %3181 = vdwg.mxu0
        %v3182 = vld [vmem:[%s1705] sm:$0xff]
        %v3183 = vld [vmem:[%s1705 + $0x8] sm:$0xff]
        %v3184 = vld [vmem:[%s1705 + $0x10] sm:$0xff]
        %v3185 = vld [vmem:[%s1705 + $0x18] sm:$0xff]
        %v3186 = vld [vmem:[%s1705 + $0x20] sm:$0xff]
        %v3187 = vld [vmem:[%s1705 + $0x28] sm:$0xff]
        %v3188 = vld [vmem:[%s1705 + $0x30] sm:$0x11]
        %v3196 = vunpack.c.l.b16 %v3182
        %v3197 = vunpack.c.h.b16 %v3182
        %v3198 = vunpack.c.l.b16 %v3183
        %v3199 = vunpack.c.h.b16 %v3183
        %v3200 = vunpack.c.l.b16 %v3184
        %v3201 = vunpack.c.h.b16 %v3184
        %v3202 = vunpack.c.l.b16 %v3185
        %v3203 = vunpack.c.h.b16 %v3185
        %v3204 = vunpack.c.l.b16 %v3186
        %v3205 = vunpack.c.h.b16 %v3186
        %v3206 = vunpack.c.l.b16 %v3187
        %v3207 = vunpack.c.h.b16 %v3187
        %v3208 = vunpack.c.l.b16 %v3188
        %v3209 = vunpack.c.h.b16 %v3188
        %v3210 = vpack.c.b16 %v3198, %v3196
        %v3211 = vpack.c.b16 %v3199, %v3197
        %v3212 = vpack.c.b16 %v3202, %v3200
        %v3213 = vpack.c.b16 %v3203, %v3201
        %v3214 = vpack.c.b16 %v3206, %v3204
        %v3215 = vpack.c.b16 %v3207, %v3205
        %v3216 = vpack.c.b16 %v3208, %v3208
        %v3217 = vpack.c.b16 %v3209, %v3209
        %v3223 = vsel %vm1511, %v3211, 0
        %v3226 = vsel %vm1511, %v3213, 0
        %v3229 = vsel %vm1511, %v3215, 0
        %v3232 = vsel %vm1511, %v3217, 0
        %3234 = vmatprep.subr.bf16.mxu0 0
        %3235 = vmatpush1.bf16.msra.mxu0 %v1413
        %3236 = vmatprep.subr.bf16.mxu0 0
        %3237 = vmatpush1.bf16.msra.mxu0 %v1414
        %3238 = vmatprep.subr.bf16.mxu0 0
        %3239 = vmatpush1.bf16.msra.mxu0 %v1415
        %3240 = vmatprep.subr.bf16.mxu0 0
        %3241 = vmatpush1.bf16.msra.mxu0 %v1416
        %3242 = vmatprep.subr.bf16.mxu0 0
        %3243 = vmatpush1.bf16.msra.mxu0 %v1417
        %3244 = vmatprep.subr.bf16.mxu0 0
        %3245 = vmatpush1.bf16.msra.mxu0 %v1418
        %3246 = vmatprep.subr.bf16.mxu0 0
        %3247 = vmatpush1.bf16.msra.mxu0 %v1419
        %3248 = vmatprep.subr.bf16.mxu0 0
        %3249 = vmatpush1.bf16.msra.mxu0 %v1420
        %3250 = vmatprep.subr.bf16.mxu0 0
        %3251 = vmatpush1.bf16.msra.mxu0 %v1421
        %3252 = vmatprep.subr.bf16.mxu0 0
        %3253 = vmatpush1.bf16.msra.mxu0 %v1422
        %3254 = vmatprep.subr.bf16.mxu0 0
        %3255 = vmatpush1.bf16.msra.mxu0 %v1423
        %3256 = vmatprep.subr.bf16.mxu0 0
        %3257 = vmatpush1.bf16.msra.mxu0 %v1424
        %3258 = vmatprep.subr.bf16.mxu0 0
        %3259 = vmatpush1.bf16.msra.mxu0 %v1425
        %3260 = vmatprep.subr.bf16.mxu0 0
        %3261 = vmatpush1.bf16.msra.mxu0 0
        %3262 = vmatprep.subr.bf16.mxu0 0
        %3263 = vmatpush1.bf16.msra.mxu0 0
        %3264 = vmatprep.subr.bf16.mxu0 0
        %3265 = vmatpush1.bf16.msra.mxu0 0
        %3266 = vmatprep.mubr.bf16.mxu0 %v3223
        %3267 = vmatmul.mubr.bf16.gmra.mrb[0].mxu0 %v3210
        %v3268 = vpop.f32.mrb[0].mxu0
        %v3269 = vadd.f32 0.0, %v3268
        %v3270 = vpop.f32.mrb[0].mxu0
        %v3271 = vpop.f32.mrb[0].mxu0
        %v3272 = vadd.f32 0.0, %v3271
        %v3273 = vpop.f32.mrb[0].mxu0
        %3274 = vmatprep.mubr.bf16.mxu0 %v3226
        %3275 = vmatmul.mubr.bf16.gmra.mrb[0].mxu0 %v3212
        %v3276 = vpop.f32.mrb[0].mxu0
        %v3277 = vadd.f32 0.0, %v3276
        %v3278 = vpop.f32.mrb[0].mxu0
        %v3279 = vpop.f32.mrb[0].mxu0
        %v3280 = vadd.f32 0.0, %v3279
        %v3281 = vpop.f32.mrb[0].mxu0
        %3282 = vmatprep.mubr.bf16.mxu0 %v3229
        %3283 = vmatmul.mubr.bf16.gmra.mrb[0].mxu0 %v3214
        %v3284 = vpop.f32.mrb[0].mxu0
        %v3285 = vadd.f32 0.0, %v3284
        %v3286 = vpop.f32.mrb[0].mxu0
        %v3287 = vpop.f32.mrb[0].mxu0
        %v3288 = vadd.f32 0.0, %v3287
        %v3289 = vpop.f32.mrb[0].mxu0
        %3290 = vmatprep.mubr.bf16.mxu0 %v3232
        %3291 = vmatmul.mubr.bf16.gmra.mrb[0].mxu0 %v3216
        %v3292 = vpop.f32.mrb[0].mxu0
        %v3293 = vadd.f32 0.0, %v3292
        %v3294 = vpop.f32.mrb[0].mxu0
        %v3295 = vpop.f32.mrb[0].mxu0
        %v3296 = vpop.f32.mrb[0].mxu0
        %3297 = vdwg.mxu0
        %v3298 = vld [vmem:[%s1822] sm:$0xff]
        %v3299 = vld [vmem:[%s1822 + $0x8] sm:$0xff]
        %v3300 = vld [vmem:[%s1822 + $0x10] sm:$0xff]
        %v3301 = vld [vmem:[%s1822 + $0x18] sm:$0xff]
        %v3302 = vld [vmem:[%s1822 + $0x20] sm:$0xff]
        %v3303 = vld [vmem:[%s1822 + $0x28] sm:$0xff]
        %v3304 = vld [vmem:[%s1822 + $0x30] sm:$0x11]
        %v3312 = vunpack.c.l.b16 %v3298
        %v3313 = vunpack.c.h.b16 %v3298
        %v3314 = vunpack.c.l.b16 %v3299
        %v3315 = vunpack.c.h.b16 %v3299
        %v3316 = vunpack.c.l.b16 %v3300
        %v3317 = vunpack.c.h.b16 %v3300
        %v3318 = vunpack.c.l.b16 %v3301
        %v3319 = vunpack.c.h.b16 %v3301
        %v3320 = vunpack.c.l.b16 %v3302
        %v3321 = vunpack.c.h.b16 %v3302
        %v3322 = vunpack.c.l.b16 %v3303
        %v3323 = vunpack.c.h.b16 %v3303
        %v3324 = vunpack.c.l.b16 %v3304
        %v3325 = vunpack.c.h.b16 %v3304
        %v3326 = vpack.c.b16 %v3314, %v3312
        %v3327 = vpack.c.b16 %v3315, %v3313
        %v3328 = vpack.c.b16 %v3318, %v3316
        %v3329 = vpack.c.b16 %v3319, %v3317
        %v3330 = vpack.c.b16 %v3322, %v3320
        %v3331 = vpack.c.b16 %v3323, %v3321
        %v3332 = vpack.c.b16 %v3324, %v3324
        %v3333 = vpack.c.b16 %v3325, %v3325
        %v3339 = vsel %vm1511, %v3327, 0
        %v3342 = vsel %vm1511, %v3329, 0
        %v3345 = vsel %vm1511, %v3331, 0
        %v3348 = vsel %vm1511, %v3333, 0
        %3350 = vmatprep.subr.bf16.mxu0 0
        %3351 = vmatpush1.bf16.msra.mxu0 %v1413
        %3352 = vmatprep.subr.bf16.mxu0 0
        %3353 = vmatpush1.bf16.msra.mxu0 %v1414
        %3354 = vmatprep.subr.bf16.mxu0 0
        %3355 = vmatpush1.bf16.msra.mxu0 %v1415
        %3356 = vmatprep.subr.bf16.mxu0 0
        %3357 = vmatpush1.bf16.msra.mxu0 %v1416
        %3358 = vmatprep.subr.bf16.mxu0 0
        %3359 = vmatpush1.bf16.msra.mxu0 %v1417
        %3360 = vmatprep.subr.bf16.mxu0 0
        %3361 = vmatpush1.bf16.msra.mxu0 %v1418
        %3362 = vmatprep.subr.bf16.mxu0 0
        %3363 = vmatpush1.bf16.msra.mxu0 %v1419
        %3364 = vmatprep.subr.bf16.mxu0 0
        %3365 = vmatpush1.bf16.msra.mxu0 %v1420
        %3366 = vmatprep.subr.bf16.mxu0 0
        %3367 = vmatpush1.bf16.msra.mxu0 %v1421
        %3368 = vmatprep.subr.bf16.mxu0 0
        %3369 = vmatpush1.bf16.msra.mxu0 %v1422
        %3370 = vmatprep.subr.bf16.mxu0 0
        %3371 = vmatpush1.bf16.msra.mxu0 %v1423
        %3372 = vmatprep.subr.bf16.mxu0 0
        %3373 = vmatpush1.bf16.msra.mxu0 %v1424
        %3374 = vmatprep.subr.bf16.mxu0 0
        %3375 = vmatpush1.bf16.msra.mxu0 %v1425
        %3376 = vmatprep.subr.bf16.mxu0 0
        %3377 = vmatpush1.bf16.msra.mxu0 0
        %3378 = vmatprep.subr.bf16.mxu0 0
        %3379 = vmatpush1.bf16.msra.mxu0 0
        %3380 = vmatprep.subr.bf16.mxu0 0
        %3381 = vmatpush1.bf16.msra.mxu0 0
        %3382 = vmatprep.mubr.bf16.mxu0 %v3339
        %3383 = vmatmul.mubr.bf16.gmra.mrb[0].mxu0 %v3326
        %v3384 = vpop.f32.mrb[0].mxu0
        %v3385 = vadd.f32 0.0, %v3384
        %v3386 = vpop.f32.mrb[0].mxu0
        %v3387 = vpop.f32.mrb[0].mxu0
        %v3388 = vadd.f32 0.0, %v3387
        %v3389 = vpop.f32.mrb[0].mxu0
        %3390 = vmatprep.mubr.bf16.mxu0 %v3342
        %3391 = vmatmul.mubr.bf16.gmra.mrb[0].mxu0 %v3328
        %v3392 = vpop.f32.mrb[0].mxu0
        %v3393 = vadd.f32 0.0, %v3392
        %v3394 = vpop.f32.mrb[0].mxu0
        %v3395 = vpop.f32.mrb[0].mxu0
        %v3396 = vadd.f32 0.0, %v3395
        %v3397 = vpop.f32.mrb[0].mxu0
        %3398 = vmatprep.mubr.bf16.mxu0 %v3345
        %3399 = vmatmul.mubr.bf16.gmra.mrb[0].mxu0 %v3330
        %v3400 = vpop.f32.mrb[0].mxu0
        %v3401 = vadd.f32 0.0, %v3400
        %v3402 = vpop.f32.mrb[0].mxu0
        %v3403 = vpop.f32.mrb[0].mxu0
        %v3404 = vadd.f32 0.0, %v3403
        %v3405 = vpop.f32.mrb[0].mxu0
        %3406 = vmatprep.mubr.bf16.mxu0 %v3348
        %3407 = vmatmul.mubr.bf16.gmra.mrb[0].mxu0 %v3332
        %v3408 = vpop.f32.mrb[0].mxu0
        %v3409 = vadd.f32 0.0, %v3408
        %v3410 = vpop.f32.mrb[0].mxu0
        %v3411 = vpop.f32.mrb[0].mxu0
        %v3412 = vpop.f32.mrb[0].mxu0
        %3413 = vdwg.mxu0
        %v3414 = vld [vmem:[%s1939] sm:$0xff]
        %v3415 = vld [vmem:[%s1939 + $0x8] sm:$0xff]
        %v3416 = vld [vmem:[%s1939 + $0x10] sm:$0xff]
        %v3417 = vld [vmem:[%s1939 + $0x18] sm:$0xff]
        %v3418 = vld [vmem:[%s1939 + $0x20] sm:$0xff]
        %v3419 = vld [vmem:[%s1939 + $0x28] sm:$0xff]
        %v3420 = vld [vmem:[%s1939 + $0x30] sm:$0x11]
        %v3428 = vunpack.c.l.b16 %v3414
        %v3429 = vunpack.c.h.b16 %v3414
        %v3430 = vunpack.c.l.b16 %v3415
        %v3431 = vunpack.c.h.b16 %v3415
        %v3432 = vunpack.c.l.b16 %v3416
        %v3433 = vunpack.c.h.b16 %v3416
        %v3434 = vunpack.c.l.b16 %v3417
        %v3435 = vunpack.c.h.b16 %v3417
        %v3436 = vunpack.c.l.b16 %v3418
        %v3437 = vunpack.c.h.b16 %v3418
        %v3438 = vunpack.c.l.b16 %v3419
        %v3439 = vunpack.c.h.b16 %v3419
        %v3440 = vunpack.c.l.b16 %v3420
        %v3441 = vunpack.c.h.b16 %v3420
        %v3442 = vpack.c.b16 %v3430, %v3428
        %v3443 = vpack.c.b16 %v3431, %v3429
        %v3444 = vpack.c.b16 %v3434, %v3432
        %v3445 = vpack.c.b16 %v3435, %v3433
        %v3446 = vpack.c.b16 %v3438, %v3436
        %v3447 = vpack.c.b16 %v3439, %v3437
        %v3448 = vpack.c.b16 %v3440, %v3440
        %v3449 = vpack.c.b16 %v3441, %v3441
        %v3455 = vsel %vm1511, %v3443, 0
        %v3458 = vsel %vm1511, %v3445, 0
        %v3461 = vsel %vm1511, %v3447, 0
        %v3464 = vsel %vm1511, %v3449, 0
        %3466 = vmatprep.subr.bf16.mxu0 0
        %3467 = vmatpush1.bf16.msra.mxu0 %v1413
        %3468 = vmatprep.subr.bf16.mxu0 0
        %3469 = vmatpush1.bf16.msra.mxu0 %v1414
        %3470 = vmatprep.subr.bf16.mxu0 0
        %3471 = vmatpush1.bf16.msra.mxu0 %v1415
        %3472 = vmatprep.subr.bf16.mxu0 0
        %3473 = vmatpush1.bf16.msra.mxu0 %v1416
        %3474 = vmatprep.subr.bf16.mxu0 0
        %3475 = vmatpush1.bf16.msra.mxu0 %v1417
        %3476 = vmatprep.subr.bf16.mxu0 0
        %3477 = vmatpush1.bf16.msra.mxu0 %v1418
        %3478 = vmatprep.subr.bf16.mxu0 0
        %3479 = vmatpush1.bf16.msra.mxu0 %v1419
        %3480 = vmatprep.subr.bf16.mxu0 0
        %3481 = vmatpush1.bf16.msra.mxu0 %v1420
        %3482 = vmatprep.subr.bf16.mxu0 0
        %3483 = vmatpush1.bf16.msra.mxu0 %v1421
        %3484 = vmatprep.subr.bf16.mxu0 0
        %3485 = vmatpush1.bf16.msra.mxu0 %v1422
        %3486 = vmatprep.subr.bf16.mxu0 0
        %3487 = vmatpush1.bf16.msra.mxu0 %v1423
        %3488 = vmatprep.subr.bf16.mxu0 0
        %3489 = vmatpush1.bf16.msra.mxu0 %v1424
        %3490 = vmatprep.subr.bf16.mxu0 0
        %3491 = vmatpush1.bf16.msra.mxu0 %v1425
        %3492 = vmatprep.subr.bf16.mxu0 0
        %3493 = vmatpush1.bf16.msra.mxu0 0
        %3494 = vmatprep.subr.bf16.mxu0 0
        %3495 = vmatpush1.bf16.msra.mxu0 0
        %3496 = vmatprep.subr.bf16.mxu0 0
        %3497 = vmatpush1.bf16.msra.mxu0 0
        %3498 = vmatprep.mubr.bf16.mxu0 %v3455
        %3499 = vmatmul.mubr.bf16.gmra.mrb[0].mxu0 %v3442
        %v3500 = vpop.f32.mrb[0].mxu0
        %v3501 = vadd.f32 0.0, %v3500
        %v3502 = vpop.f32.mrb[0].mxu0
        %v3503 = vpop.f32.mrb[0].mxu0
        %v3504 = vadd.f32 0.0, %v3503
        %v3505 = vpop.f32.mrb[0].mxu0
        %3506 = vmatprep.mubr.bf16.mxu0 %v3458
        %3507 = vmatmul.mubr.bf16.gmra.mrb[0].mxu0 %v3444
        %v3508 = vpop.f32.mrb[0].mxu0
        %v3509 = vadd.f32 0.0, %v3508
        %v3510 = vpop.f32.mrb[0].mxu0
        %v3511 = vpop.f32.mrb[0].mxu0
        %v3512 = vadd.f32 0.0, %v3511
        %v3513 = vpop.f32.mrb[0].mxu0
        %3514 = vmatprep.mubr.bf16.mxu0 %v3461
        %3515 = vmatmul.mubr.bf16.gmra.mrb[0].mxu0 %v3446
        %v3516 = vpop.f32.mrb[0].mxu0
        %v3517 = vadd.f32 0.0, %v3516
        %v3518 = vpop.f32.mrb[0].mxu0
        %v3519 = vpop.f32.mrb[0].mxu0
        %v3520 = vadd.f32 0.0, %v3519
        %v3521 = vpop.f32.mrb[0].mxu0
        %3522 = vmatprep.mubr.bf16.mxu0 %v3464
        %3523 = vmatmul.mubr.bf16.gmra.mrb[0].mxu0 %v3448
        %v3524 = vpop.f32.mrb[0].mxu0
        %v3525 = vadd.f32 0.0, %v3524
        %v3526 = vpop.f32.mrb[0].mxu0
        %v3527 = vpop.f32.mrb[0].mxu0
        %v3528 = vpop.f32.mrb[0].mxu0
        %3529 = vdwg.mxu0
        %v3530 = vld [vmem:[%s2056] sm:$0xff]
        %v3531 = vld [vmem:[%s2056 + $0x8] sm:$0xff]
        %v3532 = vld [vmem:[%s2056 + $0x10] sm:$0xff]
        %v3533 = vld [vmem:[%s2056 + $0x18] sm:$0xff]
        %v3534 = vld [vmem:[%s2056 + $0x20] sm:$0xff]
        %v3535 = vld [vmem:[%s2056 + $0x28] sm:$0xff]
        %v3536 = vld [vmem:[%s2056 + $0x30] sm:$0x11]
        %v3544 = vunpack.c.l.b16 %v3530
        %v3545 = vunpack.c.h.b16 %v3530
        %v3546 = vunpack.c.l.b16 %v3531
        %v3547 = vunpack.c.h.b16 %v3531
        %v3548 = vunpack.c.l.b16 %v3532
        %v3549 = vunpack.c.h.b16 %v3532
        %v3550 = vunpack.c.l.b16 %v3533
        %v3551 = vunpack.c.h.b16 %v3533
        %v3552 = vunpack.c.l.b16 %v3534
        %v3553 = vunpack.c.h.b16 %v3534
        %v3554 = vunpack.c.l.b16 %v3535
        %v3555 = vunpack.c.h.b16 %v3535
        %v3556 = vunpack.c.l.b16 %v3536
        %v3557 = vunpack.c.h.b16 %v3536
        %v3558 = vpack.c.b16 %v3546, %v3544
        %v3559 = vpack.c.b16 %v3547, %v3545
        %v3560 = vpack.c.b16 %v3550, %v3548
        %v3561 = vpack.c.b16 %v3551, %v3549
        %v3562 = vpack.c.b16 %v3554, %v3552
        %v3563 = vpack.c.b16 %v3555, %v3553
        %v3564 = vpack.c.b16 %v3556, %v3556
        %v3565 = vpack.c.b16 %v3557, %v3557
        %v3571 = vsel %vm1511, %v3559, 0
        %v3574 = vsel %vm1511, %v3561, 0
        %v3577 = vsel %vm1511, %v3563, 0
        %v3580 = vsel %vm1511, %v3565, 0
        %3582 = vmatprep.subr.bf16.mxu0 0
        %3583 = vmatpush1.bf16.msra.mxu0 %v1413
        %3584 = vmatprep.subr.bf16.mxu0 0
        %3585 = vmatpush1.bf16.msra.mxu0 %v1414
        %3586 = vmatprep.subr.bf16.mxu0 0
        %3587 = vmatpush1.bf16.msra.mxu0 %v1415
        %3588 = vmatprep.subr.bf16.mxu0 0
        %3589 = vmatpush1.bf16.msra.mxu0 %v1416
        %3590 = vmatprep.subr.bf16.mxu0 0
        %3591 = vmatpush1.bf16.msra.mxu0 %v1417
        %3592 = vmatprep.subr.bf16.mxu0 0
        %3593 = vmatpush1.bf16.msra.mxu0 %v1418
        %3594 = vmatprep.subr.bf16.mxu0 0
        %3595 = vmatpush1.bf16.msra.mxu0 %v1419
        %3596 = vmatprep.subr.bf16.mxu0 0
        %3597 = vmatpush1.bf16.msra.mxu0 %v1420
        %3598 = vmatprep.subr.bf16.mxu0 0
        %3599 = vmatpush1.bf16.msra.mxu0 %v1421
        %3600 = vmatprep.subr.bf16.mxu0 0
        %3601 = vmatpush1.bf16.msra.mxu0 %v1422
        %3602 = vmatprep.subr.bf16.mxu0 0
        %3603 = vmatpush1.bf16.msra.mxu0 %v1423
        %3604 = vmatprep.subr.bf16.mxu0 0
        %3605 = vmatpush1.bf16.msra.mxu0 %v1424
        %3606 = vmatprep.subr.bf16.mxu0 0
        %3607 = vmatpush1.bf16.msra.mxu0 %v1425
        %3608 = vmatprep.subr.bf16.mxu0 0
        %3609 = vmatpush1.bf16.msra.mxu0 0
        %3610 = vmatprep.subr.bf16.mxu0 0
        %3611 = vmatpush1.bf16.msra.mxu0 0
        %3612 = vmatprep.subr.bf16.mxu0 0
        %3613 = vmatpush1.bf16.msra.mxu0 0
        %3614 = vmatprep.mubr.bf16.mxu0 %v3571
        %3615 = vmatmul.mubr.bf16.gmra.mrb[0].mxu0 %v3558
        %v3616 = vpop.f32.mrb[0].mxu0
        %v3617 = vadd.f32 0.0, %v3616
        %v3618 = vpop.f32.mrb[0].mxu0
        %v3619 = vpop.f32.mrb[0].mxu0
        %v3620 = vadd.f32 0.0, %v3619
        %v3621 = vpop.f32.mrb[0].mxu0
        %3622 = vmatprep.mubr.bf16.mxu0 %v3574
        %3623 = vmatmul.mubr.bf16.gmra.mrb[0].mxu0 %v3560
        %v3624 = vpop.f32.mrb[0].mxu0
        %v3625 = vadd.f32 0.0, %v3624
        %v3626 = vpop.f32.mrb[0].mxu0
        %v3627 = vpop.f32.mrb[0].mxu0
        %v3628 = vadd.f32 0.0, %v3627
        %v3629 = vpop.f32.mrb[0].mxu0
        %3630 = vmatprep.mubr.bf16.mxu0 %v3577
        %3631 = vmatmul.mubr.bf16.gmra.mrb[0].mxu0 %v3562
        %v3632 = vpop.f32.mrb[0].mxu0
        %v3633 = vadd.f32 0.0, %v3632
        %v3634 = vpop.f32.mrb[0].mxu0
        %v3635 = vpop.f32.mrb[0].mxu0
        %v3636 = vadd.f32 0.0, %v3635
        %v3637 = vpop.f32.mrb[0].mxu0
        %3638 = vmatprep.mubr.bf16.mxu0 %v3580
        %3639 = vmatmul.mubr.bf16.gmra.mrb[0].mxu0 %v3564
        %v3640 = vpop.f32.mrb[0].mxu0
        %v3641 = vadd.f32 0.0, %v3640
        %v3642 = vpop.f32.mrb[0].mxu0
        %v3643 = vpop.f32.mrb[0].mxu0
        %v3644 = vpop.f32.mrb[0].mxu0
        %3645 = vdwg.mxu0
        %v3646 = vld [vmem:[%s2173] sm:$0xff]
        %v3647 = vld [vmem:[%s2173 + $0x8] sm:$0xff]
        %v3648 = vld [vmem:[%s2173 + $0x10] sm:$0xff]
        %v3649 = vld [vmem:[%s2173 + $0x18] sm:$0xff]
        %v3650 = vld [vmem:[%s2173 + $0x20] sm:$0xff]
        %v3651 = vld [vmem:[%s2173 + $0x28] sm:$0xff]
        %v3652 = vld [vmem:[%s2173 + $0x30] sm:$0x11]
        %v3660 = vunpack.c.l.b16 %v3646
        %v3661 = vunpack.c.h.b16 %v3646
        %v3662 = vunpack.c.l.b16 %v3647
        %v3663 = vunpack.c.h.b16 %v3647
        %v3664 = vunpack.c.l.b16 %v3648
        %v3665 = vunpack.c.h.b16 %v3648
        %v3666 = vunpack.c.l.b16 %v3649
        %v3667 = vunpack.c.h.b16 %v3649
        %v3668 = vunpack.c.l.b16 %v3650
        %v3669 = vunpack.c.h.b16 %v3650
        %v3670 = vunpack.c.l.b16 %v3651
        %v3671 = vunpack.c.h.b16 %v3651
        %v3672 = vunpack.c.l.b16 %v3652
        %v3673 = vunpack.c.h.b16 %v3652
        %v3674 = vpack.c.b16 %v3662, %v3660
        %v3675 = vpack.c.b16 %v3663, %v3661
        %v3676 = vpack.c.b16 %v3666, %v3664
        %v3677 = vpack.c.b16 %v3667, %v3665
        %v3678 = vpack.c.b16 %v3670, %v3668
        %v3679 = vpack.c.b16 %v3671, %v3669
        %v3680 = vpack.c.b16 %v3672, %v3672
        %v3681 = vpack.c.b16 %v3673, %v3673
        %v3687 = vsel %vm1511, %v3675, 0
        %v3690 = vsel %vm1511, %v3677, 0
        %v3693 = vsel %vm1511, %v3679, 0
        %v3696 = vsel %vm1511, %v3681, 0
        %3698 = vmatprep.subr.bf16.mxu0 0
        %3699 = vmatpush1.bf16.msra.mxu0 %v1413
        %3700 = vmatprep.subr.bf16.mxu0 0
        %3701 = vmatpush1.bf16.msra.mxu0 %v1414
        %3702 = vmatprep.subr.bf16.mxu0 0
        %3703 = vmatpush1.bf16.msra.mxu0 %v1415
        %3704 = vmatprep.subr.bf16.mxu0 0
        %3705 = vmatpush1.bf16.msra.mxu0 %v1416
        %3706 = vmatprep.subr.bf16.mxu0 0
        %3707 = vmatpush1.bf16.msra.mxu0 %v1417
        %3708 = vmatprep.subr.bf16.mxu0 0
        %3709 = vmatpush1.bf16.msra.mxu0 %v1418
        %3710 = vmatprep.subr.bf16.mxu0 0
        %3711 = vmatpush1.bf16.msra.mxu0 %v1419
        %3712 = vmatprep.subr.bf16.mxu0 0
        %3713 = vmatpush1.bf16.msra.mxu0 %v1420
        %3714 = vmatprep.subr.bf16.mxu0 0
        %3715 = vmatpush1.bf16.msra.mxu0 %v1421
        %3716 = vmatprep.subr.bf16.mxu0 0
        %3717 = vmatpush1.bf16.msra.mxu0 %v1422
        %3718 = vmatprep.subr.bf16.mxu0 0
        %3719 = vmatpush1.bf16.msra.mxu0 %v1423
        %3720 = vmatprep.subr.bf16.mxu0 0
        %3721 = vmatpush1.bf16.msra.mxu0 %v1424
        %3722 = vmatprep.subr.bf16.mxu0 0
        %3723 = vmatpush1.bf16.msra.mxu0 %v1425
        %3724 = vmatprep.subr.bf16.mxu0 0
        %3725 = vmatpush1.bf16.msra.mxu0 0
        %3726 = vmatprep.subr.bf16.mxu0 0
        %3727 = vmatpush1.bf16.msra.mxu0 0
        %3728 = vmatprep.subr.bf16.mxu0 0
        %3729 = vmatpush1.bf16.msra.mxu0 0
        %3730 = vmatprep.mubr.bf16.mxu0 %v3687
        %3731 = vmatmul.mubr.bf16.gmra.mrb[0].mxu0 %v3674
        %v3732 = vpop.f32.mrb[0].mxu0
        %v3733 = vadd.f32 0.0, %v3732
        %v3734 = vpop.f32.mrb[0].mxu0
        %v3735 = vpop.f32.mrb[0].mxu0
        %v3736 = vadd.f32 0.0, %v3735
        %v3737 = vpop.f32.mrb[0].mxu0
        %3738 = vmatprep.mubr.bf16.mxu0 %v3690
        %3739 = vmatmul.mubr.bf16.gmra.mrb[0].mxu0 %v3676
        %v3740 = vpop.f32.mrb[0].mxu0
        %v3741 = vadd.f32 0.0, %v3740
        %v3742 = vpop.f32.mrb[0].mxu0
        %v3743 = vpop.f32.mrb[0].mxu0
        %v3744 = vadd.f32 0.0, %v3743
        %v3745 = vpop.f32.mrb[0].mxu0
        %3746 = vmatprep.mubr.bf16.mxu0 %v3693
        %3747 = vmatmul.mubr.bf16.gmra.mrb[0].mxu0 %v3678
        %v3748 = vpop.f32.mrb[0].mxu0
        %v3749 = vadd.f32 0.0, %v3748
        %v3750 = vpop.f32.mrb[0].mxu0
        %v3751 = vpop.f32.mrb[0].mxu0
        %v3752 = vadd.f32 0.0, %v3751
        %v3753 = vpop.f32.mrb[0].mxu0
        %3754 = vmatprep.mubr.bf16.mxu0 %v3696
        %3755 = vmatmul.mubr.bf16.gmra.mrb[0].mxu0 %v3680
        %v3756 = vpop.f32.mrb[0].mxu0
        %v3757 = vadd.f32 0.0, %v3756
        %v3758 = vpop.f32.mrb[0].mxu0
        %v3759 = vpop.f32.mrb[0].mxu0
        %v3760 = vpop.f32.mrb[0].mxu0
        %3761 = vdwg.mxu0
        %v3762 = vld [vmem:[%s2290] sm:$0xff]
        %v3763 = vld [vmem:[%s2290 + $0x8] sm:$0xff]
        %v3764 = vld [vmem:[%s2290 + $0x10] sm:$0xff]
        %v3765 = vld [vmem:[%s2290 + $0x18] sm:$0xff]
        %v3766 = vld [vmem:[%s2290 + $0x20] sm:$0xff]
        %v3767 = vld [vmem:[%s2290 + $0x28] sm:$0xff]
        %v3768 = vld [vmem:[%s2290 + $0x30] sm:$0x11]
        %v3776 = vunpack.c.l.b16 %v3762
        %v3777 = vunpack.c.h.b16 %v3762
        %v3778 = vunpack.c.l.b16 %v3763
        %v3779 = vunpack.c.h.b16 %v3763
        %v3780 = vunpack.c.l.b16 %v3764
        %v3781 = vunpack.c.h.b16 %v3764
        %v3782 = vunpack.c.l.b16 %v3765
        %v3783 = vunpack.c.h.b16 %v3765
        %v3784 = vunpack.c.l.b16 %v3766
        %v3785 = vunpack.c.h.b16 %v3766
        %v3786 = vunpack.c.l.b16 %v3767
        %v3787 = vunpack.c.h.b16 %v3767
        %v3788 = vunpack.c.l.b16 %v3768
        %v3789 = vunpack.c.h.b16 %v3768
        %v3790 = vpack.c.b16 %v3778, %v3776
        %v3791 = vpack.c.b16 %v3779, %v3777
        %v3792 = vpack.c.b16 %v3782, %v3780
        %v3793 = vpack.c.b16 %v3783, %v3781
        %v3794 = vpack.c.b16 %v3786, %v3784
        %v3795 = vpack.c.b16 %v3787, %v3785
        %v3796 = vpack.c.b16 %v3788, %v3788
        %v3797 = vpack.c.b16 %v3789, %v3789
        %v3803 = vsel %vm1511, %v3791, 0
        %v3806 = vsel %vm1511, %v3793, 0
        %v3809 = vsel %vm1511, %v3795, 0
        %v3812 = vsel %vm1511, %v3797, 0
        %3814 = vmatprep.subr.bf16.mxu0 0
        %3815 = vmatpush1.bf16.msra.mxu0 %v1413
        %3816 = vmatprep.subr.bf16.mxu0 0
        %3817 = vmatpush1.bf16.msra.mxu0 %v1414
        %3818 = vmatprep.subr.bf16.mxu0 0
        %3819 = vmatpush1.bf16.msra.mxu0 %v1415
        %3820 = vmatprep.subr.bf16.mxu0 0
        %3821 = vmatpush1.bf16.msra.mxu0 %v1416
        %3822 = vmatprep.subr.bf16.mxu0 0
        %3823 = vmatpush1.bf16.msra.mxu0 %v1417
        %3824 = vmatprep.subr.bf16.mxu0 0
        %3825 = vmatpush1.bf16.msra.mxu0 %v1418
        %3826 = vmatprep.subr.bf16.mxu0 0
        %3827 = vmatpush1.bf16.msra.mxu0 %v1419
        %3828 = vmatprep.subr.bf16.mxu0 0
        %3829 = vmatpush1.bf16.msra.mxu0 %v1420
        %3830 = vmatprep.subr.bf16.mxu0 0
        %3831 = vmatpush1.bf16.msra.mxu0 %v1421
        %3832 = vmatprep.subr.bf16.mxu0 0
        %3833 = vmatpush1.bf16.msra.mxu0 %v1422
        %3834 = vmatprep.subr.bf16.mxu0 0
        %3835 = vmatpush1.bf16.msra.mxu0 %v1423
        %3836 = vmatprep.subr.bf16.mxu0 0
        %3837 = vmatpush1.bf16.msra.mxu0 %v1424
        %3838 = vmatprep.subr.bf16.mxu0 0
        %3839 = vmatpush1.bf16.msra.mxu0 %v1425
        %3840 = vmatprep.subr.bf16.mxu0 0
        %3841 = vmatpush1.bf16.msra.mxu0 0
        %3842 = vmatprep.subr.bf16.mxu0 0
        %3843 = vmatpush1.bf16.msra.mxu0 0
        %3844 = vmatprep.subr.bf16.mxu0 0
        %3845 = vmatpush1.bf16.msra.mxu0 0
        %3846 = vmatprep.mubr.bf16.mxu0 %v3803
        %3847 = vmatmul.mubr.bf16.gmra.mrb[0].mxu0 %v3790
        %v3848 = vpop.f32.mrb[0].mxu0
        %v3849 = vadd.f32 0.0, %v3848
        %v3850 = vpop.f32.mrb[0].mxu0
        %v3851 = vpop.f32.mrb[0].mxu0
        %v3852 = vadd.f32 0.0, %v3851
        %v3853 = vpop.f32.mrb[0].mxu0
        %3854 = vmatprep.mubr.bf16.mxu0 %v3806
        %3855 = vmatmul.mubr.bf16.gmra.mrb[0].mxu0 %v3792
        %v3856 = vpop.f32.mrb[0].mxu0
        %v3857 = vadd.f32 0.0, %v3856
        %v3858 = vpop.f32.mrb[0].mxu0
        %v3859 = vpop.f32.mrb[0].mxu0
        %v3860 = vadd.f32 0.0, %v3859
        %v3861 = vpop.f32.mrb[0].mxu0
        %3862 = vmatprep.mubr.bf16.mxu0 %v3809
        %3863 = vmatmul.mubr.bf16.gmra.mrb[0].mxu0 %v3794
        %v3864 = vpop.f32.mrb[0].mxu0
        %v3865 = vadd.f32 0.0, %v3864
        %v3866 = vpop.f32.mrb[0].mxu0
        %v3867 = vpop.f32.mrb[0].mxu0
        %v3868 = vadd.f32 0.0, %v3867
        %v3869 = vpop.f32.mrb[0].mxu0
        %3870 = vmatprep.mubr.bf16.mxu0 %v3812
        %3871 = vmatmul.mubr.bf16.gmra.mrb[0].mxu0 %v3796
        %v3872 = vpop.f32.mrb[0].mxu0
        %v3873 = vadd.f32 0.0, %v3872
        %v3874 = vpop.f32.mrb[0].mxu0
        %v3875 = vpop.f32.mrb[0].mxu0
        %v3876 = vpop.f32.mrb[0].mxu0
        %3877 = vdwg.mxu0
        %v3878 = vld [vmem:[%s2407] sm:$0xff]
        %v3879 = vld [vmem:[%s2407 + $0x8] sm:$0xff]
        %v3880 = vld [vmem:[%s2407 + $0x10] sm:$0xff]
        %v3881 = vld [vmem:[%s2407 + $0x18] sm:$0xff]
        %v3882 = vld [vmem:[%s2407 + $0x20] sm:$0xff]
        %v3883 = vld [vmem:[%s2407 + $0x28] sm:$0xff]
        %v3884 = vld [vmem:[%s2407 + $0x30] sm:$0x11]
        %v3892 = vunpack.c.l.b16 %v3878
        %v3893 = vunpack.c.h.b16 %v3878
        %v3894 = vunpack.c.l.b16 %v3879
        %v3895 = vunpack.c.h.b16 %v3879
        %v3896 = vunpack.c.l.b16 %v3880
        %v3897 = vunpack.c.h.b16 %v3880
        %v3898 = vunpack.c.l.b16 %v3881
        %v3899 = vunpack.c.h.b16 %v3881
        %v3900 = vunpack.c.l.b16 %v3882
        %v3901 = vunpack.c.h.b16 %v3882
        %v3902 = vunpack.c.l.b16 %v3883
        %v3903 = vunpack.c.h.b16 %v3883
        %v3904 = vunpack.c.l.b16 %v3884
        %v3905 = vunpack.c.h.b16 %v3884
        %v3906 = vpack.c.b16 %v3894, %v3892
        %v3907 = vpack.c.b16 %v3895, %v3893
        %v3908 = vpack.c.b16 %v3898, %v3896
        %v3909 = vpack.c.b16 %v3899, %v3897
        %v3910 = vpack.c.b16 %v3902, %v3900
        %v3911 = vpack.c.b16 %v3903, %v3901
        %v3912 = vpack.c.b16 %v3904, %v3904
        %v3913 = vpack.c.b16 %v3905, %v3905
        %v3919 = vsel %vm1511, %v3907, 0
        %v3922 = vsel %vm1511, %v3909, 0
        %v3925 = vsel %vm1511, %v3911, 0
        %v3928 = vsel %vm1511, %v3913, 0
        %3930 = vmatprep.subr.bf16.mxu0 0
        %3931 = vmatpush1.bf16.msra.mxu0 %v1413
        %3932 = vmatprep.subr.bf16.mxu0 0
        %3933 = vmatpush1.bf16.msra.mxu0 %v1414
        %3934 = vmatprep.subr.bf16.mxu0 0
        %3935 = vmatpush1.bf16.msra.mxu0 %v1415
        %3936 = vmatprep.subr.bf16.mxu0 0
        %3937 = vmatpush1.bf16.msra.mxu0 %v1416
        %3938 = vmatprep.subr.bf16.mxu0 0
        %3939 = vmatpush1.bf16.msra.mxu0 %v1417
        %3940 = vmatprep.subr.bf16.mxu0 0
        %3941 = vmatpush1.bf16.msra.mxu0 %v1418
        %3942 = vmatprep.subr.bf16.mxu0 0
        %3943 = vmatpush1.bf16.msra.mxu0 %v1419
        %3944 = vmatprep.subr.bf16.mxu0 0
        %3945 = vmatpush1.bf16.msra.mxu0 %v1420
        %3946 = vmatprep.subr.bf16.mxu0 0
        %3947 = vmatpush1.bf16.msra.mxu0 %v1421
        %3948 = vmatprep.subr.bf16.mxu0 0
        %3949 = vmatpush1.bf16.msra.mxu0 %v1422
        %3950 = vmatprep.subr.bf16.mxu0 0
        %3951 = vmatpush1.bf16.msra.mxu0 %v1423
        %3952 = vmatprep.subr.bf16.mxu0 0
        %3953 = vmatpush1.bf16.msra.mxu0 %v1424
        %3954 = vmatprep.subr.bf16.mxu0 0
        %3955 = vmatpush1.bf16.msra.mxu0 %v1425
        %3956 = vmatprep.subr.bf16.mxu0 0
        %3957 = vmatpush1.bf16.msra.mxu0 0
        %3958 = vmatprep.subr.bf16.mxu0 0
        %3959 = vmatpush1.bf16.msra.mxu0 0
        %3960 = vmatprep.subr.bf16.mxu0 0
        %3961 = vmatpush1.bf16.msra.mxu0 0
        %3962 = vmatprep.mubr.bf16.mxu0 %v3919
        %3963 = vmatmul.mubr.bf16.gmra.mrb[0].mxu0 %v3906
        %v3964 = vpop.f32.mrb[0].mxu0
        %v3965 = vadd.f32 0.0, %v3964
        %v3966 = vpop.f32.mrb[0].mxu0
        %v3967 = vpop.f32.mrb[0].mxu0
        %v3968 = vadd.f32 0.0, %v3967
        %v3969 = vpop.f32.mrb[0].mxu0
        %3970 = vmatprep.mubr.bf16.mxu0 %v3922
        %3971 = vmatmul.mubr.bf16.gmra.mrb[0].mxu0 %v3908
        %v3972 = vpop.f32.mrb[0].mxu0
        %v3973 = vadd.f32 0.0, %v3972
        %v3974 = vpop.f32.mrb[0].mxu0
        %v3975 = vpop.f32.mrb[0].mxu0
        %v3976 = vadd.f32 0.0, %v3975
        %v3977 = vpop.f32.mrb[0].mxu0
        %3978 = vmatprep.mubr.bf16.mxu0 %v3925
        %3979 = vmatmul.mubr.bf16.gmra.mrb[0].mxu0 %v3910
        %v3980 = vpop.f32.mrb[0].mxu0
        %v3981 = vadd.f32 0.0, %v3980
        %v3982 = vpop.f32.mrb[0].mxu0
        %v3983 = vpop.f32.mrb[0].mxu0
        %v3984 = vadd.f32 0.0, %v3983
        %v3985 = vpop.f32.mrb[0].mxu0
        %3986 = vmatprep.mubr.bf16.mxu0 %v3928
        %3987 = vmatmul.mubr.bf16.gmra.mrb[0].mxu0 %v3912
        %v3988 = vpop.f32.mrb[0].mxu0
        %v3989 = vadd.f32 0.0, %v3988
        %v3990 = vpop.f32.mrb[0].mxu0
        %v3991 = vpop.f32.mrb[0].mxu0
        %v3992 = vpop.f32.mrb[0].mxu0
        %3993 = vdwg.mxu0
        %4001 = vrot.lane.b32.xlu0 %v3153, 16
        %v4002 = vpop.permute.xlu0 %4001
        %4003 = vrot.lane.b32.xlu0 %v3156, 16
        %v4004 = vpop.permute.xlu0 %4003
        %4005 = vrot.lane.b32.xlu0 %v3161, 16
        %v4006 = vpop.permute.xlu0 %4005
        %4007 = vrot.lane.b32.xlu0 %v3164, 16
        %v4008 = vpop.permute.xlu0 %4007
        %4009 = vrot.lane.b32.xlu0 %v3169, 16
        %v4010 = vpop.permute.xlu0 %4009
        %4011 = vrot.lane.b32.xlu0 %v3172, 16
        %v4012 = vpop.permute.xlu0 %4011
        %4013 = vrot.lane.b32.xlu0 %v3177, 16
        %v4014 = vpop.permute.xlu0 %4013
        %4029 = vrot.lane.b32.xlu0 %v3269, 32
        %v4030 = vpop.permute.xlu0 %4029
        %4031 = vrot.lane.b32.xlu0 %v3272, 32
        %v4032 = vpop.permute.xlu0 %4031
        %4033 = vrot.lane.b32.xlu0 %v3277, 32
        %v4034 = vpop.permute.xlu0 %4033
        %4035 = vrot.lane.b32.xlu0 %v3280, 32
        %v4036 = vpop.permute.xlu0 %4035
        %4037 = vrot.lane.b32.xlu0 %v3285, 32
        %v4038 = vpop.permute.xlu0 %4037
        %4039 = vrot.lane.b32.xlu0 %v3288, 32
        %v4040 = vpop.permute.xlu0 %4039
        %4041 = vrot.lane.b32.xlu0 %v3293, 32
        %v4042 = vpop.permute.xlu0 %4041
        %4057 = vrot.lane.b32.xlu0 %v3385, 48
        %v4058 = vpop.permute.xlu0 %4057
        %4059 = vrot.lane.b32.xlu0 %v3388, 48
        %v4060 = vpop.permute.xlu0 %4059
        %4061 = vrot.lane.b32.xlu0 %v3393, 48
        %v4062 = vpop.permute.xlu0 %4061
        %4063 = vrot.lane.b32.xlu0 %v3396, 48
        %v4064 = vpop.permute.xlu0 %4063
        %4065 = vrot.lane.b32.xlu0 %v3401, 48
        %v4066 = vpop.permute.xlu0 %4065
        %4067 = vrot.lane.b32.xlu0 %v3404, 48
        %v4068 = vpop.permute.xlu0 %4067
        %4069 = vrot.lane.b32.xlu0 %v3409, 48
        %v4070 = vpop.permute.xlu0 %4069
        %4085 = vrot.lane.b32.xlu0 %v3501, 64
        %v4086 = vpop.permute.xlu0 %4085
        %4087 = vrot.lane.b32.xlu0 %v3504, 64
        %v4088 = vpop.permute.xlu0 %4087
        %4089 = vrot.lane.b32.xlu0 %v3509, 64
        %v4090 = vpop.permute.xlu0 %4089
        %4091 = vrot.lane.b32.xlu0 %v3512, 64
        %v4092 = vpop.permute.xlu0 %4091
        %4093 = vrot.lane.b32.xlu0 %v3517, 64
        %v4094 = vpop.permute.xlu0 %4093
        %4095 = vrot.lane.b32.xlu0 %v3520, 64
        %v4096 = vpop.permute.xlu0 %4095
        %4097 = vrot.lane.b32.xlu0 %v3525, 64
        %v4098 = vpop.permute.xlu0 %4097
        %4113 = vrot.lane.b32.xlu0 %v3617, 80
        %v4114 = vpop.permute.xlu0 %4113
        %4115 = vrot.lane.b32.xlu0 %v3620, 80
        %v4116 = vpop.permute.xlu0 %4115
        %4117 = vrot.lane.b32.xlu0 %v3625, 80
        %v4118 = vpop.permute.xlu0 %4117
        %4119 = vrot.lane.b32.xlu0 %v3628, 80
        %v4120 = vpop.permute.xlu0 %4119
        %4121 = vrot.lane.b32.xlu0 %v3633, 80
        %v4122 = vpop.permute.xlu0 %4121
        %4123 = vrot.lane.b32.xlu0 %v3636, 80
        %v4124 = vpop.permute.xlu0 %4123
        %4125 = vrot.lane.b32.xlu0 %v3641, 80
        %v4126 = vpop.permute.xlu0 %4125
        %4141 = vrot.lane.b32.xlu0 %v3733, 96
        %v4142 = vpop.permute.xlu0 %4141
        %4143 = vrot.lane.b32.xlu0 %v3736, 96
        %v4144 = vpop.permute.xlu0 %4143
        %4145 = vrot.lane.b32.xlu0 %v3741, 96
        %v4146 = vpop.permute.xlu0 %4145
        %4147 = vrot.lane.b32.xlu0 %v3744, 96
        %v4148 = vpop.permute.xlu0 %4147
        %4149 = vrot.lane.b32.xlu0 %v3749, 96
        %v4150 = vpop.permute.xlu0 %4149
        %4151 = vrot.lane.b32.xlu0 %v3752, 96
        %v4152 = vpop.permute.xlu0 %4151
        %4153 = vrot.lane.b32.xlu0 %v3757, 96
        %v4154 = vpop.permute.xlu0 %4153
        %4169 = vrot.lane.b32.xlu0 %v3849, 112
        %v4170 = vpop.permute.xlu0 %4169
        %4171 = vrot.lane.b32.xlu0 %v3852, 112
        %v4172 = vpop.permute.xlu0 %4171
        %4173 = vrot.lane.b32.xlu0 %v3857, 112
        %v4174 = vpop.permute.xlu0 %4173
        %4175 = vrot.lane.b32.xlu0 %v3860, 112
        %v4176 = vpop.permute.xlu0 %4175
        %4177 = vrot.lane.b32.xlu0 %v3865, 112
        %v4178 = vpop.permute.xlu0 %4177
        %4179 = vrot.lane.b32.xlu0 %v3868, 112
        %v4180 = vpop.permute.xlu0 %4179
        %4181 = vrot.lane.b32.xlu0 %v3873, 112
        %v4182 = vpop.permute.xlu0 %4181
        %v4190 = vsel %vm2720, %v3037, %v4002
        %v4191 = vsel %vm2720, %v3040, %v4004
        %v4192 = vsel %vm2720, %v3045, %v4006
        %v4193 = vsel %vm2720, %v3048, %v4008
        %v4194 = vsel %vm2720, %v3053, %v4010
        %v4195 = vsel %vm2720, %v3056, %v4012
        %v4196 = vsel %vm2720, %v3061, %v4014
        %v4197 = vsel %vm2728, %v4190, %v4030
        %v4198 = vsel %vm2728, %v4191, %v4032
        %v4199 = vsel %vm2728, %v4192, %v4034
        %v4200 = vsel %vm2728, %v4193, %v4036
        %v4201 = vsel %vm2728, %v4194, %v4038
        %v4202 = vsel %vm2728, %v4195, %v4040
        %v4203 = vsel %vm2728, %v4196, %v4042
        %v4204 = vsel %vm2736, %v4197, %v4058
        %v4205 = vsel %vm2736, %v4198, %v4060
        %v4206 = vsel %vm2736, %v4199, %v4062
        %v4207 = vsel %vm2736, %v4200, %v4064
        %v4208 = vsel %vm2736, %v4201, %v4066
        %v4209 = vsel %vm2736, %v4202, %v4068
        %v4210 = vsel %vm2736, %v4203, %v4070
        %v4211 = vsel %vm2744, %v4204, %v4086
        %v4212 = vsel %vm2744, %v4205, %v4088
        %v4213 = vsel %vm2744, %v4206, %v4090
        %v4214 = vsel %vm2744, %v4207, %v4092
        %v4215 = vsel %vm2744, %v4208, %v4094
        %v4216 = vsel %vm2744, %v4209, %v4096
        %v4217 = vsel %vm2744, %v4210, %v4098
        %v4218 = vsel %vm1511, %v4211, %v4114
        %v4219 = vsel %vm1511, %v4212, %v4116
        %v4220 = vsel %vm1511, %v4213, %v4118
        %v4221 = vsel %vm1511, %v4214, %v4120
        %v4222 = vsel %vm1511, %v4215, %v4122
        %v4223 = vsel %vm1511, %v4216, %v4124
        %v4224 = vsel %vm1511, %v4217, %v4126
        %v4225 = vsel %vm2759, %v4218, %v4142
        %v4226 = vsel %vm2759, %v4219, %v4144
        %v4227 = vsel %vm2759, %v4220, %v4146
        %v4228 = vsel %vm2759, %v4221, %v4148
        %v4229 = vsel %vm2759, %v4222, %v4150
        %v4230 = vsel %vm2759, %v4223, %v4152
        %v4231 = vsel %vm2759, %v4224, %v4154
        %v4232 = vsel %vm2767, %v4225, %v4170
        %v4233 = vsel %vm2767, %v4226, %v4172
        %v4234 = vsel %vm2767, %v4227, %v4174
        %v4235 = vsel %vm2767, %v4228, %v4176
        %v4236 = vsel %vm2767, %v4229, %v4178
        %v4237 = vsel %vm2767, %v4230, %v4180
        %v4238 = vsel %vm2767, %v4231, %v4182
        %v4239 = vpack.c.bf16 %v4233, %v4232
        %v4240 = vpack.c.bf16 %v3968, %v3965
        %v4241 = vpack.c.bf16 %v4235, %v4234
        %v4242 = vpack.c.bf16 %v3976, %v3973
        %v4243 = vpack.c.bf16 %v4237, %v4236
        %v4244 = vpack.c.bf16 %v3984, %v3981
        %v4245 = vpack.c.bf16 %v4238, %v4238
        %v4246 = vpack.c.bf16 %v3989, %v3989
        %v4248 = vsel %vm2720, %v4240, 0
        %v4251 = vsel %vm2720, %v4242, 0
        %v4254 = vsel %vm2720, %v4244, 0
        %v4257 = vsel %vm2720, %v4246, 0
        %4259 = vmatprep.subr.bf16.mxu0 0
        %4260 = vmatpush1.bf16.msra.mxu0 %v2825
        %4261 = vmatprep.subr.bf16.mxu0 0
        %4262 = vmatpush1.bf16.msra.mxu0 %v2826
        %4263 = vmatprep.subr.bf16.mxu0 0
        %4264 = vmatpush1.bf16.msra.mxu0 %v2827
        %4265 = vmatprep.subr.bf16.mxu0 0
        %4266 = vmatpush1.bf16.msra.mxu0 %v2828
        %4267 = vmatprep.subr.bf16.mxu0 0
        %4268 = vmatpush1.bf16.msra.mxu0 %v2829
        %4269 = vmatprep.subr.bf16.mxu0 0
        %4270 = vmatpush1.bf16.msra.mxu0 %v2830
        %4271 = vmatprep.subr.bf16.mxu0 0
        %4272 = vmatpush1.bf16.msra.mxu0 %v2831
        %4273 = vmatprep.subr.bf16.mxu0 0
        %4274 = vmatpush1.bf16.msra.mxu0 %v2832
        %4275 = vmatprep.subr.bf16.mxu0 0
        %4276 = vmatpush1.bf16.msra.mxu0 %v2833
        %4277 = vmatprep.subr.bf16.mxu0 0
        %4278 = vmatpush1.bf16.msra.mxu0 0
        %4279 = vmatprep.subr.bf16.mxu0 0
        %4280 = vmatpush1.bf16.msra.mxu0 0
        %4281 = vmatprep.subr.bf16.mxu0 0
        %4282 = vmatpush1.bf16.msra.mxu0 0
        %4283 = vmatprep.subr.bf16.mxu0 0
        %4284 = vmatpush1.bf16.msra.mxu0 0
        %4285 = vmatprep.subr.bf16.mxu0 0
        %4286 = vmatpush1.bf16.msra.mxu0 0
        %4287 = vmatprep.subr.bf16.mxu0 0
        %4288 = vmatpush1.bf16.msra.mxu0 0
        %4289 = vmatprep.subr.bf16.mxu0 0
        %4290 = vmatpush1.bf16.msra.mxu0 0
        %4291 = vmatprep.mubr.bf16.mxu0 %v4248
        %4292 = vmatmul.mubr.bf16.gmra.mrb[0].mxu0 %v4239
        %v4293 = vpop.f32.mrb[0].mxu0
        %v4294 = vadd.f32 %v2787, %v4293
        %v4295 = vpop.f32.mrb[0].mxu0
        %v4296 = vpop.f32.mrb[0].mxu0
        %v4297 = vadd.f32 %v2787, %v4296
        %v4298 = vpop.f32.mrb[0].mxu0
        %4299 = vmatprep.mubr.bf16.mxu0 %v4251
        %4300 = vmatmul.mubr.bf16.gmra.mrb[0].mxu0 %v4241
        %v4301 = vpop.f32.mrb[0].mxu0
        %v4302 = vadd.f32 %v2787, %v4301
        %v4303 = vpop.f32.mrb[0].mxu0
        %v4304 = vpop.f32.mrb[0].mxu0
        %v4305 = vadd.f32 %v2787, %v4304
        %v4306 = vpop.f32.mrb[0].mxu0
        %4307 = vmatprep.mubr.bf16.mxu0 %v4254
        %4308 = vmatmul.mubr.bf16.gmra.mrb[0].mxu0 %v4243
        %v4309 = vpop.f32.mrb[0].mxu0
        %v4310 = vadd.f32 %v2787, %v4309
        %v4311 = vpop.f32.mrb[0].mxu0
        %v4312 = vpop.f32.mrb[0].mxu0
        %v4313 = vadd.f32 %v2787, %v4312
        %v4314 = vpop.f32.mrb[0].mxu0
        %4315 = vmatprep.mubr.bf16.mxu0 %v4257
        %4316 = vmatmul.mubr.bf16.gmra.mrb[0].mxu0 %v4245
        %v4317 = vpop.f32.mrb[0].mxu0
        %v4318 = vadd.f32 %v2787, %v4317
        %v4319 = vpop.f32.mrb[0].mxu0
        %v4320 = vpop.f32.mrb[0].mxu0
        %v4321 = vpop.f32.mrb[0].mxu0
        %4322 = vdwg.mxu0
        %v4323 = vmax.f32 %v4294, 0.0
        %v4324 = vmax.f32 %v4297, 0.0
        %v4325 = vmax.f32 %v4302, 0.0
        %v4326 = vmax.f32 %v4305, 0.0
        %v4327 = vmax.f32 %v4310, 0.0
        %v4328 = vmax.f32 %v4313, 0.0
        %v4329 = vmax.f32 %v4318, 0.0
        %s4330 = scalar_lea.vmem %s293, 56
        %4331 = vst [vmem:[%s4330] sm:$0xff] %v4323
        %4332 = vst [vmem:[%s4330 + $0x8] sm:$0xff] %v4324
        %4333 = vst [vmem:[%s4330 + $0x10] sm:$0xff] %v4325
        %4334 = vst [vmem:[%s4330 + $0x18] sm:$0xff] %v4326
        %4335 = vst [vmem:[%s4330 + $0x20] sm:$0xff] %v4327
        %4336 = vst [vmem:[%s4330 + $0x28] sm:$0xff] %v4328
        %4337 = vst [vmem:[%s4330 + $0x30] sm:$0x1] %v4329
        %v4338 = vadd.f32 %v4323, %v4324
        %v4339 = vadd.f32 %v4338, %v4325
        %v4340 = vadd.f32 %v4339, %v4326
        %v4341 = vadd.f32 %v4340, %v4327
        %v4342 = vadd.f32 %v4341, %v4328
        %v4343 = vsel %vm2938, %v4329, 0.0
        %v4344 = vadd.f32 %v4342, %v4343
        %v4345 = vrot.slane %v4344, 4
        %v4346 = vadd.f32 %v4344, %v4345
        %v4347 = vrot.slane %v4346, 2
        %v4348 = vadd.f32 %v4346, %v4347
        %v4349 = vrot.slane %v4348, 1
        %v4350 = vadd.f32 %v4348, %v4349
        %v4351 = vmul.f32 %v4350, %v2947
        %s4352 = scalar_lea.vmem %s281, 1 [#allocation2]
        %4353 = vst [vmem:[%s4352] sm:$0x1] %v4351
        %v4354 = vld [vmem:[%s3] sm:$0xff]
        %v4355 = vld [vmem:[%s3 + $0x8] sm:$0xff]
        %v4356 = vld [vmem:[%s3 + $0x10] sm:$0xff]
        %v4357 = vld [vmem:[%s3 + $0x18] sm:$0xff]
        %v4358 = vld [vmem:[%s3 + $0x20] sm:$0xff]
        %v4359 = vld [vmem:[%s3 + $0x28] sm:$0xff]
        %v4360 = vld [vmem:[%s3 + $0x30] sm:$0x11]
        %v4368 = vunpack.c.l.b16 %v4354
        %v4369 = vunpack.c.h.b16 %v4354
        %v4370 = vunpack.c.l.b16 %v4355
        %v4371 = vunpack.c.h.b16 %v4355
        %v4372 = vunpack.c.l.b16 %v4356
        %v4373 = vunpack.c.h.b16 %v4356
        %v4374 = vunpack.c.l.b16 %v4357
        %v4375 = vunpack.c.h.b16 %v4357
        %v4376 = vunpack.c.l.b16 %v4358
        %v4377 = vunpack.c.h.b16 %v4358
        %v4378 = vunpack.c.l.b16 %v4359
        %v4379 = vunpack.c.h.b16 %v4359
        %v4380 = vunpack.c.l.b16 %v4360
        %v4381 = vunpack.c.h.b16 %v4360
        %v4382 = vpack.c.b16 %v4370, %v4368
        %v4383 = vpack.c.b16 %v4371, %v4369
        %v4384 = vpack.c.b16 %v4374, %v4372
        %v4385 = vpack.c.b16 %v4375, %v4373
        %v4386 = vpack.c.b16 %v4378, %v4376
        %v4387 = vpack.c.b16 %v4379, %v4377
        %v4388 = vpack.c.b16 %v4380, %v4380
        %v4389 = vpack.c.b16 %v4381, %v4381
        %v4395 = vsel %vm1511, %v4383, 0
        %v4398 = vsel %vm1511, %v4385, 0
        %v4401 = vsel %vm1511, %v4387, 0
        %v4404 = vsel %vm1511, %v4389, 0
        %4406 = vmatprep.subr.bf16.mxu0 0
        %4407 = vmatpush1.bf16.msra.mxu0 %v1426
        %4408 = vmatprep.subr.bf16.mxu0 0
        %4409 = vmatpush1.bf16.msra.mxu0 %v1427
        %4410 = vmatprep.subr.bf16.mxu0 0
        %4411 = vmatpush1.bf16.msra.mxu0 %v1428
        %4412 = vmatprep.subr.bf16.mxu0 0
        %4413 = vmatpush1.bf16.msra.mxu0 %v1429
        %4414 = vmatprep.subr.bf16.mxu0 0
        %4415 = vmatpush1.bf16.msra.mxu0 %v1430
        %4416 = vmatprep.subr.bf16.mxu0 0
        %4417 = vmatpush1.bf16.msra.mxu0 %v1431
        %4418 = vmatprep.subr.bf16.mxu0 0
        %4419 = vmatpush1.bf16.msra.mxu0 %v1432
        %4420 = vmatprep.subr.bf16.mxu0 0
        %4421 = vmatpush1.bf16.msra.mxu0 %v1433
        %4422 = vmatprep.subr.bf16.mxu0 0
        %4423 = vmatpush1.bf16.msra.mxu0 %v1434
        %4424 = vmatprep.subr.bf16.mxu0 0
        %4425 = vmatpush1.bf16.msra.mxu0 %v1435
        %4426 = vmatprep.subr.bf16.mxu0 0
        %4427 = vmatpush1.bf16.msra.mxu0 %v1436
        %4428 = vmatprep.subr.bf16.mxu0 0
        %4429 = vmatpush1.bf16.msra.mxu0 %v1437
        %4430 = vmatprep.subr.bf16.mxu0 0
        %4431 = vmatpush1.bf16.msra.mxu0 %v1438
        %4432 = vmatprep.subr.bf16.mxu0 0
        %4433 = vmatpush1.bf16.msra.mxu0 0
        %4434 = vmatprep.subr.bf16.mxu0 0
        %4435 = vmatpush1.bf16.msra.mxu0 0
        %4436 = vmatprep.subr.bf16.mxu0 0
        %4437 = vmatpush1.bf16.msra.mxu0 0
        %4438 = vmatprep.mubr.bf16.mxu0 %v4395
        %4439 = vmatmul.mubr.bf16.gmra.mrb[0].mxu0 %v4382
        %v4440 = vpop.f32.mrb[0].mxu0
        %v4441 = vadd.f32 0.0, %v4440
        %v4442 = vpop.f32.mrb[0].mxu0
        %v4443 = vpop.f32.mrb[0].mxu0
        %v4444 = vadd.f32 0.0, %v4443
        %v4445 = vpop.f32.mrb[0].mxu0
        %4446 = vmatprep.mubr.bf16.mxu0 %v4398
        %4447 = vmatmul.mubr.bf16.gmra.mrb[0].mxu0 %v4384
        %v4448 = vpop.f32.mrb[0].mxu0
        %v4449 = vadd.f32 0.0, %v4448
        %v4450 = vpop.f32.mrb[0].mxu0
        %v4451 = vpop.f32.mrb[0].mxu0
        %v4452 = vadd.f32 0.0, %v4451
        %v4453 = vpop.f32.mrb[0].mxu0
        %4454 = vmatprep.mubr.bf16.mxu0 %v4401
        %4455 = vmatmul.mubr.bf16.gmra.mrb[0].mxu0 %v4386
        %v4456 = vpop.f32.mrb[0].mxu0
        %v4457 = vadd.f32 0.0, %v4456
        %v4458 = vpop.f32.mrb[0].mxu0
        %v4459 = vpop.f32.mrb[0].mxu0
        %v4460 = vadd.f32 0.0, %v4459
        %v4461 = vpop.f32.mrb[0].mxu0
        %4462 = vmatprep.mubr.bf16.mxu0 %v4404
        %4463 = vmatmul.mubr.bf16.gmra.mrb[0].mxu0 %v4388
        %v4464 = vpop.f32.mrb[0].mxu0
        %v4465 = vadd.f32 0.0, %v4464
        %v4466 = vpop.f32.mrb[0].mxu0
        %v4467 = vpop.f32.mrb[0].mxu0
        %v4468 = vpop.f32.mrb[0].mxu0
        %4469 = vdwg.mxu0
        %v4470 = vld [vmem:[%s1588] sm:$0xff]
        %v4471 = vld [vmem:[%s1588 + $0x8] sm:$0xff]
        %v4472 = vld [vmem:[%s1588 + $0x10] sm:$0xff]
        %v4473 = vld [vmem:[%s1588 + $0x18] sm:$0xff]
        %v4474 = vld [vmem:[%s1588 + $0x20] sm:$0xff]
        %v4475 = vld [vmem:[%s1588 + $0x28] sm:$0xff]
        %v4476 = vld [vmem:[%s1588 + $0x30] sm:$0x11]
        %v4484 = vunpack.c.l.b16 %v4470
        %v4485 = vunpack.c.h.b16 %v4470
        %v4486 = vunpack.c.l.b16 %v4471
        %v4487 = vunpack.c.h.b16 %v4471
        %v4488 = vunpack.c.l.b16 %v4472
        %v4489 = vunpack.c.h.b16 %v4472
        %v4490 = vunpack.c.l.b16 %v4473
        %v4491 = vunpack.c.h.b16 %v4473
        %v4492 = vunpack.c.l.b16 %v4474
        %v4493 = vunpack.c.h.b16 %v4474
        %v4494 = vunpack.c.l.b16 %v4475
        %v4495 = vunpack.c.h.b16 %v4475
        %v4496 = vunpack.c.l.b16 %v4476
        %v4497 = vunpack.c.h.b16 %v4476
        %v4498 = vpack.c.b16 %v4486, %v4484
        %v4499 = vpack.c.b16 %v4487, %v4485
        %v4500 = vpack.c.b16 %v4490, %v4488
        %v4501 = vpack.c.b16 %v4491, %v4489
        %v4502 = vpack.c.b16 %v4494, %v4492
        %v4503 = vpack.c.b16 %v4495, %v4493
        %v4504 = vpack.c.b16 %v4496, %v4496
        %v4505 = vpack.c.b16 %v4497, %v4497
        %v4511 = vsel %vm1511, %v4499, 0
        %v4514 = vsel %vm1511, %v4501, 0
        %v4517 = vsel %vm1511, %v4503, 0
        %v4520 = vsel %vm1511, %v4505, 0
        %4522 = vmatprep.subr.bf16.mxu0 0
        %4523 = vmatpush1.bf16.msra.mxu0 %v1426
        %4524 = vmatprep.subr.bf16.mxu0 0
        %4525 = vmatpush1.bf16.msra.mxu0 %v1427
        %4526 = vmatprep.subr.bf16.mxu0 0
        %4527 = vmatpush1.bf16.msra.mxu0 %v1428
        %4528 = vmatprep.subr.bf16.mxu0 0
        %4529 = vmatpush1.bf16.msra.mxu0 %v1429
        %4530 = vmatprep.subr.bf16.mxu0 0
        %4531 = vmatpush1.bf16.msra.mxu0 %v1430
        %4532 = vmatprep.subr.bf16.mxu0 0
        %4533 = vmatpush1.bf16.msra.mxu0 %v1431
        %4534 = vmatprep.subr.bf16.mxu0 0
        %4535 = vmatpush1.bf16.msra.mxu0 %v1432
        %4536 = vmatprep.subr.bf16.mxu0 0
        %4537 = vmatpush1.bf16.msra.mxu0 %v1433
        %4538 = vmatprep.subr.bf16.mxu0 0
        %4539 = vmatpush1.bf16.msra.mxu0 %v1434
        %4540 = vmatprep.subr.bf16.mxu0 0
        %4541 = vmatpush1.bf16.msra.mxu0 %v1435
        %4542 = vmatprep.subr.bf16.mxu0 0
        %4543 = vmatpush1.bf16.msra.mxu0 %v1436
        %4544 = vmatprep.subr.bf16.mxu0 0
        %4545 = vmatpush1.bf16.msra.mxu0 %v1437
        %4546 = vmatprep.subr.bf16.mxu0 0
        %4547 = vmatpush1.bf16.msra.mxu0 %v1438
        %4548 = vmatprep.subr.bf16.mxu0 0
        %4549 = vmatpush1.bf16.msra.mxu0 0
        %4550 = vmatprep.subr.bf16.mxu0 0
        %4551 = vmatpush1.bf16.msra.mxu0 0
        %4552 = vmatprep.subr.bf16.mxu0 0
        %4553 = vmatpush1.bf16.msra.mxu0 0
        %4554 = vmatprep.mubr.bf16.mxu0 %v4511
        %4555 = vmatmul.mubr.bf16.gmra.mrb[0].mxu0 %v4498
        %v4556 = vpop.f32.mrb[0].mxu0
        %v4557 = vadd.f32 0.0, %v4556
        %v4558 = vpop.f32.mrb[0].mxu0
        %v4559 = vpop.f32.mrb[0].mxu0
        %v4560 = vadd.f32 0.0, %v4559
        %v4561 = vpop.f32.mrb[0].mxu0
        %4562 = vmatprep.mubr.bf16.mxu0 %v4514
        %4563 = vmatmul.mubr.bf16.gmra.mrb[0].mxu0 %v4500
        %v4564 = vpop.f32.mrb[0].mxu0
        %v4565 = vadd.f32 0.0, %v4564
        %v4566 = vpop.f32.mrb[0].mxu0
        %v4567 = vpop.f32.mrb[0].mxu0
        %v4568 = vadd.f32 0.0, %v4567
        %v4569 = vpop.f32.mrb[0].mxu0
        %4570 = vmatprep.mubr.bf16.mxu0 %v4517
        %4571 = vmatmul.mubr.bf16.gmra.mrb[0].mxu0 %v4502
        %v4572 = vpop.f32.mrb[0].mxu0
        %v4573 = vadd.f32 0.0, %v4572
        %v4574 = vpop.f32.mrb[0].mxu0
        %v4575 = vpop.f32.mrb[0].mxu0
        %v4576 = vadd.f32 0.0, %v4575
        %v4577 = vpop.f32.mrb[0].mxu0
        %4578 = vmatprep.mubr.bf16.mxu0 %v4520
        %4579 = vmatmul.mubr.bf16.gmra.mrb[0].mxu0 %v4504
        %v4580 = vpop.f32.mrb[0].mxu0
        %v4581 = vadd.f32 0.0, %v4580
        %v4582 = vpop.f32.mrb[0].mxu0
        %v4583 = vpop.f32.mrb[0].mxu0
        %v4584 = vpop.f32.mrb[0].mxu0
        %4585 = vdwg.mxu0
        %v4586 = vld [vmem:[%s1705] sm:$0xff]
        %v4587 = vld [vmem:[%s1705 + $0x8] sm:$0xff]
        %v4588 = vld [vmem:[%s1705 + $0x10] sm:$0xff]
        %v4589 = vld [vmem:[%s1705 + $0x18] sm:$0xff]
        %v4590 = vld [vmem:[%s1705 + $0x20] sm:$0xff]
        %v4591 = vld [vmem:[%s1705 + $0x28] sm:$0xff]
        %v4592 = vld [vmem:[%s1705 + $0x30] sm:$0x11]
        %v4600 = vunpack.c.l.b16 %v4586
        %v4601 = vunpack.c.h.b16 %v4586
        %v4602 = vunpack.c.l.b16 %v4587
        %v4603 = vunpack.c.h.b16 %v4587
        %v4604 = vunpack.c.l.b16 %v4588
        %v4605 = vunpack.c.h.b16 %v4588
        %v4606 = vunpack.c.l.b16 %v4589
        %v4607 = vunpack.c.h.b16 %v4589
        %v4608 = vunpack.c.l.b16 %v4590
        %v4609 = vunpack.c.h.b16 %v4590
        %v4610 = vunpack.c.l.b16 %v4591
        %v4611 = vunpack.c.h.b16 %v4591
        %v4612 = vunpack.c.l.b16 %v4592
        %v4613 = vunpack.c.h.b16 %v4592
        %v4614 = vpack.c.b16 %v4602, %v4600
        %v4615 = vpack.c.b16 %v4603, %v4601
        %v4616 = vpack.c.b16 %v4606, %v4604
        %v4617 = vpack.c.b16 %v4607, %v4605
        %v4618 = vpack.c.b16 %v4610, %v4608
        %v4619 = vpack.c.b16 %v4611, %v4609
        %v4620 = vpack.c.b16 %v4612, %v4612
        %v4621 = vpack.c.b16 %v4613, %v4613
        %v4627 = vsel %vm1511, %v4615, 0
        %v4630 = vsel %vm1511, %v4617, 0
        %v4633 = vsel %vm1511, %v4619, 0
        %v4636 = vsel %vm1511, %v4621, 0
        %4638 = vmatprep.subr.bf16.mxu0 0
        %4639 = vmatpush1.bf16.msra.mxu0 %v1426
        %4640 = vmatprep.subr.bf16.mxu0 0
        %4641 = vmatpush1.bf16.msra.mxu0 %v1427
        %4642 = vmatprep.subr.bf16.mxu0 0
        %4643 = vmatpush1.bf16.msra.mxu0 %v1428
        %4644 = vmatprep.subr.bf16.mxu0 0
        %4645 = vmatpush1.bf16.msra.mxu0 %v1429
        %4646 = vmatprep.subr.bf16.mxu0 0
        %4647 = vmatpush1.bf16.msra.mxu0 %v1430
        %4648 = vmatprep.subr.bf16.mxu0 0
        %4649 = vmatpush1.bf16.msra.mxu0 %v1431
        %4650 = vmatprep.subr.bf16.mxu0 0
        %4651 = vmatpush1.bf16.msra.mxu0 %v1432
        %4652 = vmatprep.subr.bf16.mxu0 0
        %4653 = vmatpush1.bf16.msra.mxu0 %v1433
        %4654 = vmatprep.subr.bf16.mxu0 0
        %4655 = vmatpush1.bf16.msra.mxu0 %v1434
        %4656 = vmatprep.subr.bf16.mxu0 0
        %4657 = vmatpush1.bf16.msra.mxu0 %v1435
        %4658 = vmatprep.subr.bf16.mxu0 0
        %4659 = vmatpush1.bf16.msra.mxu0 %v1436
        %4660 = vmatprep.subr.bf16.mxu0 0
        %4661 = vmatpush1.bf16.msra.mxu0 %v1437
        %4662 = vmatprep.subr.bf16.mxu0 0
        %4663 = vmatpush1.bf16.msra.mxu0 %v1438
        %4664 = vmatprep.subr.bf16.mxu0 0
        %4665 = vmatpush1.bf16.msra.mxu0 0
        %4666 = vmatprep.subr.bf16.mxu0 0
        %4667 = vmatpush1.bf16.msra.mxu0 0
        %4668 = vmatprep.subr.bf16.mxu0 0
        %4669 = vmatpush1.bf16.msra.mxu0 0
        %4670 = vmatprep.mubr.bf16.mxu0 %v4627
        %4671 = vmatmul.mubr.bf16.gmra.mrb[0].mxu0 %v4614
        %v4672 = vpop.f32.mrb[0].mxu0
        %v4673 = vadd.f32 0.0, %v4672
        %v4674 = vpop.f32.mrb[0].mxu0
        %v4675 = vpop.f32.mrb[0].mxu0
        %v4676 = vadd.f32 0.0, %v4675
        %v4677 = vpop.f32.mrb[0].mxu0
        %4678 = vmatprep.mubr.bf16.mxu0 %v4630
        %4679 = vmatmul.mubr.bf16.gmra.mrb[0].mxu0 %v4616
        %v4680 = vpop.f32.mrb[0].mxu0
        %v4681 = vadd.f32 0.0, %v4680
        %v4682 = vpop.f32.mrb[0].mxu0
        %v4683 = vpop.f32.mrb[0].mxu0
        %v4684 = vadd.f32 0.0, %v4683
        %v4685 = vpop.f32.mrb[0].mxu0
        %4686 = vmatprep.mubr.bf16.mxu0 %v4633
        %4687 = vmatmul.mubr.bf16.gmra.mrb[0].mxu0 %v4618
        %v4688 = vpop.f32.mrb[0].mxu0
        %v4689 = vadd.f32 0.0, %v4688
        %v4690 = vpop.f32.mrb[0].mxu0
        %v4691 = vpop.f32.mrb[0].mxu0
        %v4692 = vadd.f32 0.0, %v4691
        %v4693 = vpop.f32.mrb[0].mxu0
        %4694 = vmatprep.mubr.bf16.mxu0 %v4636
        %4695 = vmatmul.mubr.bf16.gmra.mrb[0].mxu0 %v4620
        %v4696 = vpop.f32.mrb[0].mxu0
        %v4697 = vadd.f32 0.0, %v4696
        %v4698 = vpop.f32.mrb[0].mxu0
        %v4699 = vpop.f32.mrb[0].mxu0
        %v4700 = vpop.f32.mrb[0].mxu0
        %4701 = vdwg.mxu0
        %v4702 = vld [vmem:[%s1822] sm:$0xff]
        %v4703 = vld [vmem:[%s1822 + $0x8] sm:$0xff]
        %v4704 = vld [vmem:[%s1822 + $0x10] sm:$0xff]
        %v4705 = vld [vmem:[%s1822 + $0x18] sm:$0xff]
        %v4706 = vld [vmem:[%s1822 + $0x20] sm:$0xff]
        %v4707 = vld [vmem:[%s1822 + $0x28] sm:$0xff]
        %v4708 = vld [vmem:[%s1822 + $0x30] sm:$0x11]
        %v4716 = vunpack.c.l.b16 %v4702
        %v4717 = vunpack.c.h.b16 %v4702
        %v4718 = vunpack.c.l.b16 %v4703
        %v4719 = vunpack.c.h.b16 %v4703
        %v4720 = vunpack.c.l.b16 %v4704
        %v4721 = vunpack.c.h.b16 %v4704
        %v4722 = vunpack.c.l.b16 %v4705
        %v4723 = vunpack.c.h.b16 %v4705
        %v4724 = vunpack.c.l.b16 %v4706
        %v4725 = vunpack.c.h.b16 %v4706
        %v4726 = vunpack.c.l.b16 %v4707
        %v4727 = vunpack.c.h.b16 %v4707
        %v4728 = vunpack.c.l.b16 %v4708
        %v4729 = vunpack.c.h.b16 %v4708
        %v4730 = vpack.c.b16 %v4718, %v4716
        %v4731 = vpack.c.b16 %v4719, %v4717
        %v4732 = vpack.c.b16 %v4722, %v4720
        %v4733 = vpack.c.b16 %v4723, %v4721
        %v4734 = vpack.c.b16 %v4726, %v4724
        %v4735 = vpack.c.b16 %v4727, %v4725
        %v4736 = vpack.c.b16 %v4728, %v4728
        %v4737 = vpack.c.b16 %v4729, %v4729
        %v4743 = vsel %vm1511, %v4731, 0
        %v4746 = vsel %vm1511, %v4733, 0
        %v4749 = vsel %vm1511, %v4735, 0
        %v4752 = vsel %vm1511, %v4737, 0
        %4754 = vmatprep.subr.bf16.mxu0 0
        %4755 = vmatpush1.bf16.msra.mxu0 %v1426
        %4756 = vmatprep.subr.bf16.mxu0 0
        %4757 = vmatpush1.bf16.msra.mxu0 %v1427
        %4758 = vmatprep.subr.bf16.mxu0 0
        %4759 = vmatpush1.bf16.msra.mxu0 %v1428
        %4760 = vmatprep.subr.bf16.mxu0 0
        %4761 = vmatpush1.bf16.msra.mxu0 %v1429
        %4762 = vmatprep.subr.bf16.mxu0 0
        %4763 = vmatpush1.bf16.msra.mxu0 %v1430
        %4764 = vmatprep.subr.bf16.mxu0 0
        %4765 = vmatpush1.bf16.msra.mxu0 %v1431
        %4766 = vmatprep.subr.bf16.mxu0 0
        %4767 = vmatpush1.bf16.msra.mxu0 %v1432
        %4768 = vmatprep.subr.bf16.mxu0 0
        %4769 = vmatpush1.bf16.msra.mxu0 %v1433
        %4770 = vmatprep.subr.bf16.mxu0 0
        %4771 = vmatpush1.bf16.msra.mxu0 %v1434
        %4772 = vmatprep.subr.bf16.mxu0 0
        %4773 = vmatpush1.bf16.msra.mxu0 %v1435
        %4774 = vmatprep.subr.bf16.mxu0 0
        %4775 = vmatpush1.bf16.msra.mxu0 %v1436
        %4776 = vmatprep.subr.bf16.mxu0 0
        %4777 = vmatpush1.bf16.msra.mxu0 %v1437
        %4778 = vmatprep.subr.bf16.mxu0 0
        %4779 = vmatpush1.bf16.msra.mxu0 %v1438
        %4780 = vmatprep.subr.bf16.mxu0 0
        %4781 = vmatpush1.bf16.msra.mxu0 0
        %4782 = vmatprep.subr.bf16.mxu0 0
        %4783 = vmatpush1.bf16.msra.mxu0 0
        %4784 = vmatprep.subr.bf16.mxu0 0
        %4785 = vmatpush1.bf16.msra.mxu0 0
        %4786 = vmatprep.mubr.bf16.mxu0 %v4743
        %4787 = vmatmul.mubr.bf16.gmra.mrb[0].mxu0 %v4730
        %v4788 = vpop.f32.mrb[0].mxu0
        %v4789 = vadd.f32 0.0, %v4788
        %v4790 = vpop.f32.mrb[0].mxu0
        %v4791 = vpop.f32.mrb[0].mxu0
        %v4792 = vadd.f32 0.0, %v4791
        %v4793 = vpop.f32.mrb[0].mxu0
        %4794 = vmatprep.mubr.bf16.mxu0 %v4746
        %4795 = vmatmul.mubr.bf16.gmra.mrb[0].mxu0 %v4732
        %v4796 = vpop.f32.mrb[0].mxu0
        %v4797 = vadd.f32 0.0, %v4796
        %v4798 = vpop.f32.mrb[0].mxu0
        %v4799 = vpop.f32.mrb[0].mxu0
        %v4800 = vadd.f32 0.0, %v4799
        %v4801 = vpop.f32.mrb[0].mxu0
        %4802 = vmatprep.mubr.bf16.mxu0 %v4749
        %4803 = vmatmul.mubr.bf16.gmra.mrb[0].mxu0 %v4734
        %v4804 = vpop.f32.mrb[0].mxu0
        %v4805 = vadd.f32 0.0, %v4804
        %v4806 = vpop.f32.mrb[0].mxu0
        %v4807 = vpop.f32.mrb[0].mxu0
        %v4808 = vadd.f32 0.0, %v4807
        %v4809 = vpop.f32.mrb[0].mxu0
        %4810 = vmatprep.mubr.bf16.mxu0 %v4752
        %4811 = vmatmul.mubr.bf16.gmra.mrb[0].mxu0 %v4736
        %v4812 = vpop.f32.mrb[0].mxu0
        %v4813 = vadd.f32 0.0, %v4812
        %v4814 = vpop.f32.mrb[0].mxu0
        %v4815 = vpop.f32.mrb[0].mxu0
        %v4816 = vpop.f32.mrb[0].mxu0
        %4817 = vdwg.mxu0
        %v4818 = vld [vmem:[%s1939] sm:$0xff]
        %v4819 = vld [vmem:[%s1939 + $0x8] sm:$0xff]
        %v4820 = vld [vmem:[%s1939 + $0x10] sm:$0xff]
        %v4821 = vld [vmem:[%s1939 + $0x18] sm:$0xff]
        %v4822 = vld [vmem:[%s1939 + $0x20] sm:$0xff]
        %v4823 = vld [vmem:[%s1939 + $0x28] sm:$0xff]
        %v4824 = vld [vmem:[%s1939 + $0x30] sm:$0x11]
        %v4832 = vunpack.c.l.b16 %v4818
        %v4833 = vunpack.c.h.b16 %v4818
        %v4834 = vunpack.c.l.b16 %v4819
        %v4835 = vunpack.c.h.b16 %v4819
        %v4836 = vunpack.c.l.b16 %v4820
        %v4837 = vunpack.c.h.b16 %v4820
        %v4838 = vunpack.c.l.b16 %v4821
        %v4839 = vunpack.c.h.b16 %v4821
        %v4840 = vunpack.c.l.b16 %v4822
        %v4841 = vunpack.c.h.b16 %v4822
        %v4842 = vunpack.c.l.b16 %v4823
        %v4843 = vunpack.c.h.b16 %v4823
        %v4844 = vunpack.c.l.b16 %v4824
        %v4845 = vunpack.c.h.b16 %v4824
        %v4846 = vpack.c.b16 %v4834, %v4832
        %v4847 = vpack.c.b16 %v4835, %v4833
        %v4848 = vpack.c.b16 %v4838, %v4836
        %v4849 = vpack.c.b16 %v4839, %v4837
        %v4850 = vpack.c.b16 %v4842, %v4840
        %v4851 = vpack.c.b16 %v4843, %v4841
        %v4852 = vpack.c.b16 %v4844, %v4844
        %v4853 = vpack.c.b16 %v4845, %v4845
        %v4859 = vsel %vm1511, %v4847, 0
        %v4862 = vsel %vm1511, %v4849, 0
        %v4865 = vsel %vm1511, %v4851, 0
        %v4868 = vsel %vm1511, %v4853, 0
        %4870 = vmatprep.subr.bf16.mxu0 0
        %4871 = vmatpush1.bf16.msra.mxu0 %v1426
        %4872 = vmatprep.subr.bf16.mxu0 0
        %4873 = vmatpush1.bf16.msra.mxu0 %v1427
        %4874 = vmatprep.subr.bf16.mxu0 0
        %4875 = vmatpush1.bf16.msra.mxu0 %v1428
        %4876 = vmatprep.subr.bf16.mxu0 0
        %4877 = vmatpush1.bf16.msra.mxu0 %v1429
        %4878 = vmatprep.subr.bf16.mxu0 0
        %4879 = vmatpush1.bf16.msra.mxu0 %v1430
        %4880 = vmatprep.subr.bf16.mxu0 0
        %4881 = vmatpush1.bf16.msra.mxu0 %v1431
        %4882 = vmatprep.subr.bf16.mxu0 0
        %4883 = vmatpush1.bf16.msra.mxu0 %v1432
        %4884 = vmatprep.subr.bf16.mxu0 0
        %4885 = vmatpush1.bf16.msra.mxu0 %v1433
        %4886 = vmatprep.subr.bf16.mxu0 0
        %4887 = vmatpush1.bf16.msra.mxu0 %v1434
        %4888 = vmatprep.subr.bf16.mxu0 0
        %4889 = vmatpush1.bf16.msra.mxu0 %v1435
        %4890 = vmatprep.subr.bf16.mxu0 0
        %4891 = vmatpush1.bf16.msra.mxu0 %v1436
        %4892 = vmatprep.subr.bf16.mxu0 0
        %4893 = vmatpush1.bf16.msra.mxu0 %v1437
        %4894 = vmatprep.subr.bf16.mxu0 0
        %4895 = vmatpush1.bf16.msra.mxu0 %v1438
        %4896 = vmatprep.subr.bf16.mxu0 0
        %4897 = vmatpush1.bf16.msra.mxu0 0
        %4898 = vmatprep.subr.bf16.mxu0 0
        %4899 = vmatpush1.bf16.msra.mxu0 0
        %4900 = vmatprep.subr.bf16.mxu0 0
        %4901 = vmatpush1.bf16.msra.mxu0 0
        %4902 = vmatprep.mubr.bf16.mxu0 %v4859
        %4903 = vmatmul.mubr.bf16.gmra.mrb[0].mxu0 %v4846
        %v4904 = vpop.f32.mrb[0].mxu0
        %v4905 = vadd.f32 0.0, %v4904
        %v4906 = vpop.f32.mrb[0].mxu0
        %v4907 = vpop.f32.mrb[0].mxu0
        %v4908 = vadd.f32 0.0, %v4907
        %v4909 = vpop.f32.mrb[0].mxu0
        %4910 = vmatprep.mubr.bf16.mxu0 %v4862
        %4911 = vmatmul.mubr.bf16.gmra.mrb[0].mxu0 %v4848
        %v4912 = vpop.f32.mrb[0].mxu0
        %v4913 = vadd.f32 0.0, %v4912
        %v4914 = vpop.f32.mrb[0].mxu0
        %v4915 = vpop.f32.mrb[0].mxu0
        %v4916 = vadd.f32 0.0, %v4915
        %v4917 = vpop.f32.mrb[0].mxu0
        %4918 = vmatprep.mubr.bf16.mxu0 %v4865
        %4919 = vmatmul.mubr.bf16.gmra.mrb[0].mxu0 %v4850
        %v4920 = vpop.f32.mrb[0].mxu0
        %v4921 = vadd.f32 0.0, %v4920
        %v4922 = vpop.f32.mrb[0].mxu0
        %v4923 = vpop.f32.mrb[0].mxu0
        %v4924 = vadd.f32 0.0, %v4923
        %v4925 = vpop.f32.mrb[0].mxu0
        %4926 = vmatprep.mubr.bf16.mxu0 %v4868
        %4927 = vmatmul.mubr.bf16.gmra.mrb[0].mxu0 %v4852
        %v4928 = vpop.f32.mrb[0].mxu0
        %v4929 = vadd.f32 0.0, %v4928
        %v4930 = vpop.f32.mrb[0].mxu0
        %v4931 = vpop.f32.mrb[0].mxu0
        %v4932 = vpop.f32.mrb[0].mxu0
        %4933 = vdwg.mxu0
        %v4934 = vld [vmem:[%s2056] sm:$0xff]
        %v4935 = vld [vmem:[%s2056 + $0x8] sm:$0xff]
        %v4936 = vld [vmem:[%s2056 + $0x10] sm:$0xff]
        %v4937 = vld [vmem:[%s2056 + $0x18] sm:$0xff]
        %v4938 = vld [vmem:[%s2056 + $0x20] sm:$0xff]
        %v4939 = vld [vmem:[%s2056 + $0x28] sm:$0xff]
        %v4940 = vld [vmem:[%s2056 + $0x30] sm:$0x11]
        %v4948 = vunpack.c.l.b16 %v4934
        %v4949 = vunpack.c.h.b16 %v4934
        %v4950 = vunpack.c.l.b16 %v4935
        %v4951 = vunpack.c.h.b16 %v4935
        %v4952 = vunpack.c.l.b16 %v4936
        %v4953 = vunpack.c.h.b16 %v4936
        %v4954 = vunpack.c.l.b16 %v4937
        %v4955 = vunpack.c.h.b16 %v4937
        %v4956 = vunpack.c.l.b16 %v4938
        %v4957 = vunpack.c.h.b16 %v4938
        %v4958 = vunpack.c.l.b16 %v4939
        %v4959 = vunpack.c.h.b16 %v4939
        %v4960 = vunpack.c.l.b16 %v4940
        %v4961 = vunpack.c.h.b16 %v4940
        %v4962 = vpack.c.b16 %v4950, %v4948
        %v4963 = vpack.c.b16 %v4951, %v4949
        %v4964 = vpack.c.b16 %v4954, %v4952
        %v4965 = vpack.c.b16 %v4955, %v4953
        %v4966 = vpack.c.b16 %v4958, %v4956
        %v4967 = vpack.c.b16 %v4959, %v4957
        %v4968 = vpack.c.b16 %v4960, %v4960
        %v4969 = vpack.c.b16 %v4961, %v4961
        %v4975 = vsel %vm1511, %v4963, 0
        %v4978 = vsel %vm1511, %v4965, 0
        %v4981 = vsel %vm1511, %v4967, 0
        %v4984 = vsel %vm1511, %v4969, 0
        %4986 = vmatprep.subr.bf16.mxu0 0
        %4987 = vmatpush1.bf16.msra.mxu0 %v1426
        %4988 = vmatprep.subr.bf16.mxu0 0
        %4989 = vmatpush1.bf16.msra.mxu0 %v1427
        %4990 = vmatprep.subr.bf16.mxu0 0
        %4991 = vmatpush1.bf16.msra.mxu0 %v1428
        %4992 = vmatprep.subr.bf16.mxu0 0
        %4993 = vmatpush1.bf16.msra.mxu0 %v1429
        %4994 = vmatprep.subr.bf16.mxu0 0
        %4995 = vmatpush1.bf16.msra.mxu0 %v1430
        %4996 = vmatprep.subr.bf16.mxu0 0
        %4997 = vmatpush1.bf16.msra.mxu0 %v1431
        %4998 = vmatprep.subr.bf16.mxu0 0
        %4999 = vmatpush1.bf16.msra.mxu0 %v1432
        %5000 = vmatprep.subr.bf16.mxu0 0
        %5001 = vmatpush1.bf16.msra.mxu0 %v1433
        %5002 = vmatprep.subr.bf16.mxu0 0
        %5003 = vmatpush1.bf16.msra.mxu0 %v1434
        %5004 = vmatprep.subr.bf16.mxu0 0
        %5005 = vmatpush1.bf16.msra.mxu0 %v1435
        %5006 = vmatprep.subr.bf16.mxu0 0
        %5007 = vmatpush1.bf16.msra.mxu0 %v1436
        %5008 = vmatprep.subr.bf16.mxu0 0
        %5009 = vmatpush1.bf16.msra.mxu0 %v1437
        %5010 = vmatprep.subr.bf16.mxu0 0
        %5011 = vmatpush1.bf16.msra.mxu0 %v1438
        %5012 = vmatprep.subr.bf16.mxu0 0
        %5013 = vmatpush1.bf16.msra.mxu0 0
        %5014 = vmatprep.subr.bf16.mxu0 0
        %5015 = vmatpush1.bf16.msra.mxu0 0
        %5016 = vmatprep.subr.bf16.mxu0 0
        %5017 = vmatpush1.bf16.msra.mxu0 0
        %5018 = vmatprep.mubr.bf16.mxu0 %v4975
        %5019 = vmatmul.mubr.bf16.gmra.mrb[0].mxu0 %v4962
        %v5020 = vpop.f32.mrb[0].mxu0
        %v5021 = vadd.f32 0.0, %v5020
        %v5022 = vpop.f32.mrb[0].mxu0
        %v5023 = vpop.f32.mrb[0].mxu0
        %v5024 = vadd.f32 0.0, %v5023
        %v5025 = vpop.f32.mrb[0].mxu0
        %5026 = vmatprep.mubr.bf16.mxu0 %v4978
        %5027 = vmatmul.mubr.bf16.gmra.mrb[0].mxu0 %v4964
        %v5028 = vpop.f32.mrb[0].mxu0
        %v5029 = vadd.f32 0.0, %v5028
        %v5030 = vpop.f32.mrb[0].mxu0
        %v5031 = vpop.f32.mrb[0].mxu0
        %v5032 = vadd.f32 0.0, %v5031
        %v5033 = vpop.f32.mrb[0].mxu0
        %5034 = vmatprep.mubr.bf16.mxu0 %v4981
        %5035 = vmatmul.mubr.bf16.gmra.mrb[0].mxu0 %v4966
        %v5036 = vpop.f32.mrb[0].mxu0
        %v5037 = vadd.f32 0.0, %v5036
        %v5038 = vpop.f32.mrb[0].mxu0
        %v5039 = vpop.f32.mrb[0].mxu0
        %v5040 = vadd.f32 0.0, %v5039
        %v5041 = vpop.f32.mrb[0].mxu0
        %5042 = vmatprep.mubr.bf16.mxu0 %v4984
        %5043 = vmatmul.mubr.bf16.gmra.mrb[0].mxu0 %v4968
        %v5044 = vpop.f32.mrb[0].mxu0
        %v5045 = vadd.f32 0.0, %v5044
        %v5046 = vpop.f32.mrb[0].mxu0
        %v5047 = vpop.f32.mrb[0].mxu0
        %v5048 = vpop.f32.mrb[0].mxu0
        %5049 = vdwg.mxu0
        %v5050 = vld [vmem:[%s2173] sm:$0xff]
        %v5051 = vld [vmem:[%s2173 + $0x8] sm:$0xff]
        %v5052 = vld [vmem:[%s2173 + $0x10] sm:$0xff]
        %v5053 = vld [vmem:[%s2173 + $0x18] sm:$0xff]
        %v5054 = vld [vmem:[%s2173 + $0x20] sm:$0xff]
        %v5055 = vld [vmem:[%s2173 + $0x28] sm:$0xff]
        %v5056 = vld [vmem:[%s2173 + $0x30] sm:$0x11]
        %v5064 = vunpack.c.l.b16 %v5050
        %v5065 = vunpack.c.h.b16 %v5050
        %v5066 = vunpack.c.l.b16 %v5051
        %v5067 = vunpack.c.h.b16 %v5051
        %v5068 = vunpack.c.l.b16 %v5052
        %v5069 = vunpack.c.h.b16 %v5052
        %v5070 = vunpack.c.l.b16 %v5053
        %v5071 = vunpack.c.h.b16 %v5053
        %v5072 = vunpack.c.l.b16 %v5054
        %v5073 = vunpack.c.h.b16 %v5054
        %v5074 = vunpack.c.l.b16 %v5055
        %v5075 = vunpack.c.h.b16 %v5055
        %v5076 = vunpack.c.l.b16 %v5056
        %v5077 = vunpack.c.h.b16 %v5056
        %v5078 = vpack.c.b16 %v5066, %v5064
        %v5079 = vpack.c.b16 %v5067, %v5065
        %v5080 = vpack.c.b16 %v5070, %v5068
        %v5081 = vpack.c.b16 %v5071, %v5069
        %v5082 = vpack.c.b16 %v5074, %v5072
        %v5083 = vpack.c.b16 %v5075, %v5073
        %v5084 = vpack.c.b16 %v5076, %v5076
        %v5085 = vpack.c.b16 %v5077, %v5077
        %v5091 = vsel %vm1511, %v5079, 0
        %v5094 = vsel %vm1511, %v5081, 0
        %v5097 = vsel %vm1511, %v5083, 0
        %v5100 = vsel %vm1511, %v5085, 0
        %5102 = vmatprep.subr.bf16.mxu0 0
        %5103 = vmatpush1.bf16.msra.mxu0 %v1426
        %5104 = vmatprep.subr.bf16.mxu0 0
        %5105 = vmatpush1.bf16.msra.mxu0 %v1427
        %5106 = vmatprep.subr.bf16.mxu0 0
        %5107 = vmatpush1.bf16.msra.mxu0 %v1428
        %5108 = vmatprep.subr.bf16.mxu0 0
        %5109 = vmatpush1.bf16.msra.mxu0 %v1429
        %5110 = vmatprep.subr.bf16.mxu0 0
        %5111 = vmatpush1.bf16.msra.mxu0 %v1430
        %5112 = vmatprep.subr.bf16.mxu0 0
        %5113 = vmatpush1.bf16.msra.mxu0 %v1431
        %5114 = vmatprep.subr.bf16.mxu0 0
        %5115 = vmatpush1.bf16.msra.mxu0 %v1432
        %5116 = vmatprep.subr.bf16.mxu0 0
        %5117 = vmatpush1.bf16.msra.mxu0 %v1433
        %5118 = vmatprep.subr.bf16.mxu0 0
        %5119 = vmatpush1.bf16.msra.mxu0 %v1434
        %5120 = vmatprep.subr.bf16.mxu0 0
        %5121 = vmatpush1.bf16.msra.mxu0 %v1435
        %5122 = vmatprep.subr.bf16.mxu0 0
        %5123 = vmatpush1.bf16.msra.mxu0 %v1436
        %5124 = vmatprep.subr.bf16.mxu0 0
        %5125 = vmatpush1.bf16.msra.mxu0 %v1437
        %5126 = vmatprep.subr.bf16.mxu0 0
        %5127 = vmatpush1.bf16.msra.mxu0 %v1438
        %5128 = vmatprep.subr.bf16.mxu0 0
        %5129 = vmatpush1.bf16.msra.mxu0 0
        %5130 = vmatprep.subr.bf16.mxu0 0
        %5131 = vmatpush1.bf16.msra.mxu0 0
        %5132 = vmatprep.subr.bf16.mxu0 0
        %5133 = vmatpush1.bf16.msra.mxu0 0
        %5134 = vmatprep.mubr.bf16.mxu0 %v5091
        %5135 = vmatmul.mubr.bf16.gmra.mrb[0].mxu0 %v5078
        %v5136 = vpop.f32.mrb[0].mxu0
        %v5137 = vadd.f32 0.0, %v5136
        %v5138 = vpop.f32.mrb[0].mxu0
        %v5139 = vpop.f32.mrb[0].mxu0
        %v5140 = vadd.f32 0.0, %v5139
        %v5141 = vpop.f32.mrb[0].mxu0
        %5142 = vmatprep.mubr.bf16.mxu0 %v5094
        %5143 = vmatmul.mubr.bf16.gmra.mrb[0].mxu0 %v5080
        %v5144 = vpop.f32.mrb[0].mxu0
        %v5145 = vadd.f32 0.0, %v5144
        %v5146 = vpop.f32.mrb[0].mxu0
        %v5147 = vpop.f32.mrb[0].mxu0
        %v5148 = vadd.f32 0.0, %v5147
        %v5149 = vpop.f32.mrb[0].mxu0
        %5150 = vmatprep.mubr.bf16.mxu0 %v5097
        %5151 = vmatmul.mubr.bf16.gmra.mrb[0].mxu0 %v5082
        %v5152 = vpop.f32.mrb[0].mxu0
        %v5153 = vadd.f32 0.0, %v5152
        %v5154 = vpop.f32.mrb[0].mxu0
        %v5155 = vpop.f32.mrb[0].mxu0
        %v5156 = vadd.f32 0.0, %v5155
        %v5157 = vpop.f32.mrb[0].mxu0
        %5158 = vmatprep.mubr.bf16.mxu0 %v5100
        %5159 = vmatmul.mubr.bf16.gmra.mrb[0].mxu0 %v5084
        %v5160 = vpop.f32.mrb[0].mxu0
        %v5161 = vadd.f32 0.0, %v5160
        %v5162 = vpop.f32.mrb[0].mxu0
        %v5163 = vpop.f32.mrb[0].mxu0
        %v5164 = vpop.f32.mrb[0].mxu0
        %5165 = vdwg.mxu0
        %v5166 = vld [vmem:[%s2290] sm:$0xff]
        %v5167 = vld [vmem:[%s2290 + $0x8] sm:$0xff]
        %v5168 = vld [vmem:[%s2290 + $0x10] sm:$0xff]
        %v5169 = vld [vmem:[%s2290 + $0x18] sm:$0xff]
        %v5170 = vld [vmem:[%s2290 + $0x20] sm:$0xff]
        %v5171 = vld [vmem:[%s2290 + $0x28] sm:$0xff]
        %v5172 = vld [vmem:[%s2290 + $0x30] sm:$0x11]
        %v5180 = vunpack.c.l.b16 %v5166
        %v5181 = vunpack.c.h.b16 %v5166
        %v5182 = vunpack.c.l.b16 %v5167
        %v5183 = vunpack.c.h.b16 %v5167
        %v5184 = vunpack.c.l.b16 %v5168
        %v5185 = vunpack.c.h.b16 %v5168
        %v5186 = vunpack.c.l.b16 %v5169
        %v5187 = vunpack.c.h.b16 %v5169
        %v5188 = vunpack.c.l.b16 %v5170
        %v5189 = vunpack.c.h.b16 %v5170
        %v5190 = vunpack.c.l.b16 %v5171
        %v5191 = vunpack.c.h.b16 %v5171
        %v5192 = vunpack.c.l.b16 %v5172
        %v5193 = vunpack.c.h.b16 %v5172
        %v5194 = vpack.c.b16 %v5182, %v5180
        %v5195 = vpack.c.b16 %v5183, %v5181
        %v5196 = vpack.c.b16 %v5186, %v5184
        %v5197 = vpack.c.b16 %v5187, %v5185
        %v5198 = vpack.c.b16 %v5190, %v5188
        %v5199 = vpack.c.b16 %v5191, %v5189
        %v5200 = vpack.c.b16 %v5192, %v5192
        %v5201 = vpack.c.b16 %v5193, %v5193
        %v5207 = vsel %vm1511, %v5195, 0
        %v5210 = vsel %vm1511, %v5197, 0
        %v5213 = vsel %vm1511, %v5199, 0
        %v5216 = vsel %vm1511, %v5201, 0
        %5218 = vmatprep.subr.bf16.mxu0 0
        %5219 = vmatpush1.bf16.msra.mxu0 %v1426
        %5220 = vmatprep.subr.bf16.mxu0 0
        %5221 = vmatpush1.bf16.msra.mxu0 %v1427
        %5222 = vmatprep.subr.bf16.mxu0 0
        %5223 = vmatpush1.bf16.msra.mxu0 %v1428
        %5224 = vmatprep.subr.bf16.mxu0 0
        %5225 = vmatpush1.bf16.msra.mxu0 %v1429
        %5226 = vmatprep.subr.bf16.mxu0 0
        %5227 = vmatpush1.bf16.msra.mxu0 %v1430
        %5228 = vmatprep.subr.bf16.mxu0 0
        %5229 = vmatpush1.bf16.msra.mxu0 %v1431
        %5230 = vmatprep.subr.bf16.mxu0 0
        %5231 = vmatpush1.bf16.msra.mxu0 %v1432
        %5232 = vmatprep.subr.bf16.mxu0 0
        %5233 = vmatpush1.bf16.msra.mxu0 %v1433
        %5234 = vmatprep.subr.bf16.mxu0 0
        %5235 = vmatpush1.bf16.msra.mxu0 %v1434
        %5236 = vmatprep.subr.bf16.mxu0 0
        %5237 = vmatpush1.bf16.msra.mxu0 %v1435
        %5238 = vmatprep.subr.bf16.mxu0 0
        %5239 = vmatpush1.bf16.msra.mxu0 %v1436
        %5240 = vmatprep.subr.bf16.mxu0 0
        %5241 = vmatpush1.bf16.msra.mxu0 %v1437
        %5242 = vmatprep.subr.bf16.mxu0 0
        %5243 = vmatpush1.bf16.msra.mxu0 %v1438
        %5244 = vmatprep.subr.bf16.mxu0 0
        %5245 = vmatpush1.bf16.msra.mxu0 0
        %5246 = vmatprep.subr.bf16.mxu0 0
        %5247 = vmatpush1.bf16.msra.mxu0 0
        %5248 = vmatprep.subr.bf16.mxu0 0
        %5249 = vmatpush1.bf16.msra.mxu0 0
        %5250 = vmatprep.mubr.bf16.mxu0 %v5207
        %5251 = vmatmul.mubr.bf16.gmra.mrb[0].mxu0 %v5194
        %v5252 = vpop.f32.mrb[0].mxu0
        %v5253 = vadd.f32 0.0, %v5252
        %v5254 = vpop.f32.mrb[0].mxu0
        %v5255 = vpop.f32.mrb[0].mxu0
        %v5256 = vadd.f32 0.0, %v5255
        %v5257 = vpop.f32.mrb[0].mxu0
        %5258 = vmatprep.mubr.bf16.mxu0 %v5210
        %5259 = vmatmul.mubr.bf16.gmra.mrb[0].mxu0 %v5196
        %v5260 = vpop.f32.mrb[0].mxu0
        %v5261 = vadd.f32 0.0, %v5260
        %v5262 = vpop.f32.mrb[0].mxu0
        %v5263 = vpop.f32.mrb[0].mxu0
        %v5264 = vadd.f32 0.0, %v5263
        %v5265 = vpop.f32.mrb[0].mxu0
        %5266 = vmatprep.mubr.bf16.mxu0 %v5213
        %5267 = vmatmul.mubr.bf16.gmra.mrb[0].mxu0 %v5198
        %v5268 = vpop.f32.mrb[0].mxu0
        %v5269 = vadd.f32 0.0, %v5268
        %v5270 = vpop.f32.mrb[0].mxu0
        %v5271 = vpop.f32.mrb[0].mxu0
        %v5272 = vadd.f32 0.0, %v5271
        %v5273 = vpop.f32.mrb[0].mxu0
        %5274 = vmatprep.mubr.bf16.mxu0 %v5216
        %5275 = vmatmul.mubr.bf16.gmra.mrb[0].mxu0 %v5200
        %v5276 = vpop.f32.mrb[0].mxu0
        %v5277 = vadd.f32 0.0, %v5276
        %v5278 = vpop.f32.mrb[0].mxu0
        %v5279 = vpop.f32.mrb[0].mxu0
        %v5280 = vpop.f32.mrb[0].mxu0
        %5281 = vdwg.mxu0
        %v5282 = vld [vmem:[%s2407] sm:$0xff]
        %v5283 = vld [vmem:[%s2407 + $0x8] sm:$0xff]
        %v5284 = vld [vmem:[%s2407 + $0x10] sm:$0xff]
        %v5285 = vld [vmem:[%s2407 + $0x18] sm:$0xff]
        %v5286 = vld [vmem:[%s2407 + $0x20] sm:$0xff]
        %v5287 = vld [vmem:[%s2407 + $0x28] sm:$0xff]
        %v5288 = vld [vmem:[%s2407 + $0x30] sm:$0x11]
        %v5296 = vunpack.c.l.b16 %v5282
        %v5297 = vunpack.c.h.b16 %v5282
        %v5298 = vunpack.c.l.b16 %v5283
        %v5299 = vunpack.c.h.b16 %v5283
        %v5300 = vunpack.c.l.b16 %v5284
        %v5301 = vunpack.c.h.b16 %v5284
        %v5302 = vunpack.c.l.b16 %v5285
        %v5303 = vunpack.c.h.b16 %v5285
        %v5304 = vunpack.c.l.b16 %v5286
        %v5305 = vunpack.c.h.b16 %v5286
        %v5306 = vunpack.c.l.b16 %v5287
        %v5307 = vunpack.c.h.b16 %v5287
        %v5308 = vunpack.c.l.b16 %v5288
        %v5309 = vunpack.c.h.b16 %v5288
        %v5310 = vpack.c.b16 %v5298, %v5296
        %v5311 = vpack.c.b16 %v5299, %v5297
        %v5312 = vpack.c.b16 %v5302, %v5300
        %v5313 = vpack.c.b16 %v5303, %v5301
        %v5314 = vpack.c.b16 %v5306, %v5304
        %v5315 = vpack.c.b16 %v5307, %v5305
        %v5316 = vpack.c.b16 %v5308, %v5308
        %v5317 = vpack.c.b16 %v5309, %v5309
        %v5323 = vsel %vm1511, %v5311, 0
        %v5326 = vsel %vm1511, %v5313, 0
        %v5329 = vsel %vm1511, %v5315, 0
        %v5332 = vsel %vm1511, %v5317, 0
        %5334 = vmatprep.subr.bf16.mxu0 0
        %5335 = vmatpush1.bf16.msra.mxu0 %v1426
        %5336 = vmatprep.subr.bf16.mxu0 0
        %5337 = vmatpush1.bf16.msra.mxu0 %v1427
        %5338 = vmatprep.subr.bf16.mxu0 0
        %5339 = vmatpush1.bf16.msra.mxu0 %v1428
        %5340 = vmatprep.subr.bf16.mxu0 0
        %5341 = vmatpush1.bf16.msra.mxu0 %v1429
        %5342 = vmatprep.subr.bf16.mxu0 0
        %5343 = vmatpush1.bf16.msra.mxu0 %v1430
        %5344 = vmatprep.subr.bf16.mxu0 0
        %5345 = vmatpush1.bf16.msra.mxu0 %v1431
        %5346 = vmatprep.subr.bf16.mxu0 0
        %5347 = vmatpush1.bf16.msra.mxu0 %v1432
        %5348 = vmatprep.subr.bf16.mxu0 0
        %5349 = vmatpush1.bf16.msra.mxu0 %v1433
        %5350 = vmatprep.subr.bf16.mxu0 0
        %5351 = vmatpush1.bf16.msra.mxu0 %v1434
        %5352 = vmatprep.subr.bf16.mxu0 0
        %5353 = vmatpush1.bf16.msra.mxu0 %v1435
        %5354 = vmatprep.subr.bf16.mxu0 0
        %5355 = vmatpush1.bf16.msra.mxu0 %v1436
        %5356 = vmatprep.subr.bf16.mxu0 0
        %5357 = vmatpush1.bf16.msra.mxu0 %v1437
        %5358 = vmatprep.subr.bf16.mxu0 0
        %5359 = vmatpush1.bf16.msra.mxu0 %v1438
        %5360 = vmatprep.subr.bf16.mxu0 0
        %5361 = vmatpush1.bf16.msra.mxu0 0
        %5362 = vmatprep.subr.bf16.mxu0 0
        %5363 = vmatpush1.bf16.msra.mxu0 0
        %5364 = vmatprep.subr.bf16.mxu0 0
        %5365 = vmatpush1.bf16.msra.mxu0 0
        %5366 = vmatprep.mubr.bf16.mxu0 %v5323
        %5367 = vmatmul.mubr.bf16.gmra.mrb[0].mxu0 %v5310
        %v5368 = vpop.f32.mrb[0].mxu0
        %v5369 = vadd.f32 0.0, %v5368
        %v5370 = vpop.f32.mrb[0].mxu0
        %v5371 = vpop.f32.mrb[0].mxu0
        %v5372 = vadd.f32 0.0, %v5371
        %v5373 = vpop.f32.mrb[0].mxu0
        %5374 = vmatprep.mubr.bf16.mxu0 %v5326
        %5375 = vmatmul.mubr.bf16.gmra.mrb[0].mxu0 %v5312
        %v5376 = vpop.f32.mrb[0].mxu0
        %v5377 = vadd.f32 0.0, %v5376
        %v5378 = vpop.f32.mrb[0].mxu0
        %v5379 = vpop.f32.mrb[0].mxu0
        %v5380 = vadd.f32 0.0, %v5379
        %v5381 = vpop.f32.mrb[0].mxu0
        %5382 = vmatprep.mubr.bf16.mxu0 %v5329
        %5383 = vmatmul.mubr.bf16.gmra.mrb[0].mxu0 %v5314
        %v5384 = vpop.f32.mrb[0].mxu0
        %v5385 = vadd.f32 0.0, %v5384
        %v5386 = vpop.f32.mrb[0].mxu0
        %v5387 = vpop.f32.mrb[0].mxu0
        %v5388 = vadd.f32 0.0, %v5387
        %v5389 = vpop.f32.mrb[0].mxu0
        %5390 = vmatprep.mubr.bf16.mxu0 %v5332
        %5391 = vmatmul.mubr.bf16.gmra.mrb[0].mxu0 %v5316
        %v5392 = vpop.f32.mrb[0].mxu0
        %v5393 = vadd.f32 0.0, %v5392
        %v5394 = vpop.f32.mrb[0].mxu0
        %v5395 = vpop.f32.mrb[0].mxu0
        %v5396 = vpop.f32.mrb[0].mxu0
        %5397 = vdwg.mxu0
        %5405 = vrot.lane.b32.xlu0 %v4557, 16
        %v5406 = vpop.permute.xlu0 %5405
        %5407 = vrot.lane.b32.xlu0 %v4560, 16
        %v5408 = vpop.permute.xlu0 %5407
        %5409 = vrot.lane.b32.xlu0 %v4565, 16
        %v5410 = vpop.permute.xlu0 %5409
        %5411 = vrot.lane.b32.xlu0 %v4568, 16
        %v5412 = vpop.permute.xlu0 %5411
        %5413 = vrot.lane.b32.xlu0 %v4573, 16
        %v5414 = vpop.permute.xlu0 %5413
        %5415 = vrot.lane.b32.xlu0 %v4576, 16
        %v5416 = vpop.permute.xlu0 %5415
        %5417 = vrot.lane.b32.xlu0 %v4581, 16
        %v5418 = vpop.permute.xlu0 %5417
        %5433 = vrot.lane.b32.xlu0 %v4673, 32
        %v5434 = vpop.permute.xlu0 %5433
        %5435 = vrot.lane.b32.xlu0 %v4676, 32
        %v5436 = vpop.permute.xlu0 %5435
        %5437 = vrot.lane.b32.xlu0 %v4681, 32
        %v5438 = vpop.permute.xlu0 %5437
        %5439 = vrot.lane.b32.xlu0 %v4684, 32
        %v5440 = vpop.permute.xlu0 %5439
        %5441 = vrot.lane.b32.xlu0 %v4689, 32
        %v5442 = vpop.permute.xlu0 %5441
        %5443 = vrot.lane.b32.xlu0 %v4692, 32
        %v5444 = vpop.permute.xlu0 %5443
        %5445 = vrot.lane.b32.xlu0 %v4697, 32
        %v5446 = vpop.permute.xlu0 %5445
        %5461 = vrot.lane.b32.xlu0 %v4789, 48
        %v5462 = vpop.permute.xlu0 %5461
        %5463 = vrot.lane.b32.xlu0 %v4792, 48
        %v5464 = vpop.permute.xlu0 %5463
        %5465 = vrot.lane.b32.xlu0 %v4797, 48
        %v5466 = vpop.permute.xlu0 %5465
        %5467 = vrot.lane.b32.xlu0 %v4800, 48
        %v5468 = vpop.permute.xlu0 %5467
        %5469 = vrot.lane.b32.xlu0 %v4805, 48
        %v5470 = vpop.permute.xlu0 %5469
        %5471 = vrot.lane.b32.xlu0 %v4808, 48
        %v5472 = vpop.permute.xlu0 %5471
        %5473 = vrot.lane.b32.xlu0 %v4813, 48
        %v5474 = vpop.permute.xlu0 %5473
        %5489 = vrot.lane.b32.xlu0 %v4905, 64
        %v5490 = vpop.permute.xlu0 %5489
        %5491 = vrot.lane.b32.xlu0 %v4908, 64
        %v5492 = vpop.permute.xlu0 %5491
        %5493 = vrot.lane.b32.xlu0 %v4913, 64
        %v5494 = vpop.permute.xlu0 %5493
        %5495 = vrot.lane.b32.xlu0 %v4916, 64
        %v5496 = vpop.permute.xlu0 %5495
        %5497 = vrot.lane.b32.xlu0 %v4921, 64
        %v5498 = vpop.permute.xlu0 %5497
        %5499 = vrot.lane.b32.xlu0 %v4924, 64
        %v5500 = vpop.permute.xlu0 %5499
        %5501 = vrot.lane.b32.xlu0 %v4929, 64
        %v5502 = vpop.permute.xlu0 %5501
        %5517 = vrot.lane.b32.xlu0 %v5021, 80
        %v5518 = vpop.permute.xlu0 %5517
        %5519 = vrot.lane.b32.xlu0 %v5024, 80
        %v5520 = vpop.permute.xlu0 %5519
        %5521 = vrot.lane.b32.xlu0 %v5029, 80
        %v5522 = vpop.permute.xlu0 %5521
        %5523 = vrot.lane.b32.xlu0 %v5032, 80
        %v5524 = vpop.permute.xlu0 %5523
        %5525 = vrot.lane.b32.xlu0 %v5037, 80
        %v5526 = vpop.permute.xlu0 %5525
        %5527 = vrot.lane.b32.xlu0 %v5040, 80
        %v5528 = vpop.permute.xlu0 %5527
        %5529 = vrot.lane.b32.xlu0 %v5045, 80
        %v5530 = vpop.permute.xlu0 %5529
        %5545 = vrot.lane.b32.xlu0 %v5137, 96
        %v5546 = vpop.permute.xlu0 %5545
        %5547 = vrot.lane.b32.xlu0 %v5140, 96
        %v5548 = vpop.permute.xlu0 %5547
        %5549 = vrot.lane.b32.xlu0 %v5145, 96
        %v5550 = vpop.permute.xlu0 %5549
        %5551 = vrot.lane.b32.xlu0 %v5148, 96
        %v5552 = vpop.permute.xlu0 %5551
        %5553 = vrot.lane.b32.xlu0 %v5153, 96
        %v5554 = vpop.permute.xlu0 %5553
        %5555 = vrot.lane.b32.xlu0 %v5156, 96
        %v5556 = vpop.permute.xlu0 %5555
        %5557 = vrot.lane.b32.xlu0 %v5161, 96
        %v5558 = vpop.permute.xlu0 %5557
        %5573 = vrot.lane.b32.xlu0 %v5253, 112
        %v5574 = vpop.permute.xlu0 %5573
        %5575 = vrot.lane.b32.xlu0 %v5256, 112
        %v5576 = vpop.permute.xlu0 %5575
        %5577 = vrot.lane.b32.xlu0 %v5261, 112
        %v5578 = vpop.permute.xlu0 %5577
        %5579 = vrot.lane.b32.xlu0 %v5264, 112
        %v5580 = vpop.permute.xlu0 %5579
        %5581 = vrot.lane.b32.xlu0 %v5269, 112
        %v5582 = vpop.permute.xlu0 %5581
        %5583 = vrot.lane.b32.xlu0 %v5272, 112
        %v5584 = vpop.permute.xlu0 %5583
        %5585 = vrot.lane.b32.xlu0 %v5277, 112
        %v5586 = vpop.permute.xlu0 %5585
        %v5594 = vsel %vm2720, %v4441, %v5406
        %v5595 = vsel %vm2720, %v4444, %v5408
        %v5596 = vsel %vm2720, %v4449, %v5410
        %v5597 = vsel %vm2720, %v4452, %v5412
        %v5598 = vsel %vm2720, %v4457, %v5414
        %v5599 = vsel %vm2720, %v4460, %v5416
        %v5600 = vsel %vm2720, %v4465, %v5418
        %v5601 = vsel %vm2728, %v5594, %v5434
        %v5602 = vsel %vm2728, %v5595, %v5436
        %v5603 = vsel %vm2728, %v5596, %v5438
        %v5604 = vsel %vm2728, %v5597, %v5440
        %v5605 = vsel %vm2728, %v5598, %v5442
        %v5606 = vsel %vm2728, %v5599, %v5444
        %v5607 = vsel %vm2728, %v5600, %v5446
        %v5608 = vsel %vm2736, %v5601, %v5462
        %v5609 = vsel %vm2736, %v5602, %v5464
        %v5610 = vsel %vm2736, %v5603, %v5466
        %v5611 = vsel %vm2736, %v5604, %v5468
        %v5612 = vsel %vm2736, %v5605, %v5470
        %v5613 = vsel %vm2736, %v5606, %v5472
        %v5614 = vsel %vm2736, %v5607, %v5474
        %v5615 = vsel %vm2744, %v5608, %v5490
        %v5616 = vsel %vm2744, %v5609, %v5492
        %v5617 = vsel %vm2744, %v5610, %v5494
        %v5618 = vsel %vm2744, %v5611, %v5496
        %v5619 = vsel %vm2744, %v5612, %v5498
        %v5620 = vsel %vm2744, %v5613, %v5500
        %v5621 = vsel %vm2744, %v5614, %v5502
        %v5622 = vsel %vm1511, %v5615, %v5518
        %v5623 = vsel %vm1511, %v5616, %v5520
        %v5624 = vsel %vm1511, %v5617, %v5522
        %v5625 = vsel %vm1511, %v5618, %v5524
        %v5626 = vsel %vm1511, %v5619, %v5526
        %v5627 = vsel %vm1511, %v5620, %v5528
        %v5628 = vsel %vm1511, %v5621, %v5530
        %v5629 = vsel %vm2759, %v5622, %v5546
        %v5630 = vsel %vm2759, %v5623, %v5548
        %v5631 = vsel %vm2759, %v5624, %v5550
        %v5632 = vsel %vm2759, %v5625, %v5552
        %v5633 = vsel %vm2759, %v5626, %v5554
        %v5634 = vsel %vm2759, %v5627, %v5556
        %v5635 = vsel %vm2759, %v5628, %v5558
        %v5636 = vsel %vm2767, %v5629, %v5574
        %v5637 = vsel %vm2767, %v5630, %v5576
        %v5638 = vsel %vm2767, %v5631, %v5578
        %v5639 = vsel %vm2767, %v5632, %v5580
        %v5640 = vsel %vm2767, %v5633, %v5582
        %v5641 = vsel %vm2767, %v5634, %v5584
        %v5642 = vsel %vm2767, %v5635, %v5586
        %v5643 = vpack.c.bf16 %v5637, %v5636
        %v5644 = vpack.c.bf16 %v5372, %v5369
        %v5645 = vpack.c.bf16 %v5639, %v5638
        %v5646 = vpack.c.bf16 %v5380, %v5377
        %v5647 = vpack.c.bf16 %v5641, %v5640
        %v5648 = vpack.c.bf16 %v5388, %v5385
        %v5649 = vpack.c.bf16 %v5642, %v5642
        %v5650 = vpack.c.bf16 %v5393, %v5393
        %v5652 = vsel %vm2720, %v5644, 0
        %v5655 = vsel %vm2720, %v5646, 0
        %v5658 = vsel %vm2720, %v5648, 0
        %v5661 = vsel %vm2720, %v5650, 0
        %5663 = vmatprep.subr.bf16.mxu0 0
        %5664 = vmatpush1.bf16.msra.mxu0 %v2825
        %5665 = vmatprep.subr.bf16.mxu0 0
        %5666 = vmatpush1.bf16.msra.mxu0 %v2826
        %5667 = vmatprep.subr.bf16.mxu0 0
        %5668 = vmatpush1.bf16.msra.mxu0 %v2827
        %5669 = vmatprep.subr.bf16.mxu0 0
        %5670 = vmatpush1.bf16.msra.mxu0 %v2828
        %5671 = vmatprep.subr.bf16.mxu0 0
        %5672 = vmatpush1.bf16.msra.mxu0 %v2829
        %5673 = vmatprep.subr.bf16.mxu0 0
        %5674 = vmatpush1.bf16.msra.mxu0 %v2830
        %5675 = vmatprep.subr.bf16.mxu0 0
        %5676 = vmatpush1.bf16.msra.mxu0 %v2831
        %5677 = vmatprep.subr.bf16.mxu0 0
        %5678 = vmatpush1.bf16.msra.mxu0 %v2832
        %5679 = vmatprep.subr.bf16.mxu0 0
        %5680 = vmatpush1.bf16.msra.mxu0 %v2833
        %5681 = vmatprep.subr.bf16.mxu0 0
        %5682 = vmatpush1.bf16.msra.mxu0 0
        %5683 = vmatprep.subr.bf16.mxu0 0
        %5684 = vmatpush1.bf16.msra.mxu0 0
        %5685 = vmatprep.subr.bf16.mxu0 0
        %5686 = vmatpush1.bf16.msra.mxu0 0
        %5687 = vmatprep.subr.bf16.mxu0 0
        %5688 = vmatpush1.bf16.msra.mxu0 0
        %5689 = vmatprep.subr.bf16.mxu0 0
        %5690 = vmatpush1.bf16.msra.mxu0 0
        %5691 = vmatprep.subr.bf16.mxu0 0
        %5692 = vmatpush1.bf16.msra.mxu0 0
        %5693 = vmatprep.subr.bf16.mxu0 0
        %5694 = vmatpush1.bf16.msra.mxu0 0
        %5695 = vmatprep.mubr.bf16.mxu0 %v5652
        %5696 = vmatmul.mubr.bf16.gmra.mrb[0].mxu0 %v5643
        %v5697 = vpop.f32.mrb[0].mxu0
        %v5698 = vadd.f32 %v2787, %v5697
        %v5699 = vpop.f32.mrb[0].mxu0
        %v5700 = vpop.f32.mrb[0].mxu0
        %v5701 = vadd.f32 %v2787, %v5700
        %v5702 = vpop.f32.mrb[0].mxu0
        %5703 = vmatprep.mubr.bf16.mxu0 %v5655
        %5704 = vmatmul.mubr.bf16.gmra.mrb[0].mxu0 %v5645
        %v5705 = vpop.f32.mrb[0].mxu0
        %v5706 = vadd.f32 %v2787, %v5705
        %v5707 = vpop.f32.mrb[0].mxu0
        %v5708 = vpop.f32.mrb[0].mxu0
        %v5709 = vadd.f32 %v2787, %v5708
        %v5710 = vpop.f32.mrb[0].mxu0
        %5711 = vmatprep.mubr.bf16.mxu0 %v5658
        %5712 = vmatmul.mubr.bf16.gmra.mrb[0].mxu0 %v5647
        %v5713 = vpop.f32.mrb[0].mxu0
        %v5714 = vadd.f32 %v2787, %v5713
        %v5715 = vpop.f32.mrb[0].mxu0
        %v5716 = vpop.f32.mrb[0].mxu0
        %v5717 = vadd.f32 %v2787, %v5716
        %v5718 = vpop.f32.mrb[0].mxu0
        %5719 = vmatprep.mubr.bf16.mxu0 %v5661
        %5720 = vmatmul.mubr.bf16.gmra.mrb[0].mxu0 %v5649
        %v5721 = vpop.f32.mrb[0].mxu0
        %v5722 = vadd.f32 %v2787, %v5721
        %v5723 = vpop.f32.mrb[0].mxu0
        %v5724 = vpop.f32.mrb[0].mxu0
        %v5725 = vpop.f32.mrb[0].mxu0
        %5726 = vdwg.mxu0
        %v5727 = vmax.f32 %v5698, 0.0
        %v5728 = vmax.f32 %v5701, 0.0
        %v5729 = vmax.f32 %v5706, 0.0
        %v5730 = vmax.f32 %v5709, 0.0
        %v5731 = vmax.f32 %v5714, 0.0
        %v5732 = vmax.f32 %v5717, 0.0
        %v5733 = vmax.f32 %v5722, 0.0
        %s5734 = scalar_lea.vmem %s293, 112
        %5735 = vst [vmem:[%s5734] sm:$0xff] %v5727
        %5736 = vst [vmem:[%s5734 + $0x8] sm:$0xff] %v5728
        %5737 = vst [vmem:[%s5734 + $0x10] sm:$0xff] %v5729
        %5738 = vst [vmem:[%s5734 + $0x18] sm:$0xff] %v5730
        %5739 = vst [vmem:[%s5734 + $0x20] sm:$0xff] %v5731
        %5740 = vst [vmem:[%s5734 + $0x28] sm:$0xff] %v5732
        %5741 = vst [vmem:[%s5734 + $0x30] sm:$0x1] %v5733
        %v5742 = vadd.f32 %v5727, %v5728
        %v5743 = vadd.f32 %v5742, %v5729
        %v5744 = vadd.f32 %v5743, %v5730
        %v5745 = vadd.f32 %v5744, %v5731
        %v5746 = vadd.f32 %v5745, %v5732
        %v5747 = vsel %vm2938, %v5733, 0.0
        %v5748 = vadd.f32 %v5746, %v5747
        %v5749 = vrot.slane %v5748, 4
        %v5750 = vadd.f32 %v5748, %v5749
        %v5751 = vrot.slane %v5750, 2
        %v5752 = vadd.f32 %v5750, %v5751
        %v5753 = vrot.slane %v5752, 1
        %v5754 = vadd.f32 %v5752, %v5753
        %v5755 = vmul.f32 %v5754, %v2947
        %s5756 = scalar_lea.vmem %s281, 2 [#allocation2]
        %5757 = vst [vmem:[%s5756] sm:$0x1] %v5755
        %v5758 = vld [vmem:[%s3] sm:$0xff]
        %v5759 = vld [vmem:[%s3 + $0x8] sm:$0xff]
        %v5760 = vld [vmem:[%s3 + $0x10] sm:$0xff]
        %v5761 = vld [vmem:[%s3 + $0x18] sm:$0xff]
        %v5762 = vld [vmem:[%s3 + $0x20] sm:$0xff]
        %v5763 = vld [vmem:[%s3 + $0x28] sm:$0xff]
        %v5764 = vld [vmem:[%s3 + $0x30] sm:$0x11]
        %v5772 = vunpack.c.l.b16 %v5758
        %v5773 = vunpack.c.h.b16 %v5758
        %v5774 = vunpack.c.l.b16 %v5759
        %v5775 = vunpack.c.h.b16 %v5759
        %v5776 = vunpack.c.l.b16 %v5760
        %v5777 = vunpack.c.h.b16 %v5760
        %v5778 = vunpack.c.l.b16 %v5761
        %v5779 = vunpack.c.h.b16 %v5761
        %v5780 = vunpack.c.l.b16 %v5762
        %v5781 = vunpack.c.h.b16 %v5762
        %v5782 = vunpack.c.l.b16 %v5763
        %v5783 = vunpack.c.h.b16 %v5763
        %v5784 = vunpack.c.l.b16 %v5764
        %v5785 = vunpack.c.h.b16 %v5764
        %v5786 = vpack.c.b16 %v5774, %v5772
        %v5787 = vpack.c.b16 %v5775, %v5773
        %v5788 = vpack.c.b16 %v5778, %v5776
        %v5789 = vpack.c.b16 %v5779, %v5777
        %v5790 = vpack.c.b16 %v5782, %v5780
        %v5791 = vpack.c.b16 %v5783, %v5781
        %v5792 = vpack.c.b16 %v5784, %v5784
        %v5793 = vpack.c.b16 %v5785, %v5785
        %v5799 = vsel %vm1511, %v5787, 0
        %v5802 = vsel %vm1511, %v5789, 0
        %v5805 = vsel %vm1511, %v5791, 0
        %v5808 = vsel %vm1511, %v5793, 0
        %5810 = vmatprep.subr.bf16.mxu0 0
        %5811 = vmatpush1.bf16.msra.mxu0 %v1439
        %5812 = vmatprep.subr.bf16.mxu0 0
        %5813 = vmatpush1.bf16.msra.mxu0 %v1440
        %5814 = vmatprep.subr.bf16.mxu0 0
        %5815 = vmatpush1.bf16.msra.mxu0 %v1441
        %5816 = vmatprep.subr.bf16.mxu0 0
        %5817 = vmatpush1.bf16.msra.mxu0 %v1442
        %5818 = vmatprep.subr.bf16.mxu0 0
        %5819 = vmatpush1.bf16.msra.mxu0 %v1443
        %5820 = vmatprep.subr.bf16.mxu0 0
        %5821 = vmatpush1.bf16.msra.mxu0 %v1444
        %5822 = vmatprep.subr.bf16.mxu0 0
        %5823 = vmatpush1.bf16.msra.mxu0 %v1445
        %5824 = vmatprep.subr.bf16.mxu0 0
        %5825 = vmatpush1.bf16.msra.mxu0 %v1446
        %5826 = vmatprep.subr.bf16.mxu0 0
        %5827 = vmatpush1.bf16.msra.mxu0 %v1447
        %5828 = vmatprep.subr.bf16.mxu0 0
        %5829 = vmatpush1.bf16.msra.mxu0 %v1448
        %5830 = vmatprep.subr.bf16.mxu0 0
        %5831 = vmatpush1.bf16.msra.mxu0 %v1449
        %5832 = vmatprep.subr.bf16.mxu0 0
        %5833 = vmatpush1.bf16.msra.mxu0 %v1450
        %5834 = vmatprep.subr.bf16.mxu0 0
        %5835 = vmatpush1.bf16.msra.mxu0 %v1451
        %5836 = vmatprep.subr.bf16.mxu0 0
        %5837 = vmatpush1.bf16.msra.mxu0 0
        %5838 = vmatprep.subr.bf16.mxu0 0
        %5839 = vmatpush1.bf16.msra.mxu0 0
        %5840 = vmatprep.subr.bf16.mxu0 0
        %5841 = vmatpush1.bf16.msra.mxu0 0
        %5842 = vmatprep.mubr.bf16.mxu0 %v5799
        %5843 = vmatmul.mubr.bf16.gmra.mrb[0].mxu0 %v5786
        %v5844 = vpop.f32.mrb[0].mxu0
        %v5845 = vadd.f32 0.0, %v5844
        %v5846 = vpop.f32.mrb[0].mxu0
        %v5847 = vpop.f32.mrb[0].mxu0
        %v5848 = vadd.f32 0.0, %v5847
        %v5849 = vpop.f32.mrb[0].mxu0
        %5850 = vmatprep.mubr.bf16.mxu0 %v5802
        %5851 = vmatmul.mubr.bf16.gmra.mrb[0].mxu0 %v5788
        %v5852 = vpop.f32.mrb[0].mxu0
        %v5853 = vadd.f32 0.0, %v5852
        %v5854 = vpop.f32.mrb[0].mxu0
        %v5855 = vpop.f32.mrb[0].mxu0
        %v5856 = vadd.f32 0.0, %v5855
        %v5857 = vpop.f32.mrb[0].mxu0
        %5858 = vmatprep.mubr.bf16.mxu0 %v5805
        %5859 = vmatmul.mubr.bf16.gmra.mrb[0].mxu0 %v5790
        %v5860 = vpop.f32.mrb[0].mxu0
        %v5861 = vadd.f32 0.0, %v5860
        %v5862 = vpop.f32.mrb[0].mxu0
        %v5863 = vpop.f32.mrb[0].mxu0
        %v5864 = vadd.f32 0.0, %v5863
        %v5865 = vpop.f32.mrb[0].mxu0
        %5866 = vmatprep.mubr.bf16.mxu0 %v5808
        %5867 = vmatmul.mubr.bf16.gmra.mrb[0].mxu0 %v5792
        %v5868 = vpop.f32.mrb[0].mxu0
        %v5869 = vadd.f32 0.0, %v5868
        %v5870 = vpop.f32.mrb[0].mxu0
        %v5871 = vpop.f32.mrb[0].mxu0
        %v5872 = vpop.f32.mrb[0].mxu0
        %5873 = vdwg.mxu0
        %v5874 = vld [vmem:[%s1588] sm:$0xff]
        %v5875 = vld [vmem:[%s1588 + $0x8] sm:$0xff]
        %v5876 = vld [vmem:[%s1588 + $0x10] sm:$0xff]
        %v5877 = vld [vmem:[%s1588 + $0x18] sm:$0xff]
        %v5878 = vld [vmem:[%s1588 + $0x20] sm:$0xff]
        %v5879 = vld [vmem:[%s1588 + $0x28] sm:$0xff]
        %v5880 = vld [vmem:[%s1588 + $0x30] sm:$0x11]
        %v5888 = vunpack.c.l.b16 %v5874
        %v5889 = vunpack.c.h.b16 %v5874
        %v5890 = vunpack.c.l.b16 %v5875
        %v5891 = vunpack.c.h.b16 %v5875
        %v5892 = vunpack.c.l.b16 %v5876
        %v5893 = vunpack.c.h.b16 %v5876
        %v5894 = vunpack.c.l.b16 %v5877
        %v5895 = vunpack.c.h.b16 %v5877
        %v5896 = vunpack.c.l.b16 %v5878
        %v5897 = vunpack.c.h.b16 %v5878
        %v5898 = vunpack.c.l.b16 %v5879
        %v5899 = vunpack.c.h.b16 %v5879
        %v5900 = vunpack.c.l.b16 %v5880
        %v5901 = vunpack.c.h.b16 %v5880
        %v5902 = vpack.c.b16 %v5890, %v5888
        %v5903 = vpack.c.b16 %v5891, %v5889
        %v5904 = vpack.c.b16 %v5894, %v5892
        %v5905 = vpack.c.b16 %v5895, %v5893
        %v5906 = vpack.c.b16 %v5898, %v5896
        %v5907 = vpack.c.b16 %v5899, %v5897
        %v5908 = vpack.c.b16 %v5900, %v5900
        %v5909 = vpack.c.b16 %v5901, %v5901
        %v5915 = vsel %vm1511, %v5903, 0
        %v5918 = vsel %vm1511, %v5905, 0
        %v5921 = vsel %vm1511, %v5907, 0
        %v5924 = vsel %vm1511, %v5909, 0
        %5926 = vmatprep.subr.bf16.mxu0 0
        %5927 = vmatpush1.bf16.msra.mxu0 %v1439
        %5928 = vmatprep.subr.bf16.mxu0 0
        %5929 = vmatpush1.bf16.msra.mxu0 %v1440
        %5930 = vmatprep.subr.bf16.mxu0 0
        %5931 = vmatpush1.bf16.msra.mxu0 %v1441
        %5932 = vmatprep.subr.bf16.mxu0 0
        %5933 = vmatpush1.bf16.msra.mxu0 %v1442
        %5934 = vmatprep.subr.bf16.mxu0 0
        %5935 = vmatpush1.bf16.msra.mxu0 %v1443
        %5936 = vmatprep.subr.bf16.mxu0 0
        %5937 = vmatpush1.bf16.msra.mxu0 %v1444
        %5938 = vmatprep.subr.bf16.mxu0 0
        %5939 = vmatpush1.bf16.msra.mxu0 %v1445
        %5940 = vmatprep.subr.bf16.mxu0 0
        %5941 = vmatpush1.bf16.msra.mxu0 %v1446
        %5942 = vmatprep.subr.bf16.mxu0 0
        %5943 = vmatpush1.bf16.msra.mxu0 %v1447
        %5944 = vmatprep.subr.bf16.mxu0 0
        %5945 = vmatpush1.bf16.msra.mxu0 %v1448
        %5946 = vmatprep.subr.bf16.mxu0 0
        %5947 = vmatpush1.bf16.msra.mxu0 %v1449
        %5948 = vmatprep.subr.bf16.mxu0 0
        %5949 = vmatpush1.bf16.msra.mxu0 %v1450
        %5950 = vmatprep.subr.bf16.mxu0 0
        %5951 = vmatpush1.bf16.msra.mxu0 %v1451
        %5952 = vmatprep.subr.bf16.mxu0 0
        %5953 = vmatpush1.bf16.msra.mxu0 0
        %5954 = vmatprep.subr.bf16.mxu0 0
        %5955 = vmatpush1.bf16.msra.mxu0 0
        %5956 = vmatprep.subr.bf16.mxu0 0
        %5957 = vmatpush1.bf16.msra.mxu0 0
        %5958 = vmatprep.mubr.bf16.mxu0 %v5915
        %5959 = vmatmul.mubr.bf16.gmra.mrb[0].mxu0 %v5902
        %v5960 = vpop.f32.mrb[0].mxu0
        %v5961 = vadd.f32 0.0, %v5960
        %v5962 = vpop.f32.mrb[0].mxu0
        %v5963 = vpop.f32.mrb[0].mxu0
        %v5964 = vadd.f32 0.0, %v5963
        %v5965 = vpop.f32.mrb[0].mxu0
        %5966 = vmatprep.mubr.bf16.mxu0 %v5918
        %5967 = vmatmul.mubr.bf16.gmra.mrb[0].mxu0 %v5904
        %v5968 = vpop.f32.mrb[0].mxu0
        %v5969 = vadd.f32 0.0, %v5968
        %v5970 = vpop.f32.mrb[0].mxu0
        %v5971 = vpop.f32.mrb[0].mxu0
        %v5972 = vadd.f32 0.0, %v5971
        %v5973 = vpop.f32.mrb[0].mxu0
        %5974 = vmatprep.mubr.bf16.mxu0 %v5921
        %5975 = vmatmul.mubr.bf16.gmra.mrb[0].mxu0 %v5906
        %v5976 = vpop.f32.mrb[0].mxu0
        %v5977 = vadd.f32 0.0, %v5976
        %v5978 = vpop.f32.mrb[0].mxu0
        %v5979 = vpop.f32.mrb[0].mxu0
        %v5980 = vadd.f32 0.0, %v5979
        %v5981 = vpop.f32.mrb[0].mxu0
        %5982 = vmatprep.mubr.bf16.mxu0 %v5924
        %5983 = vmatmul.mubr.bf16.gmra.mrb[0].mxu0 %v5908
        %v5984 = vpop.f32.mrb[0].mxu0
        %v5985 = vadd.f32 0.0, %v5984
        %v5986 = vpop.f32.mrb[0].mxu0
        %v5987 = vpop.f32.mrb[0].mxu0
        %v5988 = vpop.f32.mrb[0].mxu0
        %5989 = vdwg.mxu0
        %v5990 = vld [vmem:[%s1705] sm:$0xff]
        %v5991 = vld [vmem:[%s1705 + $0x8] sm:$0xff]
        %v5992 = vld [vmem:[%s1705 + $0x10] sm:$0xff]
        %v5993 = vld [vmem:[%s1705 + $0x18] sm:$0xff]
        %v5994 = vld [vmem:[%s1705 + $0x20] sm:$0xff]
        %v5995 = vld [vmem:[%s1705 + $0x28] sm:$0xff]
        %v5996 = vld [vmem:[%s1705 + $0x30] sm:$0x11]
        %v6004 = vunpack.c.l.b16 %v5990
        %v6005 = vunpack.c.h.b16 %v5990
        %v6006 = vunpack.c.l.b16 %v5991
        %v6007 = vunpack.c.h.b16 %v5991
        %v6008 = vunpack.c.l.b16 %v5992
        %v6009 = vunpack.c.h.b16 %v5992
        %v6010 = vunpack.c.l.b16 %v5993
        %v6011 = vunpack.c.h.b16 %v5993
        %v6012 = vunpack.c.l.b16 %v5994
        %v6013 = vunpack.c.h.b16 %v5994
        %v6014 = vunpack.c.l.b16 %v5995
        %v6015 = vunpack.c.h.b16 %v5995
        %v6016 = vunpack.c.l.b16 %v5996
        %v6017 = vunpack.c.h.b16 %v5996
        %v6018 = vpack.c.b16 %v6006, %v6004
        %v6019 = vpack.c.b16 %v6007, %v6005
        %v6020 = vpack.c.b16 %v6010, %v6008
        %v6021 = vpack.c.b16 %v6011, %v6009
        %v6022 = vpack.c.b16 %v6014, %v6012
        %v6023 = vpack.c.b16 %v6015, %v6013
        %v6024 = vpack.c.b16 %v6016, %v6016
        %v6025 = vpack.c.b16 %v6017, %v6017
        %v6031 = vsel %vm1511, %v6019, 0
        %v6034 = vsel %vm1511, %v6021, 0
        %v6037 = vsel %vm1511, %v6023, 0
        %v6040 = vsel %vm1511, %v6025, 0
        %6042 = vmatprep.subr.bf16.mxu0 0
        %6043 = vmatpush1.bf16.msra.mxu0 %v1439
        %6044 = vmatprep.subr.bf16.mxu0 0
        %6045 = vmatpush1.bf16.msra.mxu0 %v1440
        %6046 = vmatprep.subr.bf16.mxu0 0
        %6047 = vmatpush1.bf16.msra.mxu0 %v1441
        %6048 = vmatprep.subr.bf16.mxu0 0
        %6049 = vmatpush1.bf16.msra.mxu0 %v1442
        %6050 = vmatprep.subr.bf16.mxu0 0
        %6051 = vmatpush1.bf16.msra.mxu0 %v1443
        %6052 = vmatprep.subr.bf16.mxu0 0
        %6053 = vmatpush1.bf16.msra.mxu0 %v1444
        %6054 = vmatprep.subr.bf16.mxu0 0
        %6055 = vmatpush1.bf16.msra.mxu0 %v1445
        %6056 = vmatprep.subr.bf16.mxu0 0
        %6057 = vmatpush1.bf16.msra.mxu0 %v1446
        %6058 = vmatprep.subr.bf16.mxu0 0
        %6059 = vmatpush1.bf16.msra.mxu0 %v1447
        %6060 = vmatprep.subr.bf16.mxu0 0
        %6061 = vmatpush1.bf16.msra.mxu0 %v1448
        %6062 = vmatprep.subr.bf16.mxu0 0
        %6063 = vmatpush1.bf16.msra.mxu0 %v1449
        %6064 = vmatprep.subr.bf16.mxu0 0
        %6065 = vmatpush1.bf16.msra.mxu0 %v1450
        %6066 = vmatprep.subr.bf16.mxu0 0
        %6067 = vmatpush1.bf16.msra.mxu0 %v1451
        %6068 = vmatprep.subr.bf16.mxu0 0
        %6069 = vmatpush1.bf16.msra.mxu0 0
        %6070 = vmatprep.subr.bf16.mxu0 0
        %6071 = vmatpush1.bf16.msra.mxu0 0
        %6072 = vmatprep.subr.bf16.mxu0 0
        %6073 = vmatpush1.bf16.msra.mxu0 0
        %6074 = vmatprep.mubr.bf16.mxu0 %v6031
        %6075 = vmatmul.mubr.bf16.gmra.mrb[0].mxu0 %v6018
        %v6076 = vpop.f32.mrb[0].mxu0
        %v6077 = vadd.f32 0.0, %v6076
        %v6078 = vpop.f32.mrb[0].mxu0
        %v6079 = vpop.f32.mrb[0].mxu0
        %v6080 = vadd.f32 0.0, %v6079
        %v6081 = vpop.f32.mrb[0].mxu0
        %6082 = vmatprep.mubr.bf16.mxu0 %v6034
        %6083 = vmatmul.mubr.bf16.gmra.mrb[0].mxu0 %v6020
        %v6084 = vpop.f32.mrb[0].mxu0
        %v6085 = vadd.f32 0.0, %v6084
        %v6086 = vpop.f32.mrb[0].mxu0
        %v6087 = vpop.f32.mrb[0].mxu0
        %v6088 = vadd.f32 0.0, %v6087
        %v6089 = vpop.f32.mrb[0].mxu0
        %6090 = vmatprep.mubr.bf16.mxu0 %v6037
        %6091 = vmatmul.mubr.bf16.gmra.mrb[0].mxu0 %v6022
        %v6092 = vpop.f32.mrb[0].mxu0
        %v6093 = vadd.f32 0.0, %v6092
        %v6094 = vpop.f32.mrb[0].mxu0
        %v6095 = vpop.f32.mrb[0].mxu0
        %v6096 = vadd.f32 0.0, %v6095
        %v6097 = vpop.f32.mrb[0].mxu0
        %6098 = vmatprep.mubr.bf16.mxu0 %v6040
        %6099 = vmatmul.mubr.bf16.gmra.mrb[0].mxu0 %v6024
        %v6100 = vpop.f32.mrb[0].mxu0
        %v6101 = vadd.f32 0.0, %v6100
        %v6102 = vpop.f32.mrb[0].mxu0
        %v6103 = vpop.f32.mrb[0].mxu0
        %v6104 = vpop.f32.mrb[0].mxu0
        %6105 = vdwg.mxu0
        %v6106 = vld [vmem:[%s1822] sm:$0xff]
        %v6107 = vld [vmem:[%s1822 + $0x8] sm:$0xff]
        %v6108 = vld [vmem:[%s1822 + $0x10] sm:$0xff]
        %v6109 = vld [vmem:[%s1822 + $0x18] sm:$0xff]
        %v6110 = vld [vmem:[%s1822 + $0x20] sm:$0xff]
        %v6111 = vld [vmem:[%s1822 + $0x28] sm:$0xff]
        %v6112 = vld [vmem:[%s1822 + $0x30] sm:$0x11]
        %v6120 = vunpack.c.l.b16 %v6106
        %v6121 = vunpack.c.h.b16 %v6106
        %v6122 = vunpack.c.l.b16 %v6107
        %v6123 = vunpack.c.h.b16 %v6107
        %v6124 = vunpack.c.l.b16 %v6108
        %v6125 = vunpack.c.h.b16 %v6108
        %v6126 = vunpack.c.l.b16 %v6109
        %v6127 = vunpack.c.h.b16 %v6109
        %v6128 = vunpack.c.l.b16 %v6110
        %v6129 = vunpack.c.h.b16 %v6110
        %v6130 = vunpack.c.l.b16 %v6111
        %v6131 = vunpack.c.h.b16 %v6111
        %v6132 = vunpack.c.l.b16 %v6112
        %v6133 = vunpack.c.h.b16 %v6112
        %v6134 = vpack.c.b16 %v6122, %v6120
        %v6135 = vpack.c.b16 %v6123, %v6121
        %v6136 = vpack.c.b16 %v6126, %v6124
        %v6137 = vpack.c.b16 %v6127, %v6125
        %v6138 = vpack.c.b16 %v6130, %v6128
        %v6139 = vpack.c.b16 %v6131, %v6129
        %v6140 = vpack.c.b16 %v6132, %v6132
        %v6141 = vpack.c.b16 %v6133, %v6133
        %v6147 = vsel %vm1511, %v6135, 0
        %v6150 = vsel %vm1511, %v6137, 0
        %v6153 = vsel %vm1511, %v6139, 0
        %v6156 = vsel %vm1511, %v6141, 0
        %6158 = vmatprep.subr.bf16.mxu0 0
        %6159 = vmatpush1.bf16.msra.mxu0 %v1439
        %6160 = vmatprep.subr.bf16.mxu0 0
        %6161 = vmatpush1.bf16.msra.mxu0 %v1440
        %6162 = vmatprep.subr.bf16.mxu0 0
        %6163 = vmatpush1.bf16.msra.mxu0 %v1441
        %6164 = vmatprep.subr.bf16.mxu0 0
        %6165 = vmatpush1.bf16.msra.mxu0 %v1442
        %6166 = vmatprep.subr.bf16.mxu0 0
        %6167 = vmatpush1.bf16.msra.mxu0 %v1443
        %6168 = vmatprep.subr.bf16.mxu0 0
        %6169 = vmatpush1.bf16.msra.mxu0 %v1444
        %6170 = vmatprep.subr.bf16.mxu0 0
        %6171 = vmatpush1.bf16.msra.mxu0 %v1445
        %6172 = vmatprep.subr.bf16.mxu0 0
        %6173 = vmatpush1.bf16.msra.mxu0 %v1446
        %6174 = vmatprep.subr.bf16.mxu0 0
        %6175 = vmatpush1.bf16.msra.mxu0 %v1447
        %6176 = vmatprep.subr.bf16.mxu0 0
        %6177 = vmatpush1.bf16.msra.mxu0 %v1448
        %6178 = vmatprep.subr.bf16.mxu0 0
        %6179 = vmatpush1.bf16.msra.mxu0 %v1449
        %6180 = vmatprep.subr.bf16.mxu0 0
        %6181 = vmatpush1.bf16.msra.mxu0 %v1450
        %6182 = vmatprep.subr.bf16.mxu0 0
        %6183 = vmatpush1.bf16.msra.mxu0 %v1451
        %6184 = vmatprep.subr.bf16.mxu0 0
        %6185 = vmatpush1.bf16.msra.mxu0 0
        %6186 = vmatprep.subr.bf16.mxu0 0
        %6187 = vmatpush1.bf16.msra.mxu0 0
        %6188 = vmatprep.subr.bf16.mxu0 0
        %6189 = vmatpush1.bf16.msra.mxu0 0
        %6190 = vmatprep.mubr.bf16.mxu0 %v6147
        %6191 = vmatmul.mubr.bf16.gmra.mrb[0].mxu0 %v6134
        %v6192 = vpop.f32.mrb[0].mxu0
        %v6193 = vadd.f32 0.0, %v6192
        %v6194 = vpop.f32.mrb[0].mxu0
        %v6195 = vpop.f32.mrb[0].mxu0
        %v6196 = vadd.f32 0.0, %v6195
        %v6197 = vpop.f32.mrb[0].mxu0
        %6198 = vmatprep.mubr.bf16.mxu0 %v6150
        %6199 = vmatmul.mubr.bf16.gmra.mrb[0].mxu0 %v6136
        %v6200 = vpop.f32.mrb[0].mxu0
        %v6201 = vadd.f32 0.0, %v6200
        %v6202 = vpop.f32.mrb[0].mxu0
        %v6203 = vpop.f32.mrb[0].mxu0
        %v6204 = vadd.f32 0.0, %v6203
        %v6205 = vpop.f32.mrb[0].mxu0
        %6206 = vmatprep.mubr.bf16.mxu0 %v6153
        %6207 = vmatmul.mubr.bf16.gmra.mrb[0].mxu0 %v6138
        %v6208 = vpop.f32.mrb[0].mxu0
        %v6209 = vadd.f32 0.0, %v6208
        %v6210 = vpop.f32.mrb[0].mxu0
        %v6211 = vpop.f32.mrb[0].mxu0
        %v6212 = vadd.f32 0.0, %v6211
        %v6213 = vpop.f32.mrb[0].mxu0
        %6214 = vmatprep.mubr.bf16.mxu0 %v6156
        %6215 = vmatmul.mubr.bf16.gmra.mrb[0].mxu0 %v6140
        %v6216 = vpop.f32.mrb[0].mxu0
        %v6217 = vadd.f32 0.0, %v6216
        %v6218 = vpop.f32.mrb[0].mxu0
        %v6219 = vpop.f32.mrb[0].mxu0
        %v6220 = vpop.f32.mrb[0].mxu0
        %6221 = vdwg.mxu0
        %v6222 = vld [vmem:[%s1939] sm:$0xff]
        %v6223 = vld [vmem:[%s1939 + $0x8] sm:$0xff]
        %v6224 = vld [vmem:[%s1939 + $0x10] sm:$0xff]
        %v6225 = vld [vmem:[%s1939 + $0x18] sm:$0xff]
        %v6226 = vld [vmem:[%s1939 + $0x20] sm:$0xff]
        %v6227 = vld [vmem:[%s1939 + $0x28] sm:$0xff]
        %v6228 = vld [vmem:[%s1939 + $0x30] sm:$0x11]
        %v6236 = vunpack.c.l.b16 %v6222
        %v6237 = vunpack.c.h.b16 %v6222
        %v6238 = vunpack.c.l.b16 %v6223
        %v6239 = vunpack.c.h.b16 %v6223
        %v6240 = vunpack.c.l.b16 %v6224
        %v6241 = vunpack.c.h.b16 %v6224
        %v6242 = vunpack.c.l.b16 %v6225
        %v6243 = vunpack.c.h.b16 %v6225
        %v6244 = vunpack.c.l.b16 %v6226
        %v6245 = vunpack.c.h.b16 %v6226
        %v6246 = vunpack.c.l.b16 %v6227
        %v6247 = vunpack.c.h.b16 %v6227
        %v6248 = vunpack.c.l.b16 %v6228
        %v6249 = vunpack.c.h.b16 %v6228
        %v6250 = vpack.c.b16 %v6238, %v6236
        %v6251 = vpack.c.b16 %v6239, %v6237
        %v6252 = vpack.c.b16 %v6242, %v6240
        %v6253 = vpack.c.b16 %v6243, %v6241
        %v6254 = vpack.c.b16 %v6246, %v6244
        %v6255 = vpack.c.b16 %v6247, %v6245
        %v6256 = vpack.c.b16 %v6248, %v6248
        %v6257 = vpack.c.b16 %v6249, %v6249
        %v6263 = vsel %vm1511, %v6251, 0
        %v6266 = vsel %vm1511, %v6253, 0
        %v6269 = vsel %vm1511, %v6255, 0
        %v6272 = vsel %vm1511, %v6257, 0
        %6274 = vmatprep.subr.bf16.mxu0 0
        %6275 = vmatpush1.bf16.msra.mxu0 %v1439
        %6276 = vmatprep.subr.bf16.mxu0 0
        %6277 = vmatpush1.bf16.msra.mxu0 %v1440
        %6278 = vmatprep.subr.bf16.mxu0 0
        %6279 = vmatpush1.bf16.msra.mxu0 %v1441
        %6280 = vmatprep.subr.bf16.mxu0 0
        %6281 = vmatpush1.bf16.msra.mxu0 %v1442
        %6282 = vmatprep.subr.bf16.mxu0 0
        %6283 = vmatpush1.bf16.msra.mxu0 %v1443
        %6284 = vmatprep.subr.bf16.mxu0 0
        %6285 = vmatpush1.bf16.msra.mxu0 %v1444
        %6286 = vmatprep.subr.bf16.mxu0 0
        %6287 = vmatpush1.bf16.msra.mxu0 %v1445
        %6288 = vmatprep.subr.bf16.mxu0 0
        %6289 = vmatpush1.bf16.msra.mxu0 %v1446
        %6290 = vmatprep.subr.bf16.mxu0 0
        %6291 = vmatpush1.bf16.msra.mxu0 %v1447
        %6292 = vmatprep.subr.bf16.mxu0 0
        %6293 = vmatpush1.bf16.msra.mxu0 %v1448
        %6294 = vmatprep.subr.bf16.mxu0 0
        %6295 = vmatpush1.bf16.msra.mxu0 %v1449
        %6296 = vmatprep.subr.bf16.mxu0 0
        %6297 = vmatpush1.bf16.msra.mxu0 %v1450
        %6298 = vmatprep.subr.bf16.mxu0 0
        %6299 = vmatpush1.bf16.msra.mxu0 %v1451
        %6300 = vmatprep.subr.bf16.mxu0 0
        %6301 = vmatpush1.bf16.msra.mxu0 0
        %6302 = vmatprep.subr.bf16.mxu0 0
        %6303 = vmatpush1.bf16.msra.mxu0 0
        %6304 = vmatprep.subr.bf16.mxu0 0
        %6305 = vmatpush1.bf16.msra.mxu0 0
        %6306 = vmatprep.mubr.bf16.mxu0 %v6263
        %6307 = vmatmul.mubr.bf16.gmra.mrb[0].mxu0 %v6250
        %v6308 = vpop.f32.mrb[0].mxu0
        %v6309 = vadd.f32 0.0, %v6308
        %v6310 = vpop.f32.mrb[0].mxu0
        %v6311 = vpop.f32.mrb[0].mxu0
        %v6312 = vadd.f32 0.0, %v6311
        %v6313 = vpop.f32.mrb[0].mxu0
        %6314 = vmatprep.mubr.bf16.mxu0 %v6266
        %6315 = vmatmul.mubr.bf16.gmra.mrb[0].mxu0 %v6252
        %v6316 = vpop.f32.mrb[0].mxu0
        %v6317 = vadd.f32 0.0, %v6316
        %v6318 = vpop.f32.mrb[0].mxu0
        %v6319 = vpop.f32.mrb[0].mxu0
        %v6320 = vadd.f32 0.0, %v6319
        %v6321 = vpop.f32.mrb[0].mxu0
        %6322 = vmatprep.mubr.bf16.mxu0 %v6269
        %6323 = vmatmul.mubr.bf16.gmra.mrb[0].mxu0 %v6254
        %v6324 = vpop.f32.mrb[0].mxu0
        %v6325 = vadd.f32 0.0, %v6324
        %v6326 = vpop.f32.mrb[0].mxu0
        %v6327 = vpop.f32.mrb[0].mxu0
        %v6328 = vadd.f32 0.0, %v6327
        %v6329 = vpop.f32.mrb[0].mxu0
        %6330 = vmatprep.mubr.bf16.mxu0 %v6272
        %6331 = vmatmul.mubr.bf16.gmra.mrb[0].mxu0 %v6256
        %v6332 = vpop.f32.mrb[0].mxu0
        %v6333 = vadd.f32 0.0, %v6332
        %v6334 = vpop.f32.mrb[0].mxu0
        %v6335 = vpop.f32.mrb[0].mxu0
        %v6336 = vpop.f32.mrb[0].mxu0
        %6337 = vdwg.mxu0
        %v6338 = vld [vmem:[%s2056] sm:$0xff]
        %v6339 = vld [vmem:[%s2056 + $0x8] sm:$0xff]
        %v6340 = vld [vmem:[%s2056 + $0x10] sm:$0xff]
        %v6341 = vld [vmem:[%s2056 + $0x18] sm:$0xff]
        %v6342 = vld [vmem:[%s2056 + $0x20] sm:$0xff]
        %v6343 = vld [vmem:[%s2056 + $0x28] sm:$0xff]
        %v6344 = vld [vmem:[%s2056 + $0x30] sm:$0x11]
        %v6352 = vunpack.c.l.b16 %v6338
        %v6353 = vunpack.c.h.b16 %v6338
        %v6354 = vunpack.c.l.b16 %v6339
        %v6355 = vunpack.c.h.b16 %v6339
        %v6356 = vunpack.c.l.b16 %v6340
        %v6357 = vunpack.c.h.b16 %v6340
        %v6358 = vunpack.c.l.b16 %v6341
        %v6359 = vunpack.c.h.b16 %v6341
        %v6360 = vunpack.c.l.b16 %v6342
        %v6361 = vunpack.c.h.b16 %v6342
        %v6362 = vunpack.c.l.b16 %v6343
        %v6363 = vunpack.c.h.b16 %v6343
        %v6364 = vunpack.c.l.b16 %v6344
        %v6365 = vunpack.c.h.b16 %v6344
        %v6366 = vpack.c.b16 %v6354, %v6352
        %v6367 = vpack.c.b16 %v6355, %v6353
        %v6368 = vpack.c.b16 %v6358, %v6356
        %v6369 = vpack.c.b16 %v6359, %v6357
        %v6370 = vpack.c.b16 %v6362, %v6360
        %v6371 = vpack.c.b16 %v6363, %v6361
        %v6372 = vpack.c.b16 %v6364, %v6364
        %v6373 = vpack.c.b16 %v6365, %v6365
        %v6379 = vsel %vm1511, %v6367, 0
        %v6382 = vsel %vm1511, %v6369, 0
        %v6385 = vsel %vm1511, %v6371, 0
        %v6388 = vsel %vm1511, %v6373, 0
        %6390 = vmatprep.subr.bf16.mxu0 0
        %6391 = vmatpush1.bf16.msra.mxu0 %v1439
        %6392 = vmatprep.subr.bf16.mxu0 0
        %6393 = vmatpush1.bf16.msra.mxu0 %v1440
        %6394 = vmatprep.subr.bf16.mxu0 0
        %6395 = vmatpush1.bf16.msra.mxu0 %v1441
        %6396 = vmatprep.subr.bf16.mxu0 0
        %6397 = vmatpush1.bf16.msra.mxu0 %v1442
        %6398 = vmatprep.subr.bf16.mxu0 0
        %6399 = vmatpush1.bf16.msra.mxu0 %v1443
        %6400 = vmatprep.subr.bf16.mxu0 0
        %6401 = vmatpush1.bf16.msra.mxu0 %v1444
        %6402 = vmatprep.subr.bf16.mxu0 0
        %6403 = vmatpush1.bf16.msra.mxu0 %v1445
        %6404 = vmatprep.subr.bf16.mxu0 0
        %6405 = vmatpush1.bf16.msra.mxu0 %v1446
        %6406 = vmatprep.subr.bf16.mxu0 0
        %6407 = vmatpush1.bf16.msra.mxu0 %v1447
        %6408 = vmatprep.subr.bf16.mxu0 0
        %6409 = vmatpush1.bf16.msra.mxu0 %v1448
        %6410 = vmatprep.subr.bf16.mxu0 0
        %6411 = vmatpush1.bf16.msra.mxu0 %v1449
        %6412 = vmatprep.subr.bf16.mxu0 0
        %6413 = vmatpush1.bf16.msra.mxu0 %v1450
        %6414 = vmatprep.subr.bf16.mxu0 0
        %6415 = vmatpush1.bf16.msra.mxu0 %v1451
        %6416 = vmatprep.subr.bf16.mxu0 0
        %6417 = vmatpush1.bf16.msra.mxu0 0
        %6418 = vmatprep.subr.bf16.mxu0 0
        %6419 = vmatpush1.bf16.msra.mxu0 0
        %6420 = vmatprep.subr.bf16.mxu0 0
        %6421 = vmatpush1.bf16.msra.mxu0 0
        %6422 = vmatprep.mubr.bf16.mxu0 %v6379
        %6423 = vmatmul.mubr.bf16.gmra.mrb[0].mxu0 %v6366
        %v6424 = vpop.f32.mrb[0].mxu0
        %v6425 = vadd.f32 0.0, %v6424
        %v6426 = vpop.f32.mrb[0].mxu0
        %v6427 = vpop.f32.mrb[0].mxu0
        %v6428 = vadd.f32 0.0, %v6427
        %v6429 = vpop.f32.mrb[0].mxu0
        %6430 = vmatprep.mubr.bf16.mxu0 %v6382
        %6431 = vmatmul.mubr.bf16.gmra.mrb[0].mxu0 %v6368
        %v6432 = vpop.f32.mrb[0].mxu0
        %v6433 = vadd.f32 0.0, %v6432
        %v6434 = vpop.f32.mrb[0].mxu0
        %v6435 = vpop.f32.mrb[0].mxu0
        %v6436 = vadd.f32 0.0, %v6435
        %v6437 = vpop.f32.mrb[0].mxu0
        %6438 = vmatprep.mubr.bf16.mxu0 %v6385
        %6439 = vmatmul.mubr.bf16.gmra.mrb[0].mxu0 %v6370
        %v6440 = vpop.f32.mrb[0].mxu0
        %v6441 = vadd.f32 0.0, %v6440
        %v6442 = vpop.f32.mrb[0].mxu0
        %v6443 = vpop.f32.mrb[0].mxu0
        %v6444 = vadd.f32 0.0, %v6443
        %v6445 = vpop.f32.mrb[0].mxu0
        %6446 = vmatprep.mubr.bf16.mxu0 %v6388
        %6447 = vmatmul.mubr.bf16.gmra.mrb[0].mxu0 %v6372
        %v6448 = vpop.f32.mrb[0].mxu0
        %v6449 = vadd.f32 0.0, %v6448
        %v6450 = vpop.f32.mrb[0].mxu0
        %v6451 = vpop.f32.mrb[0].mxu0
        %v6452 = vpop.f32.mrb[0].mxu0
        %6453 = vdwg.mxu0
        %v6454 = vld [vmem:[%s2173] sm:$0xff]
        %v6455 = vld [vmem:[%s2173 + $0x8] sm:$0xff]
        %v6456 = vld [vmem:[%s2173 + $0x10] sm:$0xff]
        %v6457 = vld [vmem:[%s2173 + $0x18] sm:$0xff]
        %v6458 = vld [vmem:[%s2173 + $0x20] sm:$0xff]
        %v6459 = vld [vmem:[%s2173 + $0x28] sm:$0xff]
        %v6460 = vld [vmem:[%s2173 + $0x30] sm:$0x11]
        %v6468 = vunpack.c.l.b16 %v6454
        %v6469 = vunpack.c.h.b16 %v6454
        %v6470 = vunpack.c.l.b16 %v6455
        %v6471 = vunpack.c.h.b16 %v6455
        %v6472 = vunpack.c.l.b16 %v6456
        %v6473 = vunpack.c.h.b16 %v6456
        %v6474 = vunpack.c.l.b16 %v6457
        %v6475 = vunpack.c.h.b16 %v6457
        %v6476 = vunpack.c.l.b16 %v6458
        %v6477 = vunpack.c.h.b16 %v6458
        %v6478 = vunpack.c.l.b16 %v6459
        %v6479 = vunpack.c.h.b16 %v6459
        %v6480 = vunpack.c.l.b16 %v6460
        %v6481 = vunpack.c.h.b16 %v6460
        %v6482 = vpack.c.b16 %v6470, %v6468
        %v6483 = vpack.c.b16 %v6471, %v6469
        %v6484 = vpack.c.b16 %v6474, %v6472
        %v6485 = vpack.c.b16 %v6475, %v6473
        %v6486 = vpack.c.b16 %v6478, %v6476
        %v6487 = vpack.c.b16 %v6479, %v6477
        %v6488 = vpack.c.b16 %v6480, %v6480
        %v6489 = vpack.c.b16 %v6481, %v6481
        %v6495 = vsel %vm1511, %v6483, 0
        %v6498 = vsel %vm1511, %v6485, 0
        %v6501 = vsel %vm1511, %v6487, 0
        %v6504 = vsel %vm1511, %v6489, 0
        %6506 = vmatprep.subr.bf16.mxu0 0
        %6507 = vmatpush1.bf16.msra.mxu0 %v1439
        %6508 = vmatprep.subr.bf16.mxu0 0
        %6509 = vmatpush1.bf16.msra.mxu0 %v1440
        %6510 = vmatprep.subr.bf16.mxu0 0
        %6511 = vmatpush1.bf16.msra.mxu0 %v1441
        %6512 = vmatprep.subr.bf16.mxu0 0
        %6513 = vmatpush1.bf16.msra.mxu0 %v1442
        %6514 = vmatprep.subr.bf16.mxu0 0
        %6515 = vmatpush1.bf16.msra.mxu0 %v1443
        %6516 = vmatprep.subr.bf16.mxu0 0
        %6517 = vmatpush1.bf16.msra.mxu0 %v1444
        %6518 = vmatprep.subr.bf16.mxu0 0
        %6519 = vmatpush1.bf16.msra.mxu0 %v1445
        %6520 = vmatprep.subr.bf16.mxu0 0
        %6521 = vmatpush1.bf16.msra.mxu0 %v1446
        %6522 = vmatprep.subr.bf16.mxu0 0
        %6523 = vmatpush1.bf16.msra.mxu0 %v1447
        %6524 = vmatprep.subr.bf16.mxu0 0
        %6525 = vmatpush1.bf16.msra.mxu0 %v1448
        %6526 = vmatprep.subr.bf16.mxu0 0
        %6527 = vmatpush1.bf16.msra.mxu0 %v1449
        %6528 = vmatprep.subr.bf16.mxu0 0
        %6529 = vmatpush1.bf16.msra.mxu0 %v1450
        %6530 = vmatprep.subr.bf16.mxu0 0
        %6531 = vmatpush1.bf16.msra.mxu0 %v1451
        %6532 = vmatprep.subr.bf16.mxu0 0
        %6533 = vmatpush1.bf16.msra.mxu0 0
        %6534 = vmatprep.subr.bf16.mxu0 0
        %6535 = vmatpush1.bf16.msra.mxu0 0
        %6536 = vmatprep.subr.bf16.mxu0 0
        %6537 = vmatpush1.bf16.msra.mxu0 0
        %6538 = vmatprep.mubr.bf16.mxu0 %v6495
        %6539 = vmatmul.mubr.bf16.gmra.mrb[0].mxu0 %v6482
        %v6540 = vpop.f32.mrb[0].mxu0
        %v6541 = vadd.f32 0.0, %v6540
        %v6542 = vpop.f32.mrb[0].mxu0
        %v6543 = vpop.f32.mrb[0].mxu0
        %v6544 = vadd.f32 0.0, %v6543
        %v6545 = vpop.f32.mrb[0].mxu0
        %6546 = vmatprep.mubr.bf16.mxu0 %v6498
        %6547 = vmatmul.mubr.bf16.gmra.mrb[0].mxu0 %v6484
        %v6548 = vpop.f32.mrb[0].mxu0
        %v6549 = vadd.f32 0.0, %v6548
        %v6550 = vpop.f32.mrb[0].mxu0
        %v6551 = vpop.f32.mrb[0].mxu0
        %v6552 = vadd.f32 0.0, %v6551
        %v6553 = vpop.f32.mrb[0].mxu0
        %6554 = vmatprep.mubr.bf16.mxu0 %v6501
        %6555 = vmatmul.mubr.bf16.gmra.mrb[0].mxu0 %v6486
        %v6556 = vpop.f32.mrb[0].mxu0
        %v6557 = vadd.f32 0.0, %v6556
        %v6558 = vpop.f32.mrb[0].mxu0
        %v6559 = vpop.f32.mrb[0].mxu0
        %v6560 = vadd.f32 0.0, %v6559
        %v6561 = vpop.f32.mrb[0].mxu0
        %6562 = vmatprep.mubr.bf16.mxu0 %v6504
        %6563 = vmatmul.mubr.bf16.gmra.mrb[0].mxu0 %v6488
        %v6564 = vpop.f32.mrb[0].mxu0
        %v6565 = vadd.f32 0.0, %v6564
        %v6566 = vpop.f32.mrb[0].mxu0
        %v6567 = vpop.f32.mrb[0].mxu0
        %v6568 = vpop.f32.mrb[0].mxu0
        %6569 = vdwg.mxu0
        %v6570 = vld [vmem:[%s2290] sm:$0xff]
        %v6571 = vld [vmem:[%s2290 + $0x8] sm:$0xff]
        %v6572 = vld [vmem:[%s2290 + $0x10] sm:$0xff]
        %v6573 = vld [vmem:[%s2290 + $0x18] sm:$0xff]
        %v6574 = vld [vmem:[%s2290 + $0x20] sm:$0xff]
        %v6575 = vld [vmem:[%s2290 + $0x28] sm:$0xff]
        %v6576 = vld [vmem:[%s2290 + $0x30] sm:$0x11]
        %v6584 = vunpack.c.l.b16 %v6570
        %v6585 = vunpack.c.h.b16 %v6570
        %v6586 = vunpack.c.l.b16 %v6571
        %v6587 = vunpack.c.h.b16 %v6571
        %v6588 = vunpack.c.l.b16 %v6572
        %v6589 = vunpack.c.h.b16 %v6572
        %v6590 = vunpack.c.l.b16 %v6573
        %v6591 = vunpack.c.h.b16 %v6573
        %v6592 = vunpack.c.l.b16 %v6574
        %v6593 = vunpack.c.h.b16 %v6574
        %v6594 = vunpack.c.l.b16 %v6575
        %v6595 = vunpack.c.h.b16 %v6575
        %v6596 = vunpack.c.l.b16 %v6576
        %v6597 = vunpack.c.h.b16 %v6576
        %v6598 = vpack.c.b16 %v6586, %v6584
        %v6599 = vpack.c.b16 %v6587, %v6585
        %v6600 = vpack.c.b16 %v6590, %v6588
        %v6601 = vpack.c.b16 %v6591, %v6589
        %v6602 = vpack.c.b16 %v6594, %v6592
        %v6603 = vpack.c.b16 %v6595, %v6593
        %v6604 = vpack.c.b16 %v6596, %v6596
        %v6605 = vpack.c.b16 %v6597, %v6597
        %v6611 = vsel %vm1511, %v6599, 0
        %v6614 = vsel %vm1511, %v6601, 0
        %v6617 = vsel %vm1511, %v6603, 0
        %v6620 = vsel %vm1511, %v6605, 0
        %6622 = vmatprep.subr.bf16.mxu0 0
        %6623 = vmatpush1.bf16.msra.mxu0 %v1439
        %6624 = vmatprep.subr.bf16.mxu0 0
        %6625 = vmatpush1.bf16.msra.mxu0 %v1440
        %6626 = vmatprep.subr.bf16.mxu0 0
        %6627 = vmatpush1.bf16.msra.mxu0 %v1441
        %6628 = vmatprep.subr.bf16.mxu0 0
        %6629 = vmatpush1.bf16.msra.mxu0 %v1442
        %6630 = vmatprep.subr.bf16.mxu0 0
        %6631 = vmatpush1.bf16.msra.mxu0 %v1443
        %6632 = vmatprep.subr.bf16.mxu0 0
        %6633 = vmatpush1.bf16.msra.mxu0 %v1444
        %6634 = vmatprep.subr.bf16.mxu0 0
        %6635 = vmatpush1.bf16.msra.mxu0 %v1445
        %6636 = vmatprep.subr.bf16.mxu0 0
        %6637 = vmatpush1.bf16.msra.mxu0 %v1446
        %6638 = vmatprep.subr.bf16.mxu0 0
        %6639 = vmatpush1.bf16.msra.mxu0 %v1447
        %6640 = vmatprep.subr.bf16.mxu0 0
        %6641 = vmatpush1.bf16.msra.mxu0 %v1448
        %6642 = vmatprep.subr.bf16.mxu0 0
        %6643 = vmatpush1.bf16.msra.mxu0 %v1449
        %6644 = vmatprep.subr.bf16.mxu0 0
        %6645 = vmatpush1.bf16.msra.mxu0 %v1450
        %6646 = vmatprep.subr.bf16.mxu0 0
        %6647 = vmatpush1.bf16.msra.mxu0 %v1451
        %6648 = vmatprep.subr.bf16.mxu0 0
        %6649 = vmatpush1.bf16.msra.mxu0 0
        %6650 = vmatprep.subr.bf16.mxu0 0
        %6651 = vmatpush1.bf16.msra.mxu0 0
        %6652 = vmatprep.subr.bf16.mxu0 0
        %6653 = vmatpush1.bf16.msra.mxu0 0
        %6654 = vmatprep.mubr.bf16.mxu0 %v6611
        %6655 = vmatmul.mubr.bf16.gmra.mrb[0].mxu0 %v6598
        %v6656 = vpop.f32.mrb[0].mxu0
        %v6657 = vadd.f32 0.0, %v6656
        %v6658 = vpop.f32.mrb[0].mxu0
        %v6659 = vpop.f32.mrb[0].mxu0
        %v6660 = vadd.f32 0.0, %v6659
        %v6661 = vpop.f32.mrb[0].mxu0
        %6662 = vmatprep.mubr.bf16.mxu0 %v6614
        %6663 = vmatmul.mubr.bf16.gmra.mrb[0].mxu0 %v6600
        %v6664 = vpop.f32.mrb[0].mxu0
        %v6665 = vadd.f32 0.0, %v6664
        %v6666 = vpop.f32.mrb[0].mxu0
        %v6667 = vpop.f32.mrb[0].mxu0
        %v6668 = vadd.f32 0.0, %v6667
        %v6669 = vpop.f32.mrb[0].mxu0
        %6670 = vmatprep.mubr.bf16.mxu0 %v6617
        %6671 = vmatmul.mubr.bf16.gmra.mrb[0].mxu0 %v6602
        %v6672 = vpop.f32.mrb[0].mxu0
        %v6673 = vadd.f32 0.0, %v6672
        %v6674 = vpop.f32.mrb[0].mxu0
        %v6675 = vpop.f32.mrb[0].mxu0
        %v6676 = vadd.f32 0.0, %v6675
        %v6677 = vpop.f32.mrb[0].mxu0
        %6678 = vmatprep.mubr.bf16.mxu0 %v6620
        %6679 = vmatmul.mubr.bf16.gmra.mrb[0].mxu0 %v6604
        %v6680 = vpop.f32.mrb[0].mxu0
        %v6681 = vadd.f32 0.0, %v6680
        %v6682 = vpop.f32.mrb[0].mxu0
        %v6683 = vpop.f32.mrb[0].mxu0
        %v6684 = vpop.f32.mrb[0].mxu0
        %6685 = vdwg.mxu0
        %v6686 = vld [vmem:[%s2407] sm:$0xff]
        %v6687 = vld [vmem:[%s2407 + $0x8] sm:$0xff]
        %v6688 = vld [vmem:[%s2407 + $0x10] sm:$0xff]
        %v6689 = vld [vmem:[%s2407 + $0x18] sm:$0xff]
        %v6690 = vld [vmem:[%s2407 + $0x20] sm:$0xff]
        %v6691 = vld [vmem:[%s2407 + $0x28] sm:$0xff]
        %v6692 = vld [vmem:[%s2407 + $0x30] sm:$0x11]
        %v6700 = vunpack.c.l.b16 %v6686
        %v6701 = vunpack.c.h.b16 %v6686
        %v6702 = vunpack.c.l.b16 %v6687
        %v6703 = vunpack.c.h.b16 %v6687
        %v6704 = vunpack.c.l.b16 %v6688
        %v6705 = vunpack.c.h.b16 %v6688
        %v6706 = vunpack.c.l.b16 %v6689
        %v6707 = vunpack.c.h.b16 %v6689
        %v6708 = vunpack.c.l.b16 %v6690
        %v6709 = vunpack.c.h.b16 %v6690
        %v6710 = vunpack.c.l.b16 %v6691
        %v6711 = vunpack.c.h.b16 %v6691
        %v6712 = vunpack.c.l.b16 %v6692
        %v6713 = vunpack.c.h.b16 %v6692
        %v6714 = vpack.c.b16 %v6702, %v6700
        %v6715 = vpack.c.b16 %v6703, %v6701
        %v6716 = vpack.c.b16 %v6706, %v6704
        %v6717 = vpack.c.b16 %v6707, %v6705
        %v6718 = vpack.c.b16 %v6710, %v6708
        %v6719 = vpack.c.b16 %v6711, %v6709
        %v6720 = vpack.c.b16 %v6712, %v6712
        %v6721 = vpack.c.b16 %v6713, %v6713
        %v6727 = vsel %vm1511, %v6715, 0
        %v6730 = vsel %vm1511, %v6717, 0
        %v6733 = vsel %vm1511, %v6719, 0
        %v6736 = vsel %vm1511, %v6721, 0
        %6738 = vmatprep.subr.bf16.mxu0 0
        %6739 = vmatpush1.bf16.msra.mxu0 %v1439
        %6740 = vmatprep.subr.bf16.mxu0 0
        %6741 = vmatpush1.bf16.msra.mxu0 %v1440
        %6742 = vmatprep.subr.bf16.mxu0 0
        %6743 = vmatpush1.bf16.msra.mxu0 %v1441
        %6744 = vmatprep.subr.bf16.mxu0 0
        %6745 = vmatpush1.bf16.msra.mxu0 %v1442
        %6746 = vmatprep.subr.bf16.mxu0 0
        %6747 = vmatpush1.bf16.msra.mxu0 %v1443
        %6748 = vmatprep.subr.bf16.mxu0 0
        %6749 = vmatpush1.bf16.msra.mxu0 %v1444
        %6750 = vmatprep.subr.bf16.mxu0 0
        %6751 = vmatpush1.bf16.msra.mxu0 %v1445
        %6752 = vmatprep.subr.bf16.mxu0 0
        %6753 = vmatpush1.bf16.msra.mxu0 %v1446
        %6754 = vmatprep.subr.bf16.mxu0 0
        %6755 = vmatpush1.bf16.msra.mxu0 %v1447
        %6756 = vmatprep.subr.bf16.mxu0 0
        %6757 = vmatpush1.bf16.msra.mxu0 %v1448
        %6758 = vmatprep.subr.bf16.mxu0 0
        %6759 = vmatpush1.bf16.msra.mxu0 %v1449
        %6760 = vmatprep.subr.bf16.mxu0 0
        %6761 = vmatpush1.bf16.msra.mxu0 %v1450
        %6762 = vmatprep.subr.bf16.mxu0 0
        %6763 = vmatpush1.bf16.msra.mxu0 %v1451
        %6764 = vmatprep.subr.bf16.mxu0 0
        %6765 = vmatpush1.bf16.msra.mxu0 0
        %6766 = vmatprep.subr.bf16.mxu0 0
        %6767 = vmatpush1.bf16.msra.mxu0 0
        %6768 = vmatprep.subr.bf16.mxu0 0
        %6769 = vmatpush1.bf16.msra.mxu0 0
        %6770 = vmatprep.mubr.bf16.mxu0 %v6727
        %6771 = vmatmul.mubr.bf16.gmra.mrb[0].mxu0 %v6714
        %v6772 = vpop.f32.mrb[0].mxu0
        %v6773 = vadd.f32 0.0, %v6772
        %v6774 = vpop.f32.mrb[0].mxu0
        %v6775 = vpop.f32.mrb[0].mxu0
        %v6776 = vadd.f32 0.0, %v6775
        %v6777 = vpop.f32.mrb[0].mxu0
        %6778 = vmatprep.mubr.bf16.mxu0 %v6730
        %6779 = vmatmul.mubr.bf16.gmra.mrb[0].mxu0 %v6716
        %v6780 = vpop.f32.mrb[0].mxu0
        %v6781 = vadd.f32 0.0, %v6780
        %v6782 = vpop.f32.mrb[0].mxu0
        %v6783 = vpop.f32.mrb[0].mxu0
        %v6784 = vadd.f32 0.0, %v6783
        %v6785 = vpop.f32.mrb[0].mxu0
        %6786 = vmatprep.mubr.bf16.mxu0 %v6733
        %6787 = vmatmul.mubr.bf16.gmra.mrb[0].mxu0 %v6718
        %v6788 = vpop.f32.mrb[0].mxu0
        %v6789 = vadd.f32 0.0, %v6788
        %v6790 = vpop.f32.mrb[0].mxu0
        %v6791 = vpop.f32.mrb[0].mxu0
        %v6792 = vadd.f32 0.0, %v6791
        %v6793 = vpop.f32.mrb[0].mxu0
        %6794 = vmatprep.mubr.bf16.mxu0 %v6736
        %6795 = vmatmul.mubr.bf16.gmra.mrb[0].mxu0 %v6720
        %v6796 = vpop.f32.mrb[0].mxu0
        %v6797 = vadd.f32 0.0, %v6796
        %v6798 = vpop.f32.mrb[0].mxu0
        %v6799 = vpop.f32.mrb[0].mxu0
        %v6800 = vpop.f32.mrb[0].mxu0
        %6801 = vdwg.mxu0
        %6809 = vrot.lane.b32.xlu0 %v5961, 16
        %v6810 = vpop.permute.xlu0 %6809
        %6811 = vrot.lane.b32.xlu0 %v5964, 16
        %v6812 = vpop.permute.xlu0 %6811
        %6813 = vrot.lane.b32.xlu0 %v5969, 16
        %v6814 = vpop.permute.xlu0 %6813
        %6815 = vrot.lane.b32.xlu0 %v5972, 16
        %v6816 = vpop.permute.xlu0 %6815
        %6817 = vrot.lane.b32.xlu0 %v5977, 16
        %v6818 = vpop.permute.xlu0 %6817
        %6819 = vrot.lane.b32.xlu0 %v5980, 16
        %v6820 = vpop.permute.xlu0 %6819
        %6821 = vrot.lane.b32.xlu0 %v5985, 16
        %v6822 = vpop.permute.xlu0 %6821
        %6837 = vrot.lane.b32.xlu0 %v6077, 32
        %v6838 = vpop.permute.xlu0 %6837
        %6839 = vrot.lane.b32.xlu0 %v6080, 32
        %v6840 = vpop.permute.xlu0 %6839
        %6841 = vrot.lane.b32.xlu0 %v6085, 32
        %v6842 = vpop.permute.xlu0 %6841
        %6843 = vrot.lane.b32.xlu0 %v6088, 32
        %v6844 = vpop.permute.xlu0 %6843
        %6845 = vrot.lane.b32.xlu0 %v6093, 32
        %v6846 = vpop.permute.xlu0 %6845
        %6847 = vrot.lane.b32.xlu0 %v6096, 32
        %v6848 = vpop.permute.xlu0 %6847
        %6849 = vrot.lane.b32.xlu0 %v6101, 32
        %v6850 = vpop.permute.xlu0 %6849
        %6865 = vrot.lane.b32.xlu0 %v6193, 48
        %v6866 = vpop.permute.xlu0 %6865
        %6867 = vrot.lane.b32.xlu0 %v6196, 48
        %v6868 = vpop.permute.xlu0 %6867
        %6869 = vrot.lane.b32.xlu0 %v6201, 48
        %v6870 = vpop.permute.xlu0 %6869
        %6871 = vrot.lane.b32.xlu0 %v6204, 48
        %v6872 = vpop.permute.xlu0 %6871
        %6873 = vrot.lane.b32.xlu0 %v6209, 48
        %v6874 = vpop.permute.xlu0 %6873
        %6875 = vrot.lane.b32.xlu0 %v6212, 48
        %v6876 = vpop.permute.xlu0 %6875
        %6877 = vrot.lane.b32.xlu0 %v6217, 48
        %v6878 = vpop.permute.xlu0 %6877
        %6893 = vrot.lane.b32.xlu0 %v6309, 64
        %v6894 = vpop.permute.xlu0 %6893
        %6895 = vrot.lane.b32.xlu0 %v6312, 64
        %v6896 = vpop.permute.xlu0 %6895
        %6897 = vrot.lane.b32.xlu0 %v6317, 64
        %v6898 = vpop.permute.xlu0 %6897
        %6899 = vrot.lane.b32.xlu0 %v6320, 64
        %v6900 = vpop.permute.xlu0 %6899
        %6901 = vrot.lane.b32.xlu0 %v6325, 64
        %v6902 = vpop.permute.xlu0 %6901
        %6903 = vrot.lane.b32.xlu0 %v6328, 64
        %v6904 = vpop.permute.xlu0 %6903
        %6905 = vrot.lane.b32.xlu0 %v6333, 64
        %v6906 = vpop.permute.xlu0 %6905
        %6921 = vrot.lane.b32.xlu0 %v6425, 80
        %v6922 = vpop.permute.xlu0 %6921
        %6923 = vrot.lane.b32.xlu0 %v6428, 80
        %v6924 = vpop.permute.xlu0 %6923
        %6925 = vrot.lane.b32.xlu0 %v6433, 80
        %v6926 = vpop.permute.xlu0 %6925
        %6927 = vrot.lane.b32.xlu0 %v6436, 80
        %v6928 = vpop.permute.xlu0 %6927
        %6929 = vrot.lane.b32.xlu0 %v6441, 80
        %v6930 = vpop.permute.xlu0 %6929
        %6931 = vrot.lane.b32.xlu0 %v6444, 80
        %v6932 = vpop.permute.xlu0 %6931
        %6933 = vrot.lane.b32.xlu0 %v6449, 80
        %v6934 = vpop.permute.xlu0 %6933
        %6949 = vrot.lane.b32.xlu0 %v6541, 96
        %v6950 = vpop.permute.xlu0 %6949
        %6951 = vrot.lane.b32.xlu0 %v6544, 96
        %v6952 = vpop.permute.xlu0 %6951
        %6953 = vrot.lane.b32.xlu0 %v6549, 96
        %v6954 = vpop.permute.xlu0 %6953
        %6955 = vrot.lane.b32.xlu0 %v6552, 96
        %v6956 = vpop.permute.xlu0 %6955
        %6957 = vrot.lane.b32.xlu0 %v6557, 96
        %v6958 = vpop.permute.xlu0 %6957
        %6959 = vrot.lane.b32.xlu0 %v6560, 96
        %v6960 = vpop.permute.xlu0 %6959
        %6961 = vrot.lane.b32.xlu0 %v6565, 96
        %v6962 = vpop.permute.xlu0 %6961
        %6977 = vrot.lane.b32.xlu0 %v6657, 112
        %v6978 = vpop.permute.xlu0 %6977
        %6979 = vrot.lane.b32.xlu0 %v6660, 112
        %v6980 = vpop.permute.xlu0 %6979
        %6981 = vrot.lane.b32.xlu0 %v6665, 112
        %v6982 = vpop.permute.xlu0 %6981
        %6983 = vrot.lane.b32.xlu0 %v6668, 112
        %v6984 = vpop.permute.xlu0 %6983
        %6985 = vrot.lane.b32.xlu0 %v6673, 112
        %v6986 = vpop.permute.xlu0 %6985
        %6987 = vrot.lane.b32.xlu0 %v6676, 112
        %v6988 = vpop.permute.xlu0 %6987
        %6989 = vrot.lane.b32.xlu0 %v6681, 112
        %v6990 = vpop.permute.xlu0 %6989
        %v6998 = vsel %vm2720, %v5845, %v6810
        %v6999 = vsel %vm2720, %v5848, %v6812
        %v7000 = vsel %vm2720, %v5853, %v6814
        %v7001 = vsel %vm2720, %v5856, %v6816
        %v7002 = vsel %vm2720, %v5861, %v6818
        %v7003 = vsel %vm2720, %v5864, %v6820
        %v7004 = vsel %vm2720, %v5869, %v6822
        %v7005 = vsel %vm2728, %v6998, %v6838
        %v7006 = vsel %vm2728, %v6999, %v6840
        %v7007 = vsel %vm2728, %v7000, %v6842
        %v7008 = vsel %vm2728, %v7001, %v6844
        %v7009 = vsel %vm2728, %v7002, %v6846
        %v7010 = vsel %vm2728, %v7003, %v6848
        %v7011 = vsel %vm2728, %v7004, %v6850
        %v7012 = vsel %vm2736, %v7005, %v6866
        %v7013 = vsel %vm2736, %v7006, %v6868
        %v7014 = vsel %vm2736, %v7007, %v6870
        %v7015 = vsel %vm2736, %v7008, %v6872
        %v7016 = vsel %vm2736, %v7009, %v6874
        %v7017 = vsel %vm2736, %v7010, %v6876
        %v7018 = vsel %vm2736, %v7011, %v6878
        %v7019 = vsel %vm2744, %v7012, %v6894
        %v7020 = vsel %vm2744, %v7013, %v6896
        %v7021 = vsel %vm2744, %v7014, %v6898
        %v7022 = vsel %vm2744, %v7015, %v6900
        %v7023 = vsel %vm2744, %v7016, %v6902
        %v7024 = vsel %vm2744, %v7017, %v6904
        %v7025 = vsel %vm2744, %v7018, %v6906
        %v7026 = vsel %vm1511, %v7019, %v6922
        %v7027 = vsel %vm1511, %v7020, %v6924
        %v7028 = vsel %vm1511, %v7021, %v6926
        %v7029 = vsel %vm1511, %v7022, %v6928
        %v7030 = vsel %vm1511, %v7023, %v6930
        %v7031 = vsel %vm1511, %v7024, %v6932
        %v7032 = vsel %vm1511, %v7025, %v6934
        %v7033 = vsel %vm2759, %v7026, %v6950
        %v7034 = vsel %vm2759, %v7027, %v6952
        %v7035 = vsel %vm2759, %v7028, %v6954
        %v7036 = vsel %vm2759, %v7029, %v6956
        %v7037 = vsel %vm2759, %v7030, %v6958
        %v7038 = vsel %vm2759, %v7031, %v6960
        %v7039 = vsel %vm2759, %v7032, %v6962
        %v7040 = vsel %vm2767, %v7033, %v6978
        %v7041 = vsel %vm2767, %v7034, %v6980
        %v7042 = vsel %vm2767, %v7035, %v6982
        %v7043 = vsel %vm2767, %v7036, %v6984
        %v7044 = vsel %vm2767, %v7037, %v6986
        %v7045 = vsel %vm2767, %v7038, %v6988
        %v7046 = vsel %vm2767, %v7039, %v6990
        %v7047 = vpack.c.bf16 %v7041, %v7040
        %v7048 = vpack.c.bf16 %v6776, %v6773
        %v7049 = vpack.c.bf16 %v7043, %v7042
        %v7050 = vpack.c.bf16 %v6784, %v6781
        %v7051 = vpack.c.bf16 %v7045, %v7044
        %v7052 = vpack.c.bf16 %v6792, %v6789
        %v7053 = vpack.c.bf16 %v7046, %v7046
        %v7054 = vpack.c.bf16 %v6797, %v6797
        %v7056 = vsel %vm2720, %v7048, 0
        %v7059 = vsel %vm2720, %v7050, 0
        %v7062 = vsel %vm2720, %v7052, 0
        %v7065 = vsel %vm2720, %v7054, 0
        %7067 = vmatprep.subr.bf16.mxu0 0
        %7068 = vmatpush1.bf16.msra.mxu0 %v2825
        %7069 = vmatprep.subr.bf16.mxu0 0
        %7070 = vmatpush1.bf16.msra.mxu0 %v2826
        %7071 = vmatprep.subr.bf16.mxu0 0
        %7072 = vmatpush1.bf16.msra.mxu0 %v2827
        %7073 = vmatprep.subr.bf16.mxu0 0
        %7074 = vmatpush1.bf16.msra.mxu0 %v2828
        %7075 = vmatprep.subr.bf16.mxu0 0
        %7076 = vmatpush1.bf16.msra.mxu0 %v2829
        %7077 = vmatprep.subr.bf16.mxu0 0
        %7078 = vmatpush1.bf16.msra.mxu0 %v2830
        %7079 = vmatprep.subr.bf16.mxu0 0
        %7080 = vmatpush1.bf16.msra.mxu0 %v2831
        %7081 = vmatprep.subr.bf16.mxu0 0
        %7082 = vmatpush1.bf16.msra.mxu0 %v2832
        %7083 = vmatprep.subr.bf16.mxu0 0
        %7084 = vmatpush1.bf16.msra.mxu0 %v2833
        %7085 = vmatprep.subr.bf16.mxu0 0
        %7086 = vmatpush1.bf16.msra.mxu0 0
        %7087 = vmatprep.subr.bf16.mxu0 0
        %7088 = vmatpush1.bf16.msra.mxu0 0
        %7089 = vmatprep.subr.bf16.mxu0 0
        %7090 = vmatpush1.bf16.msra.mxu0 0
        %7091 = vmatprep.subr.bf16.mxu0 0
        %7092 = vmatpush1.bf16.msra.mxu0 0
        %7093 = vmatprep.subr.bf16.mxu0 0
        %7094 = vmatpush1.bf16.msra.mxu0 0
        %7095 = vmatprep.subr.bf16.mxu0 0
        %7096 = vmatpush1.bf16.msra.mxu0 0
        %7097 = vmatprep.subr.bf16.mxu0 0
        %7098 = vmatpush1.bf16.msra.mxu0 0
        %7099 = vmatprep.mubr.bf16.mxu0 %v7056
        %7100 = vmatmul.mubr.bf16.gmra.mrb[0].mxu0 %v7047
        %v7101 = vpop.f32.mrb[0].mxu0
        %v7102 = vadd.f32 %v2787, %v7101
        %v7103 = vpop.f32.mrb[0].mxu0
        %v7104 = vpop.f32.mrb[0].mxu0
        %v7105 = vadd.f32 %v2787, %v7104
        %v7106 = vpop.f32.mrb[0].mxu0
        %7107 = vmatprep.mubr.bf16.mxu0 %v7059
        %7108 = vmatmul.mubr.bf16.gmra.mrb[0].mxu0 %v7049
        %v7109 = vpop.f32.mrb[0].mxu0
        %v7110 = vadd.f32 %v2787, %v7109
        %v7111 = vpop.f32.mrb[0].mxu0
        %v7112 = vpop.f32.mrb[0].mxu0
        %v7113 = vadd.f32 %v2787, %v7112
        %v7114 = vpop.f32.mrb[0].mxu0
        %7115 = vmatprep.mubr.bf16.mxu0 %v7062
        %7116 = vmatmul.mubr.bf16.gmra.mrb[0].mxu0 %v7051
        %v7117 = vpop.f32.mrb[0].mxu0
        %v7118 = vadd.f32 %v2787, %v7117
        %v7119 = vpop.f32.mrb[0].mxu0
        %v7120 = vpop.f32.mrb[0].mxu0
        %v7121 = vadd.f32 %v2787, %v7120
        %v7122 = vpop.f32.mrb[0].mxu0
        %7123 = vmatprep.mubr.bf16.mxu0 %v7065
        %7124 = vmatmul.mubr.bf16.gmra.mrb[0].mxu0 %v7053
        %v7125 = vpop.f32.mrb[0].mxu0
        %v7126 = vadd.f32 %v2787, %v7125
        %v7127 = vpop.f32.mrb[0].mxu0
        %v7128 = vpop.f32.mrb[0].mxu0
        %v7129 = vpop.f32.mrb[0].mxu0
        %7130 = vdwg.mxu0
        %v7131 = vmax.f32 %v7102, 0.0
        %v7132 = vmax.f32 %v7105, 0.0
        %v7133 = vmax.f32 %v7110, 0.0
        %v7134 = vmax.f32 %v7113, 0.0
        %v7135 = vmax.f32 %v7118, 0.0
        %v7136 = vmax.f32 %v7121, 0.0
        %v7137 = vmax.f32 %v7126, 0.0
        %s7138 = scalar_lea.vmem %s293, 168
        %7139 = vst [vmem:[%s7138] sm:$0xff] %v7131
        %7140 = vst [vmem:[%s7138 + $0x8] sm:$0xff] %v7132
        %7141 = vst [vmem:[%s7138 + $0x10] sm:$0xff] %v7133
        %7142 = vst [vmem:[%s7138 + $0x18] sm:$0xff] %v7134
        %7143 = vst [vmem:[%s7138 + $0x20] sm:$0xff] %v7135
        %7144 = vst [vmem:[%s7138 + $0x28] sm:$0xff] %v7136
        %7145 = vst [vmem:[%s7138 + $0x30] sm:$0x1] %v7137
        %v7146 = vadd.f32 %v7131, %v7132
        %v7147 = vadd.f32 %v7146, %v7133
        %v7148 = vadd.f32 %v7147, %v7134
        %v7149 = vadd.f32 %v7148, %v7135
        %v7150 = vadd.f32 %v7149, %v7136
        %v7151 = vsel %vm2938, %v7137, 0.0
        %v7152 = vadd.f32 %v7150, %v7151
        %v7153 = vrot.slane %v7152, 4
        %v7154 = vadd.f32 %v7152, %v7153
        %v7155 = vrot.slane %v7154, 2
        %v7156 = vadd.f32 %v7154, %v7155
        %v7157 = vrot.slane %v7156, 1
        %v7158 = vadd.f32 %v7156, %v7157
        %v7159 = vmul.f32 %v7158, %v2947
        %s7160 = scalar_lea.vmem %s281, 3 [#allocation2]
        %7161 = vst [vmem:[%s7160] sm:$0x1] %v7159
        %s7162 = smul.u32 4, %s22
        %p7163 = scmp.lt.s32.totalorder %s7162, 7
        %s7164 = scalar_select %p7163, %s7162, 7
        %s7165 = smul.addr %s7164, 7
        %s7166 = smul.addr %s7165, 8
        %s7167 = scalar_lea.vmem %s6, %s7166
        %s7168 = sand.u32 %s187, 1
        %s7169 = scalar_lea.sflag [#allocation3], %s7168
        %s7170 = sand.u32 %s187, 1
        %s7171 = smul.addr %s7170, 4
        %s7172 = scalar_lea.vmem [#allocation2], %s7171
        // Predicated region
        $region45: #{_forward.1} parent=43 // pred_check
          %p7173 = pneg %p171
        $region46: #{_forward.1} parent=43 // pred_check_branch
          %7175 = sbr.rel (%p7173) target = $region48
        $region47: #{_forward.1} parent=43 // pred_region
          %s7176 = smul.u32 4, %s22
        $region48: #{_forward.1} parent=43 // pred_fallthru
          _
        // Predicated region
        $region49: #{_forward.1} parent=43 // pred_check
          %p7177 = pneg %p197
        $region50: #{_forward.1} parent=43 // pred_check_branch
          %7179 = sbr.rel (%p7177) target = $region52
        $region51: #{_forward.1} parent=43 // pred_region
          %s7180 = smul.u32 4, %s22
          %s7182 = ssub.s32 64, 64
          %7183 = vsyncadd %s7169, %s7182
          %s7184 = smul.addr %s7180, 16
          %s7185 = scalar_lea.hbm %s7, %s7184
          %s7186 = sshll.u32 %s7172, 4
          %s7187 = int_to_ptr.vmem [resolvable:$true] %s7186
          %7192 = dma.vmem_to_hbm [thread:$0]  %s7187, 64, %s7185, %s7169, 16, 16, 1
        $region52: #{_forward.1} parent=43 // pred_fallthru
          _
      $region44: #{_forward.1} parent=5 // pred_fallthru
        _
      %p7193 = scmp.le.s32.totalorder 2, %s17
      // Predicated region
      $region53: #{_forward.1} parent=5 // pred_check
        %p7194 = pneg %p7193
      $region54: #{_forward.1} parent=5 // pred_check_branch
        %7196 = sbr.rel (%p7194) target = $region56
      $region55: #{_forward.1} parent=5 // pred_region
        %s7197 = ssub.s32 %s17, 2
        // Predicated region
        $region57: #{_forward.1} parent=55 // pred_check
          %p7198 = pneg %p177
        $region58: #{_forward.1} parent=55 // pred_check_branch
          %7200 = sbr.rel (%p7198) target = $region60
        $region59: #{_forward.1} parent=55 // pred_region
          %s7201 = smul.u32 4, %s23
          %p7202 = scmp.lt.s32.totalorder %s7201, 7
          %s7203 = scalar_select %p7202, %s7201, 7
          %s7204 = smul.addr %s7203, 7
          %s7205 = smul.addr %s7204, 8
          %s7206 = scalar_lea.vmem %s6, %s7205
        $region60: #{_forward.1} parent=55 // pred_fallthru
          _
        // Predicated region
        $region61: #{_forward.1} parent=55 // pred_check
          %p7207 = pneg %p203
        $region62: #{_forward.1} parent=55 // pred_check_branch
          %7209 = sbr.rel (%p7207) target = $region64
        $region63: #{_forward.1} parent=55 // pred_region
          %s7210 = sand.u32 %s188, 1
          %s7211 = scalar_lea.sflag [#allocation3], %s7210
          %s7212 = sand.u32 %s188, 1
          %s7213 = smul.addr %s7212, 4
          %s7214 = scalar_lea.vmem [#allocation2], %s7213
          %7215 = dma.done %s7211, 64
        $region64: #{_forward.1} parent=55 // pred_fallthru
          _
      $region56: #{_forward.1} parent=5 // pred_fallthru
        _
    $region6: #{_forward.1} parent=1 // loop_footer
      %s21 = sadd.s32 1, %s17
    $region7: #{_forward.1} parent=1 // loop_footer_branch
      %16 = sbr.rel target = $region3
    $region8: #{_forward.1} parent=1 // loop_exit
      _
    %7216 = vsyncpa [#allocation3], 1
    %s7217 = scalar_lea.sflag [#allocation3], 1
    %7218 = vsyncpa %s7217, 1

</llo_original>
